<compile_context>
chip_gen: v5e
topology: v5e:2x2
jax: 0.10.0
libtpu: 0.0.40
codegen_flags: <defaults>
</compile_context>

<pallas_src>
import jax
import jax.numpy as jnp
import numpy as np
from jax.experimental import pallas as pl
from jax.experimental.pallas import tpu as pltpu

# ----------------------------- synthetic config -----------------------------
LAYER_NUMS = (1, 1)                 # model_cfg.LAYER_NUMS
NUM_FILTERS = (64, 32)              # model_cfg.NUM_FILTERS
UPSAMPLE_STRIDES = (1, 2)           # model_cfg.UPSAMPLE_STRIDES
NUM_UPSAMPLE_FILTERS = (32, 32)     # model_cfg.NUM_UPSAMPLE_FILTERS
# forward requires blocks[0] input channels == sum(NUM_UPSAMPLE_FILTERS)
assert sum(NUM_UPSAMPLE_FILTERS) == NUM_FILTERS[0]

CP = 128  # padded channel width: one full 128-lane vector for every activation


# --------------------- value-level building blocks (in-kernel) ----------------
def _conv3x3_bn_relu(x, w_ref, s_ref, b_ref, out_dtype):
    """3x3 'same' conv + folded BN + ReLU on a VMEM-resident activation.

    x:      (B, H, W, CP) bf16 (real channels first, padded channels are 0)
    w_ref:  (9*CP, CP) bf16 im2col weights, row t*CP+ci == W_torch[co, ci, dh, dw],
            t = dh*3 + dw; padded rows/cols are 0.
    s_ref/b_ref: (1, CP) f32 folded BatchNorm affine (0 on padded channels).
    Returns (B, H, W, CP) out_dtype.
    """
    bsz, h, w, cp = x.shape
    # zero halo (value-level; vreg-granular since cp == 128 lanes)
    zr = jnp.zeros((bsz, 1, w, cp), x.dtype)
    xp = jnp.concatenate([zr, x, zr], axis=1)                  # (B, h+2, w, cp)
    zc = jnp.zeros((bsz, h + 2, 1, cp), x.dtype)
    xp = jnp.concatenate([zc, xp, zc], axis=2)                 # (B, h+2, w+2, cp)
    # im2col: tap-major along lanes -> single MXU matmul with K = 9*CP
    taps = [xp[:, dh:dh + h, dw:dw + w, :] for dh in range(3) for dw in range(3)]
    pmat = jnp.concatenate(taps, axis=-1).reshape(bsz * h * w, 9 * cp)
    acc = jnp.dot(pmat, w_ref[...], preferred_element_type=jnp.float32)
    y = jnp.maximum(acc * s_ref[...] + b_ref[...], 0.0)        # f32 epilogue
    return y.astype(out_dtype).reshape(bsz, h, w, cp)


def _deconv_bn_relu(x, w_ref, s_ref, b_ref, stride):
    """ConvTranspose2d(kernel_size == stride) + folded BN + ReLU.

    Taps folded into the matmul N dimension:
      w_ref[ci, t*CP + co_pad] == W_torch[ci, co, i, j],  t = i*stride + j,
      where co_pad = co_offset + co places the result at its slot of the padded
      concat layout.  s_ref/b_ref: (1, stride*stride*CP) per-tap tiled affine.
    Returns (B, H*stride, W*stride, CP) bf16.
    """
    bsz, h, w, cp = x.shape
    y = jnp.dot(x.reshape(bsz * h * w, cp), w_ref[...],
                preferred_element_type=jnp.float32)            # (M, t*CP)
    y = jnp.maximum(y * s_ref[...] + b_ref[...], 0.0).astype(jnp.bfloat16)
    if stride == 1:
        return y.reshape(bsz, h, w, cp)
    # stride-2 spatial interleave: contiguous 256-lane row-phase slices;
    # the column (j) interleave is a pure reshape, rows are stacked after.
    rows = [y[:, i * stride * cp:(i + 1) * stride * cp].reshape(bsz, h, w * stride, cp)
            for i in range(stride)]
    out = jnp.concatenate([r[:, :, None, :, :] for r in rows], axis=2)
    return out.reshape(bsz, h * stride, w * stride, cp)


def _make_fused_kernel(n_b0, n_b1, s0, s1):
    """Fused forward: deblock0(x4), block1(x5), deblock1, concat(add), block0."""
    def kernel(*refs):
        i = 0
        x4_ref = refs[i]; i += 1
        x5_ref = refs[i]; i += 1
        de0 = refs[i:i + 3]; i += 3
        b1 = [refs[i + 3 * k: i + 3 * (k + 1)] for k in range(n_b1)]; i += 3 * n_b1
        de1 = refs[i:i + 3]; i += 3
        b0 = [refs[i + 3 * k: i + 3 * (k + 1)] for k in range(n_b0)]; i += 3 * n_b0
        o_ref = refs[i]

        up0 = _deconv_bn_relu(x4_ref[...], *de0, stride=s0)    # real ch [0, 32)
        x = x5_ref[...]
        for (wr, sr, br) in b1:
            x = _conv3x3_bn_relu(x, wr, sr, br, jnp.bfloat16)
        up1 = _deconv_bn_relu(x, *de1, stride=s1)              # real ch [32, 64)
        # torch.cat(ups, dim=1): disjoint real channel ranges in the padded-128
        # layout -> concat == elementwise add (VPU), no lane shuffle.
        x = up0 + up1
        for li, (wr, sr, br) in enumerate(b0):
            od = jnp.float32 if li == n_b0 - 1 else jnp.bfloat16
            x = _conv3x3_bn_relu(x, wr, sr, br, od)

        # lane-dense NCHW-flat store: (B, H*W, CP) -> (B, CP, H*W), keep the
        # real output channels; 256-wide lane dim -> unmasked full-vreg stores.
        bsz, h, w, cp = x.shape
        xt = jnp.transpose(x.reshape(bsz, h * w, cp), (0, 2, 1))
        o_ref[...] = xt[:, :o_ref.shape[1], :]
    return kernel


# ------------------------------- full forward --------------------------------
def bev_backbone_v1_forward(x_conv4, x_conv5, params):
    b, c4, h4, w4 = x_conv4.shape
    _, c5, h5, w5 = x_conv5.shape
    c_out = sum(NUM_UPSAMPLE_FILTERS)
    assert c4 <= CP and c5 <= CP and c_out <= CP
    assert h5 * UPSAMPLE_STRIDES[1] == h4 and w5 * UPSAMPLE_STRIDES[1] == w4

    # NCHW -> NHWC, bf16, channel-pad to a full 128-lane vector (lane-dense DMA,
    # vreg-granular im2col).  These are tiny XLA ops at this size; for real BEV
    # resolutions keep the surrounding model NHWC/bf16 instead.
    def prep(x, c):
        x = jnp.transpose(x, (0, 2, 3, 1)).astype(jnp.bfloat16)
        return jnp.pad(x, ((0, 0), (0, 0), (0, 0), (0, CP - c)))

    x4p = prep(x_conv4, c4)
    x5p = prep(x_conv5, c5)

    # tiny trace-time repacks of the canonical params into padded kernel layouts
    def conv_args(layer):
        w9 = layer["w9"]                                       # (9, cin, cout) bf16
        _, cin, cout = w9.shape
        wp = jnp.zeros((9, CP, CP), jnp.bfloat16).at[:, :cin, :cout].set(w9)
        sp = jnp.zeros((1, CP), jnp.float32).at[:, :cout].set(layer["scale"])
        bp = jnp.zeros((1, CP), jnp.float32).at[:, :cout].set(layer["bias"])
        return [wp.reshape(9 * CP, CP), sp, bp]

    def deconv_args(layer, co_off):
        wt = layer["w_taps"]                                   # (s*s, cin, cout) bf16
        t, cin, cout = wt.shape
        wp = (jnp.zeros((CP, t, CP), jnp.bfloat16)
              .at[:cin, :, co_off:co_off + cout].set(jnp.transpose(wt, (1, 0, 2))))
        sp = jnp.zeros((1, CP), jnp.float32).at[:, co_off:co_off + cout].set(layer["scale"])
        bp = jnp.zeros((1, CP), jnp.float32).at[:, co_off:co_off + cout].set(layer["bias"])
        return [wp.reshape(CP, t * CP), jnp.tile(sp, (1, t)), jnp.tile(bp, (1, t))]

    args = [x4p, x5p]
    args += deconv_args(params["deblock0"], 0)
    for layer in params["block1"]:
        args += conv_args(layer)
    args += deconv_args(params["deblock1"], NUM_UPSAMPLE_FILTERS[0])
    for layer in params["block0"]:
        args += conv_args(layer)

    in_specs = [pl.BlockSpec(a.shape, lambda i, nd=a.ndim: (0,) * nd) for a in args]

    # advisory cost estimate for XLA scheduling around the custom call
    m0 = b * h4 * w4
    m1 = b * h5 * w5
    flops = (2 * m0 * CP * CP                                        # deblock0
             + 2 * len(params["block1"]) * m1 * 9 * CP * CP          # block1 convs
             + 2 * m1 * CP * (UPSAMPLE_STRIDES[1] ** 2) * CP         # deblock1
             + 2 * len(params["block0"]) * m0 * 9 * CP * CP)         # block0 convs
    bytes_accessed = (sum(int(a.size) * a.dtype.itemsize for a in args)
                      + b * c_out * h4 * w4 * 4)

    kernel = _make_fused_kernel(len(params["block0"]), len(params["block1"]),
                                UPSAMPLE_STRIDES[0], UPSAMPLE_STRIDES[1])
    out = pl.pallas_call(
        kernel,
        out_shape=jax.ShapeDtypeStruct((b, c_out, h4 * w4), jnp.float32),
        grid=(1,),
        in_specs=in_specs,
        out_specs=pl.BlockSpec((b, c_out, h4 * w4), lambda i: (0, 0, 0)),
        compiler_params=pltpu.CompilerParams(dimension_semantics=("arbitrary",)),
        cost_estimate=pl.CostEstimate(flops=flops, transcendentals=0,
                                      bytes_accessed=bytes_accessed),
    )(*args)
    # NCHW-flat kernel output -> NCHW is a free reshape (no transpose / relayout)
    return out.reshape(b, c_out, h4, w4)


# -------------------------- parameter construction ---------------------------
def _fold_bn(gamma, beta, mean, var, eps=1e-3):
    scale = gamma / jnp.sqrt(var + eps)
    bias = beta - mean * scale
    return scale.reshape(1, -1).astype(jnp.float32), bias.reshape(1, -1).astype(jnp.float32)


def _make_bn(keys, cout):
    kg, kb, km, kv = keys
    gamma = 1.0 + 0.1 * jax.random.normal(kg, (cout,), jnp.float32)
    beta = 0.1 * jax.random.normal(kb, (cout,), jnp.float32)
    mean = 0.05 * jax.random.normal(km, (cout,), jnp.float32)
    var = 1.0 + 0.1 * jax.random.uniform(kv, (cout,), jnp.float32)
    return _fold_bn(gamma, beta, mean, var)


def make_conv_params(key, cin, cout):
    kw, kg, kb, km, kv = jax.random.split(key, 5)
    w9 = jax.random.normal(kw, (9, cin, cout), jnp.float32) * (2.0 / (9 * cin)) ** 0.5
    scale, bias = _make_bn((kg, kb, km, kv), cout)
    return {"w9": w9.astype(jnp.bfloat16), "scale": scale, "bias": bias}


def make_deconv_params(key, cin, cout, stride):
    kw, kg, kb, km, kv = jax.random.split(key, 5)
    t = stride * stride
    wt = jax.random.normal(kw, (t, cin, cout), jnp.float32) * (2.0 / (t * cin)) ** 0.5
    scale, bias = _make_bn((kg, kb, km, kv), cout)
    return {"w_taps": wt.astype(jnp.bfloat16), "scale": scale, "bias": bias}


def init_params(key):
    keys = jax.random.split(key, 2 + (1 + LAYER_NUMS[0]) + (1 + LAYER_NUMS[1]))
    it = iter(keys)
    return {
        "block0": [make_conv_params(next(it), NUM_FILTERS[0], NUM_FILTERS[0])
                   for _ in range(1 + LAYER_NUMS[0])],
        "block1": [make_conv_params(next(it), NUM_FILTERS[1], NUM_FILTERS[1])
                   for _ in range(1 + LAYER_NUMS[1])],
        "deblock0": make_deconv_params(next(it), NUM_FILTERS[0],
                                       NUM_UPSAMPLE_FILTERS[0], UPSAMPLE_STRIDES[0]),
        "deblock1": make_deconv_params(next(it), NUM_FILTERS[1],
                                       NUM_UPSAMPLE_FILTERS[1], UPSAMPLE_STRIDES[1]),
    }


# --------------------------- pure-JAX reference -------------------------------
# Uses the same bf16 weights / bf16 matmul inputs with f32 accumulation, so the
# kernel-vs-reference difference is summation order only -> tight tolerance.
def _ref_conv3x3_bn_relu(x, w9, scale, bias):
    cin, cout = w9.shape[1], w9.shape[2]
    w_hwio = w9.reshape(3, 3, cin, cout)
    y = jax.lax.conv_general_dilated(
        x.astype(jnp.bfloat16), w_hwio, (1, 1), ((1, 1), (1, 1)),
        dimension_numbers=("NHWC", "HWIO", "NHWC"),
        preferred_element_type=jnp.float32)
    return jnp.maximum(y * scale.reshape(1, 1, 1, -1) + bias.reshape(1, 1, 1, -1), 0.0)


def _ref_deconv_bn_relu(x, w_taps, scale, bias, stride):
    b, h, ww, cin = x.shape
    cout = w_taps.shape[-1]
    wk = w_taps.reshape(stride, stride, cin, cout)
    y = jnp.einsum("bhwc,ijcd->bhiwjd", x.astype(jnp.bfloat16), wk,
                   preferred_element_type=jnp.float32)
    y = y.reshape(b, h * stride, ww * stride, cout)
    return jnp.maximum(y * scale.reshape(1, 1, 1, -1) + bias.reshape(1, 1, 1, -1), 0.0)


def ref_forward(x_conv4, x_conv5, params):
    x4 = jnp.transpose(x_conv4, (0, 2, 3, 1))
    x5 = jnp.transpose(x_conv5, (0, 2, 3, 1))
    up0 = _ref_deconv_bn_relu(x4, params["deblock0"]["w_taps"],
                              params["deblock0"]["scale"], params["deblock0"]["bias"],
                              UPSAMPLE_STRIDES[0])
    x = x5
    for layer in params["block1"]:
        x = _ref_conv3x3_bn_relu(x, layer["w9"], layer["scale"], layer["bias"])
    up1 = _ref_deconv_bn_relu(x, params["deblock1"]["w_taps"],
                              params["deblock1"]["scale"], params["deblock1"]["bias"],
                              UPSAMPLE_STRIDES[1])
    x = jnp.concatenate([up0, up1], axis=-1)
    for layer in params["block0"]:
        x = _ref_conv3x3_bn_relu(x, layer["w9"], layer["scale"], layer["bias"])
    return jnp.transpose(x, (0, 3, 1, 2))


# ----------------------------------- main --------------------------------------
if __name__ == "__main__":
    B = 2
    H4 = W4 = 16
    H5 = W5 = 8

    key = jax.random.PRNGKey(0)
    kp, k4, k5 = jax.random.split(key, 3)
    params = init_params(kp)

    # x_conv4 / x_conv5 mimic data_dict['multi_scale_2d_features'] (NCHW, like PyTorch)
    x_conv4 = jax.random.normal(k4, (B, NUM_FILTERS[0], H4, W4), jnp.float32)
    x_conv5 = jax.random.normal(k5, (B, NUM_FILTERS[1], H5, W5), jnp.float32)

    out = jax.jit(bev_backbone_v1_forward)(x_conv4, x_conv5, params)
    out = jax.block_until_ready(out)

    assert out.shape == (B, sum(NUM_UPSAMPLE_FILTERS), H4, W4), out.shape

    # correctness check against a pure-JAX (XLA conv) reference using identical
    # bf16 operands -> tight tolerance (only accumulation order differs)
    ref = jax.block_until_ready(jax.jit(ref_forward)(x_conv4, x_conv5, params))
    np.testing.assert_allclose(np.asarray(out), np.asarray(ref), rtol=5e-3, atol=5e-3)

    print("KERNEL_OK")
</pallas_src>

<mosaic_0001>
module attributes {stable_mosaic.version = 11 : i64} {
  func.func @kernel(%arg0: i32, %arg1: memref<2x16x16x128xbf16, #tpu.memory_space<vmem>>, %arg2: memref<2x8x8x128xbf16, #tpu.memory_space<vmem>>, %arg3: memref<128x128xbf16, #tpu.memory_space<vmem>>, %arg4: memref<1x128xf32, #tpu.memory_space<vmem>>, %arg5: memref<1x128xf32, #tpu.memory_space<vmem>>, %arg6: memref<1152x128xbf16, #tpu.memory_space<vmem>>, %arg7: memref<1x128xf32, #tpu.memory_space<vmem>>, %arg8: memref<1x128xf32, #tpu.memory_space<vmem>>, %arg9: memref<1152x128xbf16, #tpu.memory_space<vmem>>, %arg10: memref<1x128xf32, #tpu.memory_space<vmem>>, %arg11: memref<1x128xf32, #tpu.memory_space<vmem>>, %arg12: memref<128x512xbf16, #tpu.memory_space<vmem>>, %arg13: memref<1x512xf32, #tpu.memory_space<vmem>>, %arg14: memref<1x512xf32, #tpu.memory_space<vmem>>, %arg15: memref<1152x128xbf16, #tpu.memory_space<vmem>>, %arg16: memref<1x128xf32, #tpu.memory_space<vmem>>, %arg17: memref<1x128xf32, #tpu.memory_space<vmem>>, %arg18: memref<1152x128xbf16, #tpu.memory_space<vmem>>, %arg19: memref<1x128xf32, #tpu.memory_space<vmem>>, %arg20: memref<1x128xf32, #tpu.memory_space<vmem>>, %arg21: memref<2x64x256xf32, #tpu.memory_space<vmem>>) attributes {dimension_semantics = [#tpu.dimension_semantics<arbitrary>], iteration_bounds = array<i64: 1>, scalar_prefetch = 0 : i64, scratch_operands = 0 : i64, tpu.core_type = #tpu.core_type<tc>, window_params = [{pipeline_mode = #tpu.pipeline_mode<synchronous>, transform_indices = @transform_0, window_bounds = array<i64: 2, 16, 16, 128>}, {pipeline_mode = #tpu.pipeline_mode<synchronous>, transform_indices = @transform_1, window_bounds = array<i64: 2, 8, 8, 128>}, {pipeline_mode = #tpu.pipeline_mode<synchronous>, transform_indices = @transform_2, window_bounds = array<i64: 128, 128>}, {pipeline_mode = #tpu.pipeline_mode<synchronous>, transform_indices = @transform_3, window_bounds = array<i64: 1, 128>}, {pipeline_mode = #tpu.pipeline_mode<synchronous>, transform_indices = @transform_4, window_bounds = array<i64: 1, 128>}, {pipeline_mode = #tpu.pipeline_mode<synchronous>, transform_indices = @transform_5, window_bounds = array<i64: 1152, 128>}, {pipeline_mode = #tpu.pipeline_mode<synchronous>, transform_indices = @transform_6, window_bounds = array<i64: 1, 128>}, {pipeline_mode = #tpu.pipeline_mode<synchronous>, transform_indices = @transform_7, window_bounds = array<i64: 1, 128>}, {pipeline_mode = #tpu.pipeline_mode<synchronous>, transform_indices = @transform_8, window_bounds = array<i64: 1152, 128>}, {pipeline_mode = #tpu.pipeline_mode<synchronous>, transform_indices = @transform_9, window_bounds = array<i64: 1, 128>}, {pipeline_mode = #tpu.pipeline_mode<synchronous>, transform_indices = @transform_10, window_bounds = array<i64: 1, 128>}, {pipeline_mode = #tpu.pipeline_mode<synchronous>, transform_indices = @transform_11, window_bounds = array<i64: 128, 512>}, {pipeline_mode = #tpu.pipeline_mode<synchronous>, transform_indices = @transform_12, window_bounds = array<i64: 1, 512>}, {pipeline_mode = #tpu.pipeline_mode<synchronous>, transform_indices = @transform_13, window_bounds = array<i64: 1, 512>}, {pipeline_mode = #tpu.pipeline_mode<synchronous>, transform_indices = @transform_14, window_bounds = array<i64: 1152, 128>}, {pipeline_mode = #tpu.pipeline_mode<synchronous>, transform_indices = @transform_15, window_bounds = array<i64: 1, 128>}, {pipeline_mode = #tpu.pipeline_mode<synchronous>, transform_indices = @transform_16, window_bounds = array<i64: 1, 128>}, {pipeline_mode = #tpu.pipeline_mode<synchronous>, transform_indices = @transform_17, window_bounds = array<i64: 1152, 128>}, {pipeline_mode = #tpu.pipeline_mode<synchronous>, transform_indices = @transform_18, window_bounds = array<i64: 1, 128>}, {pipeline_mode = #tpu.pipeline_mode<synchronous>, transform_indices = @transform_19, window_bounds = array<i64: 1, 128>}, {pipeline_mode = #tpu.pipeline_mode<synchronous>, transform_indices = @transform_20, window_bounds = array<i64: 2, 64, 256>}]} {
    %c0 = arith.constant 0 : index
    %c0_0 = arith.constant 0 : index
    %c0_1 = arith.constant 0 : index
    %c0_2 = arith.constant 0 : index
    %0 = vector.load %arg1[%c0, %c0_0, %c0_1, %c0_2] : memref<2x16x16x128xbf16, #tpu.memory_space<vmem>>, vector<2x16x16x128xbf16>
    %1 = vector.shape_cast %0 : vector<2x16x16x128xbf16> to vector<512x128xbf16>
    %c0_3 = arith.constant 0 : index
    %c0_4 = arith.constant 0 : index
    %2 = vector.load %arg3[%c0_3, %c0_4] : memref<128x128xbf16, #tpu.memory_space<vmem>>, vector<128x128xbf16>
    %cst = arith.constant dense<0.000000e+00> : vector<512x128xf32>
    %3 = tpu.matmul %1, %2, %cst {dimension_numbers = #tpu.dot_dimension_numbers<[1], [0], [0], [1], [0, 0, 1, 1], [], []>} : vector<512x128xbf16>, vector<128x128xbf16>, vector<512x128xf32> -> vector<512x128xf32>
    %c0_5 = arith.constant 0 : index
    %c0_6 = arith.constant 0 : index
    %4 = vector.load %arg4[%c0_5, %c0_6] : memref<1x128xf32, #tpu.memory_space<vmem>>, vector<1x128xf32>
    %5 = vector.broadcast %4 : vector<1x128xf32> to vector<512x128xf32>
    %6 = arith.mulf %3, %5 : vector<512x128xf32>
    %c0_7 = arith.constant 0 : index
    %c0_8 = arith.constant 0 : index
    %7 = vector.load %arg5[%c0_7, %c0_8] : memref<1x128xf32, #tpu.memory_space<vmem>>, vector<1x128xf32>
    %8 = vector.broadcast %7 : vector<1x128xf32> to vector<512x128xf32>
    %9 = arith.addf %6, %8 : vector<512x128xf32>
    %cst_9 = arith.constant 0.000000e+00 : f32
    %10 = vector.broadcast %cst_9 : f32 to vector<512x128xf32>
    %11 = arith.maximumf %9, %10 : vector<512x128xf32>
    %12 = arith.truncf %11 : vector<512x128xf32> to vector<512x128xbf16>
    %13 = vector.shape_cast %12 : vector<512x128xbf16> to vector<2x16x16x128xbf16>
    %c0_10 = arith.constant 0 : index
    %c0_11 = arith.constant 0 : index
    %c0_12 = arith.constant 0 : index
    %c0_13 = arith.constant 0 : index
    %14 = vector.load %arg2[%c0_10, %c0_11, %c0_12, %c0_13] : memref<2x8x8x128xbf16, #tpu.memory_space<vmem>>, vector<2x8x8x128xbf16>
    %cst_14 = arith.constant 0.000000e+00 : bf16
    %15 = vector.broadcast %cst_14 : bf16 to vector<2x1x8x128xbf16>
    %16 = tpu.concatenate %15, %14, %15 in 1 : vector<2x1x8x128xbf16>, vector<2x8x8x128xbf16>, vector<2x1x8x128xbf16> -> vector<2x10x8x128xbf16>
    %cst_15 = arith.constant 0.000000e+00 : bf16
    %17 = vector.broadcast %cst_15 : bf16 to vector<2x10x1x128xbf16>
    %18 = tpu.concatenate %17, %16, %17 in 2 : vector<2x10x1x128xbf16>, vector<2x10x8x128xbf16>, vector<2x10x1x128xbf16> -> vector<2x10x10x128xbf16>
    %19 = vector.extract_strided_slice %18 {offsets = [0, 0, 0, 0], sizes = [2, 8, 8, 128], strides = [1, 1, 1, 1]} : vector<2x10x10x128xbf16> to vector<2x8x8x128xbf16>
    %20 = vector.extract_strided_slice %18 {offsets = [0, 0, 1, 0], sizes = [2, 8, 8, 128], strides = [1, 1, 1, 1]} : vector<2x10x10x128xbf16> to vector<2x8x8x128xbf16>
    %21 = vector.extract_strided_slice %18 {offsets = [0, 0, 2, 0], sizes = [2, 8, 8, 128], strides = [1, 1, 1, 1]} : vector<2x10x10x128xbf16> to vector<2x8x8x128xbf16>
    %22 = vector.extract_strided_slice %18 {offsets = [0, 1, 0, 0], sizes = [2, 8, 8, 128], strides = [1, 1, 1, 1]} : vector<2x10x10x128xbf16> to vector<2x8x8x128xbf16>
    %23 = vector.extract_strided_slice %18 {offsets = [0, 1, 1, 0], sizes = [2, 8, 8, 128], strides = [1, 1, 1, 1]} : vector<2x10x10x128xbf16> to vector<2x8x8x128xbf16>
    %24 = vector.extract_strided_slice %18 {offsets = [0, 1, 2, 0], sizes = [2, 8, 8, 128], strides = [1, 1, 1, 1]} : vector<2x10x10x128xbf16> to vector<2x8x8x128xbf16>
    %25 = vector.extract_strided_slice %18 {offsets = [0, 2, 0, 0], sizes = [2, 8, 8, 128], strides = [1, 1, 1, 1]} : vector<2x10x10x128xbf16> to vector<2x8x8x128xbf16>
    %26 = vector.extract_strided_slice %18 {offsets = [0, 2, 1, 0], sizes = [2, 8, 8, 128], strides = [1, 1, 1, 1]} : vector<2x10x10x128xbf16> to vector<2x8x8x128xbf16>
    %27 = vector.extract_strided_slice %18 {offsets = [0, 2, 2, 0], sizes = [2, 8, 8, 128], strides = [1, 1, 1, 1]} : vector<2x10x10x128xbf16> to vector<2x8x8x128xbf16>
    %28 = tpu.concatenate %19, %20, %21, %22, %23, %24, %25, %26, %27 in 3 : vector<2x8x8x128xbf16>, vector<2x8x8x128xbf16>, vector<2x8x8x128xbf16>, vector<2x8x8x128xbf16>, vector<2x8x8x128xbf16>, vector<2x8x8x128xbf16>, vector<2x8x8x128xbf16>, vector<2x8x8x128xbf16>, vector<2x8x8x128xbf16> -> vector<2x8x8x1152xbf16>
    %29 = vector.shape_cast %28 : vector<2x8x8x1152xbf16> to vector<128x1152xbf16>
    %c0_16 = arith.constant 0 : index
    %c0_17 = arith.constant 0 : index
    %30 = vector.load %arg6[%c0_16, %c0_17] : memref<1152x128xbf16, #tpu.memory_space<vmem>>, vector<1152x128xbf16>
    %cst_18 = arith.constant dense<0.000000e+00> : vector<128x128xf32>
    %31 = tpu.matmul %29, %30, %cst_18 {dimension_numbers = #tpu.dot_dimension_numbers<[1], [0], [0], [1], [0, 0, 1, 1], [], []>} : vector<128x1152xbf16>, vector<1152x128xbf16>, vector<128x128xf32> -> vector<128x128xf32>
    %c0_19 = arith.constant 0 : index
    %c0_20 = arith.constant 0 : index
    %32 = vector.load %arg7[%c0_19, %c0_20] : memref<1x128xf32, #tpu.memory_space<vmem>>, vector<1x128xf32>
    %33 = vector.broadcast %32 : vector<1x128xf32> to vector<128x128xf32>
    %34 = arith.mulf %31, %33 : vector<128x128xf32>
    %c0_21 = arith.constant 0 : index
    %c0_22 = arith.constant 0 : index
    %35 = vector.load %arg8[%c0_21, %c0_22] : memref<1x128xf32, #tpu.memory_space<vmem>>, vector<1x128xf32>
    %36 = vector.broadcast %35 : vector<1x128xf32> to vector<128x128xf32>
    %37 = arith.addf %34, %36 : vector<128x128xf32>
    %cst_23 = arith.constant 0.000000e+00 : f32
    %38 = vector.broadcast %cst_23 : f32 to vector<128x128xf32>
    %39 = arith.maximumf %37, %38 : vector<128x128xf32>
    %40 = arith.truncf %39 : vector<128x128xf32> to vector<128x128xbf16>
    %41 = vector.shape_cast %40 : vector<128x128xbf16> to vector<2x8x8x128xbf16>
    %cst_24 = arith.constant 0.000000e+00 : bf16
    %42 = vector.broadcast %cst_24 : bf16 to vector<2x1x8x128xbf16>
    %43 = tpu.concatenate %42, %41, %42 in 1 : vector<2x1x8x128xbf16>, vector<2x8x8x128xbf16>, vector<2x1x8x128xbf16> -> vector<2x10x8x128xbf16>
    %cst_25 = arith.constant 0.000000e+00 : bf16
    %44 = vector.broadcast %cst_25 : bf16 to vector<2x10x1x128xbf16>
    %45 = tpu.concatenate %44, %43, %44 in 2 : vector<2x10x1x128xbf16>, vector<2x10x8x128xbf16>, vector<2x10x1x128xbf16> -> vector<2x10x10x128xbf16>
    %46 = vector.extract_strided_slice %45 {offsets = [0, 0, 0, 0], sizes = [2, 8, 8, 128], strides = [1, 1, 1, 1]} : vector<2x10x10x128xbf16> to vector<2x8x8x128xbf16>
    %47 = vector.extract_strided_slice %45 {offsets = [0, 0, 1, 0], sizes = [2, 8, 8, 128], strides = [1, 1, 1, 1]} : vector<2x10x10x128xbf16> to vector<2x8x8x128xbf16>
    %48 = vector.extract_strided_slice %45 {offsets = [0, 0, 2, 0], sizes = [2, 8, 8, 128], strides = [1, 1, 1, 1]} : vector<2x10x10x128xbf16> to vector<2x8x8x128xbf16>
    %49 = vector.extract_strided_slice %45 {offsets = [0, 1, 0, 0], sizes = [2, 8, 8, 128], strides = [1, 1, 1, 1]} : vector<2x10x10x128xbf16> to vector<2x8x8x128xbf16>
    %50 = vector.extract_strided_slice %45 {offsets = [0, 1, 1, 0], sizes = [2, 8, 8, 128], strides = [1, 1, 1, 1]} : vector<2x10x10x128xbf16> to vector<2x8x8x128xbf16>
    %51 = vector.extract_strided_slice %45 {offsets = [0, 1, 2, 0], sizes = [2, 8, 8, 128], strides = [1, 1, 1, 1]} : vector<2x10x10x128xbf16> to vector<2x8x8x128xbf16>
    %52 = vector.extract_strided_slice %45 {offsets = [0, 2, 0, 0], sizes = [2, 8, 8, 128], strides = [1, 1, 1, 1]} : vector<2x10x10x128xbf16> to vector<2x8x8x128xbf16>
    %53 = vector.extract_strided_slice %45 {offsets = [0, 2, 1, 0], sizes = [2, 8, 8, 128], strides = [1, 1, 1, 1]} : vector<2x10x10x128xbf16> to vector<2x8x8x128xbf16>
    %54 = vector.extract_strided_slice %45 {offsets = [0, 2, 2, 0], sizes = [2, 8, 8, 128], strides = [1, 1, 1, 1]} : vector<2x10x10x128xbf16> to vector<2x8x8x128xbf16>
    %55 = tpu.concatenate %46, %47, %48, %49, %50, %51, %52, %53, %54 in 3 : vector<2x8x8x128xbf16>, vector<2x8x8x128xbf16>, vector<2x8x8x128xbf16>, vector<2x8x8x128xbf16>, vector<2x8x8x128xbf16>, vector<2x8x8x128xbf16>, vector<2x8x8x128xbf16>, vector<2x8x8x128xbf16>, vector<2x8x8x128xbf16> -> vector<2x8x8x1152xbf16>
    %56 = vector.shape_cast %55 : vector<2x8x8x1152xbf16> to vector<128x1152xbf16>
    %c0_26 = arith.constant 0 : index
    %c0_27 = arith.constant 0 : index
    %57 = vector.load %arg9[%c0_26, %c0_27] : memref<1152x128xbf16, #tpu.memory_space<vmem>>, vector<1152x128xbf16>
    %cst_28 = arith.constant dense<0.000000e+00> : vector<128x128xf32>
    %58 = tpu.matmul %56, %57, %cst_28 {dimension_numbers = #tpu.dot_dimension_numbers<[1], [0], [0], [1], [0, 0, 1, 1], [], []>} : vector<128x1152xbf16>, vector<1152x128xbf16>, vector<128x128xf32> -> vector<128x128xf32>
    %c0_29 = arith.constant 0 : index
    %c0_30 = arith.constant 0 : index
    %59 = vector.load %arg10[%c0_29, %c0_30] : memref<1x128xf32, #tpu.memory_space<vmem>>, vector<1x128xf32>
    %60 = vector.broadcast %59 : vector<1x128xf32> to vector<128x128xf32>
    %61 = arith.mulf %58, %60 : vector<128x128xf32>
    %c0_31 = arith.constant 0 : index
    %c0_32 = arith.constant 0 : index
    %62 = vector.load %arg11[%c0_31, %c0_32] : memref<1x128xf32, #tpu.memory_space<vmem>>, vector<1x128xf32>
    %63 = vector.broadcast %62 : vector<1x128xf32> to vector<128x128xf32>
    %64 = arith.addf %61, %63 : vector<128x128xf32>
    %cst_33 = arith.constant 0.000000e+00 : f32
    %65 = vector.broadcast %cst_33 : f32 to vector<128x128xf32>
    %66 = arith.maximumf %64, %65 : vector<128x128xf32>
    %67 = arith.truncf %66 : vector<128x128xf32> to vector<128x128xbf16>
    %68 = vector.shape_cast %67 : vector<128x128xbf16> to vector<2x8x8x128xbf16>
    %69 = vector.shape_cast %68 : vector<2x8x8x128xbf16> to vector<128x128xbf16>
    %c0_34 = arith.constant 0 : index
    %c0_35 = arith.constant 0 : index
    %70 = vector.load %arg12[%c0_34, %c0_35] : memref<128x512xbf16, #tpu.memory_space<vmem>>, vector<128x512xbf16>
    %cst_36 = arith.constant dense<0.000000e+00> : vector<128x512xf32>
    %71 = tpu.matmul %69, %70, %cst_36 {dimension_numbers = #tpu.dot_dimension_numbers<[1], [0], [0], [1], [0, 0, 1, 1], [], []>} : vector<128x128xbf16>, vector<128x512xbf16>, vector<128x512xf32> -> vector<128x512xf32>
    %c0_37 = arith.constant 0 : index
    %c0_38 = arith.constant 0 : index
    %72 = vector.load %arg13[%c0_37, %c0_38] : memref<1x512xf32, #tpu.memory_space<vmem>>, vector<1x512xf32>
    %73 = vector.broadcast %72 : vector<1x512xf32> to vector<128x512xf32>
    %74 = arith.mulf %71, %73 : vector<128x512xf32>
    %c0_39 = arith.constant 0 : index
    %c0_40 = arith.constant 0 : index
    %75 = vector.load %arg14[%c0_39, %c0_40] : memref<1x512xf32, #tpu.memory_space<vmem>>, vector<1x512xf32>
    %76 = vector.broadcast %75 : vector<1x512xf32> to vector<128x512xf32>
    %77 = arith.addf %74, %76 : vector<128x512xf32>
    %cst_41 = arith.constant 0.000000e+00 : f32
    %78 = vector.broadcast %cst_41 : f32 to vector<128x512xf32>
    %79 = arith.maximumf %77, %78 : vector<128x512xf32>
    %80 = arith.truncf %79 : vector<128x512xf32> to vector<128x512xbf16>
    %81 = vector.extract_strided_slice %80 {offsets = [0, 0], sizes = [128, 256], strides = [1, 1]} : vector<128x512xbf16> to vector<128x256xbf16>
    %82 = vector.shape_cast %81 : vector<128x256xbf16> to vector<2x8x16x128xbf16>
    %83 = vector.extract_strided_slice %80 {offsets = [0, 256], sizes = [128, 256], strides = [1, 1]} : vector<128x512xbf16> to vector<128x256xbf16>
    %84 = vector.shape_cast %83 : vector<128x256xbf16> to vector<2x8x16x128xbf16>
    %85 = vector.shape_cast %82 : vector<2x8x16x128xbf16> to vector<2x8x1x16x128xbf16>
    %86 = vector.shape_cast %84 : vector<2x8x16x128xbf16> to vector<2x8x1x16x128xbf16>
    %87 = tpu.concatenate %85, %86 in 2 : vector<2x8x1x16x128xbf16>, vector<2x8x1x16x128xbf16> -> vector<2x8x2x16x128xbf16>
    %88 = vector.shape_cast %87 : vector<2x8x2x16x128xbf16> to vector<2x16x16x128xbf16>
    %89 = arith.addf %13, %88 : vector<2x16x16x128xbf16>
    %cst_42 = arith.constant 0.000000e+00 : bf16
    %90 = vector.broadcast %cst_42 : bf16 to vector<2x1x16x128xbf16>
    %91 = tpu.concatenate %90, %89, %90 in 1 : vector<2x1x16x128xbf16>, vector<2x16x16x128xbf16>, vector<2x1x16x128xbf16> -> vector<2x18x16x128xbf16>
    %cst_43 = arith.constant 0.000000e+00 : bf16
    %92 = vector.broadcast %cst_43 : bf16 to vector<2x18x1x128xbf16>
    %93 = tpu.concatenate %92, %91, %92 in 2 : vector<2x18x1x128xbf16>, vector<2x18x16x128xbf16>, vector<2x18x1x128xbf16> -> vector<2x18x18x128xbf16>
    %94 = vector.extract_strided_slice %93 {offsets = [0, 0, 0, 0], sizes = [2, 16, 16, 128], strides = [1, 1, 1, 1]} : vector<2x18x18x128xbf16> to vector<2x16x16x128xbf16>
    %95 = vector.extract_strided_slice %93 {offsets = [0, 0, 1, 0], sizes = [2, 16, 16, 128], strides = [1, 1, 1, 1]} : vector<2x18x18x128xbf16> to vector<2x16x16x128xbf16>
    %96 = vector.extract_strided_slice %93 {offsets = [0, 0, 2, 0], sizes = [2, 16, 16, 128], strides = [1, 1, 1, 1]} : vector<2x18x18x128xbf16> to vector<2x16x16x128xbf16>
    %97 = vector.extract_strided_slice %93 {offsets = [0, 1, 0, 0], sizes = [2, 16, 16, 128], strides = [1, 1, 1, 1]} : vector<2x18x18x128xbf16> to vector<2x16x16x128xbf16>
    %98 = vector.extract_strided_slice %93 {offsets = [0, 1, 1, 0], sizes = [2, 16, 16, 128], strides = [1, 1, 1, 1]} : vector<2x18x18x128xbf16> to vector<2x16x16x128xbf16>
    %99 = vector.extract_strided_slice %93 {offsets = [0, 1, 2, 0], sizes = [2, 16, 16, 128], strides = [1, 1, 1, 1]} : vector<2x18x18x128xbf16> to vector<2x16x16x128xbf16>
    %100 = vector.extract_strided_slice %93 {offsets = [0, 2, 0, 0], sizes = [2, 16, 16, 128], strides = [1, 1, 1, 1]} : vector<2x18x18x128xbf16> to vector<2x16x16x128xbf16>
    %101 = vector.extract_strided_slice %93 {offsets = [0, 2, 1, 0], sizes = [2, 16, 16, 128], strides = [1, 1, 1, 1]} : vector<2x18x18x128xbf16> to vector<2x16x16x128xbf16>
    %102 = vector.extract_strided_slice %93 {offsets = [0, 2, 2, 0], sizes = [2, 16, 16, 128], strides = [1, 1, 1, 1]} : vector<2x18x18x128xbf16> to vector<2x16x16x128xbf16>
    %103 = tpu.concatenate %94, %95, %96, %97, %98, %99, %100, %101, %102 in 3 : vector<2x16x16x128xbf16>, vector<2x16x16x128xbf16>, vector<2x16x16x128xbf16>, vector<2x16x16x128xbf16>, vector<2x16x16x128xbf16>, vector<2x16x16x128xbf16>, vector<2x16x16x128xbf16>, vector<2x16x16x128xbf16>, vector<2x16x16x128xbf16> -> vector<2x16x16x1152xbf16>
    %104 = vector.shape_cast %103 : vector<2x16x16x1152xbf16> to vector<512x1152xbf16>
    %c0_44 = arith.constant 0 : index
    %c0_45 = arith.constant 0 : index
    %105 = vector.load %arg15[%c0_44, %c0_45] : memref<1152x128xbf16, #tpu.memory_space<vmem>>, vector<1152x128xbf16>
    %cst_46 = arith.constant dense<0.000000e+00> : vector<512x128xf32>
    %106 = tpu.matmul %104, %105, %cst_46 {dimension_numbers = #tpu.dot_dimension_numbers<[1], [0], [0], [1], [0, 0, 1, 1], [], []>} : vector<512x1152xbf16>, vector<1152x128xbf16>, vector<512x128xf32> -> vector<512x128xf32>
    %c0_47 = arith.constant 0 : index
    %c0_48 = arith.constant 0 : index
    %107 = vector.load %arg16[%c0_47, %c0_48] : memref<1x128xf32, #tpu.memory_space<vmem>>, vector<1x128xf32>
    %108 = vector.broadcast %107 : vector<1x128xf32> to vector<512x128xf32>
    %109 = arith.mulf %106, %108 : vector<512x128xf32>
    %c0_49 = arith.constant 0 : index
    %c0_50 = arith.constant 0 : index
    %110 = vector.load %arg17[%c0_49, %c0_50] : memref<1x128xf32, #tpu.memory_space<vmem>>, vector<1x128xf32>
    %111 = vector.broadcast %110 : vector<1x128xf32> to vector<512x128xf32>
    %112 = arith.addf %109, %111 : vector<512x128xf32>
    %cst_51 = arith.constant 0.000000e+00 : f32
    %113 = vector.broadcast %cst_51 : f32 to vector<512x128xf32>
    %114 = arith.maximumf %112, %113 : vector<512x128xf32>
    %115 = arith.truncf %114 : vector<512x128xf32> to vector<512x128xbf16>
    %116 = vector.shape_cast %115 : vector<512x128xbf16> to vector<2x16x16x128xbf16>
    %cst_52 = arith.constant 0.000000e+00 : bf16
    %117 = vector.broadcast %cst_52 : bf16 to vector<2x1x16x128xbf16>
    %118 = tpu.concatenate %117, %116, %117 in 1 : vector<2x1x16x128xbf16>, vector<2x16x16x128xbf16>, vector<2x1x16x128xbf16> -> vector<2x18x16x128xbf16>
    %cst_53 = arith.constant 0.000000e+00 : bf16
    %119 = vector.broadcast %cst_53 : bf16 to vector<2x18x1x128xbf16>
    %120 = tpu.concatenate %119, %118, %119 in 2 : vector<2x18x1x128xbf16>, vector<2x18x16x128xbf16>, vector<2x18x1x128xbf16> -> vector<2x18x18x128xbf16>
    %121 = vector.extract_strided_slice %120 {offsets = [0, 0, 0, 0], sizes = [2, 16, 16, 128], strides = [1, 1, 1, 1]} : vector<2x18x18x128xbf16> to vector<2x16x16x128xbf16>
    %122 = vector.extract_strided_slice %120 {offsets = [0, 0, 1, 0], sizes = [2, 16, 16, 128], strides = [1, 1, 1, 1]} : vector<2x18x18x128xbf16> to vector<2x16x16x128xbf16>
    %123 = vector.extract_strided_slice %120 {offsets = [0, 0, 2, 0], sizes = [2, 16, 16, 128], strides = [1, 1, 1, 1]} : vector<2x18x18x128xbf16> to vector<2x16x16x128xbf16>
    %124 = vector.extract_strided_slice %120 {offsets = [0, 1, 0, 0], sizes = [2, 16, 16, 128], strides = [1, 1, 1, 1]} : vector<2x18x18x128xbf16> to vector<2x16x16x128xbf16>
    %125 = vector.extract_strided_slice %120 {offsets = [0, 1, 1, 0], sizes = [2, 16, 16, 128], strides = [1, 1, 1, 1]} : vector<2x18x18x128xbf16> to vector<2x16x16x128xbf16>
    %126 = vector.extract_strided_slice %120 {offsets = [0, 1, 2, 0], sizes = [2, 16, 16, 128], strides = [1, 1, 1, 1]} : vector<2x18x18x128xbf16> to vector<2x16x16x128xbf16>
    %127 = vector.extract_strided_slice %120 {offsets = [0, 2, 0, 0], sizes = [2, 16, 16, 128], strides = [1, 1, 1, 1]} : vector<2x18x18x128xbf16> to vector<2x16x16x128xbf16>
    %128 = vector.extract_strided_slice %120 {offsets = [0, 2, 1, 0], sizes = [2, 16, 16, 128], strides = [1, 1, 1, 1]} : vector<2x18x18x128xbf16> to vector<2x16x16x128xbf16>
    %129 = vector.extract_strided_slice %120 {offsets = [0, 2, 2, 0], sizes = [2, 16, 16, 128], strides = [1, 1, 1, 1]} : vector<2x18x18x128xbf16> to vector<2x16x16x128xbf16>
    %130 = tpu.concatenate %121, %122, %123, %124, %125, %126, %127, %128, %129 in 3 : vector<2x16x16x128xbf16>, vector<2x16x16x128xbf16>, vector<2x16x16x128xbf16>, vector<2x16x16x128xbf16>, vector<2x16x16x128xbf16>, vector<2x16x16x128xbf16>, vector<2x16x16x128xbf16>, vector<2x16x16x128xbf16>, vector<2x16x16x128xbf16> -> vector<2x16x16x1152xbf16>
    %131 = vector.shape_cast %130 : vector<2x16x16x1152xbf16> to vector<512x1152xbf16>
    %c0_54 = arith.constant 0 : index
    %c0_55 = arith.constant 0 : index
    %132 = vector.load %arg18[%c0_54, %c0_55] : memref<1152x128xbf16, #tpu.memory_space<vmem>>, vector<1152x128xbf16>
    %cst_56 = arith.constant dense<0.000000e+00> : vector<512x128xf32>
    %133 = tpu.matmul %131, %132, %cst_56 {dimension_numbers = #tpu.dot_dimension_numbers<[1], [0], [0], [1], [0, 0, 1, 1], [], []>} : vector<512x1152xbf16>, vector<1152x128xbf16>, vector<512x128xf32> -> vector<512x128xf32>
    %c0_57 = arith.constant 0 : index
    %c0_58 = arith.constant 0 : index
    %134 = vector.load %arg19[%c0_57, %c0_58] : memref<1x128xf32, #tpu.memory_space<vmem>>, vector<1x128xf32>
    %135 = vector.broadcast %134 : vector<1x128xf32> to vector<512x128xf32>
    %136 = arith.mulf %133, %135 : vector<512x128xf32>
    %c0_59 = arith.constant 0 : index
    %c0_60 = arith.constant 0 : index
    %137 = vector.load %arg20[%c0_59, %c0_60] : memref<1x128xf32, #tpu.memory_space<vmem>>, vector<1x128xf32>
    %138 = vector.broadcast %137 : vector<1x128xf32> to vector<512x128xf32>
    %139 = arith.addf %136, %138 : vector<512x128xf32>
    %cst_61 = arith.constant 0.000000e+00 : f32
    %140 = vector.broadcast %cst_61 : f32 to vector<512x128xf32>
    %141 = arith.maximumf %139, %140 : vector<512x128xf32>
    %142 = vector.shape_cast %141 : vector<512x128xf32> to vector<2x16x16x128xf32>
    %143 = vector.shape_cast %142 : vector<2x16x16x128xf32> to vector<2x256x128xf32>
    %144 = tpu.transpose %143, [0, 2, 1] : vector<2x256x128xf32> -> vector<2x128x256xf32>
    %145 = vector.extract_strided_slice %144 {offsets = [0, 0, 0], sizes = [2, 64, 256], strides = [1, 1, 1]} : vector<2x128x256xf32> to vector<2x64x256xf32>
    %c0_62 = arith.constant 0 : index
    %c0_63 = arith.constant 0 : index
    %c0_64 = arith.constant 0 : index
    %146 = vector.load %arg21[%c0_62, %c0_63, %c0_64] : memref<2x64x256xf32, #tpu.memory_space<vmem>>, vector<2x64x256xf32>
    tpu.vector_store %arg21[%c0_62, %c0_63, %c0_64], %145 {strides = array<i32>} : memref<2x64x256xf32, #tpu.memory_space<vmem>>, vector<2x64x256xf32>,
    return
  }
  func.func @transform_0(%arg0: i32) -> (i32, i32, i32, i32) {
    %c0_i32 = arith.constant 0 : i32
    %c0_i32_0 = arith.constant 0 : i32
    %c0_i32_1 = arith.constant 0 : i32
    %c0_i32_2 = arith.constant 0 : i32
    %c0_i32_3 = arith.constant 0 : i32
    return %c0_i32, %c0_i32_0, %c0_i32_1, %c0_i32_2 : i32, i32, i32, i32
  }
  func.func @transform_1(%arg0: i32) -> (i32, i32, i32, i32) {
    %c0_i32 = arith.constant 0 : i32
    %c0_i32_0 = arith.constant 0 : i32
    %c0_i32_1 = arith.constant 0 : i32
    %c0_i32_2 = arith.constant 0 : i32
    %c0_i32_3 = arith.constant 0 : i32
    return %c0_i32, %c0_i32_0, %c0_i32_1, %c0_i32_2 : i32, i32, i32, i32
  }
  func.func @transform_2(%arg0: i32) -> (i32, i32) {
    %c0_i32 = arith.constant 0 : i32
    %c0_i32_0 = arith.constant 0 : i32
    %c0_i32_1 = arith.constant 0 : i32
    return %c0_i32, %c0_i32_0 : i32, i32
  }
  func.func @transform_3(%arg0: i32) -> (i32, i32) {
    %c0_i32 = arith.constant 0 : i32
    %c0_i32_0 = arith.constant 0 : i32
    %c0_i32_1 = arith.constant 0 : i32
    return %c0_i32, %c0_i32_0 : i32, i32
  }
  func.func @transform_4(%arg0: i32) -> (i32, i32) {
    %c0_i32 = arith.constant 0 : i32
    %c0_i32_0 = arith.constant 0 : i32
    %c0_i32_1 = arith.constant 0 : i32
    return %c0_i32, %c0_i32_0 : i32, i32
  }
  func.func @transform_5(%arg0: i32) -> (i32, i32) {
    %c0_i32 = arith.constant 0 : i32
    %c0_i32_0 = arith.constant 0 : i32
    %c0_i32_1 = arith.constant 0 : i32
    return %c0_i32, %c0_i32_0 : i32, i32
  }
  func.func @transform_6(%arg0: i32) -> (i32, i32) {
    %c0_i32 = arith.constant 0 : i32
    %c0_i32_0 = arith.constant 0 : i32
    %c0_i32_1 = arith.constant 0 : i32
    return %c0_i32, %c0_i32_0 : i32, i32
  }
  func.func @transform_7(%arg0: i32) -> (i32, i32) {
    %c0_i32 = arith.constant 0 : i32
    %c0_i32_0 = arith.constant 0 : i32
    %c0_i32_1 = arith.constant 0 : i32
    return %c0_i32, %c0_i32_0 : i32, i32
  }
  func.func @transform_8(%arg0: i32) -> (i32, i32) {
    %c0_i32 = arith.constant 0 : i32
    %c0_i32_0 = arith.constant 0 : i32
    %c0_i32_1 = arith.constant 0 : i32
    return %c0_i32, %c0_i32_0 : i32, i32
  }
  func.func @transform_9(%arg0: i32) -> (i32, i32) {
    %c0_i32 = arith.constant 0 : i32
    %c0_i32_0 = arith.constant 0 : i32
    %c0_i32_1 = arith.constant 0 : i32
    return %c0_i32, %c0_i32_0 : i32, i32
  }
  func.func @transform_10(%arg0: i32) -> (i32, i32) {
    %c0_i32 = arith.constant 0 : i32
    %c0_i32_0 = arith.constant 0 : i32
    %c0_i32_1 = arith.constant 0 : i32
    return %c0_i32, %c0_i32_0 : i32, i32
  }
  func.func @transform_11(%arg0: i32) -> (i32, i32) {
    %c0_i32 = arith.constant 0 : i32
    %c0_i32_0 = arith.constant 0 : i32
    %c0_i32_1 = arith.constant 0 : i32
    return %c0_i32, %c0_i32_0 : i32, i32
  }
  func.func @transform_12(%arg0: i32) -> (i32, i32) {
    %c0_i32 = arith.constant 0 : i32
    %c0_i32_0 = arith.constant 0 : i32
    %c0_i32_1 = arith.constant 0 : i32
    return %c0_i32, %c0_i32_0 : i32, i32
  }
  func.func @transform_13(%arg0: i32) -> (i32, i32) {
    %c0_i32 = arith.constant 0 : i32
    %c0_i32_0 = arith.constant 0 : i32
    %c0_i32_1 = arith.constant 0 : i32
    return %c0_i32, %c0_i32_0 : i32, i32
  }
  func.func @transform_14(%arg0: i32) -> (i32, i32) {
    %c0_i32 = arith.constant 0 : i32
    %c0_i32_0 = arith.constant 0 : i32
    %c0_i32_1 = arith.constant 0 : i32
    return %c0_i32, %c0_i32_0 : i32, i32
  }
  func.func @transform_15(%arg0: i32) -> (i32, i32) {
    %c0_i32 = arith.constant 0 : i32
    %c0_i32_0 = arith.constant 0 : i32
    %c0_i32_1 = arith.constant 0 : i32
    return %c0_i32, %c0_i32_0 : i32, i32
  }
  func.func @transform_16(%arg0: i32) -> (i32, i32) {
    %c0_i32 = arith.constant 0 : i32
    %c0_i32_0 = arith.constant 0 : i32
    %c0_i32_1 = arith.constant 0 : i32
    return %c0_i32, %c0_i32_0 : i32, i32
  }
  func.func @transform_17(%arg0: i32) -> (i32, i32) {
    %c0_i32 = arith.constant 0 : i32
    %c0_i32_0 = arith.constant 0 : i32
    %c0_i32_1 = arith.constant 0 : i32
    return %c0_i32, %c0_i32_0 : i32, i32
  }
  func.func @transform_18(%arg0: i32) -> (i32, i32) {
    %c0_i32 = arith.constant 0 : i32
    %c0_i32_0 = arith.constant 0 : i32
    %c0_i32_1 = arith.constant 0 : i32
    return %c0_i32, %c0_i32_0 : i32, i32
  }
  func.func @transform_19(%arg0: i32) -> (i32, i32) {
    %c0_i32 = arith.constant 0 : i32
    %c0_i32_0 = arith.constant 0 : i32
    %c0_i32_1 = arith.constant 0 : i32
    return %c0_i32, %c0_i32_0 : i32, i32
  }
  func.func @transform_20(%arg0: i32) -> (i32, i32, i32) {
    %c0_i32 = arith.constant 0 : i32
    %c0_i32_0 = arith.constant 0 : i32
    %c0_i32_1 = arith.constant 0 : i32
    %c0_i32_2 = arith.constant 0 : i32
    return %c0_i32, %c0_i32_0, %c0_i32_1 : i32, i32, i32
  }
}

</mosaic_0001>

<llo_original>
// kernel: bev_backbone_v1_forward.1
$region0: #{bev_backbone_v1_forward.1}
  #allocation0 [shape = 'u32[]', space=smem, size = 0x4, offset = 0x4, fixed_abs, tag = 'smem constant byte address 0x4 - core index']
  #allocation1 [shape = 'u32[72,128]{1,0:T(1,128)}', space=vmem, size = 0x9000, scoped, tag = 'internal scratch']
  %s0 = inlined_call_operand.vmem [shape: bf16[2,16,16,128], index: 0, kind: input, shape index: {}]
  %s1 = inlined_call_operand.vmem [shape: bf16[2,8,8,128], index: 1, kind: input, shape index: {}]
  %s2 = inlined_call_operand.vmem [shape: bf16[128,128], index: 2, kind: input, shape index: {}]
  %s3 = inlined_call_operand.vmem [shape: f32[1,128], index: 3, kind: input, shape index: {}]
  %s4 = inlined_call_operand.vmem [shape: f32[1,128], index: 4, kind: input, shape index: {}]
  %s5 = inlined_call_operand.vmem [shape: bf16[1152,128], index: 5, kind: input, shape index: {}]
  %s6 = inlined_call_operand.vmem [shape: f32[1,128], index: 6, kind: input, shape index: {}]
  %s7 = inlined_call_operand.vmem [shape: f32[1,128], index: 7, kind: input, shape index: {}]
  %s8 = inlined_call_operand.vmem [shape: bf16[1152,128], index: 8, kind: input, shape index: {}]
  %s9 = inlined_call_operand.vmem [shape: f32[1,128], index: 9, kind: input, shape index: {}]
  %s10 = inlined_call_operand.vmem [shape: f32[1,128], index: 10, kind: input, shape index: {}]
  %s11 = inlined_call_operand.vmem [shape: bf16[128,512], index: 11, kind: input, shape index: {}]
  %s12 = inlined_call_operand.vmem [shape: f32[1,512], index: 12, kind: input, shape index: {}]
  %s13 = inlined_call_operand.vmem [shape: f32[1,512], index: 13, kind: input, shape index: {}]
  %s14 = inlined_call_operand.vmem [shape: bf16[1152,128], index: 14, kind: input, shape index: {}]
  %s15 = inlined_call_operand.vmem [shape: f32[1,128], index: 15, kind: input, shape index: {}]
  %s16 = inlined_call_operand.vmem [shape: f32[1,128], index: 16, kind: input, shape index: {}]
  %s17 = inlined_call_operand.vmem [shape: bf16[1152,128], index: 17, kind: input, shape index: {}]
  %s18 = inlined_call_operand.vmem [shape: f32[1,128], index: 18, kind: input, shape index: {}]
  %s19 = inlined_call_operand.vmem [shape: f32[1,128], index: 19, kind: input, shape index: {}]
  %s20 = inlined_call_operand.vmem [shape: f32[2,64,256], index: 20, kind: output, shape index: {}]
  %s21 = sld [smem:[#allocation0]]
  $region90: #{bev_backbone_v1_forward.1} parent=0
    _
  %s23 = ssub.s32 1, %s21
  %s24 = scalar_select 0, %s23, %s21
  // Predicated region
  $region2: #{bev_backbone_v1_forward.1} parent=0 // pred_check
    _
  $region3: #{bev_backbone_v1_forward.1} parent=0 // pred_check_branch
    %26 = sbr.rel (0) target = $region5
  $region4: #{bev_backbone_v1_forward.1} parent=0 // pred_region
    _
  $region5: #{bev_backbone_v1_forward.1} parent=0 // pred_fallthru
    _
  // Predicated region
  $region6: #{bev_backbone_v1_forward.1} parent=0 // pred_check
    _
  $region7: #{bev_backbone_v1_forward.1} parent=0 // pred_check_branch
    %28 = sbr.rel (0) target = $region9
  $region8: #{bev_backbone_v1_forward.1} parent=0 // pred_region
    _
  $region9: #{bev_backbone_v1_forward.1} parent=0 // pred_fallthru
    _
  // Predicated region
  $region10: #{bev_backbone_v1_forward.1} parent=0 // pred_check
    _
  $region11: #{bev_backbone_v1_forward.1} parent=0 // pred_check_branch
    %30 = sbr.rel (0) target = $region13
  $region12: #{bev_backbone_v1_forward.1} parent=0 // pred_region
    _
  $region13: #{bev_backbone_v1_forward.1} parent=0 // pred_fallthru
    _
  // Predicated region
  $region14: #{bev_backbone_v1_forward.1} parent=0 // pred_check
    _
  $region15: #{bev_backbone_v1_forward.1} parent=0 // pred_check_branch
    %32 = sbr.rel (0) target = $region17
  $region16: #{bev_backbone_v1_forward.1} parent=0 // pred_region
    _
  $region17: #{bev_backbone_v1_forward.1} parent=0 // pred_fallthru
    _
  // Predicated region
  $region18: #{bev_backbone_v1_forward.1} parent=0 // pred_check
    _
  $region19: #{bev_backbone_v1_forward.1} parent=0 // pred_check_branch
    %34 = sbr.rel (0) target = $region21
  $region20: #{bev_backbone_v1_forward.1} parent=0 // pred_region
    _
  $region21: #{bev_backbone_v1_forward.1} parent=0 // pred_fallthru
    _
  // Predicated region
  $region22: #{bev_backbone_v1_forward.1} parent=0 // pred_check
    _
  $region23: #{bev_backbone_v1_forward.1} parent=0 // pred_check_branch
    %36 = sbr.rel (0) target = $region25
  $region24: #{bev_backbone_v1_forward.1} parent=0 // pred_region
    _
  $region25: #{bev_backbone_v1_forward.1} parent=0 // pred_fallthru
    _
  // Predicated region
  $region26: #{bev_backbone_v1_forward.1} parent=0 // pred_check
    _
  $region27: #{bev_backbone_v1_forward.1} parent=0 // pred_check_branch
    %38 = sbr.rel (0) target = $region29
  $region28: #{bev_backbone_v1_forward.1} parent=0 // pred_region
    _
  $region29: #{bev_backbone_v1_forward.1} parent=0 // pred_fallthru
    _
  // Predicated region
  $region30: #{bev_backbone_v1_forward.1} parent=0 // pred_check
    _
  $region31: #{bev_backbone_v1_forward.1} parent=0 // pred_check_branch
    %40 = sbr.rel (0) target = $region33
  $region32: #{bev_backbone_v1_forward.1} parent=0 // pred_region
    _
  $region33: #{bev_backbone_v1_forward.1} parent=0 // pred_fallthru
    _
  // Predicated region
  $region34: #{bev_backbone_v1_forward.1} parent=0 // pred_check
    _
  $region35: #{bev_backbone_v1_forward.1} parent=0 // pred_check_branch
    %42 = sbr.rel (0) target = $region37
  $region36: #{bev_backbone_v1_forward.1} parent=0 // pred_region
    _
  $region37: #{bev_backbone_v1_forward.1} parent=0 // pred_fallthru
    _
  // Predicated region
  $region38: #{bev_backbone_v1_forward.1} parent=0 // pred_check
    _
  $region39: #{bev_backbone_v1_forward.1} parent=0 // pred_check_branch
    %44 = sbr.rel (0) target = $region41
  $region40: #{bev_backbone_v1_forward.1} parent=0 // pred_region
    _
  $region41: #{bev_backbone_v1_forward.1} parent=0 // pred_fallthru
    _
  // Predicated region
  $region42: #{bev_backbone_v1_forward.1} parent=0 // pred_check
    _
  $region43: #{bev_backbone_v1_forward.1} parent=0 // pred_check_branch
    %46 = sbr.rel (0) target = $region45
  $region44: #{bev_backbone_v1_forward.1} parent=0 // pred_region
    _
  $region45: #{bev_backbone_v1_forward.1} parent=0 // pred_fallthru
    _
  // Predicated region
  $region46: #{bev_backbone_v1_forward.1} parent=0 // pred_check
    _
  $region47: #{bev_backbone_v1_forward.1} parent=0 // pred_check_branch
    %48 = sbr.rel (0) target = $region49
  $region48: #{bev_backbone_v1_forward.1} parent=0 // pred_region
    _
  $region49: #{bev_backbone_v1_forward.1} parent=0 // pred_fallthru
    _
  // Predicated region
  $region50: #{bev_backbone_v1_forward.1} parent=0 // pred_check
    _
  $region51: #{bev_backbone_v1_forward.1} parent=0 // pred_check_branch
    %50 = sbr.rel (0) target = $region53
  $region52: #{bev_backbone_v1_forward.1} parent=0 // pred_region
    _
  $region53: #{bev_backbone_v1_forward.1} parent=0 // pred_fallthru
    _
  // Predicated region
  $region54: #{bev_backbone_v1_forward.1} parent=0 // pred_check
    _
  $region55: #{bev_backbone_v1_forward.1} parent=0 // pred_check_branch
    %52 = sbr.rel (0) target = $region57
  $region56: #{bev_backbone_v1_forward.1} parent=0 // pred_region
    _
  $region57: #{bev_backbone_v1_forward.1} parent=0 // pred_fallthru
    _
  // Predicated region
  $region58: #{bev_backbone_v1_forward.1} parent=0 // pred_check
    _
  $region59: #{bev_backbone_v1_forward.1} parent=0 // pred_check_branch
    %54 = sbr.rel (0) target = $region61
  $region60: #{bev_backbone_v1_forward.1} parent=0 // pred_region
    _
  $region61: #{bev_backbone_v1_forward.1} parent=0 // pred_fallthru
    _
  // Predicated region
  $region62: #{bev_backbone_v1_forward.1} parent=0 // pred_check
    _
  $region63: #{bev_backbone_v1_forward.1} parent=0 // pred_check_branch
    %56 = sbr.rel (0) target = $region65
  $region64: #{bev_backbone_v1_forward.1} parent=0 // pred_region
    _
  $region65: #{bev_backbone_v1_forward.1} parent=0 // pred_fallthru
    _
  // Predicated region
  $region66: #{bev_backbone_v1_forward.1} parent=0 // pred_check
    _
  $region67: #{bev_backbone_v1_forward.1} parent=0 // pred_check_branch
    %58 = sbr.rel (0) target = $region69
  $region68: #{bev_backbone_v1_forward.1} parent=0 // pred_region
    _
  $region69: #{bev_backbone_v1_forward.1} parent=0 // pred_fallthru
    _
  // Predicated region
  $region70: #{bev_backbone_v1_forward.1} parent=0 // pred_check
    _
  $region71: #{bev_backbone_v1_forward.1} parent=0 // pred_check_branch
    %60 = sbr.rel (0) target = $region73
  $region72: #{bev_backbone_v1_forward.1} parent=0 // pred_region
    _
  $region73: #{bev_backbone_v1_forward.1} parent=0 // pred_fallthru
    _
  // Predicated region
  $region74: #{bev_backbone_v1_forward.1} parent=0 // pred_check
    _
  $region75: #{bev_backbone_v1_forward.1} parent=0 // pred_check_branch
    %62 = sbr.rel (0) target = $region77
  $region76: #{bev_backbone_v1_forward.1} parent=0 // pred_region
    _
  $region77: #{bev_backbone_v1_forward.1} parent=0 // pred_fallthru
    _
  // Predicated region
  $region78: #{bev_backbone_v1_forward.1} parent=0 // pred_check
    _
  $region79: #{bev_backbone_v1_forward.1} parent=0 // pred_check_branch
    %64 = sbr.rel (0) target = $region81
  $region80: #{bev_backbone_v1_forward.1} parent=0 // pred_region
    _
  $region81: #{bev_backbone_v1_forward.1} parent=0 // pred_fallthru
    _
  %v66 = vld [vmem:[%s0] sm:$0xf]
  %v67 = vld [vmem:[%s0 + $0x4] sm:$0xf]
  %v68 = vld [vmem:[%s0 + $0x8] sm:$0xf]
  %v69 = vld [vmem:[%s0 + $0xc] sm:$0xf]
  %v70 = vld [vmem:[%s0 + $0x10] sm:$0xf]
  %v71 = vld [vmem:[%s0 + $0x14] sm:$0xf]
  %v72 = vld [vmem:[%s0 + $0x18] sm:$0xf]
  %v73 = vld [vmem:[%s0 + $0x1c] sm:$0xf]
  %v74 = vld [vmem:[%s0 + $0x20] sm:$0xf]
  %v75 = vld [vmem:[%s0 + $0x24] sm:$0xf]
  %v76 = vld [vmem:[%s0 + $0x28] sm:$0xf]
  %v77 = vld [vmem:[%s0 + $0x2c] sm:$0xf]
  %v78 = vld [vmem:[%s0 + $0x30] sm:$0xf]
  %v79 = vld [vmem:[%s0 + $0x34] sm:$0xf]
  %v80 = vld [vmem:[%s0 + $0x38] sm:$0xf]
  %v81 = vld [vmem:[%s0 + $0x3c] sm:$0xf]
  %v82 = vld [vmem:[%s0 + $0x40] sm:$0xf]
  %v83 = vld [vmem:[%s0 + $0x44] sm:$0xf]
  %v84 = vld [vmem:[%s0 + $0x48] sm:$0xf]
  %v85 = vld [vmem:[%s0 + $0x4c] sm:$0xf]
  %v86 = vld [vmem:[%s0 + $0x50] sm:$0xf]
  %v87 = vld [vmem:[%s0 + $0x54] sm:$0xf]
  %v88 = vld [vmem:[%s0 + $0x58] sm:$0xf]
  %v89 = vld [vmem:[%s0 + $0x5c] sm:$0xf]
  %v90 = vld [vmem:[%s0 + $0x60] sm:$0xf]
  %v91 = vld [vmem:[%s0 + $0x64] sm:$0xf]
  %v92 = vld [vmem:[%s0 + $0x68] sm:$0xf]
  %v93 = vld [vmem:[%s0 + $0x6c] sm:$0xf]
  %v94 = vld [vmem:[%s0 + $0x70] sm:$0xf]
  %v95 = vld [vmem:[%s0 + $0x74] sm:$0xf]
  %v96 = vld [vmem:[%s0 + $0x78] sm:$0xf]
  %v97 = vld [vmem:[%s0 + $0x7c] sm:$0xf]
  %v98 = vld [vmem:[%s0 + $0x80] sm:$0xf]
  %v99 = vld [vmem:[%s0 + $0x84] sm:$0xf]
  %v100 = vld [vmem:[%s0 + $0x88] sm:$0xf]
  %v101 = vld [vmem:[%s0 + $0x8c] sm:$0xf]
  %v102 = vld [vmem:[%s0 + $0x90] sm:$0xf]
  %v103 = vld [vmem:[%s0 + $0x94] sm:$0xf]
  %v104 = vld [vmem:[%s0 + $0x98] sm:$0xf]
  %v105 = vld [vmem:[%s0 + $0x9c] sm:$0xf]
  %v106 = vld [vmem:[%s0 + $0xa0] sm:$0xf]
  %v107 = vld [vmem:[%s0 + $0xa4] sm:$0xf]
  %v108 = vld [vmem:[%s0 + $0xa8] sm:$0xf]
  %v109 = vld [vmem:[%s0 + $0xac] sm:$0xf]
  %v110 = vld [vmem:[%s0 + $0xb0] sm:$0xf]
  %v111 = vld [vmem:[%s0 + $0xb4] sm:$0xf]
  %v112 = vld [vmem:[%s0 + $0xb8] sm:$0xf]
  %v113 = vld [vmem:[%s0 + $0xbc] sm:$0xf]
  %v114 = vld [vmem:[%s0 + $0xc0] sm:$0xf]
  %v115 = vld [vmem:[%s0 + $0xc4] sm:$0xf]
  %v116 = vld [vmem:[%s0 + $0xc8] sm:$0xf]
  %v117 = vld [vmem:[%s0 + $0xcc] sm:$0xf]
  %v118 = vld [vmem:[%s0 + $0xd0] sm:$0xf]
  %v119 = vld [vmem:[%s0 + $0xd4] sm:$0xf]
  %v120 = vld [vmem:[%s0 + $0xd8] sm:$0xf]
  %v121 = vld [vmem:[%s0 + $0xdc] sm:$0xf]
  %v122 = vld [vmem:[%s0 + $0xe0] sm:$0xf]
  %v123 = vld [vmem:[%s0 + $0xe4] sm:$0xf]
  %v124 = vld [vmem:[%s0 + $0xe8] sm:$0xf]
  %v125 = vld [vmem:[%s0 + $0xec] sm:$0xf]
  %v126 = vld [vmem:[%s0 + $0xf0] sm:$0xf]
  %v127 = vld [vmem:[%s0 + $0xf4] sm:$0xf]
  %v128 = vld [vmem:[%s0 + $0xf8] sm:$0xf]
  %v129 = vld [vmem:[%s0 + $0xfc] sm:$0xf]
  %v130 = vld [vmem:[%s2] sm:$0xf]
  %v131 = vld [vmem:[%s2 + $0x4] sm:$0xf]
  %v132 = vld [vmem:[%s2 + $0x8] sm:$0xf]
  %v133 = vld [vmem:[%s2 + $0xc] sm:$0xf]
  %v134 = vld [vmem:[%s2 + $0x10] sm:$0xf]
  %v135 = vld [vmem:[%s2 + $0x14] sm:$0xf]
  %v136 = vld [vmem:[%s2 + $0x18] sm:$0xf]
  %v137 = vld [vmem:[%s2 + $0x1c] sm:$0xf]
  %v138 = vld [vmem:[%s2 + $0x20] sm:$0xf]
  %v139 = vld [vmem:[%s2 + $0x24] sm:$0xf]
  %v140 = vld [vmem:[%s2 + $0x28] sm:$0xf]
  %v141 = vld [vmem:[%s2 + $0x2c] sm:$0xf]
  %v142 = vld [vmem:[%s2 + $0x30] sm:$0xf]
  %v143 = vld [vmem:[%s2 + $0x34] sm:$0xf]
  %v144 = vld [vmem:[%s2 + $0x38] sm:$0xf]
  %v145 = vld [vmem:[%s2 + $0x3c] sm:$0xf]
  %v210 = vunpack.c.l.b16 %v66
  %v211 = vunpack.c.l.b16 %v67
  %v212 = vunpack.c.l.b16 %v68
  %v213 = vunpack.c.l.b16 %v69
  %v214 = vunpack.c.l.b16 %v70
  %v215 = vunpack.c.l.b16 %v71
  %v216 = vunpack.c.l.b16 %v72
  %v217 = vunpack.c.l.b16 %v73
  %v218 = vunpack.c.l.b16 %v74
  %v219 = vunpack.c.l.b16 %v75
  %v220 = vunpack.c.l.b16 %v76
  %v221 = vunpack.c.l.b16 %v77
  %v222 = vunpack.c.l.b16 %v78
  %v223 = vunpack.c.l.b16 %v79
  %v224 = vunpack.c.l.b16 %v80
  %v225 = vunpack.c.l.b16 %v81
  %v226 = vunpack.c.l.b16 %v82
  %v227 = vunpack.c.l.b16 %v83
  %v228 = vunpack.c.l.b16 %v84
  %v229 = vunpack.c.l.b16 %v85
  %v230 = vunpack.c.l.b16 %v86
  %v231 = vunpack.c.l.b16 %v87
  %v232 = vunpack.c.l.b16 %v88
  %v233 = vunpack.c.l.b16 %v89
  %v234 = vunpack.c.l.b16 %v90
  %v235 = vunpack.c.l.b16 %v91
  %v236 = vunpack.c.l.b16 %v92
  %v237 = vunpack.c.l.b16 %v93
  %v238 = vunpack.c.l.b16 %v94
  %v239 = vunpack.c.l.b16 %v95
  %v240 = vunpack.c.l.b16 %v96
  %v241 = vunpack.c.l.b16 %v97
  %v242 = vunpack.c.l.b16 %v98
  %v243 = vunpack.c.l.b16 %v99
  %v244 = vunpack.c.l.b16 %v100
  %v245 = vunpack.c.l.b16 %v101
  %v246 = vunpack.c.l.b16 %v102
  %v247 = vunpack.c.l.b16 %v103
  %v248 = vunpack.c.l.b16 %v104
  %v249 = vunpack.c.l.b16 %v105
  %v250 = vunpack.c.l.b16 %v106
  %v251 = vunpack.c.l.b16 %v107
  %v252 = vunpack.c.l.b16 %v108
  %v253 = vunpack.c.l.b16 %v109
  %v254 = vunpack.c.l.b16 %v110
  %v255 = vunpack.c.l.b16 %v111
  %v256 = vunpack.c.l.b16 %v112
  %v257 = vunpack.c.l.b16 %v113
  %v258 = vunpack.c.l.b16 %v114
  %v259 = vunpack.c.l.b16 %v115
  %v260 = vunpack.c.l.b16 %v116
  %v261 = vunpack.c.l.b16 %v117
  %v262 = vunpack.c.l.b16 %v118
  %v263 = vunpack.c.l.b16 %v119
  %v264 = vunpack.c.l.b16 %v120
  %v265 = vunpack.c.l.b16 %v121
  %v266 = vunpack.c.l.b16 %v122
  %v267 = vunpack.c.l.b16 %v123
  %v268 = vunpack.c.l.b16 %v124
  %v269 = vunpack.c.l.b16 %v125
  %v270 = vunpack.c.l.b16 %v126
  %v271 = vunpack.c.l.b16 %v127
  %v272 = vunpack.c.l.b16 %v128
  %v273 = vunpack.c.l.b16 %v129
  %v274 = vpack.c.b16 %v211, %v210
  %v275 = vpack.c.b16 %v213, %v212
  %v276 = vpack.c.b16 %v215, %v214
  %v277 = vpack.c.b16 %v217, %v216
  %v278 = vpack.c.b16 %v219, %v218
  %v279 = vpack.c.b16 %v221, %v220
  %v280 = vpack.c.b16 %v223, %v222
  %v281 = vpack.c.b16 %v225, %v224
  %v282 = vpack.c.b16 %v227, %v226
  %v283 = vpack.c.b16 %v229, %v228
  %v284 = vpack.c.b16 %v231, %v230
  %v285 = vpack.c.b16 %v233, %v232
  %v286 = vpack.c.b16 %v235, %v234
  %v287 = vpack.c.b16 %v237, %v236
  %v288 = vpack.c.b16 %v239, %v238
  %v289 = vpack.c.b16 %v241, %v240
  %v290 = vpack.c.b16 %v243, %v242
  %v291 = vpack.c.b16 %v245, %v244
  %v292 = vpack.c.b16 %v247, %v246
  %v293 = vpack.c.b16 %v249, %v248
  %v294 = vpack.c.b16 %v251, %v250
  %v295 = vpack.c.b16 %v253, %v252
  %v296 = vpack.c.b16 %v255, %v254
  %v297 = vpack.c.b16 %v257, %v256
  %v298 = vpack.c.b16 %v259, %v258
  %v299 = vpack.c.b16 %v261, %v260
  %v300 = vpack.c.b16 %v263, %v262
  %v301 = vpack.c.b16 %v265, %v264
  %v302 = vpack.c.b16 %v267, %v266
  %v303 = vpack.c.b16 %v269, %v268
  %v304 = vpack.c.b16 %v271, %v270
  %v305 = vpack.c.b16 %v273, %v272
  %v354 = vunpack.c.l.b16 %v130
  %v355 = vunpack.c.l.b16 %v131
  %v356 = vunpack.c.l.b16 %v132
  %v357 = vunpack.c.l.b16 %v133
  %v358 = vunpack.c.l.b16 %v134
  %v359 = vunpack.c.l.b16 %v135
  %v360 = vunpack.c.l.b16 %v136
  %v361 = vunpack.c.l.b16 %v137
  %v362 = vunpack.c.l.b16 %v138
  %v363 = vunpack.c.l.b16 %v139
  %v364 = vunpack.c.l.b16 %v140
  %v365 = vunpack.c.l.b16 %v141
  %v366 = vunpack.c.l.b16 %v142
  %v367 = vunpack.c.l.b16 %v143
  %v368 = vunpack.c.l.b16 %v144
  %v369 = vunpack.c.l.b16 %v145
  %v370 = vpack.c.b16 %v355, %v354
  %v371 = vpack.c.b16 %v357, %v356
  %v372 = vpack.c.b16 %v359, %v358
  %v373 = vpack.c.b16 %v361, %v360
  %v374 = vpack.c.b16 %v363, %v362
  %v375 = vpack.c.b16 %v365, %v364
  %v376 = vpack.c.b16 %v367, %v366
  %v377 = vpack.c.b16 %v369, %v368
  %386 = vmatpush.bf16.msra.mxu0 %v377
  %387 = vmatpush.bf16.msra.mxu0 %v376
  %388 = vmatpush.bf16.msra.mxu0 %v375
  %389 = vmatpush.bf16.msra.mxu0 %v374
  %390 = vmatpush.bf16.msra.mxu0 %v373
  %391 = vmatpush.bf16.msra.mxu0 %v372
  %392 = vmatpush.bf16.msra.mxu0 %v371
  %393 = vmatpush.bf16.msra.mxu0 %v370
  %394 = vmatmul.bf16.gmra.mxu0 %v274
  %v395 = vpop.f32.mrf.mxu0
  %v396 = vadd.f32 0.0, %v395
  %v397 = vpop.f32.mrf.mxu0
  %v398 = vadd.f32 0.0, %v397
  %399 = vmatmul.bf16.gmra.mxu0 %v275
  %v400 = vpop.f32.mrf.mxu0
  %v401 = vadd.f32 0.0, %v400
  %v402 = vpop.f32.mrf.mxu0
  %v403 = vadd.f32 0.0, %v402
  %404 = vmatmul.bf16.gmra.mxu0 %v276
  %v405 = vpop.f32.mrf.mxu0
  %v406 = vadd.f32 0.0, %v405
  %v407 = vpop.f32.mrf.mxu0
  %v408 = vadd.f32 0.0, %v407
  %409 = vmatmul.bf16.gmra.mxu0 %v277
  %v410 = vpop.f32.mrf.mxu0
  %v411 = vadd.f32 0.0, %v410
  %v412 = vpop.f32.mrf.mxu0
  %v413 = vadd.f32 0.0, %v412
  %414 = vmatmul.bf16.gmra.mxu0 %v278
  %v415 = vpop.f32.mrf.mxu0
  %v416 = vadd.f32 0.0, %v415
  %v417 = vpop.f32.mrf.mxu0
  %v418 = vadd.f32 0.0, %v417
  %419 = vmatmul.bf16.gmra.mxu0 %v279
  %v420 = vpop.f32.mrf.mxu0
  %v421 = vadd.f32 0.0, %v420
  %v422 = vpop.f32.mrf.mxu0
  %v423 = vadd.f32 0.0, %v422
  %424 = vmatmul.bf16.gmra.mxu0 %v280
  %v425 = vpop.f32.mrf.mxu0
  %v426 = vadd.f32 0.0, %v425
  %v427 = vpop.f32.mrf.mxu0
  %v428 = vadd.f32 0.0, %v427
  %429 = vmatmul.bf16.gmra.mxu0 %v281
  %v430 = vpop.f32.mrf.mxu0
  %v431 = vadd.f32 0.0, %v430
  %v432 = vpop.f32.mrf.mxu0
  %v433 = vadd.f32 0.0, %v432
  %434 = vmatmul.bf16.gmra.mxu0 %v282
  %v435 = vpop.f32.mrf.mxu0
  %v436 = vadd.f32 0.0, %v435
  %v437 = vpop.f32.mrf.mxu0
  %v438 = vadd.f32 0.0, %v437
  %439 = vmatmul.bf16.gmra.mxu0 %v283
  %v440 = vpop.f32.mrf.mxu0
  %v441 = vadd.f32 0.0, %v440
  %v442 = vpop.f32.mrf.mxu0
  %v443 = vadd.f32 0.0, %v442
  %444 = vmatmul.bf16.gmra.mxu0 %v284
  %v445 = vpop.f32.mrf.mxu0
  %v446 = vadd.f32 0.0, %v445
  %v447 = vpop.f32.mrf.mxu0
  %v448 = vadd.f32 0.0, %v447
  %449 = vmatmul.bf16.gmra.mxu0 %v285
  %v450 = vpop.f32.mrf.mxu0
  %v451 = vadd.f32 0.0, %v450
  %v452 = vpop.f32.mrf.mxu0
  %v453 = vadd.f32 0.0, %v452
  %454 = vmatmul.bf16.gmra.mxu0 %v286
  %v455 = vpop.f32.mrf.mxu0
  %v456 = vadd.f32 0.0, %v455
  %v457 = vpop.f32.mrf.mxu0
  %v458 = vadd.f32 0.0, %v457
  %459 = vmatmul.bf16.gmra.mxu0 %v287
  %v460 = vpop.f32.mrf.mxu0
  %v461 = vadd.f32 0.0, %v460
  %v462 = vpop.f32.mrf.mxu0
  %v463 = vadd.f32 0.0, %v462
  %464 = vmatmul.bf16.gmra.mxu0 %v288
  %v465 = vpop.f32.mrf.mxu0
  %v466 = vadd.f32 0.0, %v465
  %v467 = vpop.f32.mrf.mxu0
  %v468 = vadd.f32 0.0, %v467
  %469 = vmatmul.bf16.gmra.mxu0 %v289
  %v470 = vpop.f32.mrf.mxu0
  %v471 = vadd.f32 0.0, %v470
  %v472 = vpop.f32.mrf.mxu0
  %v473 = vadd.f32 0.0, %v472
  %474 = vmatmul.bf16.gmra.mxu0 %v290
  %v475 = vpop.f32.mrf.mxu0
  %v476 = vadd.f32 0.0, %v475
  %v477 = vpop.f32.mrf.mxu0
  %v478 = vadd.f32 0.0, %v477
  %479 = vmatmul.bf16.gmra.mxu0 %v291
  %v480 = vpop.f32.mrf.mxu0
  %v481 = vadd.f32 0.0, %v480
  %v482 = vpop.f32.mrf.mxu0
  %v483 = vadd.f32 0.0, %v482
  %484 = vmatmul.bf16.gmra.mxu0 %v292
  %v485 = vpop.f32.mrf.mxu0
  %v486 = vadd.f32 0.0, %v485
  %v487 = vpop.f32.mrf.mxu0
  %v488 = vadd.f32 0.0, %v487
  %489 = vmatmul.bf16.gmra.mxu0 %v293
  %v490 = vpop.f32.mrf.mxu0
  %v491 = vadd.f32 0.0, %v490
  %v492 = vpop.f32.mrf.mxu0
  %v493 = vadd.f32 0.0, %v492
  %494 = vmatmul.bf16.gmra.mxu0 %v294
  %v495 = vpop.f32.mrf.mxu0
  %v496 = vadd.f32 0.0, %v495
  %v497 = vpop.f32.mrf.mxu0
  %v498 = vadd.f32 0.0, %v497
  %499 = vmatmul.bf16.gmra.mxu0 %v295
  %v500 = vpop.f32.mrf.mxu0
  %v501 = vadd.f32 0.0, %v500
  %v502 = vpop.f32.mrf.mxu0
  %v503 = vadd.f32 0.0, %v502
  %504 = vmatmul.bf16.gmra.mxu0 %v296
  %v505 = vpop.f32.mrf.mxu0
  %v506 = vadd.f32 0.0, %v505
  %v507 = vpop.f32.mrf.mxu0
  %v508 = vadd.f32 0.0, %v507
  %509 = vmatmul.bf16.gmra.mxu0 %v297
  %v510 = vpop.f32.mrf.mxu0
  %v511 = vadd.f32 0.0, %v510
  %v512 = vpop.f32.mrf.mxu0
  %v513 = vadd.f32 0.0, %v512
  %514 = vmatmul.bf16.gmra.mxu0 %v298
  %v515 = vpop.f32.mrf.mxu0
  %v516 = vadd.f32 0.0, %v515
  %v517 = vpop.f32.mrf.mxu0
  %v518 = vadd.f32 0.0, %v517
  %519 = vmatmul.bf16.gmra.mxu0 %v299
  %v520 = vpop.f32.mrf.mxu0
  %v521 = vadd.f32 0.0, %v520
  %v522 = vpop.f32.mrf.mxu0
  %v523 = vadd.f32 0.0, %v522
  %524 = vmatmul.bf16.gmra.mxu0 %v300
  %v525 = vpop.f32.mrf.mxu0
  %v526 = vadd.f32 0.0, %v525
  %v527 = vpop.f32.mrf.mxu0
  %v528 = vadd.f32 0.0, %v527
  %529 = vmatmul.bf16.gmra.mxu0 %v301
  %v530 = vpop.f32.mrf.mxu0
  %v531 = vadd.f32 0.0, %v530
  %v532 = vpop.f32.mrf.mxu0
  %v533 = vadd.f32 0.0, %v532
  %534 = vmatmul.bf16.gmra.mxu0 %v302
  %v535 = vpop.f32.mrf.mxu0
  %v536 = vadd.f32 0.0, %v535
  %v537 = vpop.f32.mrf.mxu0
  %v538 = vadd.f32 0.0, %v537
  %539 = vmatmul.bf16.gmra.mxu0 %v303
  %v540 = vpop.f32.mrf.mxu0
  %v541 = vadd.f32 0.0, %v540
  %v542 = vpop.f32.mrf.mxu0
  %v543 = vadd.f32 0.0, %v542
  %544 = vmatmul.bf16.gmra.mxu0 %v304
  %v545 = vpop.f32.mrf.mxu0
  %v546 = vadd.f32 0.0, %v545
  %v547 = vpop.f32.mrf.mxu0
  %v548 = vadd.f32 0.0, %v547
  %549 = vmatmul.bf16.gmra.mxu0 %v305
  %v550 = vpop.f32.mrf.mxu0
  %v551 = vadd.f32 0.0, %v550
  %v552 = vpop.f32.mrf.mxu0
  %v553 = vadd.f32 0.0, %v552
  %554 = vdwg.mxu0
  %v555 = vld [vmem:[%s3] sm:$0x1]
  %v557 = vperm.slane %v555, 0
  %v559 = vmul.f32 %v396, %v557
  %v560 = vmul.f32 %v398, %v557
  %v561 = vmul.f32 %v401, %v557
  %v562 = vmul.f32 %v403, %v557
  %v563 = vmul.f32 %v406, %v557
  %v564 = vmul.f32 %v408, %v557
  %v565 = vmul.f32 %v411, %v557
  %v566 = vmul.f32 %v413, %v557
  %v567 = vmul.f32 %v416, %v557
  %v568 = vmul.f32 %v418, %v557
  %v569 = vmul.f32 %v421, %v557
  %v570 = vmul.f32 %v423, %v557
  %v571 = vmul.f32 %v426, %v557
  %v572 = vmul.f32 %v428, %v557
  %v573 = vmul.f32 %v431, %v557
  %v574 = vmul.f32 %v433, %v557
  %v575 = vmul.f32 %v436, %v557
  %v576 = vmul.f32 %v438, %v557
  %v577 = vmul.f32 %v441, %v557
  %v578 = vmul.f32 %v443, %v557
  %v579 = vmul.f32 %v446, %v557
  %v580 = vmul.f32 %v448, %v557
  %v581 = vmul.f32 %v451, %v557
  %v582 = vmul.f32 %v453, %v557
  %v583 = vmul.f32 %v456, %v557
  %v584 = vmul.f32 %v458, %v557
  %v585 = vmul.f32 %v461, %v557
  %v586 = vmul.f32 %v463, %v557
  %v587 = vmul.f32 %v466, %v557
  %v588 = vmul.f32 %v468, %v557
  %v589 = vmul.f32 %v471, %v557
  %v590 = vmul.f32 %v473, %v557
  %v591 = vmul.f32 %v476, %v557
  %v592 = vmul.f32 %v478, %v557
  %v593 = vmul.f32 %v481, %v557
  %v594 = vmul.f32 %v483, %v557
  %v595 = vmul.f32 %v486, %v557
  %v596 = vmul.f32 %v488, %v557
  %v597 = vmul.f32 %v491, %v557
  %v598 = vmul.f32 %v493, %v557
  %v599 = vmul.f32 %v496, %v557
  %v600 = vmul.f32 %v498, %v557
  %v601 = vmul.f32 %v501, %v557
  %v602 = vmul.f32 %v503, %v557
  %v603 = vmul.f32 %v506, %v557
  %v604 = vmul.f32 %v508, %v557
  %v605 = vmul.f32 %v511, %v557
  %v606 = vmul.f32 %v513, %v557
  %v607 = vmul.f32 %v516, %v557
  %v608 = vmul.f32 %v518, %v557
  %v609 = vmul.f32 %v521, %v557
  %v610 = vmul.f32 %v523, %v557
  %v611 = vmul.f32 %v526, %v557
  %v612 = vmul.f32 %v528, %v557
  %v613 = vmul.f32 %v531, %v557
  %v614 = vmul.f32 %v533, %v557
  %v615 = vmul.f32 %v536, %v557
  %v616 = vmul.f32 %v538, %v557
  %v617 = vmul.f32 %v541, %v557
  %v618 = vmul.f32 %v543, %v557
  %v619 = vmul.f32 %v546, %v557
  %v620 = vmul.f32 %v548, %v557
  %v621 = vmul.f32 %v551, %v557
  %v622 = vmul.f32 %v553, %v557
  %v623 = vld [vmem:[%s4] sm:$0x1]
  %v625 = vperm.slane %v623, 0
  %v627 = vadd.f32 %v559, %v625
  %v628 = vadd.f32 %v560, %v625
  %v629 = vadd.f32 %v561, %v625
  %v630 = vadd.f32 %v562, %v625
  %v631 = vadd.f32 %v563, %v625
  %v632 = vadd.f32 %v564, %v625
  %v633 = vadd.f32 %v565, %v625
  %v634 = vadd.f32 %v566, %v625
  %v635 = vadd.f32 %v567, %v625
  %v636 = vadd.f32 %v568, %v625
  %v637 = vadd.f32 %v569, %v625
  %v638 = vadd.f32 %v570, %v625
  %v639 = vadd.f32 %v571, %v625
  %v640 = vadd.f32 %v572, %v625
  %v641 = vadd.f32 %v573, %v625
  %v642 = vadd.f32 %v574, %v625
  %v643 = vadd.f32 %v575, %v625
  %v644 = vadd.f32 %v576, %v625
  %v645 = vadd.f32 %v577, %v625
  %v646 = vadd.f32 %v578, %v625
  %v647 = vadd.f32 %v579, %v625
  %v648 = vadd.f32 %v580, %v625
  %v649 = vadd.f32 %v581, %v625
  %v650 = vadd.f32 %v582, %v625
  %v651 = vadd.f32 %v583, %v625
  %v652 = vadd.f32 %v584, %v625
  %v653 = vadd.f32 %v585, %v625
  %v654 = vadd.f32 %v586, %v625
  %v655 = vadd.f32 %v587, %v625
  %v656 = vadd.f32 %v588, %v625
  %v657 = vadd.f32 %v589, %v625
  %v658 = vadd.f32 %v590, %v625
  %v659 = vadd.f32 %v591, %v625
  %v660 = vadd.f32 %v592, %v625
  %v661 = vadd.f32 %v593, %v625
  %v662 = vadd.f32 %v594, %v625
  %v663 = vadd.f32 %v595, %v625
  %v664 = vadd.f32 %v596, %v625
  %v665 = vadd.f32 %v597, %v625
  %v666 = vadd.f32 %v598, %v625
  %v667 = vadd.f32 %v599, %v625
  %v668 = vadd.f32 %v600, %v625
  %v669 = vadd.f32 %v601, %v625
  %v670 = vadd.f32 %v602, %v625
  %v671 = vadd.f32 %v603, %v625
  %v672 = vadd.f32 %v604, %v625
  %v673 = vadd.f32 %v605, %v625
  %v674 = vadd.f32 %v606, %v625
  %v675 = vadd.f32 %v607, %v625
  %v676 = vadd.f32 %v608, %v625
  %v677 = vadd.f32 %v609, %v625
  %v678 = vadd.f32 %v610, %v625
  %v679 = vadd.f32 %v611, %v625
  %v680 = vadd.f32 %v612, %v625
  %v681 = vadd.f32 %v613, %v625
  %v682 = vadd.f32 %v614, %v625
  %v683 = vadd.f32 %v615, %v625
  %v684 = vadd.f32 %v616, %v625
  %v685 = vadd.f32 %v617, %v625
  %v686 = vadd.f32 %v618, %v625
  %v687 = vadd.f32 %v619, %v625
  %v688 = vadd.f32 %v620, %v625
  %v689 = vadd.f32 %v621, %v625
  %v690 = vadd.f32 %v622, %v625
  %v691 = vmax.f32 %v627, 0.0
  %v692 = vmax.f32 %v628, 0.0
  %v693 = vmax.f32 %v629, 0.0
  %v694 = vmax.f32 %v630, 0.0
  %v695 = vmax.f32 %v631, 0.0
  %v696 = vmax.f32 %v632, 0.0
  %v697 = vmax.f32 %v633, 0.0
  %v698 = vmax.f32 %v634, 0.0
  %v699 = vmax.f32 %v635, 0.0
  %v700 = vmax.f32 %v636, 0.0
  %v701 = vmax.f32 %v637, 0.0
  %v702 = vmax.f32 %v638, 0.0
  %v703 = vmax.f32 %v639, 0.0
  %v704 = vmax.f32 %v640, 0.0
  %v705 = vmax.f32 %v641, 0.0
  %v706 = vmax.f32 %v642, 0.0
  %v707 = vmax.f32 %v643, 0.0
  %v708 = vmax.f32 %v644, 0.0
  %v709 = vmax.f32 %v645, 0.0
  %v710 = vmax.f32 %v646, 0.0
  %v711 = vmax.f32 %v647, 0.0
  %v712 = vmax.f32 %v648, 0.0
  %v713 = vmax.f32 %v649, 0.0
  %v714 = vmax.f32 %v650, 0.0
  %v715 = vmax.f32 %v651, 0.0
  %v716 = vmax.f32 %v652, 0.0
  %v717 = vmax.f32 %v653, 0.0
  %v718 = vmax.f32 %v654, 0.0
  %v719 = vmax.f32 %v655, 0.0
  %v720 = vmax.f32 %v656, 0.0
  %v721 = vmax.f32 %v657, 0.0
  %v722 = vmax.f32 %v658, 0.0
  %v723 = vmax.f32 %v659, 0.0
  %v724 = vmax.f32 %v660, 0.0
  %v725 = vmax.f32 %v661, 0.0
  %v726 = vmax.f32 %v662, 0.0
  %v727 = vmax.f32 %v663, 0.0
  %v728 = vmax.f32 %v664, 0.0
  %v729 = vmax.f32 %v665, 0.0
  %v730 = vmax.f32 %v666, 0.0
  %v731 = vmax.f32 %v667, 0.0
  %v732 = vmax.f32 %v668, 0.0
  %v733 = vmax.f32 %v669, 0.0
  %v734 = vmax.f32 %v670, 0.0
  %v735 = vmax.f32 %v671, 0.0
  %v736 = vmax.f32 %v672, 0.0
  %v737 = vmax.f32 %v673, 0.0
  %v738 = vmax.f32 %v674, 0.0
  %v739 = vmax.f32 %v675, 0.0
  %v740 = vmax.f32 %v676, 0.0
  %v741 = vmax.f32 %v677, 0.0
  %v742 = vmax.f32 %v678, 0.0
  %v743 = vmax.f32 %v679, 0.0
  %v744 = vmax.f32 %v680, 0.0
  %v745 = vmax.f32 %v681, 0.0
  %v746 = vmax.f32 %v682, 0.0
  %v747 = vmax.f32 %v683, 0.0
  %v748 = vmax.f32 %v684, 0.0
  %v749 = vmax.f32 %v685, 0.0
  %v750 = vmax.f32 %v686, 0.0
  %v751 = vmax.f32 %v687, 0.0
  %v752 = vmax.f32 %v688, 0.0
  %v753 = vmax.f32 %v689, 0.0
  %v754 = vmax.f32 %v690, 0.0
  %v755 = vpack.c.bf16 %v691, %v691
  %v756 = vpack.c.bf16 %v692, %v692
  %v757 = vpack.c.bf16 %v693, %v693
  %v758 = vpack.c.bf16 %v694, %v694
  %v759 = vpack.c.bf16 %v695, %v695
  %v760 = vpack.c.bf16 %v696, %v696
  %v761 = vpack.c.bf16 %v697, %v697
  %v762 = vpack.c.bf16 %v698, %v698
  %v763 = vpack.c.bf16 %v699, %v699
  %v764 = vpack.c.bf16 %v700, %v700
  %v765 = vpack.c.bf16 %v701, %v701
  %v766 = vpack.c.bf16 %v702, %v702
  %v767 = vpack.c.bf16 %v703, %v703
  %v768 = vpack.c.bf16 %v704, %v704
  %v769 = vpack.c.bf16 %v705, %v705
  %v770 = vpack.c.bf16 %v706, %v706
  %v771 = vpack.c.bf16 %v707, %v707
  %v772 = vpack.c.bf16 %v708, %v708
  %v773 = vpack.c.bf16 %v709, %v709
  %v774 = vpack.c.bf16 %v710, %v710
  %v775 = vpack.c.bf16 %v711, %v711
  %v776 = vpack.c.bf16 %v712, %v712
  %v777 = vpack.c.bf16 %v713, %v713
  %v778 = vpack.c.bf16 %v714, %v714
  %v779 = vpack.c.bf16 %v715, %v715
  %v780 = vpack.c.bf16 %v716, %v716
  %v781 = vpack.c.bf16 %v717, %v717
  %v782 = vpack.c.bf16 %v718, %v718
  %v783 = vpack.c.bf16 %v719, %v719
  %v784 = vpack.c.bf16 %v720, %v720
  %v785 = vpack.c.bf16 %v721, %v721
  %v786 = vpack.c.bf16 %v722, %v722
  %v787 = vpack.c.bf16 %v723, %v723
  %v788 = vpack.c.bf16 %v724, %v724
  %v789 = vpack.c.bf16 %v725, %v725
  %v790 = vpack.c.bf16 %v726, %v726
  %v791 = vpack.c.bf16 %v727, %v727
  %v792 = vpack.c.bf16 %v728, %v728
  %v793 = vpack.c.bf16 %v729, %v729
  %v794 = vpack.c.bf16 %v730, %v730
  %v795 = vpack.c.bf16 %v731, %v731
  %v796 = vpack.c.bf16 %v732, %v732
  %v797 = vpack.c.bf16 %v733, %v733
  %v798 = vpack.c.bf16 %v734, %v734
  %v799 = vpack.c.bf16 %v735, %v735
  %v800 = vpack.c.bf16 %v736, %v736
  %v801 = vpack.c.bf16 %v737, %v737
  %v802 = vpack.c.bf16 %v738, %v738
  %v803 = vpack.c.bf16 %v739, %v739
  %v804 = vpack.c.bf16 %v740, %v740
  %v805 = vpack.c.bf16 %v741, %v741
  %v806 = vpack.c.bf16 %v742, %v742
  %v807 = vpack.c.bf16 %v743, %v743
  %v808 = vpack.c.bf16 %v744, %v744
  %v809 = vpack.c.bf16 %v745, %v745
  %v810 = vpack.c.bf16 %v746, %v746
  %v811 = vpack.c.bf16 %v747, %v747
  %v812 = vpack.c.bf16 %v748, %v748
  %v813 = vpack.c.bf16 %v749, %v749
  %v814 = vpack.c.bf16 %v750, %v750
  %v815 = vpack.c.bf16 %v751, %v751
  %v816 = vpack.c.bf16 %v752, %v752
  %v817 = vpack.c.bf16 %v753, %v753
  %v818 = vpack.c.bf16 %v754, %v754
  %v819 = vld [vmem:[%s1] sm:$0xf]
  %v820 = vld [vmem:[%s1 + $0x4] sm:$0xf]
  %v821 = vld [vmem:[%s1 + $0x8] sm:$0xf]
  %v822 = vld [vmem:[%s1 + $0xc] sm:$0xf]
  %v823 = vld [vmem:[%s1 + $0x10] sm:$0xf]
  %v824 = vld [vmem:[%s1 + $0x14] sm:$0xf]
  %v825 = vld [vmem:[%s1 + $0x18] sm:$0xf]
  %v826 = vld [vmem:[%s1 + $0x1c] sm:$0xf]
  %v827 = vld [vmem:[%s1 + $0x20] sm:$0xf]
  %v828 = vld [vmem:[%s1 + $0x24] sm:$0xf]
  %v829 = vld [vmem:[%s1 + $0x28] sm:$0xf]
  %v830 = vld [vmem:[%s1 + $0x2c] sm:$0xf]
  %v831 = vld [vmem:[%s1 + $0x30] sm:$0xf]
  %v832 = vld [vmem:[%s1 + $0x34] sm:$0xf]
  %v833 = vld [vmem:[%s1 + $0x38] sm:$0xf]
  %v834 = vld [vmem:[%s1 + $0x3c] sm:$0xf]
  %v836 = vshrl.u32 0, 16
  %v838 = vrot.slane %v836, 7
  %v839 = vshll.u32 0, 16
  %v841 = vor.u32 %v838, %v839
  %v843 = vshrl.u32 %v819, 16
  %v845 = vrot.slane %v843, 7
  %v846 = vshll.u32 %v819, 16
  %v848 = vor.u32 %v845, %v846
  %v850 = vshrl.u32 %v820, 16
  %v852 = vrot.slane %v850, 7
  %v853 = vshll.u32 %v820, 16
  %v855 = vor.u32 %v852, %v853
  %v857 = vshrl.u32 %v821, 16
  %v859 = vrot.slane %v857, 7
  %v860 = vshll.u32 %v821, 16
  %v862 = vor.u32 %v859, %v860
  %v864 = vshrl.u32 %v822, 16
  %v866 = vrot.slane %v864, 7
  %v867 = vshll.u32 %v822, 16
  %v869 = vor.u32 %v866, %v867
  %v871 = vshrl.u32 %v823, 16
  %v873 = vrot.slane %v871, 7
  %v874 = vshll.u32 %v823, 16
  %v876 = vor.u32 %v873, %v874
  %v878 = vshrl.u32 %v824, 16
  %v880 = vrot.slane %v878, 7
  %v881 = vshll.u32 %v824, 16
  %v883 = vor.u32 %v880, %v881
  %v885 = vshrl.u32 %v825, 16
  %v887 = vrot.slane %v885, 7
  %v888 = vshll.u32 %v825, 16
  %v890 = vor.u32 %v887, %v888
  %v892 = vshrl.u32 %v826, 16
  %v894 = vrot.slane %v892, 7
  %v895 = vshll.u32 %v826, 16
  %v897 = vor.u32 %v894, %v895
  %v899 = vshrl.u32 %v827, 16
  %v901 = vrot.slane %v899, 7
  %v902 = vshll.u32 %v827, 16
  %v904 = vor.u32 %v901, %v902
  %v906 = vshrl.u32 %v828, 16
  %v908 = vrot.slane %v906, 7
  %v909 = vshll.u32 %v828, 16
  %v911 = vor.u32 %v908, %v909
  %v913 = vshrl.u32 %v829, 16
  %v915 = vrot.slane %v913, 7
  %v916 = vshll.u32 %v829, 16
  %v918 = vor.u32 %v915, %v916
  %v920 = vshrl.u32 %v830, 16
  %v922 = vrot.slane %v920, 7
  %v923 = vshll.u32 %v830, 16
  %v925 = vor.u32 %v922, %v923
  %v927 = vshrl.u32 %v831, 16
  %v929 = vrot.slane %v927, 7
  %v930 = vshll.u32 %v831, 16
  %v932 = vor.u32 %v929, %v930
  %v934 = vshrl.u32 %v832, 16
  %v936 = vrot.slane %v934, 7
  %v937 = vshll.u32 %v832, 16
  %v939 = vor.u32 %v936, %v937
  %v941 = vshrl.u32 %v833, 16
  %v943 = vrot.slane %v941, 7
  %v944 = vshll.u32 %v833, 16
  %v946 = vor.u32 %v943, %v944
  %v948 = vshrl.u32 %v834, 16
  %v950 = vrot.slane %v948, 7
  %v951 = vshll.u32 %v834, 16
  %v953 = vor.u32 %v950, %v951
  %vm971 = vcmask 1040384
  %vm972 = vsmask.f32 256
  %vm973 = vmand %vm971, %vm972
  %v974 = vsel %vm973, 0, %v841
  %v975 = vsel %vm973, 0, %v848
  %v976 = vsel %vm973, 0, %v855
  %v977 = vsel %vm973, 0, %v862
  %v978 = vsel %vm973, 0, %v869
  %v979 = vsel %vm973, 0, %v876
  %v980 = vsel %vm973, 0, %v883
  %v981 = vsel %vm973, 0, %v890
  %v982 = vsel %vm973, 0, %v897
  %v983 = vsel %vm973, 0, %v904
  %v984 = vsel %vm973, 0, %v911
  %v985 = vsel %vm973, 0, %v918
  %v986 = vsel %vm973, 0, %v925
  %v987 = vsel %vm973, 0, %v932
  %v988 = vsel %vm973, 0, %v939
  %v989 = vsel %vm973, 0, %v946
  %v990 = vsel %vm973, 0, %v953
  %vm991 = vcmask 1044480
  %vm992 = vsmask.f32 4352
  %vm993 = vmand %vm991, %vm992
  %v994 = vsel %vm993, %v974, 0
  %v995 = vsel %vm993, %v975, 0
  %v996 = vsel %vm993, %v976, 0
  %v997 = vsel %vm993, %v977, 0
  %v998 = vsel %vm993, %v978, 0
  %v999 = vsel %vm993, %v979, 0
  %v1000 = vsel %vm993, %v980, 0
  %v1001 = vsel %vm993, %v981, 0
  %v1002 = vsel %vm993, %v982, 0
  %v1003 = vsel %vm993, %v983, 0
  %v1004 = vsel %vm993, %v984, 0
  %v1005 = vsel %vm993, %v985, 0
  %v1006 = vsel %vm993, %v986, 0
  %v1007 = vsel %vm993, %v987, 0
  %v1008 = vsel %vm993, %v988, 0
  %v1009 = vsel %vm993, %v989, 0
  %v1010 = vsel %vm993, %v990, 0
  %v1012 = vshrl.u32 %v994, 16
  %v1014 = vshll.u32 %v994, 16
  %v1016 = vrot.slane %v1014, 1
  %v1017 = vor.u32 %v1012, %v1016
  %v1019 = vshrl.u32 %v995, 16
  %v1021 = vshll.u32 %v995, 16
  %v1023 = vrot.slane %v1021, 1
  %v1024 = vor.u32 %v1019, %v1023
  %v1026 = vshrl.u32 %v996, 16
  %v1028 = vshll.u32 %v996, 16
  %v1030 = vrot.slane %v1028, 1
  %v1031 = vor.u32 %v1026, %v1030
  %v1033 = vshrl.u32 %v997, 16
  %v1035 = vshll.u32 %v997, 16
  %v1037 = vrot.slane %v1035, 1
  %v1038 = vor.u32 %v1033, %v1037
  %v1040 = vshrl.u32 %v998, 16
  %v1042 = vshll.u32 %v998, 16
  %v1044 = vrot.slane %v1042, 1
  %v1045 = vor.u32 %v1040, %v1044
  %v1047 = vshrl.u32 %v999, 16
  %v1049 = vshll.u32 %v999, 16
  %v1051 = vrot.slane %v1049, 1
  %v1052 = vor.u32 %v1047, %v1051
  %v1054 = vshrl.u32 %v1000, 16
  %v1056 = vshll.u32 %v1000, 16
  %v1058 = vrot.slane %v1056, 1
  %v1059 = vor.u32 %v1054, %v1058
  %v1061 = vshrl.u32 %v1001, 16
  %v1063 = vshll.u32 %v1001, 16
  %v1065 = vrot.slane %v1063, 1
  %v1066 = vor.u32 %v1061, %v1065
  %v1068 = vshrl.u32 %v1003, 16
  %v1070 = vshll.u32 %v1003, 16
  %v1072 = vrot.slane %v1070, 1
  %v1073 = vor.u32 %v1068, %v1072
  %v1075 = vshrl.u32 %v1004, 16
  %v1077 = vshll.u32 %v1004, 16
  %v1079 = vrot.slane %v1077, 1
  %v1080 = vor.u32 %v1075, %v1079
  %v1082 = vshrl.u32 %v1005, 16
  %v1084 = vshll.u32 %v1005, 16
  %v1086 = vrot.slane %v1084, 1
  %v1087 = vor.u32 %v1082, %v1086
  %v1089 = vshrl.u32 %v1006, 16
  %v1091 = vshll.u32 %v1006, 16
  %v1093 = vrot.slane %v1091, 1
  %v1094 = vor.u32 %v1089, %v1093
  %v1096 = vshrl.u32 %v1007, 16
  %v1098 = vshll.u32 %v1007, 16
  %v1100 = vrot.slane %v1098, 1
  %v1101 = vor.u32 %v1096, %v1100
  %v1103 = vshrl.u32 %v1008, 16
  %v1105 = vshll.u32 %v1008, 16
  %v1107 = vrot.slane %v1105, 1
  %v1108 = vor.u32 %v1103, %v1107
  %v1110 = vshrl.u32 %v1009, 16
  %v1112 = vshll.u32 %v1009, 16
  %v1114 = vrot.slane %v1112, 1
  %v1115 = vor.u32 %v1110, %v1114
  %v1131 = vrot.slane %v994, 1
  %v1132 = vrot.slane %v995, 1
  %v1133 = vrot.slane %v996, 1
  %v1134 = vrot.slane %v997, 1
  %v1135 = vrot.slane %v998, 1
  %v1136 = vrot.slane %v999, 1
  %v1137 = vrot.slane %v1000, 1
  %v1138 = vrot.slane %v1001, 1
  %v1139 = vrot.slane %v1003, 1
  %v1140 = vrot.slane %v1004, 1
  %v1141 = vrot.slane %v1005, 1
  %v1142 = vrot.slane %v1006, 1
  %v1143 = vrot.slane %v1007, 1
  %v1144 = vrot.slane %v1008, 1
  %v1145 = vrot.slane %v1009, 1
  %v1147 = vshrl.u32 %v1002, 16
  %v1149 = vshll.u32 %v1002, 16
  %v1151 = vrot.slane %v1149, 1
  %v1152 = vor.u32 %v1147, %v1151
  %v1154 = vshrl.u32 %v1010, 16
  %v1156 = vshll.u32 %v1010, 16
  %v1158 = vrot.slane %v1156, 1
  %v1159 = vor.u32 %v1154, %v1158
  %v1162 = vrot.slane %v1002, 1
  %v1163 = vrot.slane %v1010, 1
  %v1164 = vunpack.c.l.b16 %v994
  %v1165 = vunpack.c.l.b16 %v1017
  %v1166 = vunpack.c.l.b16 %v1131
  %v1167 = vunpack.c.l.b16 %v995
  %v1168 = vunpack.c.l.b16 %v1024
  %v1169 = vunpack.c.l.b16 %v1132
  %v1170 = vunpack.c.l.b16 %v996
  %v1171 = vunpack.c.l.b16 %v1031
  %v1172 = vunpack.c.l.b16 %v1133
  %v1173 = vunpack.c.l.b16 %v997
  %v1174 = vunpack.c.l.b16 %v1038
  %v1175 = vunpack.c.l.b16 %v1134
  %v1176 = vunpack.c.l.b16 %v998
  %v1177 = vunpack.c.l.b16 %v1045
  %v1178 = vunpack.c.l.b16 %v1135
  %v1179 = vunpack.c.l.b16 %v999
  %v1180 = vunpack.c.l.b16 %v1052
  %v1181 = vunpack.c.l.b16 %v1136
  %v1182 = vunpack.c.l.b16 %v1000
  %v1183 = vunpack.c.l.b16 %v1059
  %v1184 = vunpack.c.l.b16 %v1137
  %v1185 = vunpack.c.l.b16 %v1001
  %v1186 = vunpack.c.l.b16 %v1066
  %v1187 = vunpack.c.l.b16 %v1138
  %v1188 = vunpack.c.l.b16 %v1002
  %v1189 = vunpack.c.l.b16 %v1152
  %v1190 = vunpack.c.l.b16 %v1162
  %v1191 = vunpack.c.l.b16 %v1003
  %v1192 = vunpack.c.l.b16 %v1073
  %v1193 = vunpack.c.l.b16 %v1139
  %v1194 = vunpack.c.l.b16 %v1004
  %v1195 = vunpack.c.l.b16 %v1080
  %v1196 = vunpack.c.l.b16 %v1140
  %v1197 = vunpack.c.l.b16 %v1005
  %v1198 = vunpack.c.l.b16 %v1087
  %v1199 = vunpack.c.l.b16 %v1141
  %v1200 = vunpack.c.l.b16 %v1006
  %v1201 = vunpack.c.l.b16 %v1094
  %v1202 = vunpack.c.l.b16 %v1142
  %v1203 = vunpack.c.l.b16 %v1007
  %v1204 = vunpack.c.l.b16 %v1101
  %v1205 = vunpack.c.l.b16 %v1143
  %v1206 = vunpack.c.l.b16 %v1008
  %v1207 = vunpack.c.l.b16 %v1108
  %v1208 = vunpack.c.l.b16 %v1144
  %v1209 = vunpack.c.l.b16 %v1009
  %v1210 = vunpack.c.l.b16 %v1115
  %v1211 = vunpack.c.l.b16 %v1145
  %v1212 = vunpack.c.l.b16 %v1010
  %v1213 = vunpack.c.l.b16 %v1159
  %v1214 = vunpack.c.l.b16 %v1163
  %v1215 = vld [vmem:[%s5] sm:$0xf]
  %v1216 = vld [vmem:[%s5 + $0x4] sm:$0xf]
  %v1217 = vld [vmem:[%s5 + $0x8] sm:$0xf]
  %v1218 = vld [vmem:[%s5 + $0xc] sm:$0xf]
  %v1219 = vld [vmem:[%s5 + $0x10] sm:$0xf]
  %v1220 = vld [vmem:[%s5 + $0x14] sm:$0xf]
  %v1221 = vld [vmem:[%s5 + $0x18] sm:$0xf]
  %v1222 = vld [vmem:[%s5 + $0x1c] sm:$0xf]
  %v1223 = vld [vmem:[%s5 + $0x20] sm:$0xf]
  %v1224 = vld [vmem:[%s5 + $0x24] sm:$0xf]
  %v1225 = vld [vmem:[%s5 + $0x28] sm:$0xf]
  %v1226 = vld [vmem:[%s5 + $0x2c] sm:$0xf]
  %v1227 = vld [vmem:[%s5 + $0x30] sm:$0xf]
  %v1228 = vld [vmem:[%s5 + $0x34] sm:$0xf]
  %v1229 = vld [vmem:[%s5 + $0x38] sm:$0xf]
  %v1230 = vld [vmem:[%s5 + $0x3c] sm:$0xf]
  %v1231 = vld [vmem:[%s5 + $0x40] sm:$0xf]
  %v1232 = vld [vmem:[%s5 + $0x44] sm:$0xf]
  %v1233 = vld [vmem:[%s5 + $0x48] sm:$0xf]
  %v1234 = vld [vmem:[%s5 + $0x4c] sm:$0xf]
  %v1235 = vld [vmem:[%s5 + $0x50] sm:$0xf]
  %v1236 = vld [vmem:[%s5 + $0x54] sm:$0xf]
  %v1237 = vld [vmem:[%s5 + $0x58] sm:$0xf]
  %v1238 = vld [vmem:[%s5 + $0x5c] sm:$0xf]
  %v1239 = vld [vmem:[%s5 + $0x60] sm:$0xf]
  %v1240 = vld [vmem:[%s5 + $0x64] sm:$0xf]
  %v1241 = vld [vmem:[%s5 + $0x68] sm:$0xf]
  %v1242 = vld [vmem:[%s5 + $0x6c] sm:$0xf]
  %v1243 = vld [vmem:[%s5 + $0x70] sm:$0xf]
  %v1244 = vld [vmem:[%s5 + $0x74] sm:$0xf]
  %v1245 = vld [vmem:[%s5 + $0x78] sm:$0xf]
  %v1246 = vld [vmem:[%s5 + $0x7c] sm:$0xf]
  %v1247 = vld [vmem:[%s5 + $0x80] sm:$0xf]
  %v1248 = vld [vmem:[%s5 + $0x84] sm:$0xf]
  %v1249 = vld [vmem:[%s5 + $0x88] sm:$0xf]
  %v1250 = vld [vmem:[%s5 + $0x8c] sm:$0xf]
  %v1251 = vld [vmem:[%s5 + $0x90] sm:$0xf]
  %v1252 = vld [vmem:[%s5 + $0x94] sm:$0xf]
  %v1253 = vld [vmem:[%s5 + $0x98] sm:$0xf]
  %v1254 = vld [vmem:[%s5 + $0x9c] sm:$0xf]
  %v1255 = vld [vmem:[%s5 + $0xa0] sm:$0xf]
  %v1256 = vld [vmem:[%s5 + $0xa4] sm:$0xf]
  %v1257 = vld [vmem:[%s5 + $0xa8] sm:$0xf]
  %v1258 = vld [vmem:[%s5 + $0xac] sm:$0xf]
  %v1259 = vld [vmem:[%s5 + $0xb0] sm:$0xf]
  %v1260 = vld [vmem:[%s5 + $0xb4] sm:$0xf]
  %v1261 = vld [vmem:[%s5 + $0xb8] sm:$0xf]
  %v1262 = vld [vmem:[%s5 + $0xbc] sm:$0xf]
  %v1263 = vld [vmem:[%s5 + $0xc0] sm:$0xf]
  %v1264 = vld [vmem:[%s5 + $0xc4] sm:$0xf]
  %v1265 = vld [vmem:[%s5 + $0xc8] sm:$0xf]
  %v1266 = vld [vmem:[%s5 + $0xcc] sm:$0xf]
  %v1267 = vld [vmem:[%s5 + $0xd0] sm:$0xf]
  %v1268 = vld [vmem:[%s5 + $0xd4] sm:$0xf]
  %v1269 = vld [vmem:[%s5 + $0xd8] sm:$0xf]
  %v1270 = vld [vmem:[%s5 + $0xdc] sm:$0xf]
  %v1271 = vld [vmem:[%s5 + $0xe0] sm:$0xf]
  %v1272 = vld [vmem:[%s5 + $0xe4] sm:$0xf]
  %v1273 = vld [vmem:[%s5 + $0xe8] sm:$0xf]
  %v1274 = vld [vmem:[%s5 + $0xec] sm:$0xf]
  %v1275 = vld [vmem:[%s5 + $0xf0] sm:$0xf]
  %v1276 = vld [vmem:[%s5 + $0xf4] sm:$0xf]
  %v1277 = vld [vmem:[%s5 + $0xf8] sm:$0xf]
  %v1278 = vld [vmem:[%s5 + $0xfc] sm:$0xf]
  %v1279 = vld [vmem:[%s5 + $0x100] sm:$0xf]
  %v1280 = vld [vmem:[%s5 + $0x104] sm:$0xf]
  %v1281 = vld [vmem:[%s5 + $0x108] sm:$0xf]
  %v1282 = vld [vmem:[%s5 + $0x10c] sm:$0xf]
  %v1283 = vld [vmem:[%s5 + $0x110] sm:$0xf]
  %v1284 = vld [vmem:[%s5 + $0x114] sm:$0xf]
  %v1285 = vld [vmem:[%s5 + $0x118] sm:$0xf]
  %v1286 = vld [vmem:[%s5 + $0x11c] sm:$0xf]
  %v1287 = vld [vmem:[%s5 + $0x120] sm:$0xf]
  %v1288 = vld [vmem:[%s5 + $0x124] sm:$0xf]
  %v1289 = vld [vmem:[%s5 + $0x128] sm:$0xf]
  %v1290 = vld [vmem:[%s5 + $0x12c] sm:$0xf]
  %v1291 = vld [vmem:[%s5 + $0x130] sm:$0xf]
  %v1292 = vld [vmem:[%s5 + $0x134] sm:$0xf]
  %v1293 = vld [vmem:[%s5 + $0x138] sm:$0xf]
  %v1294 = vld [vmem:[%s5 + $0x13c] sm:$0xf]
  %v1295 = vld [vmem:[%s5 + $0x140] sm:$0xf]
  %v1296 = vld [vmem:[%s5 + $0x144] sm:$0xf]
  %v1297 = vld [vmem:[%s5 + $0x148] sm:$0xf]
  %v1298 = vld [vmem:[%s5 + $0x14c] sm:$0xf]
  %v1299 = vld [vmem:[%s5 + $0x150] sm:$0xf]
  %v1300 = vld [vmem:[%s5 + $0x154] sm:$0xf]
  %v1301 = vld [vmem:[%s5 + $0x158] sm:$0xf]
  %v1302 = vld [vmem:[%s5 + $0x15c] sm:$0xf]
  %v1303 = vld [vmem:[%s5 + $0x160] sm:$0xf]
  %v1304 = vld [vmem:[%s5 + $0x164] sm:$0xf]
  %v1305 = vld [vmem:[%s5 + $0x168] sm:$0xf]
  %v1306 = vld [vmem:[%s5 + $0x16c] sm:$0xf]
  %v1307 = vld [vmem:[%s5 + $0x170] sm:$0xf]
  %v1308 = vld [vmem:[%s5 + $0x174] sm:$0xf]
  %v1309 = vld [vmem:[%s5 + $0x178] sm:$0xf]
  %v1310 = vld [vmem:[%s5 + $0x17c] sm:$0xf]
  %v1311 = vld [vmem:[%s5 + $0x180] sm:$0xf]
  %v1312 = vld [vmem:[%s5 + $0x184] sm:$0xf]
  %v1313 = vld [vmem:[%s5 + $0x188] sm:$0xf]
  %v1314 = vld [vmem:[%s5 + $0x18c] sm:$0xf]
  %v1315 = vld [vmem:[%s5 + $0x190] sm:$0xf]
  %v1316 = vld [vmem:[%s5 + $0x194] sm:$0xf]
  %v1317 = vld [vmem:[%s5 + $0x198] sm:$0xf]
  %v1318 = vld [vmem:[%s5 + $0x19c] sm:$0xf]
  %v1319 = vld [vmem:[%s5 + $0x1a0] sm:$0xf]
  %v1320 = vld [vmem:[%s5 + $0x1a4] sm:$0xf]
  %v1321 = vld [vmem:[%s5 + $0x1a8] sm:$0xf]
  %v1322 = vld [vmem:[%s5 + $0x1ac] sm:$0xf]
  %v1323 = vld [vmem:[%s5 + $0x1b0] sm:$0xf]
  %v1324 = vld [vmem:[%s5 + $0x1b4] sm:$0xf]
  %v1325 = vld [vmem:[%s5 + $0x1b8] sm:$0xf]
  %v1326 = vld [vmem:[%s5 + $0x1bc] sm:$0xf]
  %v1327 = vld [vmem:[%s5 + $0x1c0] sm:$0xf]
  %v1328 = vld [vmem:[%s5 + $0x1c4] sm:$0xf]
  %v1329 = vld [vmem:[%s5 + $0x1c8] sm:$0xf]
  %v1330 = vld [vmem:[%s5 + $0x1cc] sm:$0xf]
  %v1331 = vld [vmem:[%s5 + $0x1d0] sm:$0xf]
  %v1332 = vld [vmem:[%s5 + $0x1d4] sm:$0xf]
  %v1333 = vld [vmem:[%s5 + $0x1d8] sm:$0xf]
  %v1334 = vld [vmem:[%s5 + $0x1dc] sm:$0xf]
  %v1335 = vld [vmem:[%s5 + $0x1e0] sm:$0xf]
  %v1336 = vld [vmem:[%s5 + $0x1e4] sm:$0xf]
  %v1337 = vld [vmem:[%s5 + $0x1e8] sm:$0xf]
  %v1338 = vld [vmem:[%s5 + $0x1ec] sm:$0xf]
  %v1339 = vld [vmem:[%s5 + $0x1f0] sm:$0xf]
  %v1340 = vld [vmem:[%s5 + $0x1f4] sm:$0xf]
  %v1341 = vld [vmem:[%s5 + $0x1f8] sm:$0xf]
  %v1342 = vld [vmem:[%s5 + $0x1fc] sm:$0xf]
  %v1343 = vld [vmem:[%s5 + $0x200] sm:$0xf]
  %v1344 = vld [vmem:[%s5 + $0x204] sm:$0xf]
  %v1345 = vld [vmem:[%s5 + $0x208] sm:$0xf]
  %v1346 = vld [vmem:[%s5 + $0x20c] sm:$0xf]
  %v1347 = vld [vmem:[%s5 + $0x210] sm:$0xf]
  %v1348 = vld [vmem:[%s5 + $0x214] sm:$0xf]
  %v1349 = vld [vmem:[%s5 + $0x218] sm:$0xf]
  %v1350 = vld [vmem:[%s5 + $0x21c] sm:$0xf]
  %v1351 = vld [vmem:[%s5 + $0x220] sm:$0xf]
  %v1352 = vld [vmem:[%s5 + $0x224] sm:$0xf]
  %v1353 = vld [vmem:[%s5 + $0x228] sm:$0xf]
  %v1354 = vld [vmem:[%s5 + $0x22c] sm:$0xf]
  %v1355 = vld [vmem:[%s5 + $0x230] sm:$0xf]
  %v1356 = vld [vmem:[%s5 + $0x234] sm:$0xf]
  %v1357 = vld [vmem:[%s5 + $0x238] sm:$0xf]
  %v1358 = vld [vmem:[%s5 + $0x23c] sm:$0xf]
  %v1359 = vpack.c.b16 %v1167, %v1164
  %v1360 = vpack.c.b16 %v1168, %v1165
  %v1361 = vpack.c.b16 %v1169, %v1166
  %v1362 = vpack.c.b16 %v1170, %v1167
  %v1363 = vpack.c.b16 %v1171, %v1168
  %v1364 = vpack.c.b16 %v1172, %v1169
  %v1365 = vpack.c.b16 %v1173, %v1170
  %v1366 = vpack.c.b16 %v1174, %v1171
  %v1367 = vpack.c.b16 %v1175, %v1172
  %v1368 = vpack.c.b16 %v1176, %v1173
  %v1369 = vpack.c.b16 %v1177, %v1174
  %v1370 = vpack.c.b16 %v1178, %v1175
  %v1371 = vpack.c.b16 %v1179, %v1176
  %v1372 = vpack.c.b16 %v1180, %v1177
  %v1373 = vpack.c.b16 %v1181, %v1178
  %v1374 = vpack.c.b16 %v1182, %v1179
  %v1375 = vpack.c.b16 %v1183, %v1180
  %v1376 = vpack.c.b16 %v1184, %v1181
  %v1377 = vpack.c.b16 %v1185, %v1182
  %v1378 = vpack.c.b16 %v1186, %v1183
  %v1379 = vpack.c.b16 %v1187, %v1184
  %v1380 = vpack.c.b16 %v1188, %v1185
  %v1381 = vpack.c.b16 %v1189, %v1186
  %v1382 = vpack.c.b16 %v1190, %v1187
  %v1383 = vpack.c.b16 %v1164, %v1188
  %v1384 = vpack.c.b16 %v1165, %v1189
  %v1385 = vpack.c.b16 %v1166, %v1190
  %v1386 = vpack.c.b16 %v1191, %v1164
  %v1387 = vpack.c.b16 %v1192, %v1165
  %v1388 = vpack.c.b16 %v1193, %v1166
  %v1389 = vpack.c.b16 %v1194, %v1191
  %v1390 = vpack.c.b16 %v1195, %v1192
  %v1391 = vpack.c.b16 %v1196, %v1193
  %v1392 = vpack.c.b16 %v1197, %v1194
  %v1393 = vpack.c.b16 %v1198, %v1195
  %v1394 = vpack.c.b16 %v1199, %v1196
  %v1395 = vpack.c.b16 %v1200, %v1197
  %v1396 = vpack.c.b16 %v1201, %v1198
  %v1397 = vpack.c.b16 %v1202, %v1199
  %v1398 = vpack.c.b16 %v1203, %v1200
  %v1399 = vpack.c.b16 %v1204, %v1201
  %v1400 = vpack.c.b16 %v1205, %v1202
  %v1401 = vpack.c.b16 %v1206, %v1203
  %v1402 = vpack.c.b16 %v1207, %v1204
  %v1403 = vpack.c.b16 %v1208, %v1205
  %v1404 = vpack.c.b16 %v1209, %v1206
  %v1405 = vpack.c.b16 %v1210, %v1207
  %v1406 = vpack.c.b16 %v1211, %v1208
  %v1407 = vpack.c.b16 %v1212, %v1209
  %v1408 = vpack.c.b16 %v1213, %v1210
  %v1409 = vpack.c.b16 %v1214, %v1211
  %v1410 = vpack.c.b16 %v1164, %v1212
  %v1411 = vpack.c.b16 %v1165, %v1213
  %v1412 = vpack.c.b16 %v1166, %v1214
  %v1611 = vunpack.c.l.b16 %v1215
  %v1612 = vunpack.c.l.b16 %v1216
  %v1613 = vunpack.c.l.b16 %v1217
  %v1614 = vunpack.c.l.b16 %v1218
  %v1615 = vunpack.c.l.b16 %v1219
  %v1616 = vunpack.c.l.b16 %v1220
  %v1617 = vunpack.c.l.b16 %v1221
  %v1618 = vunpack.c.l.b16 %v1222
  %v1619 = vunpack.c.l.b16 %v1223
  %v1620 = vunpack.c.l.b16 %v1224
  %v1621 = vunpack.c.l.b16 %v1225
  %v1622 = vunpack.c.l.b16 %v1226
  %v1623 = vunpack.c.l.b16 %v1227
  %v1624 = vunpack.c.l.b16 %v1228
  %v1625 = vunpack.c.l.b16 %v1229
  %v1626 = vunpack.c.l.b16 %v1230
  %v1627 = vunpack.c.l.b16 %v1231
  %v1628 = vunpack.c.l.b16 %v1232
  %v1629 = vunpack.c.l.b16 %v1233
  %v1630 = vunpack.c.l.b16 %v1234
  %v1631 = vunpack.c.l.b16 %v1235
  %v1632 = vunpack.c.l.b16 %v1236
  %v1633 = vunpack.c.l.b16 %v1237
  %v1634 = vunpack.c.l.b16 %v1238
  %v1635 = vunpack.c.l.b16 %v1239
  %v1636 = vunpack.c.l.b16 %v1240
  %v1637 = vunpack.c.l.b16 %v1241
  %v1638 = vunpack.c.l.b16 %v1242
  %v1639 = vunpack.c.l.b16 %v1243
  %v1640 = vunpack.c.l.b16 %v1244
  %v1641 = vunpack.c.l.b16 %v1245
  %v1642 = vunpack.c.l.b16 %v1246
  %v1643 = vunpack.c.l.b16 %v1247
  %v1644 = vunpack.c.l.b16 %v1248
  %v1645 = vunpack.c.l.b16 %v1249
  %v1646 = vunpack.c.l.b16 %v1250
  %v1647 = vunpack.c.l.b16 %v1251
  %v1648 = vunpack.c.l.b16 %v1252
  %v1649 = vunpack.c.l.b16 %v1253
  %v1650 = vunpack.c.l.b16 %v1254
  %v1651 = vunpack.c.l.b16 %v1255
  %v1652 = vunpack.c.l.b16 %v1256
  %v1653 = vunpack.c.l.b16 %v1257
  %v1654 = vunpack.c.l.b16 %v1258
  %v1655 = vunpack.c.l.b16 %v1259
  %v1656 = vunpack.c.l.b16 %v1260
  %v1657 = vunpack.c.l.b16 %v1261
  %v1658 = vunpack.c.l.b16 %v1262
  %v1659 = vunpack.c.l.b16 %v1263
  %v1660 = vunpack.c.l.b16 %v1264
  %v1661 = vunpack.c.l.b16 %v1265
  %v1662 = vunpack.c.l.b16 %v1266
  %v1663 = vunpack.c.l.b16 %v1267
  %v1664 = vunpack.c.l.b16 %v1268
  %v1665 = vunpack.c.l.b16 %v1269
  %v1666 = vunpack.c.l.b16 %v1270
  %v1667 = vunpack.c.l.b16 %v1271
  %v1668 = vunpack.c.l.b16 %v1272
  %v1669 = vunpack.c.l.b16 %v1273
  %v1670 = vunpack.c.l.b16 %v1274
  %v1671 = vunpack.c.l.b16 %v1275
  %v1672 = vunpack.c.l.b16 %v1276
  %v1673 = vunpack.c.l.b16 %v1277
  %v1674 = vunpack.c.l.b16 %v1278
  %v1675 = vunpack.c.l.b16 %v1279
  %v1676 = vunpack.c.l.b16 %v1280
  %v1677 = vunpack.c.l.b16 %v1281
  %v1678 = vunpack.c.l.b16 %v1282
  %v1679 = vunpack.c.l.b16 %v1283
  %v1680 = vunpack.c.l.b16 %v1284
  %v1681 = vunpack.c.l.b16 %v1285
  %v1682 = vunpack.c.l.b16 %v1286
  %v1683 = vunpack.c.l.b16 %v1287
  %v1684 = vunpack.c.l.b16 %v1288
  %v1685 = vunpack.c.l.b16 %v1289
  %v1686 = vunpack.c.l.b16 %v1290
  %v1687 = vunpack.c.l.b16 %v1291
  %v1688 = vunpack.c.l.b16 %v1292
  %v1689 = vunpack.c.l.b16 %v1293
  %v1690 = vunpack.c.l.b16 %v1294
  %v1691 = vunpack.c.l.b16 %v1295
  %v1692 = vunpack.c.l.b16 %v1296
  %v1693 = vunpack.c.l.b16 %v1297
  %v1694 = vunpack.c.l.b16 %v1298
  %v1695 = vunpack.c.l.b16 %v1299
  %v1696 = vunpack.c.l.b16 %v1300
  %v1697 = vunpack.c.l.b16 %v1301
  %v1698 = vunpack.c.l.b16 %v1302
  %v1699 = vunpack.c.l.b16 %v1303
  %v1700 = vunpack.c.l.b16 %v1304
  %v1701 = vunpack.c.l.b16 %v1305
  %v1702 = vunpack.c.l.b16 %v1306
  %v1703 = vunpack.c.l.b16 %v1307
  %v1704 = vunpack.c.l.b16 %v1308
  %v1705 = vunpack.c.l.b16 %v1309
  %v1706 = vunpack.c.l.b16 %v1310
  %v1707 = vunpack.c.l.b16 %v1311
  %v1708 = vunpack.c.l.b16 %v1312
  %v1709 = vunpack.c.l.b16 %v1313
  %v1710 = vunpack.c.l.b16 %v1314
  %v1711 = vunpack.c.l.b16 %v1315
  %v1712 = vunpack.c.l.b16 %v1316
  %v1713 = vunpack.c.l.b16 %v1317
  %v1714 = vunpack.c.l.b16 %v1318
  %v1715 = vunpack.c.l.b16 %v1319
  %v1716 = vunpack.c.l.b16 %v1320
  %v1717 = vunpack.c.l.b16 %v1321
  %v1718 = vunpack.c.l.b16 %v1322
  %v1719 = vunpack.c.l.b16 %v1323
  %v1720 = vunpack.c.l.b16 %v1324
  %v1721 = vunpack.c.l.b16 %v1325
  %v1722 = vunpack.c.l.b16 %v1326
  %v1723 = vunpack.c.l.b16 %v1327
  %v1724 = vunpack.c.l.b16 %v1328
  %v1725 = vunpack.c.l.b16 %v1329
  %v1726 = vunpack.c.l.b16 %v1330
  %v1727 = vunpack.c.l.b16 %v1331
  %v1728 = vunpack.c.l.b16 %v1332
  %v1729 = vunpack.c.l.b16 %v1333
  %v1730 = vunpack.c.l.b16 %v1334
  %v1731 = vunpack.c.l.b16 %v1335
  %v1732 = vunpack.c.l.b16 %v1336
  %v1733 = vunpack.c.l.b16 %v1337
  %v1734 = vunpack.c.l.b16 %v1338
  %v1735 = vunpack.c.l.b16 %v1339
  %v1736 = vunpack.c.l.b16 %v1340
  %v1737 = vunpack.c.l.b16 %v1341
  %v1738 = vunpack.c.l.b16 %v1342
  %v1739 = vunpack.c.l.b16 %v1343
  %v1740 = vunpack.c.l.b16 %v1344
  %v1741 = vunpack.c.l.b16 %v1345
  %v1742 = vunpack.c.l.b16 %v1346
  %v1743 = vunpack.c.l.b16 %v1347
  %v1744 = vunpack.c.l.b16 %v1348
  %v1745 = vunpack.c.l.b16 %v1349
  %v1746 = vunpack.c.l.b16 %v1350
  %v1747 = vunpack.c.l.b16 %v1351
  %v1748 = vunpack.c.l.b16 %v1352
  %v1749 = vunpack.c.l.b16 %v1353
  %v1750 = vunpack.c.l.b16 %v1354
  %v1751 = vunpack.c.l.b16 %v1355
  %v1752 = vunpack.c.l.b16 %v1356
  %v1753 = vunpack.c.l.b16 %v1357
  %v1754 = vunpack.c.l.b16 %v1358
  %v1755 = vpack.c.b16 %v1612, %v1611
  %v1756 = vpack.c.b16 %v1614, %v1613
  %v1757 = vpack.c.b16 %v1616, %v1615
  %v1758 = vpack.c.b16 %v1618, %v1617
  %v1759 = vpack.c.b16 %v1620, %v1619
  %v1760 = vpack.c.b16 %v1622, %v1621
  %v1761 = vpack.c.b16 %v1624, %v1623
  %v1762 = vpack.c.b16 %v1626, %v1625
  %v1763 = vpack.c.b16 %v1628, %v1627
  %v1764 = vpack.c.b16 %v1630, %v1629
  %v1765 = vpack.c.b16 %v1632, %v1631
  %v1766 = vpack.c.b16 %v1634, %v1633
  %v1767 = vpack.c.b16 %v1636, %v1635
  %v1768 = vpack.c.b16 %v1638, %v1637
  %v1769 = vpack.c.b16 %v1640, %v1639
  %v1770 = vpack.c.b16 %v1642, %v1641
  %v1771 = vpack.c.b16 %v1644, %v1643
  %v1772 = vpack.c.b16 %v1646, %v1645
  %v1773 = vpack.c.b16 %v1648, %v1647
  %v1774 = vpack.c.b16 %v1650, %v1649
  %v1775 = vpack.c.b16 %v1652, %v1651
  %v1776 = vpack.c.b16 %v1654, %v1653
  %v1777 = vpack.c.b16 %v1656, %v1655
  %v1778 = vpack.c.b16 %v1658, %v1657
  %v1779 = vpack.c.b16 %v1660, %v1659
  %v1780 = vpack.c.b16 %v1662, %v1661
  %v1781 = vpack.c.b16 %v1664, %v1663
  %v1782 = vpack.c.b16 %v1666, %v1665
  %v1783 = vpack.c.b16 %v1668, %v1667
  %v1784 = vpack.c.b16 %v1670, %v1669
  %v1785 = vpack.c.b16 %v1672, %v1671
  %v1786 = vpack.c.b16 %v1674, %v1673
  %v1787 = vpack.c.b16 %v1676, %v1675
  %v1788 = vpack.c.b16 %v1678, %v1677
  %v1789 = vpack.c.b16 %v1680, %v1679
  %v1790 = vpack.c.b16 %v1682, %v1681
  %v1791 = vpack.c.b16 %v1684, %v1683
  %v1792 = vpack.c.b16 %v1686, %v1685
  %v1793 = vpack.c.b16 %v1688, %v1687
  %v1794 = vpack.c.b16 %v1690, %v1689
  %v1795 = vpack.c.b16 %v1692, %v1691
  %v1796 = vpack.c.b16 %v1694, %v1693
  %v1797 = vpack.c.b16 %v1696, %v1695
  %v1798 = vpack.c.b16 %v1698, %v1697
  %v1799 = vpack.c.b16 %v1700, %v1699
  %v1800 = vpack.c.b16 %v1702, %v1701
  %v1801 = vpack.c.b16 %v1704, %v1703
  %v1802 = vpack.c.b16 %v1706, %v1705
  %v1803 = vpack.c.b16 %v1708, %v1707
  %v1804 = vpack.c.b16 %v1710, %v1709
  %v1805 = vpack.c.b16 %v1712, %v1711
  %v1806 = vpack.c.b16 %v1714, %v1713
  %v1807 = vpack.c.b16 %v1716, %v1715
  %v1808 = vpack.c.b16 %v1718, %v1717
  %v1809 = vpack.c.b16 %v1720, %v1719
  %v1810 = vpack.c.b16 %v1722, %v1721
  %v1811 = vpack.c.b16 %v1724, %v1723
  %v1812 = vpack.c.b16 %v1726, %v1725
  %v1813 = vpack.c.b16 %v1728, %v1727
  %v1814 = vpack.c.b16 %v1730, %v1729
  %v1815 = vpack.c.b16 %v1732, %v1731
  %v1816 = vpack.c.b16 %v1734, %v1733
  %v1817 = vpack.c.b16 %v1736, %v1735
  %v1818 = vpack.c.b16 %v1738, %v1737
  %v1819 = vpack.c.b16 %v1740, %v1739
  %v1820 = vpack.c.b16 %v1742, %v1741
  %v1821 = vpack.c.b16 %v1744, %v1743
  %v1822 = vpack.c.b16 %v1746, %v1745
  %v1823 = vpack.c.b16 %v1748, %v1747
  %v1824 = vpack.c.b16 %v1750, %v1749
  %v1825 = vpack.c.b16 %v1752, %v1751
  %v1826 = vpack.c.b16 %v1754, %v1753
  %1899 = vmatpush.bf16.msra.mxu0 %v1762
  %1900 = vmatpush.bf16.msra.mxu0 %v1761
  %1901 = vmatpush.bf16.msra.mxu0 %v1760
  %1902 = vmatpush.bf16.msra.mxu0 %v1759
  %1903 = vmatpush.bf16.msra.mxu0 %v1758
  %1904 = vmatpush.bf16.msra.mxu0 %v1757
  %1905 = vmatpush.bf16.msra.mxu0 %v1756
  %1906 = vmatpush.bf16.msra.mxu0 %v1755
  %1907 = vmatmul.bf16.gmra.mxu0 %v1359
  %v1908 = vpop.f32.mrf.mxu0
  %v1909 = vadd.f32 0.0, %v1908
  %v1910 = vpop.f32.mrf.mxu0
  %v1911 = vadd.f32 0.0, %v1910
  %1912 = vmatmul.bf16.gmra.mxu0 %v1365
  %v1913 = vpop.f32.mrf.mxu0
  %v1914 = vadd.f32 0.0, %v1913
  %v1915 = vpop.f32.mrf.mxu0
  %v1916 = vadd.f32 0.0, %v1915
  %1917 = vmatmul.bf16.gmra.mxu0 %v1371
  %v1918 = vpop.f32.mrf.mxu0
  %v1919 = vadd.f32 0.0, %v1918
  %v1920 = vpop.f32.mrf.mxu0
  %v1921 = vadd.f32 0.0, %v1920
  %1922 = vmatmul.bf16.gmra.mxu0 %v1377
  %v1923 = vpop.f32.mrf.mxu0
  %v1924 = vadd.f32 0.0, %v1923
  %v1925 = vpop.f32.mrf.mxu0
  %v1926 = vadd.f32 0.0, %v1925
  %1927 = vmatmul.bf16.gmra.mxu0 %v1386
  %v1928 = vpop.f32.mrf.mxu0
  %v1929 = vadd.f32 0.0, %v1928
  %v1930 = vpop.f32.mrf.mxu0
  %v1931 = vadd.f32 0.0, %v1930
  %1932 = vmatmul.bf16.gmra.mxu0 %v1392
  %v1933 = vpop.f32.mrf.mxu0
  %v1934 = vadd.f32 0.0, %v1933
  %v1935 = vpop.f32.mrf.mxu0
  %v1936 = vadd.f32 0.0, %v1935
  %1937 = vmatmul.bf16.gmra.mxu0 %v1398
  %v1938 = vpop.f32.mrf.mxu0
  %v1939 = vadd.f32 0.0, %v1938
  %v1940 = vpop.f32.mrf.mxu0
  %v1941 = vadd.f32 0.0, %v1940
  %1942 = vmatmul.bf16.gmra.mxu0 %v1404
  %v1943 = vpop.f32.mrf.mxu0
  %v1944 = vadd.f32 0.0, %v1943
  %v1945 = vpop.f32.mrf.mxu0
  %v1946 = vadd.f32 0.0, %v1945
  %1947 = vdwg.mxu0
  %1948 = vmatpush.bf16.msra.mxu0 %v1770
  %1949 = vmatpush.bf16.msra.mxu0 %v1769
  %1950 = vmatpush.bf16.msra.mxu0 %v1768
  %1951 = vmatpush.bf16.msra.mxu0 %v1767
  %1952 = vmatpush.bf16.msra.mxu0 %v1766
  %1953 = vmatpush.bf16.msra.mxu0 %v1765
  %1954 = vmatpush.bf16.msra.mxu0 %v1764
  %1955 = vmatpush.bf16.msra.mxu0 %v1763
  %1956 = vmatmul.bf16.gmra.mxu0 %v1360
  %v1957 = vpop.f32.mrf.mxu0
  %v1958 = vadd.f32 %v1909, %v1957
  %v1959 = vpop.f32.mrf.mxu0
  %v1960 = vadd.f32 %v1911, %v1959
  %1961 = vmatmul.bf16.gmra.mxu0 %v1366
  %v1962 = vpop.f32.mrf.mxu0
  %v1963 = vadd.f32 %v1914, %v1962
  %v1964 = vpop.f32.mrf.mxu0
  %v1965 = vadd.f32 %v1916, %v1964
  %1966 = vmatmul.bf16.gmra.mxu0 %v1372
  %v1967 = vpop.f32.mrf.mxu0
  %v1968 = vadd.f32 %v1919, %v1967
  %v1969 = vpop.f32.mrf.mxu0
  %v1970 = vadd.f32 %v1921, %v1969
  %1971 = vmatmul.bf16.gmra.mxu0 %v1378
  %v1972 = vpop.f32.mrf.mxu0
  %v1973 = vadd.f32 %v1924, %v1972
  %v1974 = vpop.f32.mrf.mxu0
  %v1975 = vadd.f32 %v1926, %v1974
  %1976 = vmatmul.bf16.gmra.mxu0 %v1387
  %v1977 = vpop.f32.mrf.mxu0
  %v1978 = vadd.f32 %v1929, %v1977
  %v1979 = vpop.f32.mrf.mxu0
  %v1980 = vadd.f32 %v1931, %v1979
  %1981 = vmatmul.bf16.gmra.mxu0 %v1393
  %v1982 = vpop.f32.mrf.mxu0
  %v1983 = vadd.f32 %v1934, %v1982
  %v1984 = vpop.f32.mrf.mxu0
  %v1985 = vadd.f32 %v1936, %v1984
  %1986 = vmatmul.bf16.gmra.mxu0 %v1399
  %v1987 = vpop.f32.mrf.mxu0
  %v1988 = vadd.f32 %v1939, %v1987
  %v1989 = vpop.f32.mrf.mxu0
  %v1990 = vadd.f32 %v1941, %v1989
  %1991 = vmatmul.bf16.gmra.mxu0 %v1405
  %v1992 = vpop.f32.mrf.mxu0
  %v1993 = vadd.f32 %v1944, %v1992
  %v1994 = vpop.f32.mrf.mxu0
  %v1995 = vadd.f32 %v1946, %v1994
  %1996 = vdwg.mxu0
  %1997 = vmatpush.bf16.msra.mxu0 %v1778
  %1998 = vmatpush.bf16.msra.mxu0 %v1777
  %1999 = vmatpush.bf16.msra.mxu0 %v1776
  %2000 = vmatpush.bf16.msra.mxu0 %v1775
  %2001 = vmatpush.bf16.msra.mxu0 %v1774
  %2002 = vmatpush.bf16.msra.mxu0 %v1773
  %2003 = vmatpush.bf16.msra.mxu0 %v1772
  %2004 = vmatpush.bf16.msra.mxu0 %v1771
  %2005 = vmatmul.bf16.gmra.mxu0 %v1361
  %v2006 = vpop.f32.mrf.mxu0
  %v2007 = vadd.f32 %v1958, %v2006
  %v2008 = vpop.f32.mrf.mxu0
  %v2009 = vadd.f32 %v1960, %v2008
  %2010 = vmatmul.bf16.gmra.mxu0 %v1367
  %v2011 = vpop.f32.mrf.mxu0
  %v2012 = vadd.f32 %v1963, %v2011
  %v2013 = vpop.f32.mrf.mxu0
  %v2014 = vadd.f32 %v1965, %v2013
  %2015 = vmatmul.bf16.gmra.mxu0 %v1373
  %v2016 = vpop.f32.mrf.mxu0
  %v2017 = vadd.f32 %v1968, %v2016
  %v2018 = vpop.f32.mrf.mxu0
  %v2019 = vadd.f32 %v1970, %v2018
  %2020 = vmatmul.bf16.gmra.mxu0 %v1379
  %v2021 = vpop.f32.mrf.mxu0
  %v2022 = vadd.f32 %v1973, %v2021
  %v2023 = vpop.f32.mrf.mxu0
  %v2024 = vadd.f32 %v1975, %v2023
  %2025 = vmatmul.bf16.gmra.mxu0 %v1388
  %v2026 = vpop.f32.mrf.mxu0
  %v2027 = vadd.f32 %v1978, %v2026
  %v2028 = vpop.f32.mrf.mxu0
  %v2029 = vadd.f32 %v1980, %v2028
  %2030 = vmatmul.bf16.gmra.mxu0 %v1394
  %v2031 = vpop.f32.mrf.mxu0
  %v2032 = vadd.f32 %v1983, %v2031
  %v2033 = vpop.f32.mrf.mxu0
  %v2034 = vadd.f32 %v1985, %v2033
  %2035 = vmatmul.bf16.gmra.mxu0 %v1400
  %v2036 = vpop.f32.mrf.mxu0
  %v2037 = vadd.f32 %v1988, %v2036
  %v2038 = vpop.f32.mrf.mxu0
  %v2039 = vadd.f32 %v1990, %v2038
  %2040 = vmatmul.bf16.gmra.mxu0 %v1406
  %v2041 = vpop.f32.mrf.mxu0
  %v2042 = vadd.f32 %v1993, %v2041
  %v2043 = vpop.f32.mrf.mxu0
  %v2044 = vadd.f32 %v1995, %v2043
  %2045 = vdwg.mxu0
  %2046 = vmatpush.bf16.msra.mxu0 %v1786
  %2047 = vmatpush.bf16.msra.mxu0 %v1785
  %2048 = vmatpush.bf16.msra.mxu0 %v1784
  %2049 = vmatpush.bf16.msra.mxu0 %v1783
  %2050 = vmatpush.bf16.msra.mxu0 %v1782
  %2051 = vmatpush.bf16.msra.mxu0 %v1781
  %2052 = vmatpush.bf16.msra.mxu0 %v1780
  %2053 = vmatpush.bf16.msra.mxu0 %v1779
  %2054 = vmatmul.bf16.gmra.mxu0 %v1362
  %v2055 = vpop.f32.mrf.mxu0
  %v2056 = vadd.f32 %v2007, %v2055
  %v2057 = vpop.f32.mrf.mxu0
  %v2058 = vadd.f32 %v2009, %v2057
  %2059 = vmatmul.bf16.gmra.mxu0 %v1368
  %v2060 = vpop.f32.mrf.mxu0
  %v2061 = vadd.f32 %v2012, %v2060
  %v2062 = vpop.f32.mrf.mxu0
  %v2063 = vadd.f32 %v2014, %v2062
  %2064 = vmatmul.bf16.gmra.mxu0 %v1374
  %v2065 = vpop.f32.mrf.mxu0
  %v2066 = vadd.f32 %v2017, %v2065
  %v2067 = vpop.f32.mrf.mxu0
  %v2068 = vadd.f32 %v2019, %v2067
  %2069 = vmatmul.bf16.gmra.mxu0 %v1380
  %v2070 = vpop.f32.mrf.mxu0
  %v2071 = vadd.f32 %v2022, %v2070
  %v2072 = vpop.f32.mrf.mxu0
  %v2073 = vadd.f32 %v2024, %v2072
  %2074 = vmatmul.bf16.gmra.mxu0 %v1389
  %v2075 = vpop.f32.mrf.mxu0
  %v2076 = vadd.f32 %v2027, %v2075
  %v2077 = vpop.f32.mrf.mxu0
  %v2078 = vadd.f32 %v2029, %v2077
  %2079 = vmatmul.bf16.gmra.mxu0 %v1395
  %v2080 = vpop.f32.mrf.mxu0
  %v2081 = vadd.f32 %v2032, %v2080
  %v2082 = vpop.f32.mrf.mxu0
  %v2083 = vadd.f32 %v2034, %v2082
  %2084 = vmatmul.bf16.gmra.mxu0 %v1401
  %v2085 = vpop.f32.mrf.mxu0
  %v2086 = vadd.f32 %v2037, %v2085
  %v2087 = vpop.f32.mrf.mxu0
  %v2088 = vadd.f32 %v2039, %v2087
  %2089 = vmatmul.bf16.gmra.mxu0 %v1407
  %v2090 = vpop.f32.mrf.mxu0
  %v2091 = vadd.f32 %v2042, %v2090
  %v2092 = vpop.f32.mrf.mxu0
  %v2093 = vadd.f32 %v2044, %v2092
  %2094 = vdwg.mxu0
  %2095 = vmatpush.bf16.msra.mxu0 %v1794
  %2096 = vmatpush.bf16.msra.mxu0 %v1793
  %2097 = vmatpush.bf16.msra.mxu0 %v1792
  %2098 = vmatpush.bf16.msra.mxu0 %v1791
  %2099 = vmatpush.bf16.msra.mxu0 %v1790
  %2100 = vmatpush.bf16.msra.mxu0 %v1789
  %2101 = vmatpush.bf16.msra.mxu0 %v1788
  %2102 = vmatpush.bf16.msra.mxu0 %v1787
  %2103 = vmatmul.bf16.gmra.mxu0 %v1363
  %v2104 = vpop.f32.mrf.mxu0
  %v2105 = vadd.f32 %v2056, %v2104
  %v2106 = vpop.f32.mrf.mxu0
  %v2107 = vadd.f32 %v2058, %v2106
  %2108 = vmatmul.bf16.gmra.mxu0 %v1369
  %v2109 = vpop.f32.mrf.mxu0
  %v2110 = vadd.f32 %v2061, %v2109
  %v2111 = vpop.f32.mrf.mxu0
  %v2112 = vadd.f32 %v2063, %v2111
  %2113 = vmatmul.bf16.gmra.mxu0 %v1375
  %v2114 = vpop.f32.mrf.mxu0
  %v2115 = vadd.f32 %v2066, %v2114
  %v2116 = vpop.f32.mrf.mxu0
  %v2117 = vadd.f32 %v2068, %v2116
  %2118 = vmatmul.bf16.gmra.mxu0 %v1381
  %v2119 = vpop.f32.mrf.mxu0
  %v2120 = vadd.f32 %v2071, %v2119
  %v2121 = vpop.f32.mrf.mxu0
  %v2122 = vadd.f32 %v2073, %v2121
  %2123 = vmatmul.bf16.gmra.mxu0 %v1390
  %v2124 = vpop.f32.mrf.mxu0
  %v2125 = vadd.f32 %v2076, %v2124
  %v2126 = vpop.f32.mrf.mxu0
  %v2127 = vadd.f32 %v2078, %v2126
  %2128 = vmatmul.bf16.gmra.mxu0 %v1396
  %v2129 = vpop.f32.mrf.mxu0
  %v2130 = vadd.f32 %v2081, %v2129
  %v2131 = vpop.f32.mrf.mxu0
  %v2132 = vadd.f32 %v2083, %v2131
  %2133 = vmatmul.bf16.gmra.mxu0 %v1402
  %v2134 = vpop.f32.mrf.mxu0
  %v2135 = vadd.f32 %v2086, %v2134
  %v2136 = vpop.f32.mrf.mxu0
  %v2137 = vadd.f32 %v2088, %v2136
  %2138 = vmatmul.bf16.gmra.mxu0 %v1408
  %v2139 = vpop.f32.mrf.mxu0
  %v2140 = vadd.f32 %v2091, %v2139
  %v2141 = vpop.f32.mrf.mxu0
  %v2142 = vadd.f32 %v2093, %v2141
  %2143 = vdwg.mxu0
  %2144 = vmatpush.bf16.msra.mxu0 %v1802
  %2145 = vmatpush.bf16.msra.mxu0 %v1801
  %2146 = vmatpush.bf16.msra.mxu0 %v1800
  %2147 = vmatpush.bf16.msra.mxu0 %v1799
  %2148 = vmatpush.bf16.msra.mxu0 %v1798
  %2149 = vmatpush.bf16.msra.mxu0 %v1797
  %2150 = vmatpush.bf16.msra.mxu0 %v1796
  %2151 = vmatpush.bf16.msra.mxu0 %v1795
  %2152 = vmatmul.bf16.gmra.mxu0 %v1364
  %v2153 = vpop.f32.mrf.mxu0
  %v2154 = vadd.f32 %v2105, %v2153
  %v2155 = vpop.f32.mrf.mxu0
  %v2156 = vadd.f32 %v2107, %v2155
  %2157 = vmatmul.bf16.gmra.mxu0 %v1370
  %v2158 = vpop.f32.mrf.mxu0
  %v2159 = vadd.f32 %v2110, %v2158
  %v2160 = vpop.f32.mrf.mxu0
  %v2161 = vadd.f32 %v2112, %v2160
  %2162 = vmatmul.bf16.gmra.mxu0 %v1376
  %v2163 = vpop.f32.mrf.mxu0
  %v2164 = vadd.f32 %v2115, %v2163
  %v2165 = vpop.f32.mrf.mxu0
  %v2166 = vadd.f32 %v2117, %v2165
  %2167 = vmatmul.bf16.gmra.mxu0 %v1382
  %v2168 = vpop.f32.mrf.mxu0
  %v2169 = vadd.f32 %v2120, %v2168
  %v2170 = vpop.f32.mrf.mxu0
  %v2171 = vadd.f32 %v2122, %v2170
  %2172 = vmatmul.bf16.gmra.mxu0 %v1391
  %v2173 = vpop.f32.mrf.mxu0
  %v2174 = vadd.f32 %v2125, %v2173
  %v2175 = vpop.f32.mrf.mxu0
  %v2176 = vadd.f32 %v2127, %v2175
  %2177 = vmatmul.bf16.gmra.mxu0 %v1397
  %v2178 = vpop.f32.mrf.mxu0
  %v2179 = vadd.f32 %v2130, %v2178
  %v2180 = vpop.f32.mrf.mxu0
  %v2181 = vadd.f32 %v2132, %v2180
  %2182 = vmatmul.bf16.gmra.mxu0 %v1403
  %v2183 = vpop.f32.mrf.mxu0
  %v2184 = vadd.f32 %v2135, %v2183
  %v2185 = vpop.f32.mrf.mxu0
  %v2186 = vadd.f32 %v2137, %v2185
  %2187 = vmatmul.bf16.gmra.mxu0 %v1409
  %v2188 = vpop.f32.mrf.mxu0
  %v2189 = vadd.f32 %v2140, %v2188
  %v2190 = vpop.f32.mrf.mxu0
  %v2191 = vadd.f32 %v2142, %v2190
  %2192 = vdwg.mxu0
  %2193 = vmatpush.bf16.msra.mxu0 %v1810
  %2194 = vmatpush.bf16.msra.mxu0 %v1809
  %2195 = vmatpush.bf16.msra.mxu0 %v1808
  %2196 = vmatpush.bf16.msra.mxu0 %v1807
  %2197 = vmatpush.bf16.msra.mxu0 %v1806
  %2198 = vmatpush.bf16.msra.mxu0 %v1805
  %2199 = vmatpush.bf16.msra.mxu0 %v1804
  %2200 = vmatpush.bf16.msra.mxu0 %v1803
  %2201 = vmatmul.bf16.gmra.mxu0 %v1365
  %v2202 = vpop.f32.mrf.mxu0
  %v2203 = vadd.f32 %v2154, %v2202
  %v2204 = vpop.f32.mrf.mxu0
  %v2205 = vadd.f32 %v2156, %v2204
  %2206 = vmatmul.bf16.gmra.mxu0 %v1371
  %v2207 = vpop.f32.mrf.mxu0
  %v2208 = vadd.f32 %v2159, %v2207
  %v2209 = vpop.f32.mrf.mxu0
  %v2210 = vadd.f32 %v2161, %v2209
  %2211 = vmatmul.bf16.gmra.mxu0 %v1377
  %v2212 = vpop.f32.mrf.mxu0
  %v2213 = vadd.f32 %v2164, %v2212
  %v2214 = vpop.f32.mrf.mxu0
  %v2215 = vadd.f32 %v2166, %v2214
  %2216 = vmatmul.bf16.gmra.mxu0 %v1383
  %v2217 = vpop.f32.mrf.mxu0
  %v2218 = vadd.f32 %v2169, %v2217
  %v2219 = vpop.f32.mrf.mxu0
  %v2220 = vadd.f32 %v2171, %v2219
  %2221 = vmatmul.bf16.gmra.mxu0 %v1392
  %v2222 = vpop.f32.mrf.mxu0
  %v2223 = vadd.f32 %v2174, %v2222
  %v2224 = vpop.f32.mrf.mxu0
  %v2225 = vadd.f32 %v2176, %v2224
  %2226 = vmatmul.bf16.gmra.mxu0 %v1398
  %v2227 = vpop.f32.mrf.mxu0
  %v2228 = vadd.f32 %v2179, %v2227
  %v2229 = vpop.f32.mrf.mxu0
  %v2230 = vadd.f32 %v2181, %v2229
  %2231 = vmatmul.bf16.gmra.mxu0 %v1404
  %v2232 = vpop.f32.mrf.mxu0
  %v2233 = vadd.f32 %v2184, %v2232
  %v2234 = vpop.f32.mrf.mxu0
  %v2235 = vadd.f32 %v2186, %v2234
  %2236 = vmatmul.bf16.gmra.mxu0 %v1410
  %v2237 = vpop.f32.mrf.mxu0
  %v2238 = vadd.f32 %v2189, %v2237
  %v2239 = vpop.f32.mrf.mxu0
  %v2240 = vadd.f32 %v2191, %v2239
  %2241 = vdwg.mxu0
  %2242 = vmatpush.bf16.msra.mxu0 %v1818
  %2243 = vmatpush.bf16.msra.mxu0 %v1817
  %2244 = vmatpush.bf16.msra.mxu0 %v1816
  %2245 = vmatpush.bf16.msra.mxu0 %v1815
  %2246 = vmatpush.bf16.msra.mxu0 %v1814
  %2247 = vmatpush.bf16.msra.mxu0 %v1813
  %2248 = vmatpush.bf16.msra.mxu0 %v1812
  %2249 = vmatpush.bf16.msra.mxu0 %v1811
  %2250 = vmatmul.bf16.gmra.mxu0 %v1366
  %v2251 = vpop.f32.mrf.mxu0
  %v2252 = vadd.f32 %v2203, %v2251
  %v2253 = vpop.f32.mrf.mxu0
  %v2254 = vadd.f32 %v2205, %v2253
  %2255 = vmatmul.bf16.gmra.mxu0 %v1372
  %v2256 = vpop.f32.mrf.mxu0
  %v2257 = vadd.f32 %v2208, %v2256
  %v2258 = vpop.f32.mrf.mxu0
  %v2259 = vadd.f32 %v2210, %v2258
  %2260 = vmatmul.bf16.gmra.mxu0 %v1378
  %v2261 = vpop.f32.mrf.mxu0
  %v2262 = vadd.f32 %v2213, %v2261
  %v2263 = vpop.f32.mrf.mxu0
  %v2264 = vadd.f32 %v2215, %v2263
  %2265 = vmatmul.bf16.gmra.mxu0 %v1384
  %v2266 = vpop.f32.mrf.mxu0
  %v2267 = vadd.f32 %v2218, %v2266
  %v2268 = vpop.f32.mrf.mxu0
  %v2269 = vadd.f32 %v2220, %v2268
  %2270 = vmatmul.bf16.gmra.mxu0 %v1393
  %v2271 = vpop.f32.mrf.mxu0
  %v2272 = vadd.f32 %v2223, %v2271
  %v2273 = vpop.f32.mrf.mxu0
  %v2274 = vadd.f32 %v2225, %v2273
  %2275 = vmatmul.bf16.gmra.mxu0 %v1399
  %v2276 = vpop.f32.mrf.mxu0
  %v2277 = vadd.f32 %v2228, %v2276
  %v2278 = vpop.f32.mrf.mxu0
  %v2279 = vadd.f32 %v2230, %v2278
  %2280 = vmatmul.bf16.gmra.mxu0 %v1405
  %v2281 = vpop.f32.mrf.mxu0
  %v2282 = vadd.f32 %v2233, %v2281
  %v2283 = vpop.f32.mrf.mxu0
  %v2284 = vadd.f32 %v2235, %v2283
  %2285 = vmatmul.bf16.gmra.mxu0 %v1411
  %v2286 = vpop.f32.mrf.mxu0
  %v2287 = vadd.f32 %v2238, %v2286
  %v2288 = vpop.f32.mrf.mxu0
  %v2289 = vadd.f32 %v2240, %v2288
  %2290 = vdwg.mxu0
  %2291 = vmatpush.bf16.msra.mxu0 %v1826
  %2292 = vmatpush.bf16.msra.mxu0 %v1825
  %2293 = vmatpush.bf16.msra.mxu0 %v1824
  %2294 = vmatpush.bf16.msra.mxu0 %v1823
  %2295 = vmatpush.bf16.msra.mxu0 %v1822
  %2296 = vmatpush.bf16.msra.mxu0 %v1821
  %2297 = vmatpush.bf16.msra.mxu0 %v1820
  %2298 = vmatpush.bf16.msra.mxu0 %v1819
  %2299 = vmatmul.bf16.gmra.mxu0 %v1367
  %v2300 = vpop.f32.mrf.mxu0
  %v2301 = vadd.f32 %v2252, %v2300
  %v2302 = vpop.f32.mrf.mxu0
  %v2303 = vadd.f32 %v2254, %v2302
  %2304 = vmatmul.bf16.gmra.mxu0 %v1373
  %v2305 = vpop.f32.mrf.mxu0
  %v2306 = vadd.f32 %v2257, %v2305
  %v2307 = vpop.f32.mrf.mxu0
  %v2308 = vadd.f32 %v2259, %v2307
  %2309 = vmatmul.bf16.gmra.mxu0 %v1379
  %v2310 = vpop.f32.mrf.mxu0
  %v2311 = vadd.f32 %v2262, %v2310
  %v2312 = vpop.f32.mrf.mxu0
  %v2313 = vadd.f32 %v2264, %v2312
  %2314 = vmatmul.bf16.gmra.mxu0 %v1385
  %v2315 = vpop.f32.mrf.mxu0
  %v2316 = vadd.f32 %v2267, %v2315
  %v2317 = vpop.f32.mrf.mxu0
  %v2318 = vadd.f32 %v2269, %v2317
  %2319 = vmatmul.bf16.gmra.mxu0 %v1394
  %v2320 = vpop.f32.mrf.mxu0
  %v2321 = vadd.f32 %v2272, %v2320
  %v2322 = vpop.f32.mrf.mxu0
  %v2323 = vadd.f32 %v2274, %v2322
  %2324 = vmatmul.bf16.gmra.mxu0 %v1400
  %v2325 = vpop.f32.mrf.mxu0
  %v2326 = vadd.f32 %v2277, %v2325
  %v2327 = vpop.f32.mrf.mxu0
  %v2328 = vadd.f32 %v2279, %v2327
  %2329 = vmatmul.bf16.gmra.mxu0 %v1406
  %v2330 = vpop.f32.mrf.mxu0
  %v2331 = vadd.f32 %v2282, %v2330
  %v2332 = vpop.f32.mrf.mxu0
  %v2333 = vadd.f32 %v2284, %v2332
  %2334 = vmatmul.bf16.gmra.mxu0 %v1412
  %v2335 = vpop.f32.mrf.mxu0
  %v2336 = vadd.f32 %v2287, %v2335
  %v2337 = vpop.f32.mrf.mxu0
  %v2338 = vadd.f32 %v2289, %v2337
  %2339 = vdwg.mxu0
  %v2340 = vld [vmem:[%s6] sm:$0x1]
  %v2342 = vperm.slane %v2340, 0
  %v2344 = vmul.f32 %v2301, %v2342
  %v2345 = vmul.f32 %v2303, %v2342
  %v2346 = vmul.f32 %v2306, %v2342
  %v2347 = vmul.f32 %v2308, %v2342
  %v2348 = vmul.f32 %v2311, %v2342
  %v2349 = vmul.f32 %v2313, %v2342
  %v2350 = vmul.f32 %v2316, %v2342
  %v2351 = vmul.f32 %v2318, %v2342
  %v2352 = vmul.f32 %v2321, %v2342
  %v2353 = vmul.f32 %v2323, %v2342
  %v2354 = vmul.f32 %v2326, %v2342
  %v2355 = vmul.f32 %v2328, %v2342
  %v2356 = vmul.f32 %v2331, %v2342
  %v2357 = vmul.f32 %v2333, %v2342
  %v2358 = vmul.f32 %v2336, %v2342
  %v2359 = vmul.f32 %v2338, %v2342
  %v2360 = vld [vmem:[%s7] sm:$0x1]
  %v2362 = vperm.slane %v2360, 0
  %v2364 = vadd.f32 %v2344, %v2362
  %v2365 = vadd.f32 %v2345, %v2362
  %v2366 = vadd.f32 %v2346, %v2362
  %v2367 = vadd.f32 %v2347, %v2362
  %v2368 = vadd.f32 %v2348, %v2362
  %v2369 = vadd.f32 %v2349, %v2362
  %v2370 = vadd.f32 %v2350, %v2362
  %v2371 = vadd.f32 %v2351, %v2362
  %v2372 = vadd.f32 %v2352, %v2362
  %v2373 = vadd.f32 %v2353, %v2362
  %v2374 = vadd.f32 %v2354, %v2362
  %v2375 = vadd.f32 %v2355, %v2362
  %v2376 = vadd.f32 %v2356, %v2362
  %v2377 = vadd.f32 %v2357, %v2362
  %v2378 = vadd.f32 %v2358, %v2362
  %v2379 = vadd.f32 %v2359, %v2362
  %v2380 = vmax.f32 %v2364, 0.0
  %v2381 = vmax.f32 %v2365, 0.0
  %v2382 = vmax.f32 %v2366, 0.0
  %v2383 = vmax.f32 %v2367, 0.0
  %v2384 = vmax.f32 %v2368, 0.0
  %v2385 = vmax.f32 %v2369, 0.0
  %v2386 = vmax.f32 %v2370, 0.0
  %v2387 = vmax.f32 %v2371, 0.0
  %v2388 = vmax.f32 %v2372, 0.0
  %v2389 = vmax.f32 %v2373, 0.0
  %v2390 = vmax.f32 %v2374, 0.0
  %v2391 = vmax.f32 %v2375, 0.0
  %v2392 = vmax.f32 %v2376, 0.0
  %v2393 = vmax.f32 %v2377, 0.0
  %v2394 = vmax.f32 %v2378, 0.0
  %v2395 = vmax.f32 %v2379, 0.0
  %v2396 = vpack.c.bf16 %v2380, %v2380
  %v2397 = vpack.c.bf16 %v2381, %v2381
  %v2398 = vpack.c.bf16 %v2382, %v2382
  %v2399 = vpack.c.bf16 %v2383, %v2383
  %v2400 = vpack.c.bf16 %v2384, %v2384
  %v2401 = vpack.c.bf16 %v2385, %v2385
  %v2402 = vpack.c.bf16 %v2386, %v2386
  %v2403 = vpack.c.bf16 %v2387, %v2387
  %v2404 = vpack.c.bf16 %v2388, %v2388
  %v2405 = vpack.c.bf16 %v2389, %v2389
  %v2406 = vpack.c.bf16 %v2390, %v2390
  %v2407 = vpack.c.bf16 %v2391, %v2391
  %v2408 = vpack.c.bf16 %v2392, %v2392
  %v2409 = vpack.c.bf16 %v2393, %v2393
  %v2410 = vpack.c.bf16 %v2394, %v2394
  %v2411 = vpack.c.bf16 %v2395, %v2395
  %v2413 = vshrl.u32 %v2396, 16
  %v2415 = vrot.slane %v2413, 7
  %v2416 = vshll.u32 %v2396, 16
  %v2418 = vor.u32 %v2415, %v2416
  %v2420 = vshrl.u32 %v2397, 16
  %v2422 = vrot.slane %v2420, 7
  %v2423 = vshll.u32 %v2397, 16
  %v2425 = vor.u32 %v2422, %v2423
  %v2427 = vshrl.u32 %v2398, 16
  %v2429 = vrot.slane %v2427, 7
  %v2430 = vshll.u32 %v2398, 16
  %v2432 = vor.u32 %v2429, %v2430
  %v2434 = vshrl.u32 %v2399, 16
  %v2436 = vrot.slane %v2434, 7
  %v2437 = vshll.u32 %v2399, 16
  %v2439 = vor.u32 %v2436, %v2437
  %v2441 = vshrl.u32 %v2400, 16
  %v2443 = vrot.slane %v2441, 7
  %v2444 = vshll.u32 %v2400, 16
  %v2446 = vor.u32 %v2443, %v2444
  %v2448 = vshrl.u32 %v2401, 16
  %v2450 = vrot.slane %v2448, 7
  %v2451 = vshll.u32 %v2401, 16
  %v2453 = vor.u32 %v2450, %v2451
  %v2455 = vshrl.u32 %v2402, 16
  %v2457 = vrot.slane %v2455, 7
  %v2458 = vshll.u32 %v2402, 16
  %v2460 = vor.u32 %v2457, %v2458
  %v2462 = vshrl.u32 %v2403, 16
  %v2464 = vrot.slane %v2462, 7
  %v2465 = vshll.u32 %v2403, 16
  %v2467 = vor.u32 %v2464, %v2465
  %v2469 = vshrl.u32 %v2404, 16
  %v2471 = vrot.slane %v2469, 7
  %v2472 = vshll.u32 %v2404, 16
  %v2474 = vor.u32 %v2471, %v2472
  %v2476 = vshrl.u32 %v2405, 16
  %v2478 = vrot.slane %v2476, 7
  %v2479 = vshll.u32 %v2405, 16
  %v2481 = vor.u32 %v2478, %v2479
  %v2483 = vshrl.u32 %v2406, 16
  %v2485 = vrot.slane %v2483, 7
  %v2486 = vshll.u32 %v2406, 16
  %v2488 = vor.u32 %v2485, %v2486
  %v2490 = vshrl.u32 %v2407, 16
  %v2492 = vrot.slane %v2490, 7
  %v2493 = vshll.u32 %v2407, 16
  %v2495 = vor.u32 %v2492, %v2493
  %v2497 = vshrl.u32 %v2408, 16
  %v2499 = vrot.slane %v2497, 7
  %v2500 = vshll.u32 %v2408, 16
  %v2502 = vor.u32 %v2499, %v2500
  %v2504 = vshrl.u32 %v2409, 16
  %v2506 = vrot.slane %v2504, 7
  %v2507 = vshll.u32 %v2409, 16
  %v2509 = vor.u32 %v2506, %v2507
  %v2511 = vshrl.u32 %v2410, 16
  %v2513 = vrot.slane %v2511, 7
  %v2514 = vshll.u32 %v2410, 16
  %v2516 = vor.u32 %v2513, %v2514
  %v2518 = vshrl.u32 %v2411, 16
  %v2520 = vrot.slane %v2518, 7
  %v2521 = vshll.u32 %v2411, 16
  %v2523 = vor.u32 %v2520, %v2521
  %v2540 = vsel %vm973, 0, %v2418
  %v2541 = vsel %vm973, 0, %v2425
  %v2542 = vsel %vm973, 0, %v2432
  %v2543 = vsel %vm973, 0, %v2439
  %v2544 = vsel %vm973, 0, %v2446
  %v2545 = vsel %vm973, 0, %v2453
  %v2546 = vsel %vm973, 0, %v2460
  %v2547 = vsel %vm973, 0, %v2467
  %v2548 = vsel %vm973, 0, %v2474
  %v2549 = vsel %vm973, 0, %v2481
  %v2550 = vsel %vm973, 0, %v2488
  %v2551 = vsel %vm973, 0, %v2495
  %v2552 = vsel %vm973, 0, %v2502
  %v2553 = vsel %vm973, 0, %v2509
  %v2554 = vsel %vm973, 0, %v2516
  %v2555 = vsel %vm973, 0, %v2523
  %v2556 = vsel %vm993, %v2540, 0
  %v2557 = vsel %vm993, %v2541, 0
  %v2558 = vsel %vm993, %v2542, 0
  %v2559 = vsel %vm993, %v2543, 0
  %v2560 = vsel %vm993, %v2544, 0
  %v2561 = vsel %vm993, %v2545, 0
  %v2562 = vsel %vm993, %v2546, 0
  %v2563 = vsel %vm993, %v2547, 0
  %v2564 = vsel %vm993, %v2548, 0
  %v2565 = vsel %vm993, %v2549, 0
  %v2566 = vsel %vm993, %v2550, 0
  %v2567 = vsel %vm993, %v2551, 0
  %v2568 = vsel %vm993, %v2552, 0
  %v2569 = vsel %vm993, %v2553, 0
  %v2570 = vsel %vm993, %v2554, 0
  %v2571 = vsel %vm993, %v2555, 0
  %v2573 = vshrl.u32 %v2556, 16
  %v2575 = vshll.u32 %v2556, 16
  %v2577 = vrot.slane %v2575, 1
  %v2578 = vor.u32 %v2573, %v2577
  %v2580 = vshrl.u32 %v2557, 16
  %v2582 = vshll.u32 %v2557, 16
  %v2584 = vrot.slane %v2582, 1
  %v2585 = vor.u32 %v2580, %v2584
  %v2587 = vshrl.u32 %v2558, 16
  %v2589 = vshll.u32 %v2558, 16
  %v2591 = vrot.slane %v2589, 1
  %v2592 = vor.u32 %v2587, %v2591
  %v2594 = vshrl.u32 %v2559, 16
  %v2596 = vshll.u32 %v2559, 16
  %v2598 = vrot.slane %v2596, 1
  %v2599 = vor.u32 %v2594, %v2598
  %v2601 = vshrl.u32 %v2560, 16
  %v2603 = vshll.u32 %v2560, 16
  %v2605 = vrot.slane %v2603, 1
  %v2606 = vor.u32 %v2601, %v2605
  %v2608 = vshrl.u32 %v2561, 16
  %v2610 = vshll.u32 %v2561, 16
  %v2612 = vrot.slane %v2610, 1
  %v2613 = vor.u32 %v2608, %v2612
  %v2615 = vshrl.u32 %v2562, 16
  %v2617 = vshll.u32 %v2562, 16
  %v2619 = vrot.slane %v2617, 1
  %v2620 = vor.u32 %v2615, %v2619
  %v2622 = vshrl.u32 %v2564, 16
  %v2624 = vshll.u32 %v2564, 16
  %v2626 = vrot.slane %v2624, 1
  %v2627 = vor.u32 %v2622, %v2626
  %v2629 = vshrl.u32 %v2565, 16
  %v2631 = vshll.u32 %v2565, 16
  %v2633 = vrot.slane %v2631, 1
  %v2634 = vor.u32 %v2629, %v2633
  %v2636 = vshrl.u32 %v2566, 16
  %v2638 = vshll.u32 %v2566, 16
  %v2640 = vrot.slane %v2638, 1
  %v2641 = vor.u32 %v2636, %v2640
  %v2643 = vshrl.u32 %v2567, 16
  %v2645 = vshll.u32 %v2567, 16
  %v2647 = vrot.slane %v2645, 1
  %v2648 = vor.u32 %v2643, %v2647
  %v2650 = vshrl.u32 %v2568, 16
  %v2652 = vshll.u32 %v2568, 16
  %v2654 = vrot.slane %v2652, 1
  %v2655 = vor.u32 %v2650, %v2654
  %v2657 = vshrl.u32 %v2569, 16
  %v2659 = vshll.u32 %v2569, 16
  %v2661 = vrot.slane %v2659, 1
  %v2662 = vor.u32 %v2657, %v2661
  %v2664 = vshrl.u32 %v2570, 16
  %v2666 = vshll.u32 %v2570, 16
  %v2668 = vrot.slane %v2666, 1
  %v2669 = vor.u32 %v2664, %v2668
  %v2684 = vrot.slane %v2556, 1
  %v2685 = vrot.slane %v2557, 1
  %v2686 = vrot.slane %v2558, 1
  %v2687 = vrot.slane %v2559, 1
  %v2688 = vrot.slane %v2560, 1
  %v2689 = vrot.slane %v2561, 1
  %v2690 = vrot.slane %v2562, 1
  %v2691 = vrot.slane %v2564, 1
  %v2692 = vrot.slane %v2565, 1
  %v2693 = vrot.slane %v2566, 1
  %v2694 = vrot.slane %v2567, 1
  %v2695 = vrot.slane %v2568, 1
  %v2696 = vrot.slane %v2569, 1
  %v2697 = vrot.slane %v2570, 1
  %v2699 = vshrl.u32 %v2563, 16
  %v2701 = vshll.u32 %v2563, 16
  %v2703 = vrot.slane %v2701, 1
  %v2704 = vor.u32 %v2699, %v2703
  %v2706 = vshrl.u32 %v2571, 16
  %v2708 = vshll.u32 %v2571, 16
  %v2710 = vrot.slane %v2708, 1
  %v2711 = vor.u32 %v2706, %v2710
  %v2714 = vrot.slane %v2563, 1
  %v2715 = vrot.slane %v2571, 1
  %v2716 = vunpack.c.l.b16 %v2556
  %v2717 = vunpack.c.l.b16 %v2578
  %v2718 = vunpack.c.l.b16 %v2684
  %v2719 = vunpack.c.l.b16 %v2557
  %v2720 = vunpack.c.l.b16 %v2585
  %v2721 = vunpack.c.l.b16 %v2685
  %v2722 = vunpack.c.l.b16 %v2558
  %v2723 = vunpack.c.l.b16 %v2592
  %v2724 = vunpack.c.l.b16 %v2686
  %v2725 = vunpack.c.l.b16 %v2559
  %v2726 = vunpack.c.l.b16 %v2599
  %v2727 = vunpack.c.l.b16 %v2687
  %v2728 = vunpack.c.l.b16 %v2560
  %v2729 = vunpack.c.l.b16 %v2606
  %v2730 = vunpack.c.l.b16 %v2688
  %v2731 = vunpack.c.l.b16 %v2561
  %v2732 = vunpack.c.l.b16 %v2613
  %v2733 = vunpack.c.l.b16 %v2689
  %v2734 = vunpack.c.l.b16 %v2562
  %v2735 = vunpack.c.l.b16 %v2620
  %v2736 = vunpack.c.l.b16 %v2690
  %v2737 = vunpack.c.l.b16 %v2563
  %v2738 = vunpack.c.l.b16 %v2704
  %v2739 = vunpack.c.l.b16 %v2714
  %v2740 = vunpack.c.l.b16 %v2564
  %v2741 = vunpack.c.l.b16 %v2627
  %v2742 = vunpack.c.l.b16 %v2691
  %v2743 = vunpack.c.l.b16 %v2565
  %v2744 = vunpack.c.l.b16 %v2634
  %v2745 = vunpack.c.l.b16 %v2692
  %v2746 = vunpack.c.l.b16 %v2566
  %v2747 = vunpack.c.l.b16 %v2641
  %v2748 = vunpack.c.l.b16 %v2693
  %v2749 = vunpack.c.l.b16 %v2567
  %v2750 = vunpack.c.l.b16 %v2648
  %v2751 = vunpack.c.l.b16 %v2694
  %v2752 = vunpack.c.l.b16 %v2568
  %v2753 = vunpack.c.l.b16 %v2655
  %v2754 = vunpack.c.l.b16 %v2695
  %v2755 = vunpack.c.l.b16 %v2569
  %v2756 = vunpack.c.l.b16 %v2662
  %v2757 = vunpack.c.l.b16 %v2696
  %v2758 = vunpack.c.l.b16 %v2570
  %v2759 = vunpack.c.l.b16 %v2669
  %v2760 = vunpack.c.l.b16 %v2697
  %v2761 = vunpack.c.l.b16 %v2571
  %v2762 = vunpack.c.l.b16 %v2711
  %v2763 = vunpack.c.l.b16 %v2715
  %v2764 = vld [vmem:[%s8] sm:$0xf]
  %v2765 = vld [vmem:[%s8 + $0x4] sm:$0xf]
  %v2766 = vld [vmem:[%s8 + $0x8] sm:$0xf]
  %v2767 = vld [vmem:[%s8 + $0xc] sm:$0xf]
  %v2768 = vld [vmem:[%s8 + $0x10] sm:$0xf]
  %v2769 = vld [vmem:[%s8 + $0x14] sm:$0xf]
  %v2770 = vld [vmem:[%s8 + $0x18] sm:$0xf]
  %v2771 = vld [vmem:[%s8 + $0x1c] sm:$0xf]
  %v2772 = vld [vmem:[%s8 + $0x20] sm:$0xf]
  %v2773 = vld [vmem:[%s8 + $0x24] sm:$0xf]
  %v2774 = vld [vmem:[%s8 + $0x28] sm:$0xf]
  %v2775 = vld [vmem:[%s8 + $0x2c] sm:$0xf]
  %v2776 = vld [vmem:[%s8 + $0x30] sm:$0xf]
  %v2777 = vld [vmem:[%s8 + $0x34] sm:$0xf]
  %v2778 = vld [vmem:[%s8 + $0x38] sm:$0xf]
  %v2779 = vld [vmem:[%s8 + $0x3c] sm:$0xf]
  %v2780 = vld [vmem:[%s8 + $0x40] sm:$0xf]
  %v2781 = vld [vmem:[%s8 + $0x44] sm:$0xf]
  %v2782 = vld [vmem:[%s8 + $0x48] sm:$0xf]
  %v2783 = vld [vmem:[%s8 + $0x4c] sm:$0xf]
  %v2784 = vld [vmem:[%s8 + $0x50] sm:$0xf]
  %v2785 = vld [vmem:[%s8 + $0x54] sm:$0xf]
  %v2786 = vld [vmem:[%s8 + $0x58] sm:$0xf]
  %v2787 = vld [vmem:[%s8 + $0x5c] sm:$0xf]
  %v2788 = vld [vmem:[%s8 + $0x60] sm:$0xf]
  %v2789 = vld [vmem:[%s8 + $0x64] sm:$0xf]
  %v2790 = vld [vmem:[%s8 + $0x68] sm:$0xf]
  %v2791 = vld [vmem:[%s8 + $0x6c] sm:$0xf]
  %v2792 = vld [vmem:[%s8 + $0x70] sm:$0xf]
  %v2793 = vld [vmem:[%s8 + $0x74] sm:$0xf]
  %v2794 = vld [vmem:[%s8 + $0x78] sm:$0xf]
  %v2795 = vld [vmem:[%s8 + $0x7c] sm:$0xf]
  %v2796 = vld [vmem:[%s8 + $0x80] sm:$0xf]
  %v2797 = vld [vmem:[%s8 + $0x84] sm:$0xf]
  %v2798 = vld [vmem:[%s8 + $0x88] sm:$0xf]
  %v2799 = vld [vmem:[%s8 + $0x8c] sm:$0xf]
  %v2800 = vld [vmem:[%s8 + $0x90] sm:$0xf]
  %v2801 = vld [vmem:[%s8 + $0x94] sm:$0xf]
  %v2802 = vld [vmem:[%s8 + $0x98] sm:$0xf]
  %v2803 = vld [vmem:[%s8 + $0x9c] sm:$0xf]
  %v2804 = vld [vmem:[%s8 + $0xa0] sm:$0xf]
  %v2805 = vld [vmem:[%s8 + $0xa4] sm:$0xf]
  %v2806 = vld [vmem:[%s8 + $0xa8] sm:$0xf]
  %v2807 = vld [vmem:[%s8 + $0xac] sm:$0xf]
  %v2808 = vld [vmem:[%s8 + $0xb0] sm:$0xf]
  %v2809 = vld [vmem:[%s8 + $0xb4] sm:$0xf]
  %v2810 = vld [vmem:[%s8 + $0xb8] sm:$0xf]
  %v2811 = vld [vmem:[%s8 + $0xbc] sm:$0xf]
  %v2812 = vld [vmem:[%s8 + $0xc0] sm:$0xf]
  %v2813 = vld [vmem:[%s8 + $0xc4] sm:$0xf]
  %v2814 = vld [vmem:[%s8 + $0xc8] sm:$0xf]
  %v2815 = vld [vmem:[%s8 + $0xcc] sm:$0xf]
  %v2816 = vld [vmem:[%s8 + $0xd0] sm:$0xf]
  %v2817 = vld [vmem:[%s8 + $0xd4] sm:$0xf]
  %v2818 = vld [vmem:[%s8 + $0xd8] sm:$0xf]
  %v2819 = vld [vmem:[%s8 + $0xdc] sm:$0xf]
  %v2820 = vld [vmem:[%s8 + $0xe0] sm:$0xf]
  %v2821 = vld [vmem:[%s8 + $0xe4] sm:$0xf]
  %v2822 = vld [vmem:[%s8 + $0xe8] sm:$0xf]
  %v2823 = vld [vmem:[%s8 + $0xec] sm:$0xf]
  %v2824 = vld [vmem:[%s8 + $0xf0] sm:$0xf]
  %v2825 = vld [vmem:[%s8 + $0xf4] sm:$0xf]
  %v2826 = vld [vmem:[%s8 + $0xf8] sm:$0xf]
  %v2827 = vld [vmem:[%s8 + $0xfc] sm:$0xf]
  %v2828 = vld [vmem:[%s8 + $0x100] sm:$0xf]
  %v2829 = vld [vmem:[%s8 + $0x104] sm:$0xf]
  %v2830 = vld [vmem:[%s8 + $0x108] sm:$0xf]
  %v2831 = vld [vmem:[%s8 + $0x10c] sm:$0xf]
  %v2832 = vld [vmem:[%s8 + $0x110] sm:$0xf]
  %v2833 = vld [vmem:[%s8 + $0x114] sm:$0xf]
  %v2834 = vld [vmem:[%s8 + $0x118] sm:$0xf]
  %v2835 = vld [vmem:[%s8 + $0x11c] sm:$0xf]
  %v2836 = vld [vmem:[%s8 + $0x120] sm:$0xf]
  %v2837 = vld [vmem:[%s8 + $0x124] sm:$0xf]
  %v2838 = vld [vmem:[%s8 + $0x128] sm:$0xf]
  %v2839 = vld [vmem:[%s8 + $0x12c] sm:$0xf]
  %v2840 = vld [vmem:[%s8 + $0x130] sm:$0xf]
  %v2841 = vld [vmem:[%s8 + $0x134] sm:$0xf]
  %v2842 = vld [vmem:[%s8 + $0x138] sm:$0xf]
  %v2843 = vld [vmem:[%s8 + $0x13c] sm:$0xf]
  %v2844 = vld [vmem:[%s8 + $0x140] sm:$0xf]
  %v2845 = vld [vmem:[%s8 + $0x144] sm:$0xf]
  %v2846 = vld [vmem:[%s8 + $0x148] sm:$0xf]
  %v2847 = vld [vmem:[%s8 + $0x14c] sm:$0xf]
  %v2848 = vld [vmem:[%s8 + $0x150] sm:$0xf]
  %v2849 = vld [vmem:[%s8 + $0x154] sm:$0xf]
  %v2850 = vld [vmem:[%s8 + $0x158] sm:$0xf]
  %v2851 = vld [vmem:[%s8 + $0x15c] sm:$0xf]
  %v2852 = vld [vmem:[%s8 + $0x160] sm:$0xf]
  %v2853 = vld [vmem:[%s8 + $0x164] sm:$0xf]
  %v2854 = vld [vmem:[%s8 + $0x168] sm:$0xf]
  %v2855 = vld [vmem:[%s8 + $0x16c] sm:$0xf]
  %v2856 = vld [vmem:[%s8 + $0x170] sm:$0xf]
  %v2857 = vld [vmem:[%s8 + $0x174] sm:$0xf]
  %v2858 = vld [vmem:[%s8 + $0x178] sm:$0xf]
  %v2859 = vld [vmem:[%s8 + $0x17c] sm:$0xf]
  %v2860 = vld [vmem:[%s8 + $0x180] sm:$0xf]
  %v2861 = vld [vmem:[%s8 + $0x184] sm:$0xf]
  %v2862 = vld [vmem:[%s8 + $0x188] sm:$0xf]
  %v2863 = vld [vmem:[%s8 + $0x18c] sm:$0xf]
  %v2864 = vld [vmem:[%s8 + $0x190] sm:$0xf]
  %v2865 = vld [vmem:[%s8 + $0x194] sm:$0xf]
  %v2866 = vld [vmem:[%s8 + $0x198] sm:$0xf]
  %v2867 = vld [vmem:[%s8 + $0x19c] sm:$0xf]
  %v2868 = vld [vmem:[%s8 + $0x1a0] sm:$0xf]
  %v2869 = vld [vmem:[%s8 + $0x1a4] sm:$0xf]
  %v2870 = vld [vmem:[%s8 + $0x1a8] sm:$0xf]
  %v2871 = vld [vmem:[%s8 + $0x1ac] sm:$0xf]
  %v2872 = vld [vmem:[%s8 + $0x1b0] sm:$0xf]
  %v2873 = vld [vmem:[%s8 + $0x1b4] sm:$0xf]
  %v2874 = vld [vmem:[%s8 + $0x1b8] sm:$0xf]
  %v2875 = vld [vmem:[%s8 + $0x1bc] sm:$0xf]
  %v2876 = vld [vmem:[%s8 + $0x1c0] sm:$0xf]
  %v2877 = vld [vmem:[%s8 + $0x1c4] sm:$0xf]
  %v2878 = vld [vmem:[%s8 + $0x1c8] sm:$0xf]
  %v2879 = vld [vmem:[%s8 + $0x1cc] sm:$0xf]
  %v2880 = vld [vmem:[%s8 + $0x1d0] sm:$0xf]
  %v2881 = vld [vmem:[%s8 + $0x1d4] sm:$0xf]
  %v2882 = vld [vmem:[%s8 + $0x1d8] sm:$0xf]
  %v2883 = vld [vmem:[%s8 + $0x1dc] sm:$0xf]
  %v2884 = vld [vmem:[%s8 + $0x1e0] sm:$0xf]
  %v2885 = vld [vmem:[%s8 + $0x1e4] sm:$0xf]
  %v2886 = vld [vmem:[%s8 + $0x1e8] sm:$0xf]
  %v2887 = vld [vmem:[%s8 + $0x1ec] sm:$0xf]
  %v2888 = vld [vmem:[%s8 + $0x1f0] sm:$0xf]
  %v2889 = vld [vmem:[%s8 + $0x1f4] sm:$0xf]
  %v2890 = vld [vmem:[%s8 + $0x1f8] sm:$0xf]
  %v2891 = vld [vmem:[%s8 + $0x1fc] sm:$0xf]
  %v2892 = vld [vmem:[%s8 + $0x200] sm:$0xf]
  %v2893 = vld [vmem:[%s8 + $0x204] sm:$0xf]
  %v2894 = vld [vmem:[%s8 + $0x208] sm:$0xf]
  %v2895 = vld [vmem:[%s8 + $0x20c] sm:$0xf]
  %v2896 = vld [vmem:[%s8 + $0x210] sm:$0xf]
  %v2897 = vld [vmem:[%s8 + $0x214] sm:$0xf]
  %v2898 = vld [vmem:[%s8 + $0x218] sm:$0xf]
  %v2899 = vld [vmem:[%s8 + $0x21c] sm:$0xf]
  %v2900 = vld [vmem:[%s8 + $0x220] sm:$0xf]
  %v2901 = vld [vmem:[%s8 + $0x224] sm:$0xf]
  %v2902 = vld [vmem:[%s8 + $0x228] sm:$0xf]
  %v2903 = vld [vmem:[%s8 + $0x22c] sm:$0xf]
  %v2904 = vld [vmem:[%s8 + $0x230] sm:$0xf]
  %v2905 = vld [vmem:[%s8 + $0x234] sm:$0xf]
  %v2906 = vld [vmem:[%s8 + $0x238] sm:$0xf]
  %v2907 = vld [vmem:[%s8 + $0x23c] sm:$0xf]
  %v2908 = vpack.c.b16 %v2716, %v1164
  %v2909 = vpack.c.b16 %v2717, %v1165
  %v2910 = vpack.c.b16 %v2718, %v1166
  %v2911 = vpack.c.b16 %v2719, %v2716
  %v2912 = vpack.c.b16 %v2720, %v2717
  %v2913 = vpack.c.b16 %v2721, %v2718
  %v2914 = vpack.c.b16 %v2722, %v2719
  %v2915 = vpack.c.b16 %v2723, %v2720
  %v2916 = vpack.c.b16 %v2724, %v2721
  %v2917 = vpack.c.b16 %v2725, %v2722
  %v2918 = vpack.c.b16 %v2726, %v2723
  %v2919 = vpack.c.b16 %v2727, %v2724
  %v2920 = vpack.c.b16 %v2728, %v2725
  %v2921 = vpack.c.b16 %v2729, %v2726
  %v2922 = vpack.c.b16 %v2730, %v2727
  %v2923 = vpack.c.b16 %v2731, %v2728
  %v2924 = vpack.c.b16 %v2732, %v2729
  %v2925 = vpack.c.b16 %v2733, %v2730
  %v2926 = vpack.c.b16 %v2734, %v2731
  %v2927 = vpack.c.b16 %v2735, %v2732
  %v2928 = vpack.c.b16 %v2736, %v2733
  %v2929 = vpack.c.b16 %v2737, %v2734
  %v2930 = vpack.c.b16 %v2738, %v2735
  %v2931 = vpack.c.b16 %v2739, %v2736
  %v2932 = vpack.c.b16 %v1164, %v2737
  %v2933 = vpack.c.b16 %v1165, %v2738
  %v2934 = vpack.c.b16 %v1166, %v2739
  %v2935 = vpack.c.b16 %v2740, %v1164
  %v2936 = vpack.c.b16 %v2741, %v1165
  %v2937 = vpack.c.b16 %v2742, %v1166
  %v2938 = vpack.c.b16 %v2743, %v2740
  %v2939 = vpack.c.b16 %v2744, %v2741
  %v2940 = vpack.c.b16 %v2745, %v2742
  %v2941 = vpack.c.b16 %v2746, %v2743
  %v2942 = vpack.c.b16 %v2747, %v2744
  %v2943 = vpack.c.b16 %v2748, %v2745
  %v2944 = vpack.c.b16 %v2749, %v2746
  %v2945 = vpack.c.b16 %v2750, %v2747
  %v2946 = vpack.c.b16 %v2751, %v2748
  %v2947 = vpack.c.b16 %v2752, %v2749
  %v2948 = vpack.c.b16 %v2753, %v2750
  %v2949 = vpack.c.b16 %v2754, %v2751
  %v2950 = vpack.c.b16 %v2755, %v2752
  %v2951 = vpack.c.b16 %v2756, %v2753
  %v2952 = vpack.c.b16 %v2757, %v2754
  %v2953 = vpack.c.b16 %v2758, %v2755
  %v2954 = vpack.c.b16 %v2759, %v2756
  %v2955 = vpack.c.b16 %v2760, %v2757
  %v2956 = vpack.c.b16 %v2761, %v2758
  %v2957 = vpack.c.b16 %v2762, %v2759
  %v2958 = vpack.c.b16 %v2763, %v2760
  %v2959 = vpack.c.b16 %v1164, %v2761
  %v2960 = vpack.c.b16 %v1165, %v2762
  %v2961 = vpack.c.b16 %v1166, %v2763
  %v3160 = vunpack.c.l.b16 %v2764
  %v3161 = vunpack.c.l.b16 %v2765
  %v3162 = vunpack.c.l.b16 %v2766
  %v3163 = vunpack.c.l.b16 %v2767
  %v3164 = vunpack.c.l.b16 %v2768
  %v3165 = vunpack.c.l.b16 %v2769
  %v3166 = vunpack.c.l.b16 %v2770
  %v3167 = vunpack.c.l.b16 %v2771
  %v3168 = vunpack.c.l.b16 %v2772
  %v3169 = vunpack.c.l.b16 %v2773
  %v3170 = vunpack.c.l.b16 %v2774
  %v3171 = vunpack.c.l.b16 %v2775
  %v3172 = vunpack.c.l.b16 %v2776
  %v3173 = vunpack.c.l.b16 %v2777
  %v3174 = vunpack.c.l.b16 %v2778
  %v3175 = vunpack.c.l.b16 %v2779
  %v3176 = vunpack.c.l.b16 %v2780
  %v3177 = vunpack.c.l.b16 %v2781
  %v3178 = vunpack.c.l.b16 %v2782
  %v3179 = vunpack.c.l.b16 %v2783
  %v3180 = vunpack.c.l.b16 %v2784
  %v3181 = vunpack.c.l.b16 %v2785
  %v3182 = vunpack.c.l.b16 %v2786
  %v3183 = vunpack.c.l.b16 %v2787
  %v3184 = vunpack.c.l.b16 %v2788
  %v3185 = vunpack.c.l.b16 %v2789
  %v3186 = vunpack.c.l.b16 %v2790
  %v3187 = vunpack.c.l.b16 %v2791
  %v3188 = vunpack.c.l.b16 %v2792
  %v3189 = vunpack.c.l.b16 %v2793
  %v3190 = vunpack.c.l.b16 %v2794
  %v3191 = vunpack.c.l.b16 %v2795
  %v3192 = vunpack.c.l.b16 %v2796
  %v3193 = vunpack.c.l.b16 %v2797
  %v3194 = vunpack.c.l.b16 %v2798
  %v3195 = vunpack.c.l.b16 %v2799
  %v3196 = vunpack.c.l.b16 %v2800
  %v3197 = vunpack.c.l.b16 %v2801
  %v3198 = vunpack.c.l.b16 %v2802
  %v3199 = vunpack.c.l.b16 %v2803
  %v3200 = vunpack.c.l.b16 %v2804
  %v3201 = vunpack.c.l.b16 %v2805
  %v3202 = vunpack.c.l.b16 %v2806
  %v3203 = vunpack.c.l.b16 %v2807
  %v3204 = vunpack.c.l.b16 %v2808
  %v3205 = vunpack.c.l.b16 %v2809
  %v3206 = vunpack.c.l.b16 %v2810
  %v3207 = vunpack.c.l.b16 %v2811
  %v3208 = vunpack.c.l.b16 %v2812
  %v3209 = vunpack.c.l.b16 %v2813
  %v3210 = vunpack.c.l.b16 %v2814
  %v3211 = vunpack.c.l.b16 %v2815
  %v3212 = vunpack.c.l.b16 %v2816
  %v3213 = vunpack.c.l.b16 %v2817
  %v3214 = vunpack.c.l.b16 %v2818
  %v3215 = vunpack.c.l.b16 %v2819
  %v3216 = vunpack.c.l.b16 %v2820
  %v3217 = vunpack.c.l.b16 %v2821
  %v3218 = vunpack.c.l.b16 %v2822
  %v3219 = vunpack.c.l.b16 %v2823
  %v3220 = vunpack.c.l.b16 %v2824
  %v3221 = vunpack.c.l.b16 %v2825
  %v3222 = vunpack.c.l.b16 %v2826
  %v3223 = vunpack.c.l.b16 %v2827
  %v3224 = vunpack.c.l.b16 %v2828
  %v3225 = vunpack.c.l.b16 %v2829
  %v3226 = vunpack.c.l.b16 %v2830
  %v3227 = vunpack.c.l.b16 %v2831
  %v3228 = vunpack.c.l.b16 %v2832
  %v3229 = vunpack.c.l.b16 %v2833
  %v3230 = vunpack.c.l.b16 %v2834
  %v3231 = vunpack.c.l.b16 %v2835
  %v3232 = vunpack.c.l.b16 %v2836
  %v3233 = vunpack.c.l.b16 %v2837
  %v3234 = vunpack.c.l.b16 %v2838
  %v3235 = vunpack.c.l.b16 %v2839
  %v3236 = vunpack.c.l.b16 %v2840
  %v3237 = vunpack.c.l.b16 %v2841
  %v3238 = vunpack.c.l.b16 %v2842
  %v3239 = vunpack.c.l.b16 %v2843
  %v3240 = vunpack.c.l.b16 %v2844
  %v3241 = vunpack.c.l.b16 %v2845
  %v3242 = vunpack.c.l.b16 %v2846
  %v3243 = vunpack.c.l.b16 %v2847
  %v3244 = vunpack.c.l.b16 %v2848
  %v3245 = vunpack.c.l.b16 %v2849
  %v3246 = vunpack.c.l.b16 %v2850
  %v3247 = vunpack.c.l.b16 %v2851
  %v3248 = vunpack.c.l.b16 %v2852
  %v3249 = vunpack.c.l.b16 %v2853
  %v3250 = vunpack.c.l.b16 %v2854
  %v3251 = vunpack.c.l.b16 %v2855
  %v3252 = vunpack.c.l.b16 %v2856
  %v3253 = vunpack.c.l.b16 %v2857
  %v3254 = vunpack.c.l.b16 %v2858
  %v3255 = vunpack.c.l.b16 %v2859
  %v3256 = vunpack.c.l.b16 %v2860
  %v3257 = vunpack.c.l.b16 %v2861
  %v3258 = vunpack.c.l.b16 %v2862
  %v3259 = vunpack.c.l.b16 %v2863
  %v3260 = vunpack.c.l.b16 %v2864
  %v3261 = vunpack.c.l.b16 %v2865
  %v3262 = vunpack.c.l.b16 %v2866
  %v3263 = vunpack.c.l.b16 %v2867
  %v3264 = vunpack.c.l.b16 %v2868
  %v3265 = vunpack.c.l.b16 %v2869
  %v3266 = vunpack.c.l.b16 %v2870
  %v3267 = vunpack.c.l.b16 %v2871
  %v3268 = vunpack.c.l.b16 %v2872
  %v3269 = vunpack.c.l.b16 %v2873
  %v3270 = vunpack.c.l.b16 %v2874
  %v3271 = vunpack.c.l.b16 %v2875
  %v3272 = vunpack.c.l.b16 %v2876
  %v3273 = vunpack.c.l.b16 %v2877
  %v3274 = vunpack.c.l.b16 %v2878
  %v3275 = vunpack.c.l.b16 %v2879
  %v3276 = vunpack.c.l.b16 %v2880
  %v3277 = vunpack.c.l.b16 %v2881
  %v3278 = vunpack.c.l.b16 %v2882
  %v3279 = vunpack.c.l.b16 %v2883
  %v3280 = vunpack.c.l.b16 %v2884
  %v3281 = vunpack.c.l.b16 %v2885
  %v3282 = vunpack.c.l.b16 %v2886
  %v3283 = vunpack.c.l.b16 %v2887
  %v3284 = vunpack.c.l.b16 %v2888
  %v3285 = vunpack.c.l.b16 %v2889
  %v3286 = vunpack.c.l.b16 %v2890
  %v3287 = vunpack.c.l.b16 %v2891
  %v3288 = vunpack.c.l.b16 %v2892
  %v3289 = vunpack.c.l.b16 %v2893
  %v3290 = vunpack.c.l.b16 %v2894
  %v3291 = vunpack.c.l.b16 %v2895
  %v3292 = vunpack.c.l.b16 %v2896
  %v3293 = vunpack.c.l.b16 %v2897
  %v3294 = vunpack.c.l.b16 %v2898
  %v3295 = vunpack.c.l.b16 %v2899
  %v3296 = vunpack.c.l.b16 %v2900
  %v3297 = vunpack.c.l.b16 %v2901
  %v3298 = vunpack.c.l.b16 %v2902
  %v3299 = vunpack.c.l.b16 %v2903
  %v3300 = vunpack.c.l.b16 %v2904
  %v3301 = vunpack.c.l.b16 %v2905
  %v3302 = vunpack.c.l.b16 %v2906
  %v3303 = vunpack.c.l.b16 %v2907
  %v3304 = vpack.c.b16 %v3161, %v3160
  %v3305 = vpack.c.b16 %v3163, %v3162
  %v3306 = vpack.c.b16 %v3165, %v3164
  %v3307 = vpack.c.b16 %v3167, %v3166
  %v3308 = vpack.c.b16 %v3169, %v3168
  %v3309 = vpack.c.b16 %v3171, %v3170
  %v3310 = vpack.c.b16 %v3173, %v3172
  %v3311 = vpack.c.b16 %v3175, %v3174
  %v3312 = vpack.c.b16 %v3177, %v3176
  %v3313 = vpack.c.b16 %v3179, %v3178
  %v3314 = vpack.c.b16 %v3181, %v3180
  %v3315 = vpack.c.b16 %v3183, %v3182
  %v3316 = vpack.c.b16 %v3185, %v3184
  %v3317 = vpack.c.b16 %v3187, %v3186
  %v3318 = vpack.c.b16 %v3189, %v3188
  %v3319 = vpack.c.b16 %v3191, %v3190
  %v3320 = vpack.c.b16 %v3193, %v3192
  %v3321 = vpack.c.b16 %v3195, %v3194
  %v3322 = vpack.c.b16 %v3197, %v3196
  %v3323 = vpack.c.b16 %v3199, %v3198
  %v3324 = vpack.c.b16 %v3201, %v3200
  %v3325 = vpack.c.b16 %v3203, %v3202
  %v3326 = vpack.c.b16 %v3205, %v3204
  %v3327 = vpack.c.b16 %v3207, %v3206
  %v3328 = vpack.c.b16 %v3209, %v3208
  %v3329 = vpack.c.b16 %v3211, %v3210
  %v3330 = vpack.c.b16 %v3213, %v3212
  %v3331 = vpack.c.b16 %v3215, %v3214
  %v3332 = vpack.c.b16 %v3217, %v3216
  %v3333 = vpack.c.b16 %v3219, %v3218
  %v3334 = vpack.c.b16 %v3221, %v3220
  %v3335 = vpack.c.b16 %v3223, %v3222
  %v3336 = vpack.c.b16 %v3225, %v3224
  %v3337 = vpack.c.b16 %v3227, %v3226
  %v3338 = vpack.c.b16 %v3229, %v3228
  %v3339 = vpack.c.b16 %v3231, %v3230
  %v3340 = vpack.c.b16 %v3233, %v3232
  %v3341 = vpack.c.b16 %v3235, %v3234
  %v3342 = vpack.c.b16 %v3237, %v3236
  %v3343 = vpack.c.b16 %v3239, %v3238
  %v3344 = vpack.c.b16 %v3241, %v3240
  %v3345 = vpack.c.b16 %v3243, %v3242
  %v3346 = vpack.c.b16 %v3245, %v3244
  %v3347 = vpack.c.b16 %v3247, %v3246
  %v3348 = vpack.c.b16 %v3249, %v3248
  %v3349 = vpack.c.b16 %v3251, %v3250
  %v3350 = vpack.c.b16 %v3253, %v3252
  %v3351 = vpack.c.b16 %v3255, %v3254
  %v3352 = vpack.c.b16 %v3257, %v3256
  %v3353 = vpack.c.b16 %v3259, %v3258
  %v3354 = vpack.c.b16 %v3261, %v3260
  %v3355 = vpack.c.b16 %v3263, %v3262
  %v3356 = vpack.c.b16 %v3265, %v3264
  %v3357 = vpack.c.b16 %v3267, %v3266
  %v3358 = vpack.c.b16 %v3269, %v3268
  %v3359 = vpack.c.b16 %v3271, %v3270
  %v3360 = vpack.c.b16 %v3273, %v3272
  %v3361 = vpack.c.b16 %v3275, %v3274
  %v3362 = vpack.c.b16 %v3277, %v3276
  %v3363 = vpack.c.b16 %v3279, %v3278
  %v3364 = vpack.c.b16 %v3281, %v3280
  %v3365 = vpack.c.b16 %v3283, %v3282
  %v3366 = vpack.c.b16 %v3285, %v3284
  %v3367 = vpack.c.b16 %v3287, %v3286
  %v3368 = vpack.c.b16 %v3289, %v3288
  %v3369 = vpack.c.b16 %v3291, %v3290
  %v3370 = vpack.c.b16 %v3293, %v3292
  %v3371 = vpack.c.b16 %v3295, %v3294
  %v3372 = vpack.c.b16 %v3297, %v3296
  %v3373 = vpack.c.b16 %v3299, %v3298
  %v3374 = vpack.c.b16 %v3301, %v3300
  %v3375 = vpack.c.b16 %v3303, %v3302
  %3448 = vmatpush.bf16.msra.mxu0 %v3311
  %3449 = vmatpush.bf16.msra.mxu0 %v3310
  %3450 = vmatpush.bf16.msra.mxu0 %v3309
  %3451 = vmatpush.bf16.msra.mxu0 %v3308
  %3452 = vmatpush.bf16.msra.mxu0 %v3307
  %3453 = vmatpush.bf16.msra.mxu0 %v3306
  %3454 = vmatpush.bf16.msra.mxu0 %v3305
  %3455 = vmatpush.bf16.msra.mxu0 %v3304
  %3456 = vmatmul.bf16.gmra.mxu0 %v2908
  %v3457 = vpop.f32.mrf.mxu0
  %v3458 = vadd.f32 0.0, %v3457
  %v3459 = vpop.f32.mrf.mxu0
  %v3460 = vadd.f32 0.0, %v3459
  %3461 = vmatmul.bf16.gmra.mxu0 %v2914
  %v3462 = vpop.f32.mrf.mxu0
  %v3463 = vadd.f32 0.0, %v3462
  %v3464 = vpop.f32.mrf.mxu0
  %v3465 = vadd.f32 0.0, %v3464
  %3466 = vmatmul.bf16.gmra.mxu0 %v2920
  %v3467 = vpop.f32.mrf.mxu0
  %v3468 = vadd.f32 0.0, %v3467
  %v3469 = vpop.f32.mrf.mxu0
  %v3470 = vadd.f32 0.0, %v3469
  %3471 = vmatmul.bf16.gmra.mxu0 %v2926
  %v3472 = vpop.f32.mrf.mxu0
  %v3473 = vadd.f32 0.0, %v3472
  %v3474 = vpop.f32.mrf.mxu0
  %v3475 = vadd.f32 0.0, %v3474
  %3476 = vmatmul.bf16.gmra.mxu0 %v2935
  %v3477 = vpop.f32.mrf.mxu0
  %v3478 = vadd.f32 0.0, %v3477
  %v3479 = vpop.f32.mrf.mxu0
  %v3480 = vadd.f32 0.0, %v3479
  %3481 = vmatmul.bf16.gmra.mxu0 %v2941
  %v3482 = vpop.f32.mrf.mxu0
  %v3483 = vadd.f32 0.0, %v3482
  %v3484 = vpop.f32.mrf.mxu0
  %v3485 = vadd.f32 0.0, %v3484
  %3486 = vmatmul.bf16.gmra.mxu0 %v2947
  %v3487 = vpop.f32.mrf.mxu0
  %v3488 = vadd.f32 0.0, %v3487
  %v3489 = vpop.f32.mrf.mxu0
  %v3490 = vadd.f32 0.0, %v3489
  %3491 = vmatmul.bf16.gmra.mxu0 %v2953
  %v3492 = vpop.f32.mrf.mxu0
  %v3493 = vadd.f32 0.0, %v3492
  %v3494 = vpop.f32.mrf.mxu0
  %v3495 = vadd.f32 0.0, %v3494
  %3496 = vdwg.mxu0
  %3497 = vmatpush.bf16.msra.mxu0 %v3319
  %3498 = vmatpush.bf16.msra.mxu0 %v3318
  %3499 = vmatpush.bf16.msra.mxu0 %v3317
  %3500 = vmatpush.bf16.msra.mxu0 %v3316
  %3501 = vmatpush.bf16.msra.mxu0 %v3315
  %3502 = vmatpush.bf16.msra.mxu0 %v3314
  %3503 = vmatpush.bf16.msra.mxu0 %v3313
  %3504 = vmatpush.bf16.msra.mxu0 %v3312
  %3505 = vmatmul.bf16.gmra.mxu0 %v2909
  %v3506 = vpop.f32.mrf.mxu0
  %v3507 = vadd.f32 %v3458, %v3506
  %v3508 = vpop.f32.mrf.mxu0
  %v3509 = vadd.f32 %v3460, %v3508
  %3510 = vmatmul.bf16.gmra.mxu0 %v2915
  %v3511 = vpop.f32.mrf.mxu0
  %v3512 = vadd.f32 %v3463, %v3511
  %v3513 = vpop.f32.mrf.mxu0
  %v3514 = vadd.f32 %v3465, %v3513
  %3515 = vmatmul.bf16.gmra.mxu0 %v2921
  %v3516 = vpop.f32.mrf.mxu0
  %v3517 = vadd.f32 %v3468, %v3516
  %v3518 = vpop.f32.mrf.mxu0
  %v3519 = vadd.f32 %v3470, %v3518
  %3520 = vmatmul.bf16.gmra.mxu0 %v2927
  %v3521 = vpop.f32.mrf.mxu0
  %v3522 = vadd.f32 %v3473, %v3521
  %v3523 = vpop.f32.mrf.mxu0
  %v3524 = vadd.f32 %v3475, %v3523
  %3525 = vmatmul.bf16.gmra.mxu0 %v2936
  %v3526 = vpop.f32.mrf.mxu0
  %v3527 = vadd.f32 %v3478, %v3526
  %v3528 = vpop.f32.mrf.mxu0
  %v3529 = vadd.f32 %v3480, %v3528
  %3530 = vmatmul.bf16.gmra.mxu0 %v2942
  %v3531 = vpop.f32.mrf.mxu0
  %v3532 = vadd.f32 %v3483, %v3531
  %v3533 = vpop.f32.mrf.mxu0
  %v3534 = vadd.f32 %v3485, %v3533
  %3535 = vmatmul.bf16.gmra.mxu0 %v2948
  %v3536 = vpop.f32.mrf.mxu0
  %v3537 = vadd.f32 %v3488, %v3536
  %v3538 = vpop.f32.mrf.mxu0
  %v3539 = vadd.f32 %v3490, %v3538
  %3540 = vmatmul.bf16.gmra.mxu0 %v2954
  %v3541 = vpop.f32.mrf.mxu0
  %v3542 = vadd.f32 %v3493, %v3541
  %v3543 = vpop.f32.mrf.mxu0
  %v3544 = vadd.f32 %v3495, %v3543
  %3545 = vdwg.mxu0
  %3546 = vmatpush.bf16.msra.mxu0 %v3327
  %3547 = vmatpush.bf16.msra.mxu0 %v3326
  %3548 = vmatpush.bf16.msra.mxu0 %v3325
  %3549 = vmatpush.bf16.msra.mxu0 %v3324
  %3550 = vmatpush.bf16.msra.mxu0 %v3323
  %3551 = vmatpush.bf16.msra.mxu0 %v3322
  %3552 = vmatpush.bf16.msra.mxu0 %v3321
  %3553 = vmatpush.bf16.msra.mxu0 %v3320
  %3554 = vmatmul.bf16.gmra.mxu0 %v2910
  %v3555 = vpop.f32.mrf.mxu0
  %v3556 = vadd.f32 %v3507, %v3555
  %v3557 = vpop.f32.mrf.mxu0
  %v3558 = vadd.f32 %v3509, %v3557
  %3559 = vmatmul.bf16.gmra.mxu0 %v2916
  %v3560 = vpop.f32.mrf.mxu0
  %v3561 = vadd.f32 %v3512, %v3560
  %v3562 = vpop.f32.mrf.mxu0
  %v3563 = vadd.f32 %v3514, %v3562
  %3564 = vmatmul.bf16.gmra.mxu0 %v2922
  %v3565 = vpop.f32.mrf.mxu0
  %v3566 = vadd.f32 %v3517, %v3565
  %v3567 = vpop.f32.mrf.mxu0
  %v3568 = vadd.f32 %v3519, %v3567
  %3569 = vmatmul.bf16.gmra.mxu0 %v2928
  %v3570 = vpop.f32.mrf.mxu0
  %v3571 = vadd.f32 %v3522, %v3570
  %v3572 = vpop.f32.mrf.mxu0
  %v3573 = vadd.f32 %v3524, %v3572
  %3574 = vmatmul.bf16.gmra.mxu0 %v2937
  %v3575 = vpop.f32.mrf.mxu0
  %v3576 = vadd.f32 %v3527, %v3575
  %v3577 = vpop.f32.mrf.mxu0
  %v3578 = vadd.f32 %v3529, %v3577
  %3579 = vmatmul.bf16.gmra.mxu0 %v2943
  %v3580 = vpop.f32.mrf.mxu0
  %v3581 = vadd.f32 %v3532, %v3580
  %v3582 = vpop.f32.mrf.mxu0
  %v3583 = vadd.f32 %v3534, %v3582
  %3584 = vmatmul.bf16.gmra.mxu0 %v2949
  %v3585 = vpop.f32.mrf.mxu0
  %v3586 = vadd.f32 %v3537, %v3585
  %v3587 = vpop.f32.mrf.mxu0
  %v3588 = vadd.f32 %v3539, %v3587
  %3589 = vmatmul.bf16.gmra.mxu0 %v2955
  %v3590 = vpop.f32.mrf.mxu0
  %v3591 = vadd.f32 %v3542, %v3590
  %v3592 = vpop.f32.mrf.mxu0
  %v3593 = vadd.f32 %v3544, %v3592
  %3594 = vdwg.mxu0
  %3595 = vmatpush.bf16.msra.mxu0 %v3335
  %3596 = vmatpush.bf16.msra.mxu0 %v3334
  %3597 = vmatpush.bf16.msra.mxu0 %v3333
  %3598 = vmatpush.bf16.msra.mxu0 %v3332
  %3599 = vmatpush.bf16.msra.mxu0 %v3331
  %3600 = vmatpush.bf16.msra.mxu0 %v3330
  %3601 = vmatpush.bf16.msra.mxu0 %v3329
  %3602 = vmatpush.bf16.msra.mxu0 %v3328
  %3603 = vmatmul.bf16.gmra.mxu0 %v2911
  %v3604 = vpop.f32.mrf.mxu0
  %v3605 = vadd.f32 %v3556, %v3604
  %v3606 = vpop.f32.mrf.mxu0
  %v3607 = vadd.f32 %v3558, %v3606
  %3608 = vmatmul.bf16.gmra.mxu0 %v2917
  %v3609 = vpop.f32.mrf.mxu0
  %v3610 = vadd.f32 %v3561, %v3609
  %v3611 = vpop.f32.mrf.mxu0
  %v3612 = vadd.f32 %v3563, %v3611
  %3613 = vmatmul.bf16.gmra.mxu0 %v2923
  %v3614 = vpop.f32.mrf.mxu0
  %v3615 = vadd.f32 %v3566, %v3614
  %v3616 = vpop.f32.mrf.mxu0
  %v3617 = vadd.f32 %v3568, %v3616
  %3618 = vmatmul.bf16.gmra.mxu0 %v2929
  %v3619 = vpop.f32.mrf.mxu0
  %v3620 = vadd.f32 %v3571, %v3619
  %v3621 = vpop.f32.mrf.mxu0
  %v3622 = vadd.f32 %v3573, %v3621
  %3623 = vmatmul.bf16.gmra.mxu0 %v2938
  %v3624 = vpop.f32.mrf.mxu0
  %v3625 = vadd.f32 %v3576, %v3624
  %v3626 = vpop.f32.mrf.mxu0
  %v3627 = vadd.f32 %v3578, %v3626
  %3628 = vmatmul.bf16.gmra.mxu0 %v2944
  %v3629 = vpop.f32.mrf.mxu0
  %v3630 = vadd.f32 %v3581, %v3629
  %v3631 = vpop.f32.mrf.mxu0
  %v3632 = vadd.f32 %v3583, %v3631
  %3633 = vmatmul.bf16.gmra.mxu0 %v2950
  %v3634 = vpop.f32.mrf.mxu0
  %v3635 = vadd.f32 %v3586, %v3634
  %v3636 = vpop.f32.mrf.mxu0
  %v3637 = vadd.f32 %v3588, %v3636
  %3638 = vmatmul.bf16.gmra.mxu0 %v2956
  %v3639 = vpop.f32.mrf.mxu0
  %v3640 = vadd.f32 %v3591, %v3639
  %v3641 = vpop.f32.mrf.mxu0
  %v3642 = vadd.f32 %v3593, %v3641
  %3643 = vdwg.mxu0
  %3644 = vmatpush.bf16.msra.mxu0 %v3343
  %3645 = vmatpush.bf16.msra.mxu0 %v3342
  %3646 = vmatpush.bf16.msra.mxu0 %v3341
  %3647 = vmatpush.bf16.msra.mxu0 %v3340
  %3648 = vmatpush.bf16.msra.mxu0 %v3339
  %3649 = vmatpush.bf16.msra.mxu0 %v3338
  %3650 = vmatpush.bf16.msra.mxu0 %v3337
  %3651 = vmatpush.bf16.msra.mxu0 %v3336
  %3652 = vmatmul.bf16.gmra.mxu0 %v2912
  %v3653 = vpop.f32.mrf.mxu0
  %v3654 = vadd.f32 %v3605, %v3653
  %v3655 = vpop.f32.mrf.mxu0
  %v3656 = vadd.f32 %v3607, %v3655
  %3657 = vmatmul.bf16.gmra.mxu0 %v2918
  %v3658 = vpop.f32.mrf.mxu0
  %v3659 = vadd.f32 %v3610, %v3658
  %v3660 = vpop.f32.mrf.mxu0
  %v3661 = vadd.f32 %v3612, %v3660
  %3662 = vmatmul.bf16.gmra.mxu0 %v2924
  %v3663 = vpop.f32.mrf.mxu0
  %v3664 = vadd.f32 %v3615, %v3663
  %v3665 = vpop.f32.mrf.mxu0
  %v3666 = vadd.f32 %v3617, %v3665
  %3667 = vmatmul.bf16.gmra.mxu0 %v2930
  %v3668 = vpop.f32.mrf.mxu0
  %v3669 = vadd.f32 %v3620, %v3668
  %v3670 = vpop.f32.mrf.mxu0
  %v3671 = vadd.f32 %v3622, %v3670
  %3672 = vmatmul.bf16.gmra.mxu0 %v2939
  %v3673 = vpop.f32.mrf.mxu0
  %v3674 = vadd.f32 %v3625, %v3673
  %v3675 = vpop.f32.mrf.mxu0
  %v3676 = vadd.f32 %v3627, %v3675
  %3677 = vmatmul.bf16.gmra.mxu0 %v2945
  %v3678 = vpop.f32.mrf.mxu0
  %v3679 = vadd.f32 %v3630, %v3678
  %v3680 = vpop.f32.mrf.mxu0
  %v3681 = vadd.f32 %v3632, %v3680
  %3682 = vmatmul.bf16.gmra.mxu0 %v2951
  %v3683 = vpop.f32.mrf.mxu0
  %v3684 = vadd.f32 %v3635, %v3683
  %v3685 = vpop.f32.mrf.mxu0
  %v3686 = vadd.f32 %v3637, %v3685
  %3687 = vmatmul.bf16.gmra.mxu0 %v2957
  %v3688 = vpop.f32.mrf.mxu0
  %v3689 = vadd.f32 %v3640, %v3688
  %v3690 = vpop.f32.mrf.mxu0
  %v3691 = vadd.f32 %v3642, %v3690
  %3692 = vdwg.mxu0
  %3693 = vmatpush.bf16.msra.mxu0 %v3351
  %3694 = vmatpush.bf16.msra.mxu0 %v3350
  %3695 = vmatpush.bf16.msra.mxu0 %v3349
  %3696 = vmatpush.bf16.msra.mxu0 %v3348
  %3697 = vmatpush.bf16.msra.mxu0 %v3347
  %3698 = vmatpush.bf16.msra.mxu0 %v3346
  %3699 = vmatpush.bf16.msra.mxu0 %v3345
  %3700 = vmatpush.bf16.msra.mxu0 %v3344
  %3701 = vmatmul.bf16.gmra.mxu0 %v2913
  %v3702 = vpop.f32.mrf.mxu0
  %v3703 = vadd.f32 %v3654, %v3702
  %v3704 = vpop.f32.mrf.mxu0
  %v3705 = vadd.f32 %v3656, %v3704
  %3706 = vmatmul.bf16.gmra.mxu0 %v2919
  %v3707 = vpop.f32.mrf.mxu0
  %v3708 = vadd.f32 %v3659, %v3707
  %v3709 = vpop.f32.mrf.mxu0
  %v3710 = vadd.f32 %v3661, %v3709
  %3711 = vmatmul.bf16.gmra.mxu0 %v2925
  %v3712 = vpop.f32.mrf.mxu0
  %v3713 = vadd.f32 %v3664, %v3712
  %v3714 = vpop.f32.mrf.mxu0
  %v3715 = vadd.f32 %v3666, %v3714
  %3716 = vmatmul.bf16.gmra.mxu0 %v2931
  %v3717 = vpop.f32.mrf.mxu0
  %v3718 = vadd.f32 %v3669, %v3717
  %v3719 = vpop.f32.mrf.mxu0
  %v3720 = vadd.f32 %v3671, %v3719
  %3721 = vmatmul.bf16.gmra.mxu0 %v2940
  %v3722 = vpop.f32.mrf.mxu0
  %v3723 = vadd.f32 %v3674, %v3722
  %v3724 = vpop.f32.mrf.mxu0
  %v3725 = vadd.f32 %v3676, %v3724
  %3726 = vmatmul.bf16.gmra.mxu0 %v2946
  %v3727 = vpop.f32.mrf.mxu0
  %v3728 = vadd.f32 %v3679, %v3727
  %v3729 = vpop.f32.mrf.mxu0
  %v3730 = vadd.f32 %v3681, %v3729
  %3731 = vmatmul.bf16.gmra.mxu0 %v2952
  %v3732 = vpop.f32.mrf.mxu0
  %v3733 = vadd.f32 %v3684, %v3732
  %v3734 = vpop.f32.mrf.mxu0
  %v3735 = vadd.f32 %v3686, %v3734
  %3736 = vmatmul.bf16.gmra.mxu0 %v2958
  %v3737 = vpop.f32.mrf.mxu0
  %v3738 = vadd.f32 %v3689, %v3737
  %v3739 = vpop.f32.mrf.mxu0
  %v3740 = vadd.f32 %v3691, %v3739
  %3741 = vdwg.mxu0
  %3742 = vmatpush.bf16.msra.mxu0 %v3359
  %3743 = vmatpush.bf16.msra.mxu0 %v3358
  %3744 = vmatpush.bf16.msra.mxu0 %v3357
  %3745 = vmatpush.bf16.msra.mxu0 %v3356
  %3746 = vmatpush.bf16.msra.mxu0 %v3355
  %3747 = vmatpush.bf16.msra.mxu0 %v3354
  %3748 = vmatpush.bf16.msra.mxu0 %v3353
  %3749 = vmatpush.bf16.msra.mxu0 %v3352
  %3750 = vmatmul.bf16.gmra.mxu0 %v2914
  %v3751 = vpop.f32.mrf.mxu0
  %v3752 = vadd.f32 %v3703, %v3751
  %v3753 = vpop.f32.mrf.mxu0
  %v3754 = vadd.f32 %v3705, %v3753
  %3755 = vmatmul.bf16.gmra.mxu0 %v2920
  %v3756 = vpop.f32.mrf.mxu0
  %v3757 = vadd.f32 %v3708, %v3756
  %v3758 = vpop.f32.mrf.mxu0
  %v3759 = vadd.f32 %v3710, %v3758
  %3760 = vmatmul.bf16.gmra.mxu0 %v2926
  %v3761 = vpop.f32.mrf.mxu0
  %v3762 = vadd.f32 %v3713, %v3761
  %v3763 = vpop.f32.mrf.mxu0
  %v3764 = vadd.f32 %v3715, %v3763
  %3765 = vmatmul.bf16.gmra.mxu0 %v2932
  %v3766 = vpop.f32.mrf.mxu0
  %v3767 = vadd.f32 %v3718, %v3766
  %v3768 = vpop.f32.mrf.mxu0
  %v3769 = vadd.f32 %v3720, %v3768
  %3770 = vmatmul.bf16.gmra.mxu0 %v2941
  %v3771 = vpop.f32.mrf.mxu0
  %v3772 = vadd.f32 %v3723, %v3771
  %v3773 = vpop.f32.mrf.mxu0
  %v3774 = vadd.f32 %v3725, %v3773
  %3775 = vmatmul.bf16.gmra.mxu0 %v2947
  %v3776 = vpop.f32.mrf.mxu0
  %v3777 = vadd.f32 %v3728, %v3776
  %v3778 = vpop.f32.mrf.mxu0
  %v3779 = vadd.f32 %v3730, %v3778
  %3780 = vmatmul.bf16.gmra.mxu0 %v2953
  %v3781 = vpop.f32.mrf.mxu0
  %v3782 = vadd.f32 %v3733, %v3781
  %v3783 = vpop.f32.mrf.mxu0
  %v3784 = vadd.f32 %v3735, %v3783
  %3785 = vmatmul.bf16.gmra.mxu0 %v2959
  %v3786 = vpop.f32.mrf.mxu0
  %v3787 = vadd.f32 %v3738, %v3786
  %v3788 = vpop.f32.mrf.mxu0
  %v3789 = vadd.f32 %v3740, %v3788
  %3790 = vdwg.mxu0
  %3791 = vmatpush.bf16.msra.mxu0 %v3367
  %3792 = vmatpush.bf16.msra.mxu0 %v3366
  %3793 = vmatpush.bf16.msra.mxu0 %v3365
  %3794 = vmatpush.bf16.msra.mxu0 %v3364
  %3795 = vmatpush.bf16.msra.mxu0 %v3363
  %3796 = vmatpush.bf16.msra.mxu0 %v3362
  %3797 = vmatpush.bf16.msra.mxu0 %v3361
  %3798 = vmatpush.bf16.msra.mxu0 %v3360
  %3799 = vmatmul.bf16.gmra.mxu0 %v2915
  %v3800 = vpop.f32.mrf.mxu0
  %v3801 = vadd.f32 %v3752, %v3800
  %v3802 = vpop.f32.mrf.mxu0
  %v3803 = vadd.f32 %v3754, %v3802
  %3804 = vmatmul.bf16.gmra.mxu0 %v2921
  %v3805 = vpop.f32.mrf.mxu0
  %v3806 = vadd.f32 %v3757, %v3805
  %v3807 = vpop.f32.mrf.mxu0
  %v3808 = vadd.f32 %v3759, %v3807
  %3809 = vmatmul.bf16.gmra.mxu0 %v2927
  %v3810 = vpop.f32.mrf.mxu0
  %v3811 = vadd.f32 %v3762, %v3810
  %v3812 = vpop.f32.mrf.mxu0
  %v3813 = vadd.f32 %v3764, %v3812
  %3814 = vmatmul.bf16.gmra.mxu0 %v2933
  %v3815 = vpop.f32.mrf.mxu0
  %v3816 = vadd.f32 %v3767, %v3815
  %v3817 = vpop.f32.mrf.mxu0
  %v3818 = vadd.f32 %v3769, %v3817
  %3819 = vmatmul.bf16.gmra.mxu0 %v2942
  %v3820 = vpop.f32.mrf.mxu0
  %v3821 = vadd.f32 %v3772, %v3820
  %v3822 = vpop.f32.mrf.mxu0
  %v3823 = vadd.f32 %v3774, %v3822
  %3824 = vmatmul.bf16.gmra.mxu0 %v2948
  %v3825 = vpop.f32.mrf.mxu0
  %v3826 = vadd.f32 %v3777, %v3825
  %v3827 = vpop.f32.mrf.mxu0
  %v3828 = vadd.f32 %v3779, %v3827
  %3829 = vmatmul.bf16.gmra.mxu0 %v2954
  %v3830 = vpop.f32.mrf.mxu0
  %v3831 = vadd.f32 %v3782, %v3830
  %v3832 = vpop.f32.mrf.mxu0
  %v3833 = vadd.f32 %v3784, %v3832
  %3834 = vmatmul.bf16.gmra.mxu0 %v2960
  %v3835 = vpop.f32.mrf.mxu0
  %v3836 = vadd.f32 %v3787, %v3835
  %v3837 = vpop.f32.mrf.mxu0
  %v3838 = vadd.f32 %v3789, %v3837
  %3839 = vdwg.mxu0
  %3840 = vmatpush.bf16.msra.mxu0 %v3375
  %3841 = vmatpush.bf16.msra.mxu0 %v3374
  %3842 = vmatpush.bf16.msra.mxu0 %v3373
  %3843 = vmatpush.bf16.msra.mxu0 %v3372
  %3844 = vmatpush.bf16.msra.mxu0 %v3371
  %3845 = vmatpush.bf16.msra.mxu0 %v3370
  %3846 = vmatpush.bf16.msra.mxu0 %v3369
  %3847 = vmatpush.bf16.msra.mxu0 %v3368
  %3848 = vmatmul.bf16.gmra.mxu0 %v2916
  %v3849 = vpop.f32.mrf.mxu0
  %v3850 = vadd.f32 %v3801, %v3849
  %v3851 = vpop.f32.mrf.mxu0
  %v3852 = vadd.f32 %v3803, %v3851
  %3853 = vmatmul.bf16.gmra.mxu0 %v2922
  %v3854 = vpop.f32.mrf.mxu0
  %v3855 = vadd.f32 %v3806, %v3854
  %v3856 = vpop.f32.mrf.mxu0
  %v3857 = vadd.f32 %v3808, %v3856
  %3858 = vmatmul.bf16.gmra.mxu0 %v2928
  %v3859 = vpop.f32.mrf.mxu0
  %v3860 = vadd.f32 %v3811, %v3859
  %v3861 = vpop.f32.mrf.mxu0
  %v3862 = vadd.f32 %v3813, %v3861
  %3863 = vmatmul.bf16.gmra.mxu0 %v2934
  %v3864 = vpop.f32.mrf.mxu0
  %v3865 = vadd.f32 %v3816, %v3864
  %v3866 = vpop.f32.mrf.mxu0
  %v3867 = vadd.f32 %v3818, %v3866
  %3868 = vmatmul.bf16.gmra.mxu0 %v2943
  %v3869 = vpop.f32.mrf.mxu0
  %v3870 = vadd.f32 %v3821, %v3869
  %v3871 = vpop.f32.mrf.mxu0
  %v3872 = vadd.f32 %v3823, %v3871
  %3873 = vmatmul.bf16.gmra.mxu0 %v2949
  %v3874 = vpop.f32.mrf.mxu0
  %v3875 = vadd.f32 %v3826, %v3874
  %v3876 = vpop.f32.mrf.mxu0
  %v3877 = vadd.f32 %v3828, %v3876
  %3878 = vmatmul.bf16.gmra.mxu0 %v2955
  %v3879 = vpop.f32.mrf.mxu0
  %v3880 = vadd.f32 %v3831, %v3879
  %v3881 = vpop.f32.mrf.mxu0
  %v3882 = vadd.f32 %v3833, %v3881
  %3883 = vmatmul.bf16.gmra.mxu0 %v2961
  %v3884 = vpop.f32.mrf.mxu0
  %v3885 = vadd.f32 %v3836, %v3884
  %v3886 = vpop.f32.mrf.mxu0
  %v3887 = vadd.f32 %v3838, %v3886
  %3888 = vdwg.mxu0
  %v3889 = vld [vmem:[%s9] sm:$0x1]
  %v3891 = vperm.slane %v3889, 0
  %v3893 = vmul.f32 %v3850, %v3891
  %v3894 = vmul.f32 %v3852, %v3891
  %v3895 = vmul.f32 %v3855, %v3891
  %v3896 = vmul.f32 %v3857, %v3891
  %v3897 = vmul.f32 %v3860, %v3891
  %v3898 = vmul.f32 %v3862, %v3891
  %v3899 = vmul.f32 %v3865, %v3891
  %v3900 = vmul.f32 %v3867, %v3891
  %v3901 = vmul.f32 %v3870, %v3891
  %v3902 = vmul.f32 %v3872, %v3891
  %v3903 = vmul.f32 %v3875, %v3891
  %v3904 = vmul.f32 %v3877, %v3891
  %v3905 = vmul.f32 %v3880, %v3891
  %v3906 = vmul.f32 %v3882, %v3891
  %v3907 = vmul.f32 %v3885, %v3891
  %v3908 = vmul.f32 %v3887, %v3891
  %v3909 = vld [vmem:[%s10] sm:$0x1]
  %v3911 = vperm.slane %v3909, 0
  %v3913 = vadd.f32 %v3893, %v3911
  %v3914 = vadd.f32 %v3894, %v3911
  %v3915 = vadd.f32 %v3895, %v3911
  %v3916 = vadd.f32 %v3896, %v3911
  %v3917 = vadd.f32 %v3897, %v3911
  %v3918 = vadd.f32 %v3898, %v3911
  %v3919 = vadd.f32 %v3899, %v3911
  %v3920 = vadd.f32 %v3900, %v3911
  %v3921 = vadd.f32 %v3901, %v3911
  %v3922 = vadd.f32 %v3902, %v3911
  %v3923 = vadd.f32 %v3903, %v3911
  %v3924 = vadd.f32 %v3904, %v3911
  %v3925 = vadd.f32 %v3905, %v3911
  %v3926 = vadd.f32 %v3906, %v3911
  %v3927 = vadd.f32 %v3907, %v3911
  %v3928 = vadd.f32 %v3908, %v3911
  %v3929 = vmax.f32 %v3913, 0.0
  %v3930 = vmax.f32 %v3914, 0.0
  %v3931 = vmax.f32 %v3915, 0.0
  %v3932 = vmax.f32 %v3916, 0.0
  %v3933 = vmax.f32 %v3917, 0.0
  %v3934 = vmax.f32 %v3918, 0.0
  %v3935 = vmax.f32 %v3919, 0.0
  %v3936 = vmax.f32 %v3920, 0.0
  %v3937 = vmax.f32 %v3921, 0.0
  %v3938 = vmax.f32 %v3922, 0.0
  %v3939 = vmax.f32 %v3923, 0.0
  %v3940 = vmax.f32 %v3924, 0.0
  %v3941 = vmax.f32 %v3925, 0.0
  %v3942 = vmax.f32 %v3926, 0.0
  %v3943 = vmax.f32 %v3927, 0.0
  %v3944 = vmax.f32 %v3928, 0.0
  %v3945 = vpack.c.bf16 %v3930, %v3929
  %v3946 = vpack.c.bf16 %v3932, %v3931
  %v3947 = vpack.c.bf16 %v3934, %v3933
  %v3948 = vpack.c.bf16 %v3936, %v3935
  %v3949 = vpack.c.bf16 %v3938, %v3937
  %v3950 = vpack.c.bf16 %v3940, %v3939
  %v3951 = vpack.c.bf16 %v3942, %v3941
  %v3952 = vpack.c.bf16 %v3944, %v3943
  %v3953 = vld [vmem:[%s11] sm:$0xff]
  %v3954 = vld [vmem:[%s11 + $0x8] sm:$0xff]
  %v3955 = vld [vmem:[%s11 + $0x10] sm:$0xff]
  %v3956 = vld [vmem:[%s11 + $0x18] sm:$0xff]
  %v3957 = vld [vmem:[%s11 + $0x20] sm:$0xff]
  %v3958 = vld [vmem:[%s11 + $0x28] sm:$0xff]
  %v3959 = vld [vmem:[%s11 + $0x30] sm:$0xff]
  %v3960 = vld [vmem:[%s11 + $0x38] sm:$0xff]
  %v3961 = vld [vmem:[%s11 + $0x40] sm:$0xff]
  %v3962 = vld [vmem:[%s11 + $0x48] sm:$0xff]
  %v3963 = vld [vmem:[%s11 + $0x50] sm:$0xff]
  %v3964 = vld [vmem:[%s11 + $0x58] sm:$0xff]
  %v3965 = vld [vmem:[%s11 + $0x60] sm:$0xff]
  %v3966 = vld [vmem:[%s11 + $0x68] sm:$0xff]
  %v3967 = vld [vmem:[%s11 + $0x70] sm:$0xff]
  %v3968 = vld [vmem:[%s11 + $0x78] sm:$0xff]
  %v3969 = vld [vmem:[%s11 + $0x80] sm:$0xff]
  %v3970 = vld [vmem:[%s11 + $0x88] sm:$0xff]
  %v3971 = vld [vmem:[%s11 + $0x90] sm:$0xff]
  %v3972 = vld [vmem:[%s11 + $0x98] sm:$0xff]
  %v3973 = vld [vmem:[%s11 + $0xa0] sm:$0xff]
  %v3974 = vld [vmem:[%s11 + $0xa8] sm:$0xff]
  %v3975 = vld [vmem:[%s11 + $0xb0] sm:$0xff]
  %v3976 = vld [vmem:[%s11 + $0xb8] sm:$0xff]
  %v3977 = vld [vmem:[%s11 + $0xc0] sm:$0xff]
  %v3978 = vld [vmem:[%s11 + $0xc8] sm:$0xff]
  %v3979 = vld [vmem:[%s11 + $0xd0] sm:$0xff]
  %v3980 = vld [vmem:[%s11 + $0xd8] sm:$0xff]
  %v3981 = vld [vmem:[%s11 + $0xe0] sm:$0xff]
  %v3982 = vld [vmem:[%s11 + $0xe8] sm:$0xff]
  %v3983 = vld [vmem:[%s11 + $0xf0] sm:$0xff]
  %v3984 = vld [vmem:[%s11 + $0xf8] sm:$0xff]
  %v4017 = vunpack.c.l.b16 %v3953
  %v4018 = vunpack.c.h.b16 %v3953
  %v4019 = vunpack.c.l.b16 %v3954
  %v4020 = vunpack.c.h.b16 %v3954
  %v4021 = vunpack.c.l.b16 %v3955
  %v4022 = vunpack.c.h.b16 %v3955
  %v4023 = vunpack.c.l.b16 %v3956
  %v4024 = vunpack.c.h.b16 %v3956
  %v4025 = vunpack.c.l.b16 %v3957
  %v4026 = vunpack.c.h.b16 %v3957
  %v4027 = vunpack.c.l.b16 %v3958
  %v4028 = vunpack.c.h.b16 %v3958
  %v4029 = vunpack.c.l.b16 %v3959
  %v4030 = vunpack.c.h.b16 %v3959
  %v4031 = vunpack.c.l.b16 %v3960
  %v4032 = vunpack.c.h.b16 %v3960
  %v4033 = vunpack.c.l.b16 %v3961
  %v4034 = vunpack.c.h.b16 %v3961
  %v4035 = vunpack.c.l.b16 %v3962
  %v4036 = vunpack.c.h.b16 %v3962
  %v4037 = vunpack.c.l.b16 %v3963
  %v4038 = vunpack.c.h.b16 %v3963
  %v4039 = vunpack.c.l.b16 %v3964
  %v4040 = vunpack.c.h.b16 %v3964
  %v4041 = vunpack.c.l.b16 %v3965
  %v4042 = vunpack.c.h.b16 %v3965
  %v4043 = vunpack.c.l.b16 %v3966
  %v4044 = vunpack.c.h.b16 %v3966
  %v4045 = vunpack.c.l.b16 %v3967
  %v4046 = vunpack.c.h.b16 %v3967
  %v4047 = vunpack.c.l.b16 %v3968
  %v4048 = vunpack.c.h.b16 %v3968
  %v4049 = vunpack.c.l.b16 %v3969
  %v4050 = vunpack.c.h.b16 %v3969
  %v4051 = vunpack.c.l.b16 %v3970
  %v4052 = vunpack.c.h.b16 %v3970
  %v4053 = vunpack.c.l.b16 %v3971
  %v4054 = vunpack.c.h.b16 %v3971
  %v4055 = vunpack.c.l.b16 %v3972
  %v4056 = vunpack.c.h.b16 %v3972
  %v4057 = vunpack.c.l.b16 %v3973
  %v4058 = vunpack.c.h.b16 %v3973
  %v4059 = vunpack.c.l.b16 %v3974
  %v4060 = vunpack.c.h.b16 %v3974
  %v4061 = vunpack.c.l.b16 %v3975
  %v4062 = vunpack.c.h.b16 %v3975
  %v4063 = vunpack.c.l.b16 %v3976
  %v4064 = vunpack.c.h.b16 %v3976
  %v4065 = vunpack.c.l.b16 %v3977
  %v4066 = vunpack.c.h.b16 %v3977
  %v4067 = vunpack.c.l.b16 %v3978
  %v4068 = vunpack.c.h.b16 %v3978
  %v4069 = vunpack.c.l.b16 %v3979
  %v4070 = vunpack.c.h.b16 %v3979
  %v4071 = vunpack.c.l.b16 %v3980
  %v4072 = vunpack.c.h.b16 %v3980
  %v4073 = vunpack.c.l.b16 %v3981
  %v4074 = vunpack.c.h.b16 %v3981
  %v4075 = vunpack.c.l.b16 %v3982
  %v4076 = vunpack.c.h.b16 %v3982
  %v4077 = vunpack.c.l.b16 %v3983
  %v4078 = vunpack.c.h.b16 %v3983
  %v4079 = vunpack.c.l.b16 %v3984
  %v4080 = vunpack.c.h.b16 %v3984
  %v4081 = vpack.c.b16 %v4021, %v4017
  %v4082 = vpack.c.b16 %v4022, %v4018
  %v4083 = vpack.c.b16 %v4023, %v4019
  %v4084 = vpack.c.b16 %v4024, %v4020
  %v4085 = vpack.c.b16 %v4029, %v4025
  %v4086 = vpack.c.b16 %v4030, %v4026
  %v4087 = vpack.c.b16 %v4031, %v4027
  %v4088 = vpack.c.b16 %v4032, %v4028
  %v4089 = vpack.c.b16 %v4037, %v4033
  %v4090 = vpack.c.b16 %v4038, %v4034
  %v4091 = vpack.c.b16 %v4039, %v4035
  %v4092 = vpack.c.b16 %v4040, %v4036
  %v4093 = vpack.c.b16 %v4045, %v4041
  %v4094 = vpack.c.b16 %v4046, %v4042
  %v4095 = vpack.c.b16 %v4047, %v4043
  %v4096 = vpack.c.b16 %v4048, %v4044
  %v4097 = vpack.c.b16 %v4053, %v4049
  %v4098 = vpack.c.b16 %v4054, %v4050
  %v4099 = vpack.c.b16 %v4055, %v4051
  %v4100 = vpack.c.b16 %v4056, %v4052
  %v4101 = vpack.c.b16 %v4061, %v4057
  %v4102 = vpack.c.b16 %v4062, %v4058
  %v4103 = vpack.c.b16 %v4063, %v4059
  %v4104 = vpack.c.b16 %v4064, %v4060
  %v4105 = vpack.c.b16 %v4069, %v4065
  %v4106 = vpack.c.b16 %v4070, %v4066
  %v4107 = vpack.c.b16 %v4071, %v4067
  %v4108 = vpack.c.b16 %v4072, %v4068
  %v4109 = vpack.c.b16 %v4077, %v4073
  %v4110 = vpack.c.b16 %v4078, %v4074
  %v4111 = vpack.c.b16 %v4079, %v4075
  %v4112 = vpack.c.b16 %v4080, %v4076
  %4145 = vmatpush.bf16.msra.mxu0 %v4109
  %4146 = vmatpush.bf16.msra.mxu0 %v4105
  %4147 = vmatpush.bf16.msra.mxu0 %v4101
  %4148 = vmatpush.bf16.msra.mxu0 %v4097
  %4149 = vmatpush.bf16.msra.mxu0 %v4093
  %4150 = vmatpush.bf16.msra.mxu0 %v4089
  %4151 = vmatpush.bf16.msra.mxu0 %v4085
  %4152 = vmatpush.bf16.msra.mxu0 %v4081
  %4153 = vmatmul.bf16.gmra.mxu0 %v3945
  %v4154 = vpop.f32.mrf.mxu0
  %v4155 = vadd.f32 0.0, %v4154
  %v4156 = vpop.f32.mrf.mxu0
  %v4157 = vadd.f32 0.0, %v4156
  %4158 = vmatmul.bf16.gmra.mxu0 %v3946
  %v4159 = vpop.f32.mrf.mxu0
  %v4160 = vadd.f32 0.0, %v4159
  %v4161 = vpop.f32.mrf.mxu0
  %v4162 = vadd.f32 0.0, %v4161
  %4163 = vmatmul.bf16.gmra.mxu0 %v3947
  %v4164 = vpop.f32.mrf.mxu0
  %v4165 = vadd.f32 0.0, %v4164
  %v4166 = vpop.f32.mrf.mxu0
  %v4167 = vadd.f32 0.0, %v4166
  %4168 = vmatmul.bf16.gmra.mxu0 %v3948
  %v4169 = vpop.f32.mrf.mxu0
  %v4170 = vadd.f32 0.0, %v4169
  %v4171 = vpop.f32.mrf.mxu0
  %v4172 = vadd.f32 0.0, %v4171
  %4173 = vmatmul.bf16.gmra.mxu0 %v3949
  %v4174 = vpop.f32.mrf.mxu0
  %v4175 = vadd.f32 0.0, %v4174
  %v4176 = vpop.f32.mrf.mxu0
  %v4177 = vadd.f32 0.0, %v4176
  %4178 = vmatmul.bf16.gmra.mxu0 %v3950
  %v4179 = vpop.f32.mrf.mxu0
  %v4180 = vadd.f32 0.0, %v4179
  %v4181 = vpop.f32.mrf.mxu0
  %v4182 = vadd.f32 0.0, %v4181
  %4183 = vmatmul.bf16.gmra.mxu0 %v3951
  %v4184 = vpop.f32.mrf.mxu0
  %v4185 = vadd.f32 0.0, %v4184
  %v4186 = vpop.f32.mrf.mxu0
  %v4187 = vadd.f32 0.0, %v4186
  %4188 = vmatmul.bf16.gmra.mxu0 %v3952
  %v4189 = vpop.f32.mrf.mxu0
  %v4190 = vadd.f32 0.0, %v4189
  %v4191 = vpop.f32.mrf.mxu0
  %v4192 = vadd.f32 0.0, %v4191
  %4193 = vdwg.mxu0
  %4194 = vmatpush.bf16.msra.mxu0 %v4110
  %4195 = vmatpush.bf16.msra.mxu0 %v4106
  %4196 = vmatpush.bf16.msra.mxu0 %v4102
  %4197 = vmatpush.bf16.msra.mxu0 %v4098
  %4198 = vmatpush.bf16.msra.mxu0 %v4094
  %4199 = vmatpush.bf16.msra.mxu0 %v4090
  %4200 = vmatpush.bf16.msra.mxu0 %v4086
  %4201 = vmatpush.bf16.msra.mxu0 %v4082
  %4202 = vmatmul.bf16.gmra.mxu0 %v3945
  %v4203 = vpop.f32.mrf.mxu0
  %v4204 = vadd.f32 0.0, %v4203
  %v4205 = vpop.f32.mrf.mxu0
  %v4206 = vadd.f32 0.0, %v4205
  %4207 = vmatmul.bf16.gmra.mxu0 %v3946
  %v4208 = vpop.f32.mrf.mxu0
  %v4209 = vadd.f32 0.0, %v4208
  %v4210 = vpop.f32.mrf.mxu0
  %v4211 = vadd.f32 0.0, %v4210
  %4212 = vmatmul.bf16.gmra.mxu0 %v3947
  %v4213 = vpop.f32.mrf.mxu0
  %v4214 = vadd.f32 0.0, %v4213
  %v4215 = vpop.f32.mrf.mxu0
  %v4216 = vadd.f32 0.0, %v4215
  %4217 = vmatmul.bf16.gmra.mxu0 %v3948
  %v4218 = vpop.f32.mrf.mxu0
  %v4219 = vadd.f32 0.0, %v4218
  %v4220 = vpop.f32.mrf.mxu0
  %v4221 = vadd.f32 0.0, %v4220
  %4222 = vmatmul.bf16.gmra.mxu0 %v3949
  %v4223 = vpop.f32.mrf.mxu0
  %v4224 = vadd.f32 0.0, %v4223
  %v4225 = vpop.f32.mrf.mxu0
  %v4226 = vadd.f32 0.0, %v4225
  %4227 = vmatmul.bf16.gmra.mxu0 %v3950
  %v4228 = vpop.f32.mrf.mxu0
  %v4229 = vadd.f32 0.0, %v4228
  %v4230 = vpop.f32.mrf.mxu0
  %v4231 = vadd.f32 0.0, %v4230
  %4232 = vmatmul.bf16.gmra.mxu0 %v3951
  %v4233 = vpop.f32.mrf.mxu0
  %v4234 = vadd.f32 0.0, %v4233
  %v4235 = vpop.f32.mrf.mxu0
  %v4236 = vadd.f32 0.0, %v4235
  %4237 = vmatmul.bf16.gmra.mxu0 %v3952
  %v4238 = vpop.f32.mrf.mxu0
  %v4239 = vadd.f32 0.0, %v4238
  %v4240 = vpop.f32.mrf.mxu0
  %v4241 = vadd.f32 0.0, %v4240
  %4242 = vdwg.mxu0
  %4243 = vmatpush.bf16.msra.mxu0 %v4111
  %4244 = vmatpush.bf16.msra.mxu0 %v4107
  %4245 = vmatpush.bf16.msra.mxu0 %v4103
  %4246 = vmatpush.bf16.msra.mxu0 %v4099
  %4247 = vmatpush.bf16.msra.mxu0 %v4095
  %4248 = vmatpush.bf16.msra.mxu0 %v4091
  %4249 = vmatpush.bf16.msra.mxu0 %v4087
  %4250 = vmatpush.bf16.msra.mxu0 %v4083
  %4251 = vmatmul.bf16.gmra.mxu0 %v3945
  %v4252 = vpop.f32.mrf.mxu0
  %v4253 = vadd.f32 0.0, %v4252
  %v4254 = vpop.f32.mrf.mxu0
  %v4255 = vadd.f32 0.0, %v4254
  %4256 = vmatmul.bf16.gmra.mxu0 %v3946
  %v4257 = vpop.f32.mrf.mxu0
  %v4258 = vadd.f32 0.0, %v4257
  %v4259 = vpop.f32.mrf.mxu0
  %v4260 = vadd.f32 0.0, %v4259
  %4261 = vmatmul.bf16.gmra.mxu0 %v3947
  %v4262 = vpop.f32.mrf.mxu0
  %v4263 = vadd.f32 0.0, %v4262
  %v4264 = vpop.f32.mrf.mxu0
  %v4265 = vadd.f32 0.0, %v4264
  %4266 = vmatmul.bf16.gmra.mxu0 %v3948
  %v4267 = vpop.f32.mrf.mxu0
  %v4268 = vadd.f32 0.0, %v4267
  %v4269 = vpop.f32.mrf.mxu0
  %v4270 = vadd.f32 0.0, %v4269
  %4271 = vmatmul.bf16.gmra.mxu0 %v3949
  %v4272 = vpop.f32.mrf.mxu0
  %v4273 = vadd.f32 0.0, %v4272
  %v4274 = vpop.f32.mrf.mxu0
  %v4275 = vadd.f32 0.0, %v4274
  %4276 = vmatmul.bf16.gmra.mxu0 %v3950
  %v4277 = vpop.f32.mrf.mxu0
  %v4278 = vadd.f32 0.0, %v4277
  %v4279 = vpop.f32.mrf.mxu0
  %v4280 = vadd.f32 0.0, %v4279
  %4281 = vmatmul.bf16.gmra.mxu0 %v3951
  %v4282 = vpop.f32.mrf.mxu0
  %v4283 = vadd.f32 0.0, %v4282
  %v4284 = vpop.f32.mrf.mxu0
  %v4285 = vadd.f32 0.0, %v4284
  %4286 = vmatmul.bf16.gmra.mxu0 %v3952
  %v4287 = vpop.f32.mrf.mxu0
  %v4288 = vadd.f32 0.0, %v4287
  %v4289 = vpop.f32.mrf.mxu0
  %v4290 = vadd.f32 0.0, %v4289
  %4291 = vdwg.mxu0
  %4292 = vmatpush.bf16.msra.mxu0 %v4112
  %4293 = vmatpush.bf16.msra.mxu0 %v4108
  %4294 = vmatpush.bf16.msra.mxu0 %v4104
  %4295 = vmatpush.bf16.msra.mxu0 %v4100
  %4296 = vmatpush.bf16.msra.mxu0 %v4096
  %4297 = vmatpush.bf16.msra.mxu0 %v4092
  %4298 = vmatpush.bf16.msra.mxu0 %v4088
  %4299 = vmatpush.bf16.msra.mxu0 %v4084
  %4300 = vmatmul.bf16.gmra.mxu0 %v3945
  %v4301 = vpop.f32.mrf.mxu0
  %v4302 = vadd.f32 0.0, %v4301
  %v4303 = vpop.f32.mrf.mxu0
  %v4304 = vadd.f32 0.0, %v4303
  %4305 = vmatmul.bf16.gmra.mxu0 %v3946
  %v4306 = vpop.f32.mrf.mxu0
  %v4307 = vadd.f32 0.0, %v4306
  %v4308 = vpop.f32.mrf.mxu0
  %v4309 = vadd.f32 0.0, %v4308
  %4310 = vmatmul.bf16.gmra.mxu0 %v3947
  %v4311 = vpop.f32.mrf.mxu0
  %v4312 = vadd.f32 0.0, %v4311
  %v4313 = vpop.f32.mrf.mxu0
  %v4314 = vadd.f32 0.0, %v4313
  %4315 = vmatmul.bf16.gmra.mxu0 %v3948
  %v4316 = vpop.f32.mrf.mxu0
  %v4317 = vadd.f32 0.0, %v4316
  %v4318 = vpop.f32.mrf.mxu0
  %v4319 = vadd.f32 0.0, %v4318
  %4320 = vmatmul.bf16.gmra.mxu0 %v3949
  %v4321 = vpop.f32.mrf.mxu0
  %v4322 = vadd.f32 0.0, %v4321
  %v4323 = vpop.f32.mrf.mxu0
  %v4324 = vadd.f32 0.0, %v4323
  %4325 = vmatmul.bf16.gmra.mxu0 %v3950
  %v4326 = vpop.f32.mrf.mxu0
  %v4327 = vadd.f32 0.0, %v4326
  %v4328 = vpop.f32.mrf.mxu0
  %v4329 = vadd.f32 0.0, %v4328
  %4330 = vmatmul.bf16.gmra.mxu0 %v3951
  %v4331 = vpop.f32.mrf.mxu0
  %v4332 = vadd.f32 0.0, %v4331
  %v4333 = vpop.f32.mrf.mxu0
  %v4334 = vadd.f32 0.0, %v4333
  %4335 = vmatmul.bf16.gmra.mxu0 %v3952
  %v4336 = vpop.f32.mrf.mxu0
  %v4337 = vadd.f32 0.0, %v4336
  %v4338 = vpop.f32.mrf.mxu0
  %v4339 = vadd.f32 0.0, %v4338
  %4340 = vdwg.mxu0
  %v4341 = vld [vmem:[%s12] sm:$0xf]
  %v4343 = vperm.slane %v4341, 0
  %v4344 = vperm.slane %v4341, 1
  %v4345 = vperm.slane %v4341, 2
  %v4346 = vperm.slane %v4341, 3
  %v4351 = vmul.f32 %v4155, %v4343
  %v4352 = vmul.f32 %v4204, %v4344
  %v4353 = vmul.f32 %v4253, %v4345
  %v4354 = vmul.f32 %v4302, %v4346
  %v4355 = vmul.f32 %v4157, %v4343
  %v4356 = vmul.f32 %v4206, %v4344
  %v4357 = vmul.f32 %v4255, %v4345
  %v4358 = vmul.f32 %v4304, %v4346
  %v4359 = vmul.f32 %v4160, %v4343
  %v4360 = vmul.f32 %v4209, %v4344
  %v4361 = vmul.f32 %v4258, %v4345
  %v4362 = vmul.f32 %v4307, %v4346
  %v4363 = vmul.f32 %v4162, %v4343
  %v4364 = vmul.f32 %v4211, %v4344
  %v4365 = vmul.f32 %v4260, %v4345
  %v4366 = vmul.f32 %v4309, %v4346
  %v4367 = vmul.f32 %v4165, %v4343
  %v4368 = vmul.f32 %v4214, %v4344
  %v4369 = vmul.f32 %v4263, %v4345
  %v4370 = vmul.f32 %v4312, %v4346
  %v4371 = vmul.f32 %v4167, %v4343
  %v4372 = vmul.f32 %v4216, %v4344
  %v4373 = vmul.f32 %v4265, %v4345
  %v4374 = vmul.f32 %v4314, %v4346
  %v4375 = vmul.f32 %v4170, %v4343
  %v4376 = vmul.f32 %v4219, %v4344
  %v4377 = vmul.f32 %v4268, %v4345
  %v4378 = vmul.f32 %v4317, %v4346
  %v4379 = vmul.f32 %v4172, %v4343
  %v4380 = vmul.f32 %v4221, %v4344
  %v4381 = vmul.f32 %v4270, %v4345
  %v4382 = vmul.f32 %v4319, %v4346
  %v4383 = vmul.f32 %v4175, %v4343
  %v4384 = vmul.f32 %v4224, %v4344
  %v4385 = vmul.f32 %v4273, %v4345
  %v4386 = vmul.f32 %v4322, %v4346
  %v4387 = vmul.f32 %v4177, %v4343
  %v4388 = vmul.f32 %v4226, %v4344
  %v4389 = vmul.f32 %v4275, %v4345
  %v4390 = vmul.f32 %v4324, %v4346
  %v4391 = vmul.f32 %v4180, %v4343
  %v4392 = vmul.f32 %v4229, %v4344
  %v4393 = vmul.f32 %v4278, %v4345
  %v4394 = vmul.f32 %v4327, %v4346
  %v4395 = vmul.f32 %v4182, %v4343
  %v4396 = vmul.f32 %v4231, %v4344
  %v4397 = vmul.f32 %v4280, %v4345
  %v4398 = vmul.f32 %v4329, %v4346
  %v4399 = vmul.f32 %v4185, %v4343
  %v4400 = vmul.f32 %v4234, %v4344
  %v4401 = vmul.f32 %v4283, %v4345
  %v4402 = vmul.f32 %v4332, %v4346
  %v4403 = vmul.f32 %v4187, %v4343
  %v4404 = vmul.f32 %v4236, %v4344
  %v4405 = vmul.f32 %v4285, %v4345
  %v4406 = vmul.f32 %v4334, %v4346
  %v4407 = vmul.f32 %v4190, %v4343
  %v4408 = vmul.f32 %v4239, %v4344
  %v4409 = vmul.f32 %v4288, %v4345
  %v4410 = vmul.f32 %v4337, %v4346
  %v4411 = vmul.f32 %v4192, %v4343
  %v4412 = vmul.f32 %v4241, %v4344
  %v4413 = vmul.f32 %v4290, %v4345
  %v4414 = vmul.f32 %v4339, %v4346
  %v4415 = vld [vmem:[%s13] sm:$0xf]
  %v4417 = vperm.slane %v4415, 0
  %v4418 = vperm.slane %v4415, 1
  %v4419 = vperm.slane %v4415, 2
  %v4420 = vperm.slane %v4415, 3
  %v4425 = vadd.f32 %v4351, %v4417
  %v4426 = vadd.f32 %v4352, %v4418
  %v4427 = vadd.f32 %v4353, %v4419
  %v4428 = vadd.f32 %v4354, %v4420
  %v4429 = vadd.f32 %v4355, %v4417
  %v4430 = vadd.f32 %v4356, %v4418
  %v4431 = vadd.f32 %v4357, %v4419
  %v4432 = vadd.f32 %v4358, %v4420
  %v4433 = vadd.f32 %v4359, %v4417
  %v4434 = vadd.f32 %v4360, %v4418
  %v4435 = vadd.f32 %v4361, %v4419
  %v4436 = vadd.f32 %v4362, %v4420
  %v4437 = vadd.f32 %v4363, %v4417
  %v4438 = vadd.f32 %v4364, %v4418
  %v4439 = vadd.f32 %v4365, %v4419
  %v4440 = vadd.f32 %v4366, %v4420
  %v4441 = vadd.f32 %v4367, %v4417
  %v4442 = vadd.f32 %v4368, %v4418
  %v4443 = vadd.f32 %v4369, %v4419
  %v4444 = vadd.f32 %v4370, %v4420
  %v4445 = vadd.f32 %v4371, %v4417
  %v4446 = vadd.f32 %v4372, %v4418
  %v4447 = vadd.f32 %v4373, %v4419
  %v4448 = vadd.f32 %v4374, %v4420
  %v4449 = vadd.f32 %v4375, %v4417
  %v4450 = vadd.f32 %v4376, %v4418
  %v4451 = vadd.f32 %v4377, %v4419
  %v4452 = vadd.f32 %v4378, %v4420
  %v4453 = vadd.f32 %v4379, %v4417
  %v4454 = vadd.f32 %v4380, %v4418
  %v4455 = vadd.f32 %v4381, %v4419
  %v4456 = vadd.f32 %v4382, %v4420
  %v4457 = vadd.f32 %v4383, %v4417
  %v4458 = vadd.f32 %v4384, %v4418
  %v4459 = vadd.f32 %v4385, %v4419
  %v4460 = vadd.f32 %v4386, %v4420
  %v4461 = vadd.f32 %v4387, %v4417
  %v4462 = vadd.f32 %v4388, %v4418
  %v4463 = vadd.f32 %v4389, %v4419
  %v4464 = vadd.f32 %v4390, %v4420
  %v4465 = vadd.f32 %v4391, %v4417
  %v4466 = vadd.f32 %v4392, %v4418
  %v4467 = vadd.f32 %v4393, %v4419
  %v4468 = vadd.f32 %v4394, %v4420
  %v4469 = vadd.f32 %v4395, %v4417
  %v4470 = vadd.f32 %v4396, %v4418
  %v4471 = vadd.f32 %v4397, %v4419
  %v4472 = vadd.f32 %v4398, %v4420
  %v4473 = vadd.f32 %v4399, %v4417
  %v4474 = vadd.f32 %v4400, %v4418
  %v4475 = vadd.f32 %v4401, %v4419
  %v4476 = vadd.f32 %v4402, %v4420
  %v4477 = vadd.f32 %v4403, %v4417
  %v4478 = vadd.f32 %v4404, %v4418
  %v4479 = vadd.f32 %v4405, %v4419
  %v4480 = vadd.f32 %v4406, %v4420
  %v4481 = vadd.f32 %v4407, %v4417
  %v4482 = vadd.f32 %v4408, %v4418
  %v4483 = vadd.f32 %v4409, %v4419
  %v4484 = vadd.f32 %v4410, %v4420
  %v4485 = vadd.f32 %v4411, %v4417
  %v4486 = vadd.f32 %v4412, %v4418
  %v4487 = vadd.f32 %v4413, %v4419
  %v4488 = vadd.f32 %v4414, %v4420
  %v4489 = vmax.f32 %v4425, 0.0
  %v4490 = vmax.f32 %v4426, 0.0
  %v4491 = vmax.f32 %v4427, 0.0
  %v4492 = vmax.f32 %v4428, 0.0
  %v4493 = vmax.f32 %v4429, 0.0
  %v4494 = vmax.f32 %v4430, 0.0
  %v4495 = vmax.f32 %v4431, 0.0
  %v4496 = vmax.f32 %v4432, 0.0
  %v4497 = vmax.f32 %v4433, 0.0
  %v4498 = vmax.f32 %v4434, 0.0
  %v4499 = vmax.f32 %v4435, 0.0
  %v4500 = vmax.f32 %v4436, 0.0
  %v4501 = vmax.f32 %v4437, 0.0
  %v4502 = vmax.f32 %v4438, 0.0
  %v4503 = vmax.f32 %v4439, 0.0
  %v4504 = vmax.f32 %v4440, 0.0
  %v4505 = vmax.f32 %v4441, 0.0
  %v4506 = vmax.f32 %v4442, 0.0
  %v4507 = vmax.f32 %v4443, 0.0
  %v4508 = vmax.f32 %v4444, 0.0
  %v4509 = vmax.f32 %v4445, 0.0
  %v4510 = vmax.f32 %v4446, 0.0
  %v4511 = vmax.f32 %v4447, 0.0
  %v4512 = vmax.f32 %v4448, 0.0
  %v4513 = vmax.f32 %v4449, 0.0
  %v4514 = vmax.f32 %v4450, 0.0
  %v4515 = vmax.f32 %v4451, 0.0
  %v4516 = vmax.f32 %v4452, 0.0
  %v4517 = vmax.f32 %v4453, 0.0
  %v4518 = vmax.f32 %v4454, 0.0
  %v4519 = vmax.f32 %v4455, 0.0
  %v4520 = vmax.f32 %v4456, 0.0
  %v4521 = vmax.f32 %v4457, 0.0
  %v4522 = vmax.f32 %v4458, 0.0
  %v4523 = vmax.f32 %v4459, 0.0
  %v4524 = vmax.f32 %v4460, 0.0
  %v4525 = vmax.f32 %v4461, 0.0
  %v4526 = vmax.f32 %v4462, 0.0
  %v4527 = vmax.f32 %v4463, 0.0
  %v4528 = vmax.f32 %v4464, 0.0
  %v4529 = vmax.f32 %v4465, 0.0
  %v4530 = vmax.f32 %v4466, 0.0
  %v4531 = vmax.f32 %v4467, 0.0
  %v4532 = vmax.f32 %v4468, 0.0
  %v4533 = vmax.f32 %v4469, 0.0
  %v4534 = vmax.f32 %v4470, 0.0
  %v4535 = vmax.f32 %v4471, 0.0
  %v4536 = vmax.f32 %v4472, 0.0
  %v4537 = vmax.f32 %v4473, 0.0
  %v4538 = vmax.f32 %v4474, 0.0
  %v4539 = vmax.f32 %v4475, 0.0
  %v4540 = vmax.f32 %v4476, 0.0
  %v4541 = vmax.f32 %v4477, 0.0
  %v4542 = vmax.f32 %v4478, 0.0
  %v4543 = vmax.f32 %v4479, 0.0
  %v4544 = vmax.f32 %v4480, 0.0
  %v4545 = vmax.f32 %v4481, 0.0
  %v4546 = vmax.f32 %v4482, 0.0
  %v4547 = vmax.f32 %v4483, 0.0
  %v4548 = vmax.f32 %v4484, 0.0
  %v4549 = vmax.f32 %v4485, 0.0
  %v4550 = vmax.f32 %v4486, 0.0
  %v4551 = vmax.f32 %v4487, 0.0
  %v4552 = vmax.f32 %v4488, 0.0
  %v4553 = vpack.c.bf16 %v4490, %v4489
  %v4554 = vpack.c.bf16 %v4492, %v4491
  %v4555 = vpack.c.bf16 %v4494, %v4493
  %v4556 = vpack.c.bf16 %v4496, %v4495
  %v4557 = vpack.c.bf16 %v4498, %v4497
  %v4558 = vpack.c.bf16 %v4500, %v4499
  %v4559 = vpack.c.bf16 %v4502, %v4501
  %v4560 = vpack.c.bf16 %v4504, %v4503
  %v4561 = vpack.c.bf16 %v4506, %v4505
  %v4562 = vpack.c.bf16 %v4508, %v4507
  %v4563 = vpack.c.bf16 %v4510, %v4509
  %v4564 = vpack.c.bf16 %v4512, %v4511
  %v4565 = vpack.c.bf16 %v4514, %v4513
  %v4566 = vpack.c.bf16 %v4516, %v4515
  %v4567 = vpack.c.bf16 %v4518, %v4517
  %v4568 = vpack.c.bf16 %v4520, %v4519
  %v4569 = vpack.c.bf16 %v4522, %v4521
  %v4570 = vpack.c.bf16 %v4524, %v4523
  %v4571 = vpack.c.bf16 %v4526, %v4525
  %v4572 = vpack.c.bf16 %v4528, %v4527
  %v4573 = vpack.c.bf16 %v4530, %v4529
  %v4574 = vpack.c.bf16 %v4532, %v4531
  %v4575 = vpack.c.bf16 %v4534, %v4533
  %v4576 = vpack.c.bf16 %v4536, %v4535
  %v4577 = vpack.c.bf16 %v4538, %v4537
  %v4578 = vpack.c.bf16 %v4540, %v4539
  %v4579 = vpack.c.bf16 %v4542, %v4541
  %v4580 = vpack.c.bf16 %v4544, %v4543
  %v4581 = vpack.c.bf16 %v4546, %v4545
  %v4582 = vpack.c.bf16 %v4548, %v4547
  %v4583 = vpack.c.bf16 %v4550, %v4549
  %v4584 = vpack.c.bf16 %v4552, %v4551
  %v4586 = vunpack.c.l.b16 %v4553
  %v4587 = vunpack.c.h.b16 %v4553
  %v4588 = vpack.i.b16 %v4587, %v4586
  %v4591 = vunpack.c.l.b16 %v4555
  %v4592 = vunpack.c.h.b16 %v4555
  %v4593 = vpack.i.b16 %v4592, %v4591
  %v4596 = vunpack.c.l.b16 %v4557
  %v4597 = vunpack.c.h.b16 %v4557
  %v4598 = vpack.i.b16 %v4597, %v4596
  %v4601 = vunpack.c.l.b16 %v4559
  %v4602 = vunpack.c.h.b16 %v4559
  %v4603 = vpack.i.b16 %v4602, %v4601
  %v4606 = vunpack.c.l.b16 %v4561
  %v4607 = vunpack.c.h.b16 %v4561
  %v4608 = vpack.i.b16 %v4607, %v4606
  %v4611 = vunpack.c.l.b16 %v4563
  %v4612 = vunpack.c.h.b16 %v4563
  %v4613 = vpack.i.b16 %v4612, %v4611
  %v4616 = vunpack.c.l.b16 %v4565
  %v4617 = vunpack.c.h.b16 %v4565
  %v4618 = vpack.i.b16 %v4617, %v4616
  %v4621 = vunpack.c.l.b16 %v4567
  %v4622 = vunpack.c.h.b16 %v4567
  %v4623 = vpack.i.b16 %v4622, %v4621
  %v4626 = vunpack.c.l.b16 %v4569
  %v4627 = vunpack.c.h.b16 %v4569
  %v4628 = vpack.i.b16 %v4627, %v4626
  %v4631 = vunpack.c.l.b16 %v4571
  %v4632 = vunpack.c.h.b16 %v4571
  %v4633 = vpack.i.b16 %v4632, %v4631
  %v4636 = vunpack.c.l.b16 %v4573
  %v4637 = vunpack.c.h.b16 %v4573
  %v4638 = vpack.i.b16 %v4637, %v4636
  %v4641 = vunpack.c.l.b16 %v4575
  %v4642 = vunpack.c.h.b16 %v4575
  %v4643 = vpack.i.b16 %v4642, %v4641
  %v4646 = vunpack.c.l.b16 %v4577
  %v4647 = vunpack.c.h.b16 %v4577
  %v4648 = vpack.i.b16 %v4647, %v4646
  %v4651 = vunpack.c.l.b16 %v4579
  %v4652 = vunpack.c.h.b16 %v4579
  %v4653 = vpack.i.b16 %v4652, %v4651
  %v4656 = vunpack.c.l.b16 %v4581
  %v4657 = vunpack.c.h.b16 %v4581
  %v4658 = vpack.i.b16 %v4657, %v4656
  %v4661 = vunpack.c.l.b16 %v4583
  %v4662 = vunpack.c.h.b16 %v4583
  %v4663 = vpack.i.b16 %v4662, %v4661
  %v4666 = vunpack.c.l.b16 %v4554
  %v4667 = vunpack.c.h.b16 %v4554
  %v4668 = vpack.i.b16 %v4667, %v4666
  %v4671 = vunpack.c.l.b16 %v4556
  %v4672 = vunpack.c.h.b16 %v4556
  %v4673 = vpack.i.b16 %v4672, %v4671
  %v4676 = vunpack.c.l.b16 %v4558
  %v4677 = vunpack.c.h.b16 %v4558
  %v4678 = vpack.i.b16 %v4677, %v4676
  %v4681 = vunpack.c.l.b16 %v4560
  %v4682 = vunpack.c.h.b16 %v4560
  %v4683 = vpack.i.b16 %v4682, %v4681
  %v4686 = vunpack.c.l.b16 %v4562
  %v4687 = vunpack.c.h.b16 %v4562
  %v4688 = vpack.i.b16 %v4687, %v4686
  %v4691 = vunpack.c.l.b16 %v4564
  %v4692 = vunpack.c.h.b16 %v4564
  %v4693 = vpack.i.b16 %v4692, %v4691
  %v4696 = vunpack.c.l.b16 %v4566
  %v4697 = vunpack.c.h.b16 %v4566
  %v4698 = vpack.i.b16 %v4697, %v4696
  %v4701 = vunpack.c.l.b16 %v4568
  %v4702 = vunpack.c.h.b16 %v4568
  %v4703 = vpack.i.b16 %v4702, %v4701
  %v4706 = vunpack.c.l.b16 %v4570
  %v4707 = vunpack.c.h.b16 %v4570
  %v4708 = vpack.i.b16 %v4707, %v4706
  %v4711 = vunpack.c.l.b16 %v4572
  %v4712 = vunpack.c.h.b16 %v4572
  %v4713 = vpack.i.b16 %v4712, %v4711
  %v4716 = vunpack.c.l.b16 %v4574
  %v4717 = vunpack.c.h.b16 %v4574
  %v4718 = vpack.i.b16 %v4717, %v4716
  %v4721 = vunpack.c.l.b16 %v4576
  %v4722 = vunpack.c.h.b16 %v4576
  %v4723 = vpack.i.b16 %v4722, %v4721
  %v4726 = vunpack.c.l.b16 %v4578
  %v4727 = vunpack.c.h.b16 %v4578
  %v4728 = vpack.i.b16 %v4727, %v4726
  %v4731 = vunpack.c.l.b16 %v4580
  %v4732 = vunpack.c.h.b16 %v4580
  %v4733 = vpack.i.b16 %v4732, %v4731
  %v4736 = vunpack.c.l.b16 %v4582
  %v4737 = vunpack.c.h.b16 %v4582
  %v4738 = vpack.i.b16 %v4737, %v4736
  %v4741 = vunpack.c.l.b16 %v4584
  %v4742 = vunpack.c.h.b16 %v4584
  %v4743 = vpack.i.b16 %v4742, %v4741
  %v4745 = vunpack.c.l.bf16 %v755
  %v4746 = vunpack.c.l.bf16 %v756
  %v4747 = vunpack.c.l.bf16 %v757
  %v4748 = vunpack.c.l.bf16 %v758
  %v4749 = vunpack.c.l.bf16 %v759
  %v4750 = vunpack.c.l.bf16 %v760
  %v4751 = vunpack.c.l.bf16 %v761
  %v4752 = vunpack.c.l.bf16 %v762
  %v4753 = vunpack.c.l.bf16 %v763
  %v4754 = vunpack.c.l.bf16 %v764
  %v4755 = vunpack.c.l.bf16 %v765
  %v4756 = vunpack.c.l.bf16 %v766
  %v4757 = vunpack.c.l.bf16 %v767
  %v4758 = vunpack.c.l.bf16 %v768
  %v4759 = vunpack.c.l.bf16 %v769
  %v4760 = vunpack.c.l.bf16 %v770
  %v4761 = vunpack.c.l.bf16 %v771
  %v4762 = vunpack.c.l.bf16 %v772
  %v4763 = vunpack.c.l.bf16 %v773
  %v4764 = vunpack.c.l.bf16 %v774
  %v4765 = vunpack.c.l.bf16 %v775
  %v4766 = vunpack.c.l.bf16 %v776
  %v4767 = vunpack.c.l.bf16 %v777
  %v4768 = vunpack.c.l.bf16 %v778
  %v4769 = vunpack.c.l.bf16 %v779
  %v4770 = vunpack.c.l.bf16 %v780
  %v4771 = vunpack.c.l.bf16 %v781
  %v4772 = vunpack.c.l.bf16 %v782
  %v4773 = vunpack.c.l.bf16 %v783
  %v4774 = vunpack.c.l.bf16 %v784
  %v4775 = vunpack.c.l.bf16 %v785
  %v4776 = vunpack.c.l.bf16 %v786
  %v4777 = vunpack.c.l.bf16 %v787
  %v4778 = vunpack.c.l.bf16 %v788
  %v4779 = vunpack.c.l.bf16 %v789
  %v4780 = vunpack.c.l.bf16 %v790
  %v4781 = vunpack.c.l.bf16 %v791
  %v4782 = vunpack.c.l.bf16 %v792
  %v4783 = vunpack.c.l.bf16 %v793
  %v4784 = vunpack.c.l.bf16 %v794
  %v4785 = vunpack.c.l.bf16 %v795
  %v4786 = vunpack.c.l.bf16 %v796
  %v4787 = vunpack.c.l.bf16 %v797
  %v4788 = vunpack.c.l.bf16 %v798
  %v4789 = vunpack.c.l.bf16 %v799
  %v4790 = vunpack.c.l.bf16 %v800
  %v4791 = vunpack.c.l.bf16 %v801
  %v4792 = vunpack.c.l.bf16 %v802
  %v4793 = vunpack.c.l.bf16 %v803
  %v4794 = vunpack.c.l.bf16 %v804
  %v4795 = vunpack.c.l.bf16 %v805
  %v4796 = vunpack.c.l.bf16 %v806
  %v4797 = vunpack.c.l.bf16 %v807
  %v4798 = vunpack.c.l.bf16 %v808
  %v4799 = vunpack.c.l.bf16 %v809
  %v4800 = vunpack.c.l.bf16 %v810
  %v4801 = vunpack.c.l.bf16 %v811
  %v4802 = vunpack.c.l.bf16 %v812
  %v4803 = vunpack.c.l.bf16 %v813
  %v4804 = vunpack.c.l.bf16 %v814
  %v4805 = vunpack.c.l.bf16 %v815
  %v4806 = vunpack.c.l.bf16 %v816
  %v4807 = vunpack.c.l.bf16 %v817
  %v4808 = vunpack.c.l.bf16 %v818
  %v4809 = vunpack.c.l.bf16 %v4588
  %v4810 = vunpack.c.h.bf16 %v4588
  %v4811 = vunpack.c.l.bf16 %v4668
  %v4812 = vunpack.c.h.bf16 %v4668
  %v4813 = vunpack.c.l.bf16 %v4593
  %v4814 = vunpack.c.h.bf16 %v4593
  %v4815 = vunpack.c.l.bf16 %v4673
  %v4816 = vunpack.c.h.bf16 %v4673
  %v4817 = vunpack.c.l.bf16 %v4598
  %v4818 = vunpack.c.h.bf16 %v4598
  %v4819 = vunpack.c.l.bf16 %v4678
  %v4820 = vunpack.c.h.bf16 %v4678
  %v4821 = vunpack.c.l.bf16 %v4603
  %v4822 = vunpack.c.h.bf16 %v4603
  %v4823 = vunpack.c.l.bf16 %v4683
  %v4824 = vunpack.c.h.bf16 %v4683
  %v4825 = vunpack.c.l.bf16 %v4608
  %v4826 = vunpack.c.h.bf16 %v4608
  %v4827 = vunpack.c.l.bf16 %v4688
  %v4828 = vunpack.c.h.bf16 %v4688
  %v4829 = vunpack.c.l.bf16 %v4613
  %v4830 = vunpack.c.h.bf16 %v4613
  %v4831 = vunpack.c.l.bf16 %v4693
  %v4832 = vunpack.c.h.bf16 %v4693
  %v4833 = vunpack.c.l.bf16 %v4618
  %v4834 = vunpack.c.h.bf16 %v4618
  %v4835 = vunpack.c.l.bf16 %v4698
  %v4836 = vunpack.c.h.bf16 %v4698
  %v4837 = vunpack.c.l.bf16 %v4623
  %v4838 = vunpack.c.h.bf16 %v4623
  %v4839 = vunpack.c.l.bf16 %v4703
  %v4840 = vunpack.c.h.bf16 %v4703
  %v4841 = vunpack.c.l.bf16 %v4628
  %v4842 = vunpack.c.h.bf16 %v4628
  %v4843 = vunpack.c.l.bf16 %v4708
  %v4844 = vunpack.c.h.bf16 %v4708
  %v4845 = vunpack.c.l.bf16 %v4633
  %v4846 = vunpack.c.h.bf16 %v4633
  %v4847 = vunpack.c.l.bf16 %v4713
  %v4848 = vunpack.c.h.bf16 %v4713
  %v4849 = vunpack.c.l.bf16 %v4638
  %v4850 = vunpack.c.h.bf16 %v4638
  %v4851 = vunpack.c.l.bf16 %v4718
  %v4852 = vunpack.c.h.bf16 %v4718
  %v4853 = vunpack.c.l.bf16 %v4643
  %v4854 = vunpack.c.h.bf16 %v4643
  %v4855 = vunpack.c.l.bf16 %v4723
  %v4856 = vunpack.c.h.bf16 %v4723
  %v4857 = vunpack.c.l.bf16 %v4648
  %v4858 = vunpack.c.h.bf16 %v4648
  %v4859 = vunpack.c.l.bf16 %v4728
  %v4860 = vunpack.c.h.bf16 %v4728
  %v4861 = vunpack.c.l.bf16 %v4653
  %v4862 = vunpack.c.h.bf16 %v4653
  %v4863 = vunpack.c.l.bf16 %v4733
  %v4864 = vunpack.c.h.bf16 %v4733
  %v4865 = vunpack.c.l.bf16 %v4658
  %v4866 = vunpack.c.h.bf16 %v4658
  %v4867 = vunpack.c.l.bf16 %v4738
  %v4868 = vunpack.c.h.bf16 %v4738
  %v4869 = vunpack.c.l.bf16 %v4663
  %v4870 = vunpack.c.h.bf16 %v4663
  %v4871 = vunpack.c.l.bf16 %v4743
  %v4872 = vunpack.c.h.bf16 %v4743
  %v4873 = vadd.f32 %v4745, %v4809
  %v4874 = vadd.f32 %v4746, %v4810
  %v4875 = vadd.f32 %v4747, %v4811
  %v4876 = vadd.f32 %v4748, %v4812
  %v4877 = vadd.f32 %v4749, %v4813
  %v4878 = vadd.f32 %v4750, %v4814
  %v4879 = vadd.f32 %v4751, %v4815
  %v4880 = vadd.f32 %v4752, %v4816
  %v4881 = vadd.f32 %v4753, %v4817
  %v4882 = vadd.f32 %v4754, %v4818
  %v4883 = vadd.f32 %v4755, %v4819
  %v4884 = vadd.f32 %v4756, %v4820
  %v4885 = vadd.f32 %v4757, %v4821
  %v4886 = vadd.f32 %v4758, %v4822
  %v4887 = vadd.f32 %v4759, %v4823
  %v4888 = vadd.f32 %v4760, %v4824
  %v4889 = vadd.f32 %v4761, %v4825
  %v4890 = vadd.f32 %v4762, %v4826
  %v4891 = vadd.f32 %v4763, %v4827
  %v4892 = vadd.f32 %v4764, %v4828
  %v4893 = vadd.f32 %v4765, %v4829
  %v4894 = vadd.f32 %v4766, %v4830
  %v4895 = vadd.f32 %v4767, %v4831
  %v4896 = vadd.f32 %v4768, %v4832
  %v4897 = vadd.f32 %v4769, %v4833
  %v4898 = vadd.f32 %v4770, %v4834
  %v4899 = vadd.f32 %v4771, %v4835
  %v4900 = vadd.f32 %v4772, %v4836
  %v4901 = vadd.f32 %v4773, %v4837
  %v4902 = vadd.f32 %v4774, %v4838
  %v4903 = vadd.f32 %v4775, %v4839
  %v4904 = vadd.f32 %v4776, %v4840
  %v4905 = vadd.f32 %v4777, %v4841
  %v4906 = vadd.f32 %v4778, %v4842
  %v4907 = vadd.f32 %v4779, %v4843
  %v4908 = vadd.f32 %v4780, %v4844
  %v4909 = vadd.f32 %v4781, %v4845
  %v4910 = vadd.f32 %v4782, %v4846
  %v4911 = vadd.f32 %v4783, %v4847
  %v4912 = vadd.f32 %v4784, %v4848
  %v4913 = vadd.f32 %v4785, %v4849
  %v4914 = vadd.f32 %v4786, %v4850
  %v4915 = vadd.f32 %v4787, %v4851
  %v4916 = vadd.f32 %v4788, %v4852
  %v4917 = vadd.f32 %v4789, %v4853
  %v4918 = vadd.f32 %v4790, %v4854
  %v4919 = vadd.f32 %v4791, %v4855
  %v4920 = vadd.f32 %v4792, %v4856
  %v4921 = vadd.f32 %v4793, %v4857
  %v4922 = vadd.f32 %v4794, %v4858
  %v4923 = vadd.f32 %v4795, %v4859
  %v4924 = vadd.f32 %v4796, %v4860
  %v4925 = vadd.f32 %v4797, %v4861
  %v4926 = vadd.f32 %v4798, %v4862
  %v4927 = vadd.f32 %v4799, %v4863
  %v4928 = vadd.f32 %v4800, %v4864
  %v4929 = vadd.f32 %v4801, %v4865
  %v4930 = vadd.f32 %v4802, %v4866
  %v4931 = vadd.f32 %v4803, %v4867
  %v4932 = vadd.f32 %v4804, %v4868
  %v4933 = vadd.f32 %v4805, %v4869
  %v4934 = vadd.f32 %v4806, %v4870
  %v4935 = vadd.f32 %v4807, %v4871
  %v4936 = vadd.f32 %v4808, %v4872
  %v4937 = vpack.c.bf16 %v4873, %v4873
  %v4938 = vpack.c.bf16 %v4874, %v4874
  %v4939 = vpack.c.bf16 %v4875, %v4875
  %v4940 = vpack.c.bf16 %v4876, %v4876
  %v4941 = vpack.c.bf16 %v4877, %v4877
  %v4942 = vpack.c.bf16 %v4878, %v4878
  %v4943 = vpack.c.bf16 %v4879, %v4879
  %v4944 = vpack.c.bf16 %v4880, %v4880
  %v4945 = vpack.c.bf16 %v4881, %v4881
  %v4946 = vpack.c.bf16 %v4882, %v4882
  %v4947 = vpack.c.bf16 %v4883, %v4883
  %v4948 = vpack.c.bf16 %v4884, %v4884
  %v4949 = vpack.c.bf16 %v4885, %v4885
  %v4950 = vpack.c.bf16 %v4886, %v4886
  %v4951 = vpack.c.bf16 %v4887, %v4887
  %v4952 = vpack.c.bf16 %v4888, %v4888
  %v4953 = vpack.c.bf16 %v4889, %v4889
  %v4954 = vpack.c.bf16 %v4890, %v4890
  %v4955 = vpack.c.bf16 %v4891, %v4891
  %v4956 = vpack.c.bf16 %v4892, %v4892
  %v4957 = vpack.c.bf16 %v4893, %v4893
  %v4958 = vpack.c.bf16 %v4894, %v4894
  %v4959 = vpack.c.bf16 %v4895, %v4895
  %v4960 = vpack.c.bf16 %v4896, %v4896
  %v4961 = vpack.c.bf16 %v4897, %v4897
  %v4962 = vpack.c.bf16 %v4898, %v4898
  %v4963 = vpack.c.bf16 %v4899, %v4899
  %v4964 = vpack.c.bf16 %v4900, %v4900
  %v4965 = vpack.c.bf16 %v4901, %v4901
  %v4966 = vpack.c.bf16 %v4902, %v4902
  %v4967 = vpack.c.bf16 %v4903, %v4903
  %v4968 = vpack.c.bf16 %v4904, %v4904
  %v4969 = vpack.c.bf16 %v4905, %v4905
  %v4970 = vpack.c.bf16 %v4906, %v4906
  %v4971 = vpack.c.bf16 %v4907, %v4907
  %v4972 = vpack.c.bf16 %v4908, %v4908
  %v4973 = vpack.c.bf16 %v4909, %v4909
  %v4974 = vpack.c.bf16 %v4910, %v4910
  %v4975 = vpack.c.bf16 %v4911, %v4911
  %v4976 = vpack.c.bf16 %v4912, %v4912
  %v4977 = vpack.c.bf16 %v4913, %v4913
  %v4978 = vpack.c.bf16 %v4914, %v4914
  %v4979 = vpack.c.bf16 %v4915, %v4915
  %v4980 = vpack.c.bf16 %v4916, %v4916
  %v4981 = vpack.c.bf16 %v4917, %v4917
  %v4982 = vpack.c.bf16 %v4918, %v4918
  %v4983 = vpack.c.bf16 %v4919, %v4919
  %v4984 = vpack.c.bf16 %v4920, %v4920
  %v4985 = vpack.c.bf16 %v4921, %v4921
  %v4986 = vpack.c.bf16 %v4922, %v4922
  %v4987 = vpack.c.bf16 %v4923, %v4923
  %v4988 = vpack.c.bf16 %v4924, %v4924
  %v4989 = vpack.c.bf16 %v4925, %v4925
  %v4990 = vpack.c.bf16 %v4926, %v4926
  %v4991 = vpack.c.bf16 %v4927, %v4927
  %v4992 = vpack.c.bf16 %v4928, %v4928
  %v4993 = vpack.c.bf16 %v4929, %v4929
  %v4994 = vpack.c.bf16 %v4930, %v4930
  %v4995 = vpack.c.bf16 %v4931, %v4931
  %v4996 = vpack.c.bf16 %v4932, %v4932
  %v4997 = vpack.c.bf16 %v4933, %v4933
  %v4998 = vpack.c.bf16 %v4934, %v4934
  %v4999 = vpack.c.bf16 %v4935, %v4935
  %v5000 = vpack.c.bf16 %v4936, %v4936
  %v5065 = vunpack.c.l.b16 %v4937
  %v5066 = vunpack.c.l.b16 %v4938
  %v5067 = vunpack.c.l.b16 %v4939
  %v5068 = vunpack.c.l.b16 %v4940
  %v5069 = vunpack.c.l.b16 %v4941
  %v5070 = vunpack.c.l.b16 %v4942
  %v5071 = vunpack.c.l.b16 %v4943
  %v5072 = vunpack.c.l.b16 %v4944
  %v5073 = vunpack.c.l.b16 %v4945
  %v5074 = vunpack.c.l.b16 %v4946
  %v5075 = vunpack.c.l.b16 %v4947
  %v5076 = vunpack.c.l.b16 %v4948
  %v5077 = vunpack.c.l.b16 %v4949
  %v5078 = vunpack.c.l.b16 %v4950
  %v5079 = vunpack.c.l.b16 %v4951
  %v5080 = vunpack.c.l.b16 %v4952
  %v5081 = vunpack.c.l.b16 %v4953
  %v5082 = vunpack.c.l.b16 %v4954
  %v5083 = vunpack.c.l.b16 %v4955
  %v5084 = vunpack.c.l.b16 %v4956
  %v5085 = vunpack.c.l.b16 %v4957
  %v5086 = vunpack.c.l.b16 %v4958
  %v5087 = vunpack.c.l.b16 %v4959
  %v5088 = vunpack.c.l.b16 %v4960
  %v5089 = vunpack.c.l.b16 %v4961
  %v5090 = vunpack.c.l.b16 %v4962
  %v5091 = vunpack.c.l.b16 %v4963
  %v5092 = vunpack.c.l.b16 %v4964
  %v5093 = vunpack.c.l.b16 %v4965
  %v5094 = vunpack.c.l.b16 %v4966
  %v5095 = vunpack.c.l.b16 %v4967
  %v5096 = vunpack.c.l.b16 %v4968
  %v5097 = vunpack.c.l.b16 %v4969
  %v5098 = vunpack.c.l.b16 %v4970
  %v5099 = vunpack.c.l.b16 %v4971
  %v5100 = vunpack.c.l.b16 %v4972
  %v5101 = vunpack.c.l.b16 %v4973
  %v5102 = vunpack.c.l.b16 %v4974
  %v5103 = vunpack.c.l.b16 %v4975
  %v5104 = vunpack.c.l.b16 %v4976
  %v5105 = vunpack.c.l.b16 %v4977
  %v5106 = vunpack.c.l.b16 %v4978
  %v5107 = vunpack.c.l.b16 %v4979
  %v5108 = vunpack.c.l.b16 %v4980
  %v5109 = vunpack.c.l.b16 %v4981
  %v5110 = vunpack.c.l.b16 %v4982
  %v5111 = vunpack.c.l.b16 %v4983
  %v5112 = vunpack.c.l.b16 %v4984
  %v5113 = vunpack.c.l.b16 %v4985
  %v5114 = vunpack.c.l.b16 %v4986
  %v5115 = vunpack.c.l.b16 %v4987
  %v5116 = vunpack.c.l.b16 %v4988
  %v5117 = vunpack.c.l.b16 %v4989
  %v5118 = vunpack.c.l.b16 %v4990
  %v5119 = vunpack.c.l.b16 %v4991
  %v5120 = vunpack.c.l.b16 %v4992
  %v5121 = vunpack.c.l.b16 %v4993
  %v5122 = vunpack.c.l.b16 %v4994
  %v5123 = vunpack.c.l.b16 %v4995
  %v5124 = vunpack.c.l.b16 %v4996
  %v5125 = vunpack.c.l.b16 %v4997
  %v5126 = vunpack.c.l.b16 %v4998
  %v5127 = vunpack.c.l.b16 %v4999
  %v5128 = vunpack.c.l.b16 %v5000
  %v5129 = vpack.c.b16 %v5066, %v5065
  %v5130 = vpack.c.b16 %v5068, %v5067
  %v5131 = vpack.c.b16 %v5070, %v5069
  %v5132 = vpack.c.b16 %v5072, %v5071
  %v5133 = vpack.c.b16 %v5074, %v5073
  %v5134 = vpack.c.b16 %v5076, %v5075
  %v5135 = vpack.c.b16 %v5078, %v5077
  %v5136 = vpack.c.b16 %v5080, %v5079
  %v5137 = vpack.c.b16 %v5082, %v5081
  %v5138 = vpack.c.b16 %v5084, %v5083
  %v5139 = vpack.c.b16 %v5086, %v5085
  %v5140 = vpack.c.b16 %v5088, %v5087
  %v5141 = vpack.c.b16 %v5090, %v5089
  %v5142 = vpack.c.b16 %v5092, %v5091
  %v5143 = vpack.c.b16 %v5094, %v5093
  %v5144 = vpack.c.b16 %v5096, %v5095
  %v5145 = vpack.c.b16 %v5098, %v5097
  %v5146 = vpack.c.b16 %v5100, %v5099
  %v5147 = vpack.c.b16 %v5102, %v5101
  %v5148 = vpack.c.b16 %v5104, %v5103
  %v5149 = vpack.c.b16 %v5106, %v5105
  %v5150 = vpack.c.b16 %v5108, %v5107
  %v5151 = vpack.c.b16 %v5110, %v5109
  %v5152 = vpack.c.b16 %v5112, %v5111
  %v5153 = vpack.c.b16 %v5114, %v5113
  %v5154 = vpack.c.b16 %v5116, %v5115
  %v5155 = vpack.c.b16 %v5118, %v5117
  %v5156 = vpack.c.b16 %v5120, %v5119
  %v5157 = vpack.c.b16 %v5122, %v5121
  %v5158 = vpack.c.b16 %v5124, %v5123
  %v5159 = vpack.c.b16 %v5126, %v5125
  %v5160 = vpack.c.b16 %v5128, %v5127
  %v5162 = vshrl.u32 %v5129, 16
  %v5164 = vrot.slane %v5162, 7
  %v5165 = vshll.u32 %v5129, 16
  %v5167 = vor.u32 %v5164, %v5165
  %v5169 = vshrl.u32 %v5130, 16
  %v5171 = vrot.slane %v5169, 7
  %v5172 = vshll.u32 %v5130, 16
  %v5174 = vor.u32 %v5171, %v5172
  %v5176 = vshrl.u32 %v5131, 16
  %v5178 = vrot.slane %v5176, 7
  %v5179 = vshll.u32 %v5131, 16
  %v5181 = vor.u32 %v5178, %v5179
  %v5183 = vshrl.u32 %v5132, 16
  %v5185 = vrot.slane %v5183, 7
  %v5186 = vshll.u32 %v5132, 16
  %v5188 = vor.u32 %v5185, %v5186
  %v5190 = vshrl.u32 %v5133, 16
  %v5192 = vrot.slane %v5190, 7
  %v5193 = vshll.u32 %v5133, 16
  %v5195 = vor.u32 %v5192, %v5193
  %v5197 = vshrl.u32 %v5134, 16
  %v5199 = vrot.slane %v5197, 7
  %v5200 = vshll.u32 %v5134, 16
  %v5202 = vor.u32 %v5199, %v5200
  %v5204 = vshrl.u32 %v5135, 16
  %v5206 = vrot.slane %v5204, 7
  %v5207 = vshll.u32 %v5135, 16
  %v5209 = vor.u32 %v5206, %v5207
  %v5211 = vshrl.u32 %v5136, 16
  %v5213 = vrot.slane %v5211, 7
  %v5214 = vshll.u32 %v5136, 16
  %v5216 = vor.u32 %v5213, %v5214
  %v5218 = vshrl.u32 %v5137, 16
  %v5220 = vrot.slane %v5218, 7
  %v5221 = vshll.u32 %v5137, 16
  %v5223 = vor.u32 %v5220, %v5221
  %v5225 = vshrl.u32 %v5138, 16
  %v5227 = vrot.slane %v5225, 7
  %v5228 = vshll.u32 %v5138, 16
  %v5230 = vor.u32 %v5227, %v5228
  %v5232 = vshrl.u32 %v5139, 16
  %v5234 = vrot.slane %v5232, 7
  %v5235 = vshll.u32 %v5139, 16
  %v5237 = vor.u32 %v5234, %v5235
  %v5239 = vshrl.u32 %v5140, 16
  %v5241 = vrot.slane %v5239, 7
  %v5242 = vshll.u32 %v5140, 16
  %v5244 = vor.u32 %v5241, %v5242
  %v5246 = vshrl.u32 %v5141, 16
  %v5248 = vrot.slane %v5246, 7
  %v5249 = vshll.u32 %v5141, 16
  %v5251 = vor.u32 %v5248, %v5249
  %v5253 = vshrl.u32 %v5142, 16
  %v5255 = vrot.slane %v5253, 7
  %v5256 = vshll.u32 %v5142, 16
  %v5258 = vor.u32 %v5255, %v5256
  %v5260 = vshrl.u32 %v5143, 16
  %v5262 = vrot.slane %v5260, 7
  %v5263 = vshll.u32 %v5143, 16
  %v5265 = vor.u32 %v5262, %v5263
  %v5267 = vshrl.u32 %v5144, 16
  %v5269 = vrot.slane %v5267, 7
  %v5270 = vshll.u32 %v5144, 16
  %v5272 = vor.u32 %v5269, %v5270
  %v5274 = vshrl.u32 %v5145, 16
  %v5276 = vrot.slane %v5274, 7
  %v5277 = vshll.u32 %v5145, 16
  %v5279 = vor.u32 %v5276, %v5277
  %v5281 = vshrl.u32 %v5146, 16
  %v5283 = vrot.slane %v5281, 7
  %v5284 = vshll.u32 %v5146, 16
  %v5286 = vor.u32 %v5283, %v5284
  %v5288 = vshrl.u32 %v5147, 16
  %v5290 = vrot.slane %v5288, 7
  %v5291 = vshll.u32 %v5147, 16
  %v5293 = vor.u32 %v5290, %v5291
  %v5295 = vshrl.u32 %v5148, 16
  %v5297 = vrot.slane %v5295, 7
  %v5298 = vshll.u32 %v5148, 16
  %v5300 = vor.u32 %v5297, %v5298
  %v5302 = vshrl.u32 %v5149, 16
  %v5304 = vrot.slane %v5302, 7
  %v5305 = vshll.u32 %v5149, 16
  %v5307 = vor.u32 %v5304, %v5305
  %v5309 = vshrl.u32 %v5150, 16
  %v5311 = vrot.slane %v5309, 7
  %v5312 = vshll.u32 %v5150, 16
  %v5314 = vor.u32 %v5311, %v5312
  %v5316 = vshrl.u32 %v5151, 16
  %v5318 = vrot.slane %v5316, 7
  %v5319 = vshll.u32 %v5151, 16
  %v5321 = vor.u32 %v5318, %v5319
  %v5323 = vshrl.u32 %v5152, 16
  %v5325 = vrot.slane %v5323, 7
  %v5326 = vshll.u32 %v5152, 16
  %v5328 = vor.u32 %v5325, %v5326
  %v5330 = vshrl.u32 %v5153, 16
  %v5332 = vrot.slane %v5330, 7
  %v5333 = vshll.u32 %v5153, 16
  %v5335 = vor.u32 %v5332, %v5333
  %v5337 = vshrl.u32 %v5154, 16
  %v5339 = vrot.slane %v5337, 7
  %v5340 = vshll.u32 %v5154, 16
  %v5342 = vor.u32 %v5339, %v5340
  %v5344 = vshrl.u32 %v5155, 16
  %v5346 = vrot.slane %v5344, 7
  %v5347 = vshll.u32 %v5155, 16
  %v5349 = vor.u32 %v5346, %v5347
  %v5351 = vshrl.u32 %v5156, 16
  %v5353 = vrot.slane %v5351, 7
  %v5354 = vshll.u32 %v5156, 16
  %v5356 = vor.u32 %v5353, %v5354
  %v5358 = vshrl.u32 %v5157, 16
  %v5360 = vrot.slane %v5358, 7
  %v5361 = vshll.u32 %v5157, 16
  %v5363 = vor.u32 %v5360, %v5361
  %v5365 = vshrl.u32 %v5158, 16
  %v5367 = vrot.slane %v5365, 7
  %v5368 = vshll.u32 %v5158, 16
  %v5370 = vor.u32 %v5367, %v5368
  %v5372 = vshrl.u32 %v5159, 16
  %v5374 = vrot.slane %v5372, 7
  %v5375 = vshll.u32 %v5159, 16
  %v5377 = vor.u32 %v5374, %v5375
  %v5379 = vshrl.u32 %v5160, 16
  %v5381 = vrot.slane %v5379, 7
  %v5382 = vshll.u32 %v5160, 16
  %v5384 = vor.u32 %v5381, %v5382
  %v5450 = vsel %vm973, 0, %v5167
  %v5451 = vsel %vm973, 0, %v5174
  %v5452 = vsel %vm973, 0, %v5181
  %v5453 = vsel %vm973, 0, %v5188
  %v5454 = vsel %vm973, 0, %v5195
  %v5455 = vsel %vm973, 0, %v5202
  %v5456 = vsel %vm973, 0, %v5209
  %v5457 = vsel %vm973, 0, %v5216
  %v5458 = vsel %vm973, 0, %v5223
  %v5459 = vsel %vm973, 0, %v5230
  %v5460 = vsel %vm973, 0, %v5237
  %v5461 = vsel %vm973, 0, %v5244
  %v5462 = vsel %vm973, 0, %v5251
  %v5463 = vsel %vm973, 0, %v5258
  %v5464 = vsel %vm973, 0, %v5265
  %v5465 = vsel %vm973, 0, %v5272
  %v5466 = vsel %vm973, 0, %v5279
  %v5467 = vsel %vm973, 0, %v5286
  %v5468 = vsel %vm973, 0, %v5293
  %v5469 = vsel %vm973, 0, %v5300
  %v5470 = vsel %vm973, 0, %v5307
  %v5471 = vsel %vm973, 0, %v5314
  %v5472 = vsel %vm973, 0, %v5321
  %v5473 = vsel %vm973, 0, %v5328
  %v5474 = vsel %vm973, 0, %v5335
  %v5475 = vsel %vm973, 0, %v5342
  %v5476 = vsel %vm973, 0, %v5349
  %v5477 = vsel %vm973, 0, %v5356
  %v5478 = vsel %vm973, 0, %v5363
  %v5479 = vsel %vm973, 0, %v5370
  %v5480 = vsel %vm973, 0, %v5377
  %v5481 = vsel %vm973, 0, %v5384
  %v5482 = vsel %vm973, %v838, 0
  %v5483 = vsel %vm973, %v5164, 0
  %v5484 = vsel %vm973, %v5171, 0
  %v5485 = vsel %vm973, %v5178, 0
  %v5486 = vsel %vm973, %v5185, 0
  %v5487 = vsel %vm973, %v5192, 0
  %v5488 = vsel %vm973, %v5199, 0
  %v5489 = vsel %vm973, %v5206, 0
  %v5490 = vsel %vm973, %v5213, 0
  %v5491 = vsel %vm973, %v5220, 0
  %v5492 = vsel %vm973, %v5227, 0
  %v5493 = vsel %vm973, %v5234, 0
  %v5494 = vsel %vm973, %v5241, 0
  %v5495 = vsel %vm973, %v5248, 0
  %v5496 = vsel %vm973, %v5255, 0
  %v5497 = vsel %vm973, %v5262, 0
  %v5498 = vsel %vm973, %v5269, 0
  %v5499 = vsel %vm973, %v5276, 0
  %v5500 = vsel %vm973, %v5283, 0
  %v5501 = vsel %vm973, %v5290, 0
  %v5502 = vsel %vm973, %v5297, 0
  %v5503 = vsel %vm973, %v5304, 0
  %v5504 = vsel %vm973, %v5311, 0
  %v5505 = vsel %vm973, %v5318, 0
  %v5506 = vsel %vm973, %v5325, 0
  %v5507 = vsel %vm973, %v5332, 0
  %v5508 = vsel %vm973, %v5339, 0
  %v5509 = vsel %vm973, %v5346, 0
  %v5510 = vsel %vm973, %v5353, 0
  %v5511 = vsel %vm973, %v5360, 0
  %v5512 = vsel %vm973, %v5367, 0
  %v5513 = vsel %vm973, %v5374, 0
  %v5514 = vsel %vm973, %v5381, 0
  %vm5515 = vsmask.f32 7424
  %v5517 = vshrl.u32 %v974, 16
  %v5519 = vshll.u32 %v974, 16
  %v5521 = vrot.slane %v5519, 1
  %v5522 = vor.u32 %v5517, %v5521
  %v5524 = vshll.u32 %v5482, 16
  %v5526 = vrot.slane %v5524, 1
  %v5527 = vsel %vm5515, %v5522, %v5526
  %v5529 = vshrl.u32 %v5450, 16
  %v5531 = vshll.u32 %v5450, 16
  %v5533 = vrot.slane %v5531, 1
  %v5534 = vor.u32 %v5529, %v5533
  %v5536 = vshll.u32 %v5483, 16
  %v5538 = vrot.slane %v5536, 1
  %v5539 = vsel %vm5515, %v5534, %v5538
  %v5541 = vshrl.u32 %v5451, 16
  %v5543 = vshll.u32 %v5451, 16
  %v5545 = vrot.slane %v5543, 1
  %v5546 = vor.u32 %v5541, %v5545
  %v5548 = vshll.u32 %v5484, 16
  %v5550 = vrot.slane %v5548, 1
  %v5551 = vsel %vm5515, %v5546, %v5550
  %v5553 = vshrl.u32 %v5452, 16
  %v5555 = vshll.u32 %v5452, 16
  %v5557 = vrot.slane %v5555, 1
  %v5558 = vor.u32 %v5553, %v5557
  %v5560 = vshll.u32 %v5485, 16
  %v5562 = vrot.slane %v5560, 1
  %v5563 = vsel %vm5515, %v5558, %v5562
  %v5565 = vshrl.u32 %v5453, 16
  %v5567 = vshll.u32 %v5453, 16
  %v5569 = vrot.slane %v5567, 1
  %v5570 = vor.u32 %v5565, %v5569
  %v5572 = vshll.u32 %v5486, 16
  %v5574 = vrot.slane %v5572, 1
  %v5575 = vsel %vm5515, %v5570, %v5574
  %v5577 = vshrl.u32 %v5454, 16
  %v5579 = vshll.u32 %v5454, 16
  %v5581 = vrot.slane %v5579, 1
  %v5582 = vor.u32 %v5577, %v5581
  %v5584 = vshll.u32 %v5487, 16
  %v5586 = vrot.slane %v5584, 1
  %v5587 = vsel %vm5515, %v5582, %v5586
  %v5589 = vshrl.u32 %v5455, 16
  %v5591 = vshll.u32 %v5455, 16
  %v5593 = vrot.slane %v5591, 1
  %v5594 = vor.u32 %v5589, %v5593
  %v5596 = vshll.u32 %v5488, 16
  %v5598 = vrot.slane %v5596, 1
  %v5599 = vsel %vm5515, %v5594, %v5598
  %v5601 = vshrl.u32 %v5456, 16
  %v5603 = vshll.u32 %v5456, 16
  %v5605 = vrot.slane %v5603, 1
  %v5606 = vor.u32 %v5601, %v5605
  %v5608 = vshll.u32 %v5489, 16
  %v5610 = vrot.slane %v5608, 1
  %v5611 = vsel %vm5515, %v5606, %v5610
  %v5613 = vshrl.u32 %v5457, 16
  %v5615 = vshll.u32 %v5457, 16
  %v5617 = vrot.slane %v5615, 1
  %v5618 = vor.u32 %v5613, %v5617
  %v5620 = vshll.u32 %v5490, 16
  %v5622 = vrot.slane %v5620, 1
  %v5623 = vsel %vm5515, %v5618, %v5622
  %v5625 = vshrl.u32 %v5458, 16
  %v5627 = vshll.u32 %v5458, 16
  %v5629 = vrot.slane %v5627, 1
  %v5630 = vor.u32 %v5625, %v5629
  %v5632 = vshll.u32 %v5491, 16
  %v5634 = vrot.slane %v5632, 1
  %v5635 = vsel %vm5515, %v5630, %v5634
  %v5637 = vshrl.u32 %v5459, 16
  %v5639 = vshll.u32 %v5459, 16
  %v5641 = vrot.slane %v5639, 1
  %v5642 = vor.u32 %v5637, %v5641
  %v5644 = vshll.u32 %v5492, 16
  %v5646 = vrot.slane %v5644, 1
  %v5647 = vsel %vm5515, %v5642, %v5646
  %v5649 = vshrl.u32 %v5460, 16
  %v5651 = vshll.u32 %v5460, 16
  %v5653 = vrot.slane %v5651, 1
  %v5654 = vor.u32 %v5649, %v5653
  %v5656 = vshll.u32 %v5493, 16
  %v5658 = vrot.slane %v5656, 1
  %v5659 = vsel %vm5515, %v5654, %v5658
  %v5661 = vshrl.u32 %v5461, 16
  %v5663 = vshll.u32 %v5461, 16
  %v5665 = vrot.slane %v5663, 1
  %v5666 = vor.u32 %v5661, %v5665
  %v5668 = vshll.u32 %v5494, 16
  %v5670 = vrot.slane %v5668, 1
  %v5671 = vsel %vm5515, %v5666, %v5670
  %v5673 = vshrl.u32 %v5462, 16
  %v5675 = vshll.u32 %v5462, 16
  %v5677 = vrot.slane %v5675, 1
  %v5678 = vor.u32 %v5673, %v5677
  %v5680 = vshll.u32 %v5495, 16
  %v5682 = vrot.slane %v5680, 1
  %v5683 = vsel %vm5515, %v5678, %v5682
  %v5685 = vshrl.u32 %v5463, 16
  %v5687 = vshll.u32 %v5463, 16
  %v5689 = vrot.slane %v5687, 1
  %v5690 = vor.u32 %v5685, %v5689
  %v5692 = vshll.u32 %v5496, 16
  %v5694 = vrot.slane %v5692, 1
  %v5695 = vsel %vm5515, %v5690, %v5694
  %v5697 = vshrl.u32 %v5464, 16
  %v5699 = vshll.u32 %v5464, 16
  %v5701 = vrot.slane %v5699, 1
  %v5702 = vor.u32 %v5697, %v5701
  %v5704 = vshll.u32 %v5497, 16
  %v5706 = vrot.slane %v5704, 1
  %v5707 = vsel %vm5515, %v5702, %v5706
  %v5709 = vshrl.u32 %v5466, 16
  %v5711 = vshll.u32 %v5466, 16
  %v5713 = vrot.slane %v5711, 1
  %v5714 = vor.u32 %v5709, %v5713
  %v5716 = vshll.u32 %v5499, 16
  %v5718 = vrot.slane %v5716, 1
  %v5719 = vsel %vm5515, %v5714, %v5718
  %v5721 = vshrl.u32 %v5467, 16
  %v5723 = vshll.u32 %v5467, 16
  %v5725 = vrot.slane %v5723, 1
  %v5726 = vor.u32 %v5721, %v5725
  %v5728 = vshll.u32 %v5500, 16
  %v5730 = vrot.slane %v5728, 1
  %v5731 = vsel %vm5515, %v5726, %v5730
  %v5733 = vshrl.u32 %v5468, 16
  %v5735 = vshll.u32 %v5468, 16
  %v5737 = vrot.slane %v5735, 1
  %v5738 = vor.u32 %v5733, %v5737
  %v5740 = vshll.u32 %v5501, 16
  %v5742 = vrot.slane %v5740, 1
  %v5743 = vsel %vm5515, %v5738, %v5742
  %v5745 = vshrl.u32 %v5469, 16
  %v5747 = vshll.u32 %v5469, 16
  %v5749 = vrot.slane %v5747, 1
  %v5750 = vor.u32 %v5745, %v5749
  %v5752 = vshll.u32 %v5502, 16
  %v5754 = vrot.slane %v5752, 1
  %v5755 = vsel %vm5515, %v5750, %v5754
  %v5757 = vshrl.u32 %v5470, 16
  %v5759 = vshll.u32 %v5470, 16
  %v5761 = vrot.slane %v5759, 1
  %v5762 = vor.u32 %v5757, %v5761
  %v5764 = vshll.u32 %v5503, 16
  %v5766 = vrot.slane %v5764, 1
  %v5767 = vsel %vm5515, %v5762, %v5766
  %v5769 = vshrl.u32 %v5471, 16
  %v5771 = vshll.u32 %v5471, 16
  %v5773 = vrot.slane %v5771, 1
  %v5774 = vor.u32 %v5769, %v5773
  %v5776 = vshll.u32 %v5504, 16
  %v5778 = vrot.slane %v5776, 1
  %v5779 = vsel %vm5515, %v5774, %v5778
  %v5781 = vshrl.u32 %v5472, 16
  %v5783 = vshll.u32 %v5472, 16
  %v5785 = vrot.slane %v5783, 1
  %v5786 = vor.u32 %v5781, %v5785
  %v5788 = vshll.u32 %v5505, 16
  %v5790 = vrot.slane %v5788, 1
  %v5791 = vsel %vm5515, %v5786, %v5790
  %v5793 = vshrl.u32 %v5473, 16
  %v5795 = vshll.u32 %v5473, 16
  %v5797 = vrot.slane %v5795, 1
  %v5798 = vor.u32 %v5793, %v5797
  %v5800 = vshll.u32 %v5506, 16
  %v5802 = vrot.slane %v5800, 1
  %v5803 = vsel %vm5515, %v5798, %v5802
  %v5805 = vshrl.u32 %v5474, 16
  %v5807 = vshll.u32 %v5474, 16
  %v5809 = vrot.slane %v5807, 1
  %v5810 = vor.u32 %v5805, %v5809
  %v5812 = vshll.u32 %v5507, 16
  %v5814 = vrot.slane %v5812, 1
  %v5815 = vsel %vm5515, %v5810, %v5814
  %v5817 = vshrl.u32 %v5475, 16
  %v5819 = vshll.u32 %v5475, 16
  %v5821 = vrot.slane %v5819, 1
  %v5822 = vor.u32 %v5817, %v5821
  %v5824 = vshll.u32 %v5508, 16
  %v5826 = vrot.slane %v5824, 1
  %v5827 = vsel %vm5515, %v5822, %v5826
  %v5829 = vshrl.u32 %v5476, 16
  %v5831 = vshll.u32 %v5476, 16
  %v5833 = vrot.slane %v5831, 1
  %v5834 = vor.u32 %v5829, %v5833
  %v5836 = vshll.u32 %v5509, 16
  %v5838 = vrot.slane %v5836, 1
  %v5839 = vsel %vm5515, %v5834, %v5838
  %v5841 = vshrl.u32 %v5477, 16
  %v5843 = vshll.u32 %v5477, 16
  %v5845 = vrot.slane %v5843, 1
  %v5846 = vor.u32 %v5841, %v5845
  %v5848 = vshll.u32 %v5510, 16
  %v5850 = vrot.slane %v5848, 1
  %v5851 = vsel %vm5515, %v5846, %v5850
  %v5853 = vshrl.u32 %v5478, 16
  %v5855 = vshll.u32 %v5478, 16
  %v5857 = vrot.slane %v5855, 1
  %v5858 = vor.u32 %v5853, %v5857
  %v5860 = vshll.u32 %v5511, 16
  %v5862 = vrot.slane %v5860, 1
  %v5863 = vsel %vm5515, %v5858, %v5862
  %v5865 = vshrl.u32 %v5479, 16
  %v5867 = vshll.u32 %v5479, 16
  %v5869 = vrot.slane %v5867, 1
  %v5870 = vor.u32 %v5865, %v5869
  %v5872 = vshll.u32 %v5512, 16
  %v5874 = vrot.slane %v5872, 1
  %v5875 = vsel %vm5515, %v5870, %v5874
  %v5877 = vshrl.u32 %v5480, 16
  %v5879 = vshll.u32 %v5480, 16
  %v5881 = vrot.slane %v5879, 1
  %v5882 = vor.u32 %v5877, %v5881
  %v5884 = vshll.u32 %v5513, 16
  %v5886 = vrot.slane %v5884, 1
  %v5887 = vsel %vm5515, %v5882, %v5886
  %vm5981 = vcmask 1046528
  %v5982 = vrot.slane %v974, 1
  %v5983 = vrot.slane %v5482, 1
  %v5984 = vsel %vm5981, %v5982, %v5983
  %v5985 = vrot.slane %v5450, 1
  %v5986 = vrot.slane %v5483, 1
  %v5987 = vsel %vm5981, %v5985, %v5986
  %v5988 = vrot.slane %v5451, 1
  %v5989 = vrot.slane %v5484, 1
  %v5990 = vsel %vm5981, %v5988, %v5989
  %v5991 = vrot.slane %v5452, 1
  %v5992 = vrot.slane %v5485, 1
  %v5993 = vsel %vm5981, %v5991, %v5992
  %v5994 = vrot.slane %v5453, 1
  %v5995 = vrot.slane %v5486, 1
  %v5996 = vsel %vm5981, %v5994, %v5995
  %v5997 = vrot.slane %v5454, 1
  %v5998 = vrot.slane %v5487, 1
  %v5999 = vsel %vm5981, %v5997, %v5998
  %v6000 = vrot.slane %v5455, 1
  %v6001 = vrot.slane %v5488, 1
  %v6002 = vsel %vm5981, %v6000, %v6001
  %v6003 = vrot.slane %v5456, 1
  %v6004 = vrot.slane %v5489, 1
  %v6005 = vsel %vm5981, %v6003, %v6004
  %v6006 = vrot.slane %v5457, 1
  %v6007 = vrot.slane %v5490, 1
  %v6008 = vsel %vm5981, %v6006, %v6007
  %v6009 = vrot.slane %v5458, 1
  %v6010 = vrot.slane %v5491, 1
  %v6011 = vsel %vm5981, %v6009, %v6010
  %v6012 = vrot.slane %v5459, 1
  %v6013 = vrot.slane %v5492, 1
  %v6014 = vsel %vm5981, %v6012, %v6013
  %v6015 = vrot.slane %v5460, 1
  %v6016 = vrot.slane %v5493, 1
  %v6017 = vsel %vm5981, %v6015, %v6016
  %v6018 = vrot.slane %v5461, 1
  %v6019 = vrot.slane %v5494, 1
  %v6020 = vsel %vm5981, %v6018, %v6019
  %v6021 = vrot.slane %v5462, 1
  %v6022 = vrot.slane %v5495, 1
  %v6023 = vsel %vm5981, %v6021, %v6022
  %v6024 = vrot.slane %v5463, 1
  %v6025 = vrot.slane %v5496, 1
  %v6026 = vsel %vm5981, %v6024, %v6025
  %v6027 = vrot.slane %v5464, 1
  %v6028 = vrot.slane %v5497, 1
  %v6029 = vsel %vm5981, %v6027, %v6028
  %v6030 = vrot.slane %v5466, 1
  %v6031 = vrot.slane %v5499, 1
  %v6032 = vsel %vm5981, %v6030, %v6031
  %v6033 = vrot.slane %v5467, 1
  %v6034 = vrot.slane %v5500, 1
  %v6035 = vsel %vm5981, %v6033, %v6034
  %v6036 = vrot.slane %v5468, 1
  %v6037 = vrot.slane %v5501, 1
  %v6038 = vsel %vm5981, %v6036, %v6037
  %v6039 = vrot.slane %v5469, 1
  %v6040 = vrot.slane %v5502, 1
  %v6041 = vsel %vm5981, %v6039, %v6040
  %v6042 = vrot.slane %v5470, 1
  %v6043 = vrot.slane %v5503, 1
  %v6044 = vsel %vm5981, %v6042, %v6043
  %v6045 = vrot.slane %v5471, 1
  %v6046 = vrot.slane %v5504, 1
  %v6047 = vsel %vm5981, %v6045, %v6046
  %v6048 = vrot.slane %v5472, 1
  %v6049 = vrot.slane %v5505, 1
  %v6050 = vsel %vm5981, %v6048, %v6049
  %v6051 = vrot.slane %v5473, 1
  %v6052 = vrot.slane %v5506, 1
  %v6053 = vsel %vm5981, %v6051, %v6052
  %v6054 = vrot.slane %v5474, 1
  %v6055 = vrot.slane %v5507, 1
  %v6056 = vsel %vm5981, %v6054, %v6055
  %v6057 = vrot.slane %v5475, 1
  %v6058 = vrot.slane %v5508, 1
  %v6059 = vsel %vm5981, %v6057, %v6058
  %v6060 = vrot.slane %v5476, 1
  %v6061 = vrot.slane %v5509, 1
  %v6062 = vsel %vm5981, %v6060, %v6061
  %v6063 = vrot.slane %v5477, 1
  %v6064 = vrot.slane %v5510, 1
  %v6065 = vsel %vm5981, %v6063, %v6064
  %v6066 = vrot.slane %v5478, 1
  %v6067 = vrot.slane %v5511, 1
  %v6068 = vsel %vm5981, %v6066, %v6067
  %v6069 = vrot.slane %v5479, 1
  %v6070 = vrot.slane %v5512, 1
  %v6071 = vsel %vm5981, %v6069, %v6070
  %v6072 = vrot.slane %v5480, 1
  %v6073 = vrot.slane %v5513, 1
  %v6074 = vsel %vm5981, %v6072, %v6073
  %v6107 = vshrl.u32 %v5465, 16
  %v6109 = vshll.u32 %v5465, 16
  %v6111 = vrot.slane %v6109, 1
  %v6112 = vor.u32 %v6107, %v6111
  %v6114 = vshll.u32 %v5498, 16
  %v6116 = vrot.slane %v6114, 1
  %v6117 = vsel %vm5515, %v6112, %v6116
  %v6119 = vshrl.u32 %v5481, 16
  %v6121 = vshll.u32 %v5481, 16
  %v6123 = vrot.slane %v6121, 1
  %v6124 = vor.u32 %v6119, %v6123
  %v6126 = vshll.u32 %v5514, 16
  %v6128 = vrot.slane %v6126, 1
  %v6129 = vsel %vm5515, %v6124, %v6128
  %v6136 = vrot.slane %v5465, 1
  %v6137 = vrot.slane %v5498, 1
  %v6138 = vsel %vm5981, %v6136, %v6137
  %v6139 = vrot.slane %v5481, 1
  %v6140 = vrot.slane %v5514, 1
  %v6141 = vsel %vm5981, %v6139, %v6140
  %v6144 = vld [vmem:[%s14] sm:$0xf]
  %v6145 = vld [vmem:[%s14 + $0x4] sm:$0xf]
  %v6146 = vld [vmem:[%s14 + $0x8] sm:$0xf]
  %v6147 = vld [vmem:[%s14 + $0xc] sm:$0xf]
  %v6148 = vld [vmem:[%s14 + $0x10] sm:$0xf]
  %v6149 = vld [vmem:[%s14 + $0x14] sm:$0xf]
  %v6150 = vld [vmem:[%s14 + $0x18] sm:$0xf]
  %v6151 = vld [vmem:[%s14 + $0x1c] sm:$0xf]
  %v6152 = vld [vmem:[%s14 + $0x20] sm:$0xf]
  %v6153 = vld [vmem:[%s14 + $0x24] sm:$0xf]
  %v6154 = vld [vmem:[%s14 + $0x28] sm:$0xf]
  %v6155 = vld [vmem:[%s14 + $0x2c] sm:$0xf]
  %v6156 = vld [vmem:[%s14 + $0x30] sm:$0xf]
  %v6157 = vld [vmem:[%s14 + $0x34] sm:$0xf]
  %v6158 = vld [vmem:[%s14 + $0x38] sm:$0xf]
  %v6159 = vld [vmem:[%s14 + $0x3c] sm:$0xf]
  %v6160 = vld [vmem:[%s14 + $0x40] sm:$0xf]
  %v6161 = vld [vmem:[%s14 + $0x44] sm:$0xf]
  %v6162 = vld [vmem:[%s14 + $0x48] sm:$0xf]
  %v6163 = vld [vmem:[%s14 + $0x4c] sm:$0xf]
  %v6164 = vld [vmem:[%s14 + $0x50] sm:$0xf]
  %v6165 = vld [vmem:[%s14 + $0x54] sm:$0xf]
  %v6166 = vld [vmem:[%s14 + $0x58] sm:$0xf]
  %v6167 = vld [vmem:[%s14 + $0x5c] sm:$0xf]
  %v6168 = vld [vmem:[%s14 + $0x60] sm:$0xf]
  %v6169 = vld [vmem:[%s14 + $0x64] sm:$0xf]
  %v6170 = vld [vmem:[%s14 + $0x68] sm:$0xf]
  %v6171 = vld [vmem:[%s14 + $0x6c] sm:$0xf]
  %v6172 = vld [vmem:[%s14 + $0x70] sm:$0xf]
  %v6173 = vld [vmem:[%s14 + $0x74] sm:$0xf]
  %v6174 = vld [vmem:[%s14 + $0x78] sm:$0xf]
  %v6175 = vld [vmem:[%s14 + $0x7c] sm:$0xf]
  %v6176 = vld [vmem:[%s14 + $0x80] sm:$0xf]
  %v6177 = vld [vmem:[%s14 + $0x84] sm:$0xf]
  %v6178 = vld [vmem:[%s14 + $0x88] sm:$0xf]
  %v6179 = vld [vmem:[%s14 + $0x8c] sm:$0xf]
  %v6180 = vld [vmem:[%s14 + $0x90] sm:$0xf]
  %v6181 = vld [vmem:[%s14 + $0x94] sm:$0xf]
  %v6182 = vld [vmem:[%s14 + $0x98] sm:$0xf]
  %v6183 = vld [vmem:[%s14 + $0x9c] sm:$0xf]
  %v6184 = vld [vmem:[%s14 + $0xa0] sm:$0xf]
  %v6185 = vld [vmem:[%s14 + $0xa4] sm:$0xf]
  %v6186 = vld [vmem:[%s14 + $0xa8] sm:$0xf]
  %v6187 = vld [vmem:[%s14 + $0xac] sm:$0xf]
  %v6188 = vld [vmem:[%s14 + $0xb0] sm:$0xf]
  %v6189 = vld [vmem:[%s14 + $0xb4] sm:$0xf]
  %v6190 = vld [vmem:[%s14 + $0xb8] sm:$0xf]
  %v6191 = vld [vmem:[%s14 + $0xbc] sm:$0xf]
  %v6192 = vld [vmem:[%s14 + $0xc0] sm:$0xf]
  %v6193 = vld [vmem:[%s14 + $0xc4] sm:$0xf]
  %v6194 = vld [vmem:[%s14 + $0xc8] sm:$0xf]
  %v6195 = vld [vmem:[%s14 + $0xcc] sm:$0xf]
  %v6196 = vld [vmem:[%s14 + $0xd0] sm:$0xf]
  %v6197 = vld [vmem:[%s14 + $0xd4] sm:$0xf]
  %v6198 = vld [vmem:[%s14 + $0xd8] sm:$0xf]
  %v6199 = vld [vmem:[%s14 + $0xdc] sm:$0xf]
  %v6200 = vld [vmem:[%s14 + $0xe0] sm:$0xf]
  %v6201 = vld [vmem:[%s14 + $0xe4] sm:$0xf]
  %v6202 = vld [vmem:[%s14 + $0xe8] sm:$0xf]
  %v6203 = vld [vmem:[%s14 + $0xec] sm:$0xf]
  %v6204 = vld [vmem:[%s14 + $0xf0] sm:$0xf]
  %v6205 = vld [vmem:[%s14 + $0xf4] sm:$0xf]
  %v6206 = vld [vmem:[%s14 + $0xf8] sm:$0xf]
  %v6207 = vld [vmem:[%s14 + $0xfc] sm:$0xf]
  %v6208 = vld [vmem:[%s14 + $0x100] sm:$0xf]
  %v6209 = vld [vmem:[%s14 + $0x104] sm:$0xf]
  %v6210 = vld [vmem:[%s14 + $0x108] sm:$0xf]
  %v6211 = vld [vmem:[%s14 + $0x10c] sm:$0xf]
  %v6212 = vld [vmem:[%s14 + $0x110] sm:$0xf]
  %v6213 = vld [vmem:[%s14 + $0x114] sm:$0xf]
  %v6214 = vld [vmem:[%s14 + $0x118] sm:$0xf]
  %v6215 = vld [vmem:[%s14 + $0x11c] sm:$0xf]
  %v6216 = vld [vmem:[%s14 + $0x120] sm:$0xf]
  %v6217 = vld [vmem:[%s14 + $0x124] sm:$0xf]
  %v6218 = vld [vmem:[%s14 + $0x128] sm:$0xf]
  %v6219 = vld [vmem:[%s14 + $0x12c] sm:$0xf]
  %v6220 = vld [vmem:[%s14 + $0x130] sm:$0xf]
  %v6221 = vld [vmem:[%s14 + $0x134] sm:$0xf]
  %v6222 = vld [vmem:[%s14 + $0x138] sm:$0xf]
  %v6223 = vld [vmem:[%s14 + $0x13c] sm:$0xf]
  %v6224 = vld [vmem:[%s14 + $0x140] sm:$0xf]
  %v6225 = vld [vmem:[%s14 + $0x144] sm:$0xf]
  %v6226 = vld [vmem:[%s14 + $0x148] sm:$0xf]
  %v6227 = vld [vmem:[%s14 + $0x14c] sm:$0xf]
  %v6228 = vld [vmem:[%s14 + $0x150] sm:$0xf]
  %v6229 = vld [vmem:[%s14 + $0x154] sm:$0xf]
  %v6230 = vld [vmem:[%s14 + $0x158] sm:$0xf]
  %v6231 = vld [vmem:[%s14 + $0x15c] sm:$0xf]
  %v6232 = vld [vmem:[%s14 + $0x160] sm:$0xf]
  %v6233 = vld [vmem:[%s14 + $0x164] sm:$0xf]
  %v6234 = vld [vmem:[%s14 + $0x168] sm:$0xf]
  %v6235 = vld [vmem:[%s14 + $0x16c] sm:$0xf]
  %v6236 = vld [vmem:[%s14 + $0x170] sm:$0xf]
  %v6237 = vld [vmem:[%s14 + $0x174] sm:$0xf]
  %v6238 = vld [vmem:[%s14 + $0x178] sm:$0xf]
  %v6239 = vld [vmem:[%s14 + $0x17c] sm:$0xf]
  %v6240 = vld [vmem:[%s14 + $0x180] sm:$0xf]
  %v6241 = vld [vmem:[%s14 + $0x184] sm:$0xf]
  %v6242 = vld [vmem:[%s14 + $0x188] sm:$0xf]
  %v6243 = vld [vmem:[%s14 + $0x18c] sm:$0xf]
  %v6244 = vld [vmem:[%s14 + $0x190] sm:$0xf]
  %v6245 = vld [vmem:[%s14 + $0x194] sm:$0xf]
  %v6246 = vld [vmem:[%s14 + $0x198] sm:$0xf]
  %v6247 = vld [vmem:[%s14 + $0x19c] sm:$0xf]
  %v6248 = vld [vmem:[%s14 + $0x1a0] sm:$0xf]
  %v6249 = vld [vmem:[%s14 + $0x1a4] sm:$0xf]
  %v6250 = vld [vmem:[%s14 + $0x1a8] sm:$0xf]
  %v6251 = vld [vmem:[%s14 + $0x1ac] sm:$0xf]
  %v6252 = vld [vmem:[%s14 + $0x1b0] sm:$0xf]
  %v6253 = vld [vmem:[%s14 + $0x1b4] sm:$0xf]
  %v6254 = vld [vmem:[%s14 + $0x1b8] sm:$0xf]
  %v6255 = vld [vmem:[%s14 + $0x1bc] sm:$0xf]
  %v6256 = vld [vmem:[%s14 + $0x1c0] sm:$0xf]
  %v6257 = vld [vmem:[%s14 + $0x1c4] sm:$0xf]
  %v6258 = vld [vmem:[%s14 + $0x1c8] sm:$0xf]
  %v6259 = vld [vmem:[%s14 + $0x1cc] sm:$0xf]
  %v6260 = vld [vmem:[%s14 + $0x1d0] sm:$0xf]
  %v6261 = vld [vmem:[%s14 + $0x1d4] sm:$0xf]
  %v6262 = vld [vmem:[%s14 + $0x1d8] sm:$0xf]
  %v6263 = vld [vmem:[%s14 + $0x1dc] sm:$0xf]
  %v6264 = vld [vmem:[%s14 + $0x1e0] sm:$0xf]
  %v6265 = vld [vmem:[%s14 + $0x1e4] sm:$0xf]
  %v6266 = vld [vmem:[%s14 + $0x1e8] sm:$0xf]
  %v6267 = vld [vmem:[%s14 + $0x1ec] sm:$0xf]
  %v6268 = vld [vmem:[%s14 + $0x1f0] sm:$0xf]
  %v6269 = vld [vmem:[%s14 + $0x1f4] sm:$0xf]
  %v6270 = vld [vmem:[%s14 + $0x1f8] sm:$0xf]
  %v6271 = vld [vmem:[%s14 + $0x1fc] sm:$0xf]
  %v6272 = vld [vmem:[%s14 + $0x200] sm:$0xf]
  %v6273 = vld [vmem:[%s14 + $0x204] sm:$0xf]
  %v6274 = vld [vmem:[%s14 + $0x208] sm:$0xf]
  %v6275 = vld [vmem:[%s14 + $0x20c] sm:$0xf]
  %v6276 = vld [vmem:[%s14 + $0x210] sm:$0xf]
  %v6277 = vld [vmem:[%s14 + $0x214] sm:$0xf]
  %v6278 = vld [vmem:[%s14 + $0x218] sm:$0xf]
  %v6279 = vld [vmem:[%s14 + $0x21c] sm:$0xf]
  %v6280 = vld [vmem:[%s14 + $0x220] sm:$0xf]
  %v6281 = vld [vmem:[%s14 + $0x224] sm:$0xf]
  %v6282 = vld [vmem:[%s14 + $0x228] sm:$0xf]
  %v6283 = vld [vmem:[%s14 + $0x22c] sm:$0xf]
  %v6284 = vld [vmem:[%s14 + $0x230] sm:$0xf]
  %v6285 = vld [vmem:[%s14 + $0x234] sm:$0xf]
  %v6286 = vld [vmem:[%s14 + $0x238] sm:$0xf]
  %v6287 = vld [vmem:[%s14 + $0x23c] sm:$0xf]
  %v6432 = vunpack.c.l.b16 %v6144
  %v6433 = vunpack.c.l.b16 %v6145
  %v6434 = vunpack.c.l.b16 %v6146
  %v6435 = vunpack.c.l.b16 %v6147
  %v6436 = vunpack.c.l.b16 %v6148
  %v6437 = vunpack.c.l.b16 %v6149
  %v6438 = vunpack.c.l.b16 %v6150
  %v6439 = vunpack.c.l.b16 %v6151
  %v6440 = vunpack.c.l.b16 %v6152
  %v6441 = vunpack.c.l.b16 %v6153
  %v6442 = vunpack.c.l.b16 %v6154
  %v6443 = vunpack.c.l.b16 %v6155
  %v6444 = vunpack.c.l.b16 %v6156
  %v6445 = vunpack.c.l.b16 %v6157
  %v6446 = vunpack.c.l.b16 %v6158
  %v6447 = vunpack.c.l.b16 %v6159
  %v6448 = vunpack.c.l.b16 %v6160
  %v6449 = vunpack.c.l.b16 %v6161
  %v6450 = vunpack.c.l.b16 %v6162
  %v6451 = vunpack.c.l.b16 %v6163
  %v6452 = vunpack.c.l.b16 %v6164
  %v6453 = vunpack.c.l.b16 %v6165
  %v6454 = vunpack.c.l.b16 %v6166
  %v6455 = vunpack.c.l.b16 %v6167
  %v6456 = vunpack.c.l.b16 %v6168
  %v6457 = vunpack.c.l.b16 %v6169
  %v6458 = vunpack.c.l.b16 %v6170
  %v6459 = vunpack.c.l.b16 %v6171
  %v6460 = vunpack.c.l.b16 %v6172
  %v6461 = vunpack.c.l.b16 %v6173
  %v6462 = vunpack.c.l.b16 %v6174
  %v6463 = vunpack.c.l.b16 %v6175
  %v6464 = vunpack.c.l.b16 %v6176
  %v6465 = vunpack.c.l.b16 %v6177
  %v6466 = vunpack.c.l.b16 %v6178
  %v6467 = vunpack.c.l.b16 %v6179
  %v6468 = vunpack.c.l.b16 %v6180
  %v6469 = vunpack.c.l.b16 %v6181
  %v6470 = vunpack.c.l.b16 %v6182
  %v6471 = vunpack.c.l.b16 %v6183
  %v6472 = vunpack.c.l.b16 %v6184
  %v6473 = vunpack.c.l.b16 %v6185
  %v6474 = vunpack.c.l.b16 %v6186
  %v6475 = vunpack.c.l.b16 %v6187
  %v6476 = vunpack.c.l.b16 %v6188
  %v6477 = vunpack.c.l.b16 %v6189
  %v6478 = vunpack.c.l.b16 %v6190
  %v6479 = vunpack.c.l.b16 %v6191
  %v6480 = vunpack.c.l.b16 %v6192
  %v6481 = vunpack.c.l.b16 %v6193
  %v6482 = vunpack.c.l.b16 %v6194
  %v6483 = vunpack.c.l.b16 %v6195
  %v6484 = vunpack.c.l.b16 %v6196
  %v6485 = vunpack.c.l.b16 %v6197
  %v6486 = vunpack.c.l.b16 %v6198
  %v6487 = vunpack.c.l.b16 %v6199
  %v6488 = vunpack.c.l.b16 %v6200
  %v6489 = vunpack.c.l.b16 %v6201
  %v6490 = vunpack.c.l.b16 %v6202
  %v6491 = vunpack.c.l.b16 %v6203
  %v6492 = vunpack.c.l.b16 %v6204
  %v6493 = vunpack.c.l.b16 %v6205
  %v6494 = vunpack.c.l.b16 %v6206
  %v6495 = vunpack.c.l.b16 %v6207
  %v6496 = vunpack.c.l.b16 %v6208
  %v6497 = vunpack.c.l.b16 %v6209
  %v6498 = vunpack.c.l.b16 %v6210
  %v6499 = vunpack.c.l.b16 %v6211
  %v6500 = vunpack.c.l.b16 %v6212
  %v6501 = vunpack.c.l.b16 %v6213
  %v6502 = vunpack.c.l.b16 %v6214
  %v6503 = vunpack.c.l.b16 %v6215
  %v6504 = vunpack.c.l.b16 %v6216
  %v6505 = vunpack.c.l.b16 %v6217
  %v6506 = vunpack.c.l.b16 %v6218
  %v6507 = vunpack.c.l.b16 %v6219
  %v6508 = vunpack.c.l.b16 %v6220
  %v6509 = vunpack.c.l.b16 %v6221
  %v6510 = vunpack.c.l.b16 %v6222
  %v6511 = vunpack.c.l.b16 %v6223
  %v6512 = vunpack.c.l.b16 %v6224
  %v6513 = vunpack.c.l.b16 %v6225
  %v6514 = vunpack.c.l.b16 %v6226
  %v6515 = vunpack.c.l.b16 %v6227
  %v6516 = vunpack.c.l.b16 %v6228
  %v6517 = vunpack.c.l.b16 %v6229
  %v6518 = vunpack.c.l.b16 %v6230
  %v6519 = vunpack.c.l.b16 %v6231
  %v6520 = vunpack.c.l.b16 %v6232
  %v6521 = vunpack.c.l.b16 %v6233
  %v6522 = vunpack.c.l.b16 %v6234
  %v6523 = vunpack.c.l.b16 %v6235
  %v6524 = vunpack.c.l.b16 %v6236
  %v6525 = vunpack.c.l.b16 %v6237
  %v6526 = vunpack.c.l.b16 %v6238
  %v6527 = vunpack.c.l.b16 %v6239
  %v6528 = vunpack.c.l.b16 %v6240
  %v6529 = vunpack.c.l.b16 %v6241
  %v6530 = vunpack.c.l.b16 %v6242
  %v6531 = vunpack.c.l.b16 %v6243
  %v6532 = vunpack.c.l.b16 %v6244
  %v6533 = vunpack.c.l.b16 %v6245
  %v6534 = vunpack.c.l.b16 %v6246
  %v6535 = vunpack.c.l.b16 %v6247
  %v6536 = vunpack.c.l.b16 %v6248
  %v6537 = vunpack.c.l.b16 %v6249
  %v6538 = vunpack.c.l.b16 %v6250
  %v6539 = vunpack.c.l.b16 %v6251
  %v6540 = vunpack.c.l.b16 %v6252
  %v6541 = vunpack.c.l.b16 %v6253
  %v6542 = vunpack.c.l.b16 %v6254
  %v6543 = vunpack.c.l.b16 %v6255
  %v6544 = vunpack.c.l.b16 %v6256
  %v6545 = vunpack.c.l.b16 %v6257
  %v6546 = vunpack.c.l.b16 %v6258
  %v6547 = vunpack.c.l.b16 %v6259
  %v6548 = vunpack.c.l.b16 %v6260
  %v6549 = vunpack.c.l.b16 %v6261
  %v6550 = vunpack.c.l.b16 %v6262
  %v6551 = vunpack.c.l.b16 %v6263
  %v6552 = vunpack.c.l.b16 %v6264
  %v6553 = vunpack.c.l.b16 %v6265
  %v6554 = vunpack.c.l.b16 %v6266
  %v6555 = vunpack.c.l.b16 %v6267
  %v6556 = vunpack.c.l.b16 %v6268
  %v6557 = vunpack.c.l.b16 %v6269
  %v6558 = vunpack.c.l.b16 %v6270
  %v6559 = vunpack.c.l.b16 %v6271
  %v6560 = vunpack.c.l.b16 %v6272
  %v6561 = vunpack.c.l.b16 %v6273
  %v6562 = vunpack.c.l.b16 %v6274
  %v6563 = vunpack.c.l.b16 %v6275
  %v6564 = vunpack.c.l.b16 %v6276
  %v6565 = vunpack.c.l.b16 %v6277
  %v6566 = vunpack.c.l.b16 %v6278
  %v6567 = vunpack.c.l.b16 %v6279
  %v6568 = vunpack.c.l.b16 %v6280
  %v6569 = vunpack.c.l.b16 %v6281
  %v6570 = vunpack.c.l.b16 %v6282
  %v6571 = vunpack.c.l.b16 %v6283
  %v6572 = vunpack.c.l.b16 %v6284
  %v6573 = vunpack.c.l.b16 %v6285
  %v6574 = vunpack.c.l.b16 %v6286
  %v6575 = vunpack.c.l.b16 %v6287
  %v6576 = vpack.c.b16 %v6433, %v6432
  %v6577 = vpack.c.b16 %v6435, %v6434
  %v6578 = vpack.c.b16 %v6437, %v6436
  %v6579 = vpack.c.b16 %v6439, %v6438
  %v6580 = vpack.c.b16 %v6441, %v6440
  %v6581 = vpack.c.b16 %v6443, %v6442
  %v6582 = vpack.c.b16 %v6445, %v6444
  %v6583 = vpack.c.b16 %v6447, %v6446
  %v6584 = vpack.c.b16 %v6449, %v6448
  %v6585 = vpack.c.b16 %v6451, %v6450
  %v6586 = vpack.c.b16 %v6453, %v6452
  %v6587 = vpack.c.b16 %v6455, %v6454
  %v6588 = vpack.c.b16 %v6457, %v6456
  %v6589 = vpack.c.b16 %v6459, %v6458
  %v6590 = vpack.c.b16 %v6461, %v6460
  %v6591 = vpack.c.b16 %v6463, %v6462
  %v6592 = vpack.c.b16 %v6465, %v6464
  %v6593 = vpack.c.b16 %v6467, %v6466
  %v6594 = vpack.c.b16 %v6469, %v6468
  %v6595 = vpack.c.b16 %v6471, %v6470
  %v6596 = vpack.c.b16 %v6473, %v6472
  %v6597 = vpack.c.b16 %v6475, %v6474
  %v6598 = vpack.c.b16 %v6477, %v6476
  %v6599 = vpack.c.b16 %v6479, %v6478
  %v6600 = vpack.c.b16 %v6481, %v6480
  %v6601 = vpack.c.b16 %v6483, %v6482
  %v6602 = vpack.c.b16 %v6485, %v6484
  %v6603 = vpack.c.b16 %v6487, %v6486
  %v6604 = vpack.c.b16 %v6489, %v6488
  %v6605 = vpack.c.b16 %v6491, %v6490
  %v6606 = vpack.c.b16 %v6493, %v6492
  %v6607 = vpack.c.b16 %v6495, %v6494
  %v6608 = vpack.c.b16 %v6497, %v6496
  %v6609 = vpack.c.b16 %v6499, %v6498
  %v6610 = vpack.c.b16 %v6501, %v6500
  %v6611 = vpack.c.b16 %v6503, %v6502
  %v6612 = vpack.c.b16 %v6505, %v6504
  %v6613 = vpack.c.b16 %v6507, %v6506
  %v6614 = vpack.c.b16 %v6509, %v6508
  %v6615 = vpack.c.b16 %v6511, %v6510
  %v6616 = vpack.c.b16 %v6513, %v6512
  %v6617 = vpack.c.b16 %v6515, %v6514
  %v6618 = vpack.c.b16 %v6517, %v6516
  %v6619 = vpack.c.b16 %v6519, %v6518
  %v6620 = vpack.c.b16 %v6521, %v6520
  %v6621 = vpack.c.b16 %v6523, %v6522
  %v6622 = vpack.c.b16 %v6525, %v6524
  %v6623 = vpack.c.b16 %v6527, %v6526
  %v6624 = vpack.c.b16 %v6529, %v6528
  %v6625 = vpack.c.b16 %v6531, %v6530
  %v6626 = vpack.c.b16 %v6533, %v6532
  %v6627 = vpack.c.b16 %v6535, %v6534
  %v6628 = vpack.c.b16 %v6537, %v6536
  %v6629 = vpack.c.b16 %v6539, %v6538
  %v6630 = vpack.c.b16 %v6541, %v6540
  %v6631 = vpack.c.b16 %v6543, %v6542
  %v6632 = vpack.c.b16 %v6545, %v6544
  %v6633 = vpack.c.b16 %v6547, %v6546
  %v6634 = vpack.c.b16 %v6549, %v6548
  %v6635 = vpack.c.b16 %v6551, %v6550
  %v6636 = vpack.c.b16 %v6553, %v6552
  %v6637 = vpack.c.b16 %v6555, %v6554
  %v6638 = vpack.c.b16 %v6557, %v6556
  %v6639 = vpack.c.b16 %v6559, %v6558
  %v6640 = vpack.c.b16 %v6561, %v6560
  %v6641 = vpack.c.b16 %v6563, %v6562
  %v6642 = vpack.c.b16 %v6565, %v6564
  %v6643 = vpack.c.b16 %v6567, %v6566
  %v6644 = vpack.c.b16 %v6569, %v6568
  %v6645 = vpack.c.b16 %v6571, %v6570
  %v6646 = vpack.c.b16 %v6573, %v6572
  %v6647 = vpack.c.b16 %v6575, %v6574
  %6720 = vmatpush.bf16.msra.mxu0 %v6583
  %6721 = vmatpush.bf16.msra.mxu0 %v6582
  %6722 = vmatpush.bf16.msra.mxu0 %v6581
  %6723 = vmatpush.bf16.msra.mxu0 %v6580
  %6724 = vmatpush.bf16.msra.mxu0 %v6579
  %6725 = vmatpush.bf16.msra.mxu0 %v6578
  %6726 = vmatpush.bf16.msra.mxu0 %v6577
  %6727 = vmatpush.bf16.msra.mxu0 %v6576
  %6728 = vmatmul.bf16.gmra.mxu0 %v974
  %v6729 = vpop.f32.mrf.mxu0
  %v6730 = vadd.f32 0.0, %v6729
  %v6731 = vpop.f32.mrf.mxu0
  %v6732 = vadd.f32 0.0, %v6731
  %6733 = vmatmul.bf16.gmra.mxu0 %v5450
  %v6734 = vpop.f32.mrf.mxu0
  %v6735 = vadd.f32 0.0, %v6734
  %v6736 = vpop.f32.mrf.mxu0
  %v6737 = vadd.f32 0.0, %v6736
  %6738 = vmatmul.bf16.gmra.mxu0 %v5451
  %v6739 = vpop.f32.mrf.mxu0
  %v6740 = vadd.f32 0.0, %v6739
  %v6741 = vpop.f32.mrf.mxu0
  %v6742 = vadd.f32 0.0, %v6741
  %6743 = vmatmul.bf16.gmra.mxu0 %v5452
  %v6744 = vpop.f32.mrf.mxu0
  %v6745 = vadd.f32 0.0, %v6744
  %v6746 = vpop.f32.mrf.mxu0
  %v6747 = vadd.f32 0.0, %v6746
  %6748 = vmatmul.bf16.gmra.mxu0 %v5453
  %v6749 = vpop.f32.mrf.mxu0
  %v6750 = vadd.f32 0.0, %v6749
  %v6751 = vpop.f32.mrf.mxu0
  %v6752 = vadd.f32 0.0, %v6751
  %6753 = vmatmul.bf16.gmra.mxu0 %v5454
  %v6754 = vpop.f32.mrf.mxu0
  %v6755 = vadd.f32 0.0, %v6754
  %v6756 = vpop.f32.mrf.mxu0
  %v6757 = vadd.f32 0.0, %v6756
  %6758 = vmatmul.bf16.gmra.mxu0 %v5455
  %v6759 = vpop.f32.mrf.mxu0
  %v6760 = vadd.f32 0.0, %v6759
  %v6761 = vpop.f32.mrf.mxu0
  %v6762 = vadd.f32 0.0, %v6761
  %6763 = vmatmul.bf16.gmra.mxu0 %v5456
  %v6764 = vpop.f32.mrf.mxu0
  %v6765 = vadd.f32 0.0, %v6764
  %v6766 = vpop.f32.mrf.mxu0
  %v6767 = vadd.f32 0.0, %v6766
  %6768 = vmatmul.bf16.gmra.mxu0 %v5457
  %v6769 = vpop.f32.mrf.mxu0
  %v6770 = vadd.f32 0.0, %v6769
  %v6771 = vpop.f32.mrf.mxu0
  %v6772 = vadd.f32 0.0, %v6771
  %6773 = vmatmul.bf16.gmra.mxu0 %v5458
  %v6774 = vpop.f32.mrf.mxu0
  %v6775 = vadd.f32 0.0, %v6774
  %v6776 = vpop.f32.mrf.mxu0
  %v6777 = vadd.f32 0.0, %v6776
  %6778 = vmatmul.bf16.gmra.mxu0 %v5459
  %v6779 = vpop.f32.mrf.mxu0
  %v6780 = vadd.f32 0.0, %v6779
  %v6781 = vpop.f32.mrf.mxu0
  %v6782 = vadd.f32 0.0, %v6781
  %6783 = vmatmul.bf16.gmra.mxu0 %v5460
  %v6784 = vpop.f32.mrf.mxu0
  %v6785 = vadd.f32 0.0, %v6784
  %v6786 = vpop.f32.mrf.mxu0
  %v6787 = vadd.f32 0.0, %v6786
  %6788 = vmatmul.bf16.gmra.mxu0 %v5461
  %v6789 = vpop.f32.mrf.mxu0
  %v6790 = vadd.f32 0.0, %v6789
  %v6791 = vpop.f32.mrf.mxu0
  %v6792 = vadd.f32 0.0, %v6791
  %6793 = vmatmul.bf16.gmra.mxu0 %v5462
  %v6794 = vpop.f32.mrf.mxu0
  %v6795 = vadd.f32 0.0, %v6794
  %v6796 = vpop.f32.mrf.mxu0
  %v6797 = vadd.f32 0.0, %v6796
  %6798 = vmatmul.bf16.gmra.mxu0 %v5463
  %v6799 = vpop.f32.mrf.mxu0
  %v6800 = vadd.f32 0.0, %v6799
  %v6801 = vpop.f32.mrf.mxu0
  %v6802 = vadd.f32 0.0, %v6801
  %6803 = vmatmul.bf16.gmra.mxu0 %v5464
  %v6804 = vpop.f32.mrf.mxu0
  %v6805 = vadd.f32 0.0, %v6804
  %v6806 = vpop.f32.mrf.mxu0
  %v6807 = vadd.f32 0.0, %v6806
  %6808 = vmatmul.bf16.gmra.mxu0 %v974
  %v6809 = vpop.f32.mrf.mxu0
  %v6810 = vadd.f32 0.0, %v6809
  %v6811 = vpop.f32.mrf.mxu0
  %v6812 = vadd.f32 0.0, %v6811
  %6813 = vmatmul.bf16.gmra.mxu0 %v5466
  %v6814 = vpop.f32.mrf.mxu0
  %v6815 = vadd.f32 0.0, %v6814
  %v6816 = vpop.f32.mrf.mxu0
  %v6817 = vadd.f32 0.0, %v6816
  %6818 = vmatmul.bf16.gmra.mxu0 %v5467
  %v6819 = vpop.f32.mrf.mxu0
  %v6820 = vadd.f32 0.0, %v6819
  %v6821 = vpop.f32.mrf.mxu0
  %v6822 = vadd.f32 0.0, %v6821
  %6823 = vmatmul.bf16.gmra.mxu0 %v5468
  %v6824 = vpop.f32.mrf.mxu0
  %v6825 = vadd.f32 0.0, %v6824
  %v6826 = vpop.f32.mrf.mxu0
  %v6827 = vadd.f32 0.0, %v6826
  %6828 = vmatmul.bf16.gmra.mxu0 %v5469
  %v6829 = vpop.f32.mrf.mxu0
  %v6830 = vadd.f32 0.0, %v6829
  %v6831 = vpop.f32.mrf.mxu0
  %v6832 = vadd.f32 0.0, %v6831
  %6833 = vmatmul.bf16.gmra.mxu0 %v5470
  %v6834 = vpop.f32.mrf.mxu0
  %v6835 = vadd.f32 0.0, %v6834
  %v6836 = vpop.f32.mrf.mxu0
  %v6837 = vadd.f32 0.0, %v6836
  %6838 = vmatmul.bf16.gmra.mxu0 %v5471
  %v6839 = vpop.f32.mrf.mxu0
  %v6840 = vadd.f32 0.0, %v6839
  %v6841 = vpop.f32.mrf.mxu0
  %v6842 = vadd.f32 0.0, %v6841
  %6843 = vmatmul.bf16.gmra.mxu0 %v5472
  %v6844 = vpop.f32.mrf.mxu0
  %v6845 = vadd.f32 0.0, %v6844
  %v6846 = vpop.f32.mrf.mxu0
  %v6847 = vadd.f32 0.0, %v6846
  %6848 = vmatmul.bf16.gmra.mxu0 %v5473
  %v6849 = vpop.f32.mrf.mxu0
  %v6850 = vadd.f32 0.0, %v6849
  %v6851 = vpop.f32.mrf.mxu0
  %v6852 = vadd.f32 0.0, %v6851
  %6853 = vmatmul.bf16.gmra.mxu0 %v5474
  %v6854 = vpop.f32.mrf.mxu0
  %v6855 = vadd.f32 0.0, %v6854
  %v6856 = vpop.f32.mrf.mxu0
  %v6857 = vadd.f32 0.0, %v6856
  %6858 = vmatmul.bf16.gmra.mxu0 %v5475
  %v6859 = vpop.f32.mrf.mxu0
  %v6860 = vadd.f32 0.0, %v6859
  %v6861 = vpop.f32.mrf.mxu0
  %v6862 = vadd.f32 0.0, %v6861
  %6863 = vmatmul.bf16.gmra.mxu0 %v5476
  %v6864 = vpop.f32.mrf.mxu0
  %v6865 = vadd.f32 0.0, %v6864
  %v6866 = vpop.f32.mrf.mxu0
  %v6867 = vadd.f32 0.0, %v6866
  %6868 = vmatmul.bf16.gmra.mxu0 %v5477
  %v6869 = vpop.f32.mrf.mxu0
  %v6870 = vadd.f32 0.0, %v6869
  %v6871 = vpop.f32.mrf.mxu0
  %v6872 = vadd.f32 0.0, %v6871
  %6873 = vmatmul.bf16.gmra.mxu0 %v5478
  %v6874 = vpop.f32.mrf.mxu0
  %v6875 = vadd.f32 0.0, %v6874
  %v6876 = vpop.f32.mrf.mxu0
  %v6877 = vadd.f32 0.0, %v6876
  %6878 = vmatmul.bf16.gmra.mxu0 %v5479
  %v6879 = vpop.f32.mrf.mxu0
  %v6880 = vadd.f32 0.0, %v6879
  %v6881 = vpop.f32.mrf.mxu0
  %v6882 = vadd.f32 0.0, %v6881
  %6883 = vmatmul.bf16.gmra.mxu0 %v5480
  %v6884 = vpop.f32.mrf.mxu0
  %v6885 = vadd.f32 0.0, %v6884
  %v6886 = vpop.f32.mrf.mxu0
  %v6887 = vadd.f32 0.0, %v6886
  %6888 = vdwg.mxu0
  %6889 = vmatpush.bf16.msra.mxu0 %v6591
  %6890 = vmatpush.bf16.msra.mxu0 %v6590
  %6891 = vmatpush.bf16.msra.mxu0 %v6589
  %6892 = vmatpush.bf16.msra.mxu0 %v6588
  %6893 = vmatpush.bf16.msra.mxu0 %v6587
  %6894 = vmatpush.bf16.msra.mxu0 %v6586
  %6895 = vmatpush.bf16.msra.mxu0 %v6585
  %6896 = vmatpush.bf16.msra.mxu0 %v6584
  %6897 = vmatmul.bf16.gmra.mxu0 %v5527
  %v6898 = vpop.f32.mrf.mxu0
  %v6899 = vadd.f32 %v6730, %v6898
  %v6900 = vpop.f32.mrf.mxu0
  %v6901 = vadd.f32 %v6732, %v6900
  %6902 = vmatmul.bf16.gmra.mxu0 %v5539
  %v6903 = vpop.f32.mrf.mxu0
  %v6904 = vadd.f32 %v6735, %v6903
  %v6905 = vpop.f32.mrf.mxu0
  %v6906 = vadd.f32 %v6737, %v6905
  %6907 = vmatmul.bf16.gmra.mxu0 %v5551
  %v6908 = vpop.f32.mrf.mxu0
  %v6909 = vadd.f32 %v6740, %v6908
  %v6910 = vpop.f32.mrf.mxu0
  %v6911 = vadd.f32 %v6742, %v6910
  %6912 = vmatmul.bf16.gmra.mxu0 %v5563
  %v6913 = vpop.f32.mrf.mxu0
  %v6914 = vadd.f32 %v6745, %v6913
  %v6915 = vpop.f32.mrf.mxu0
  %v6916 = vadd.f32 %v6747, %v6915
  %6917 = vmatmul.bf16.gmra.mxu0 %v5575
  %v6918 = vpop.f32.mrf.mxu0
  %v6919 = vadd.f32 %v6750, %v6918
  %v6920 = vpop.f32.mrf.mxu0
  %v6921 = vadd.f32 %v6752, %v6920
  %6922 = vmatmul.bf16.gmra.mxu0 %v5587
  %v6923 = vpop.f32.mrf.mxu0
  %v6924 = vadd.f32 %v6755, %v6923
  %v6925 = vpop.f32.mrf.mxu0
  %v6926 = vadd.f32 %v6757, %v6925
  %6927 = vmatmul.bf16.gmra.mxu0 %v5599
  %v6928 = vpop.f32.mrf.mxu0
  %v6929 = vadd.f32 %v6760, %v6928
  %v6930 = vpop.f32.mrf.mxu0
  %v6931 = vadd.f32 %v6762, %v6930
  %6932 = vmatmul.bf16.gmra.mxu0 %v5611
  %v6933 = vpop.f32.mrf.mxu0
  %v6934 = vadd.f32 %v6765, %v6933
  %v6935 = vpop.f32.mrf.mxu0
  %v6936 = vadd.f32 %v6767, %v6935
  %6937 = vmatmul.bf16.gmra.mxu0 %v5623
  %v6938 = vpop.f32.mrf.mxu0
  %v6939 = vadd.f32 %v6770, %v6938
  %v6940 = vpop.f32.mrf.mxu0
  %v6941 = vadd.f32 %v6772, %v6940
  %6942 = vmatmul.bf16.gmra.mxu0 %v5635
  %v6943 = vpop.f32.mrf.mxu0
  %v6944 = vadd.f32 %v6775, %v6943
  %v6945 = vpop.f32.mrf.mxu0
  %v6946 = vadd.f32 %v6777, %v6945
  %6947 = vmatmul.bf16.gmra.mxu0 %v5647
  %v6948 = vpop.f32.mrf.mxu0
  %v6949 = vadd.f32 %v6780, %v6948
  %v6950 = vpop.f32.mrf.mxu0
  %v6951 = vadd.f32 %v6782, %v6950
  %6952 = vmatmul.bf16.gmra.mxu0 %v5659
  %v6953 = vpop.f32.mrf.mxu0
  %v6954 = vadd.f32 %v6785, %v6953
  %v6955 = vpop.f32.mrf.mxu0
  %v6956 = vadd.f32 %v6787, %v6955
  %6957 = vmatmul.bf16.gmra.mxu0 %v5671
  %v6958 = vpop.f32.mrf.mxu0
  %v6959 = vadd.f32 %v6790, %v6958
  %v6960 = vpop.f32.mrf.mxu0
  %v6961 = vadd.f32 %v6792, %v6960
  %6962 = vmatmul.bf16.gmra.mxu0 %v5683
  %v6963 = vpop.f32.mrf.mxu0
  %v6964 = vadd.f32 %v6795, %v6963
  %v6965 = vpop.f32.mrf.mxu0
  %v6966 = vadd.f32 %v6797, %v6965
  %6967 = vmatmul.bf16.gmra.mxu0 %v5695
  %v6968 = vpop.f32.mrf.mxu0
  %v6969 = vadd.f32 %v6800, %v6968
  %v6970 = vpop.f32.mrf.mxu0
  %v6971 = vadd.f32 %v6802, %v6970
  %6972 = vmatmul.bf16.gmra.mxu0 %v5707
  %v6973 = vpop.f32.mrf.mxu0
  %v6974 = vadd.f32 %v6805, %v6973
  %v6975 = vpop.f32.mrf.mxu0
  %v6976 = vadd.f32 %v6807, %v6975
  %6977 = vmatmul.bf16.gmra.mxu0 %v5527
  %v6978 = vpop.f32.mrf.mxu0
  %v6979 = vadd.f32 %v6810, %v6978
  %v6980 = vpop.f32.mrf.mxu0
  %v6981 = vadd.f32 %v6812, %v6980
  %6982 = vmatmul.bf16.gmra.mxu0 %v5719
  %v6983 = vpop.f32.mrf.mxu0
  %v6984 = vadd.f32 %v6815, %v6983
  %v6985 = vpop.f32.mrf.mxu0
  %v6986 = vadd.f32 %v6817, %v6985
  %6987 = vmatmul.bf16.gmra.mxu0 %v5731
  %v6988 = vpop.f32.mrf.mxu0
  %v6989 = vadd.f32 %v6820, %v6988
  %v6990 = vpop.f32.mrf.mxu0
  %v6991 = vadd.f32 %v6822, %v6990
  %6992 = vmatmul.bf16.gmra.mxu0 %v5743
  %v6993 = vpop.f32.mrf.mxu0
  %v6994 = vadd.f32 %v6825, %v6993
  %v6995 = vpop.f32.mrf.mxu0
  %v6996 = vadd.f32 %v6827, %v6995
  %6997 = vmatmul.bf16.gmra.mxu0 %v5755
  %v6998 = vpop.f32.mrf.mxu0
  %v6999 = vadd.f32 %v6830, %v6998
  %v7000 = vpop.f32.mrf.mxu0
  %v7001 = vadd.f32 %v6832, %v7000
  %7002 = vmatmul.bf16.gmra.mxu0 %v5767
  %v7003 = vpop.f32.mrf.mxu0
  %v7004 = vadd.f32 %v6835, %v7003
  %v7005 = vpop.f32.mrf.mxu0
  %v7006 = vadd.f32 %v6837, %v7005
  %7007 = vmatmul.bf16.gmra.mxu0 %v5779
  %v7008 = vpop.f32.mrf.mxu0
  %v7009 = vadd.f32 %v6840, %v7008
  %v7010 = vpop.f32.mrf.mxu0
  %v7011 = vadd.f32 %v6842, %v7010
  %7012 = vmatmul.bf16.gmra.mxu0 %v5791
  %v7013 = vpop.f32.mrf.mxu0
  %v7014 = vadd.f32 %v6845, %v7013
  %v7015 = vpop.f32.mrf.mxu0
  %v7016 = vadd.f32 %v6847, %v7015
  %7017 = vmatmul.bf16.gmra.mxu0 %v5803
  %v7018 = vpop.f32.mrf.mxu0
  %v7019 = vadd.f32 %v6850, %v7018
  %v7020 = vpop.f32.mrf.mxu0
  %v7021 = vadd.f32 %v6852, %v7020
  %7022 = vmatmul.bf16.gmra.mxu0 %v5815
  %v7023 = vpop.f32.mrf.mxu0
  %v7024 = vadd.f32 %v6855, %v7023
  %v7025 = vpop.f32.mrf.mxu0
  %v7026 = vadd.f32 %v6857, %v7025
  %7027 = vmatmul.bf16.gmra.mxu0 %v5827
  %v7028 = vpop.f32.mrf.mxu0
  %v7029 = vadd.f32 %v6860, %v7028
  %v7030 = vpop.f32.mrf.mxu0
  %v7031 = vadd.f32 %v6862, %v7030
  %7032 = vmatmul.bf16.gmra.mxu0 %v5839
  %v7033 = vpop.f32.mrf.mxu0
  %v7034 = vadd.f32 %v6865, %v7033
  %v7035 = vpop.f32.mrf.mxu0
  %v7036 = vadd.f32 %v6867, %v7035
  %7037 = vmatmul.bf16.gmra.mxu0 %v5851
  %v7038 = vpop.f32.mrf.mxu0
  %v7039 = vadd.f32 %v6870, %v7038
  %v7040 = vpop.f32.mrf.mxu0
  %v7041 = vadd.f32 %v6872, %v7040
  %7042 = vmatmul.bf16.gmra.mxu0 %v5863
  %v7043 = vpop.f32.mrf.mxu0
  %v7044 = vadd.f32 %v6875, %v7043
  %v7045 = vpop.f32.mrf.mxu0
  %v7046 = vadd.f32 %v6877, %v7045
  %7047 = vmatmul.bf16.gmra.mxu0 %v5875
  %v7048 = vpop.f32.mrf.mxu0
  %v7049 = vadd.f32 %v6880, %v7048
  %v7050 = vpop.f32.mrf.mxu0
  %v7051 = vadd.f32 %v6882, %v7050
  %7052 = vmatmul.bf16.gmra.mxu0 %v5887
  %v7053 = vpop.f32.mrf.mxu0
  %v7054 = vadd.f32 %v6885, %v7053
  %v7055 = vpop.f32.mrf.mxu0
  %v7056 = vadd.f32 %v6887, %v7055
  %7057 = vdwg.mxu0
  %7058 = vmatpush.bf16.msra.mxu0 %v6599
  %7059 = vmatpush.bf16.msra.mxu0 %v6598
  %7060 = vmatpush.bf16.msra.mxu0 %v6597
  %7061 = vmatpush.bf16.msra.mxu0 %v6596
  %7062 = vmatpush.bf16.msra.mxu0 %v6595
  %7063 = vmatpush.bf16.msra.mxu0 %v6594
  %7064 = vmatpush.bf16.msra.mxu0 %v6593
  %7065 = vmatpush.bf16.msra.mxu0 %v6592
  %7066 = vmatmul.bf16.gmra.mxu0 %v5984
  %v7067 = vpop.f32.mrf.mxu0
  %v7068 = vadd.f32 %v6899, %v7067
  %v7069 = vpop.f32.mrf.mxu0
  %v7070 = vadd.f32 %v6901, %v7069
  %7071 = vmatmul.bf16.gmra.mxu0 %v5987
  %v7072 = vpop.f32.mrf.mxu0
  %v7073 = vadd.f32 %v6904, %v7072
  %v7074 = vpop.f32.mrf.mxu0
  %v7075 = vadd.f32 %v6906, %v7074
  %7076 = vmatmul.bf16.gmra.mxu0 %v5990
  %v7077 = vpop.f32.mrf.mxu0
  %v7078 = vadd.f32 %v6909, %v7077
  %v7079 = vpop.f32.mrf.mxu0
  %v7080 = vadd.f32 %v6911, %v7079
  %7081 = vmatmul.bf16.gmra.mxu0 %v5993
  %v7082 = vpop.f32.mrf.mxu0
  %v7083 = vadd.f32 %v6914, %v7082
  %v7084 = vpop.f32.mrf.mxu0
  %v7085 = vadd.f32 %v6916, %v7084
  %7086 = vmatmul.bf16.gmra.mxu0 %v5996
  %v7087 = vpop.f32.mrf.mxu0
  %v7088 = vadd.f32 %v6919, %v7087
  %v7089 = vpop.f32.mrf.mxu0
  %v7090 = vadd.f32 %v6921, %v7089
  %7091 = vmatmul.bf16.gmra.mxu0 %v5999
  %v7092 = vpop.f32.mrf.mxu0
  %v7093 = vadd.f32 %v6924, %v7092
  %v7094 = vpop.f32.mrf.mxu0
  %v7095 = vadd.f32 %v6926, %v7094
  %7096 = vmatmul.bf16.gmra.mxu0 %v6002
  %v7097 = vpop.f32.mrf.mxu0
  %v7098 = vadd.f32 %v6929, %v7097
  %v7099 = vpop.f32.mrf.mxu0
  %v7100 = vadd.f32 %v6931, %v7099
  %7101 = vmatmul.bf16.gmra.mxu0 %v6005
  %v7102 = vpop.f32.mrf.mxu0
  %v7103 = vadd.f32 %v6934, %v7102
  %v7104 = vpop.f32.mrf.mxu0
  %v7105 = vadd.f32 %v6936, %v7104
  %7106 = vmatmul.bf16.gmra.mxu0 %v6008
  %v7107 = vpop.f32.mrf.mxu0
  %v7108 = vadd.f32 %v6939, %v7107
  %v7109 = vpop.f32.mrf.mxu0
  %v7110 = vadd.f32 %v6941, %v7109
  %7111 = vmatmul.bf16.gmra.mxu0 %v6011
  %v7112 = vpop.f32.mrf.mxu0
  %v7113 = vadd.f32 %v6944, %v7112
  %v7114 = vpop.f32.mrf.mxu0
  %v7115 = vadd.f32 %v6946, %v7114
  %7116 = vmatmul.bf16.gmra.mxu0 %v6014
  %v7117 = vpop.f32.mrf.mxu0
  %v7118 = vadd.f32 %v6949, %v7117
  %v7119 = vpop.f32.mrf.mxu0
  %v7120 = vadd.f32 %v6951, %v7119
  %7121 = vmatmul.bf16.gmra.mxu0 %v6017
  %v7122 = vpop.f32.mrf.mxu0
  %v7123 = vadd.f32 %v6954, %v7122
  %v7124 = vpop.f32.mrf.mxu0
  %v7125 = vadd.f32 %v6956, %v7124
  %7126 = vmatmul.bf16.gmra.mxu0 %v6020
  %v7127 = vpop.f32.mrf.mxu0
  %v7128 = vadd.f32 %v6959, %v7127
  %v7129 = vpop.f32.mrf.mxu0
  %v7130 = vadd.f32 %v6961, %v7129
  %7131 = vmatmul.bf16.gmra.mxu0 %v6023
  %v7132 = vpop.f32.mrf.mxu0
  %v7133 = vadd.f32 %v6964, %v7132
  %v7134 = vpop.f32.mrf.mxu0
  %v7135 = vadd.f32 %v6966, %v7134
  %7136 = vmatmul.bf16.gmra.mxu0 %v6026
  %v7137 = vpop.f32.mrf.mxu0
  %v7138 = vadd.f32 %v6969, %v7137
  %v7139 = vpop.f32.mrf.mxu0
  %v7140 = vadd.f32 %v6971, %v7139
  %7141 = vmatmul.bf16.gmra.mxu0 %v6029
  %v7142 = vpop.f32.mrf.mxu0
  %v7143 = vadd.f32 %v6974, %v7142
  %v7144 = vpop.f32.mrf.mxu0
  %v7145 = vadd.f32 %v6976, %v7144
  %7146 = vmatmul.bf16.gmra.mxu0 %v5984
  %v7147 = vpop.f32.mrf.mxu0
  %v7148 = vadd.f32 %v6979, %v7147
  %v7149 = vpop.f32.mrf.mxu0
  %v7150 = vadd.f32 %v6981, %v7149
  %7151 = vmatmul.bf16.gmra.mxu0 %v6032
  %v7152 = vpop.f32.mrf.mxu0
  %v7153 = vadd.f32 %v6984, %v7152
  %v7154 = vpop.f32.mrf.mxu0
  %v7155 = vadd.f32 %v6986, %v7154
  %7156 = vmatmul.bf16.gmra.mxu0 %v6035
  %v7157 = vpop.f32.mrf.mxu0
  %v7158 = vadd.f32 %v6989, %v7157
  %v7159 = vpop.f32.mrf.mxu0
  %v7160 = vadd.f32 %v6991, %v7159
  %7161 = vmatmul.bf16.gmra.mxu0 %v6038
  %v7162 = vpop.f32.mrf.mxu0
  %v7163 = vadd.f32 %v6994, %v7162
  %v7164 = vpop.f32.mrf.mxu0
  %v7165 = vadd.f32 %v6996, %v7164
  %7166 = vmatmul.bf16.gmra.mxu0 %v6041
  %v7167 = vpop.f32.mrf.mxu0
  %v7168 = vadd.f32 %v6999, %v7167
  %v7169 = vpop.f32.mrf.mxu0
  %v7170 = vadd.f32 %v7001, %v7169
  %7171 = vmatmul.bf16.gmra.mxu0 %v6044
  %v7172 = vpop.f32.mrf.mxu0
  %v7173 = vadd.f32 %v7004, %v7172
  %v7174 = vpop.f32.mrf.mxu0
  %v7175 = vadd.f32 %v7006, %v7174
  %7176 = vmatmul.bf16.gmra.mxu0 %v6047
  %v7177 = vpop.f32.mrf.mxu0
  %v7178 = vadd.f32 %v7009, %v7177
  %v7179 = vpop.f32.mrf.mxu0
  %v7180 = vadd.f32 %v7011, %v7179
  %7181 = vmatmul.bf16.gmra.mxu0 %v6050
  %v7182 = vpop.f32.mrf.mxu0
  %v7183 = vadd.f32 %v7014, %v7182
  %v7184 = vpop.f32.mrf.mxu0
  %v7185 = vadd.f32 %v7016, %v7184
  %7186 = vmatmul.bf16.gmra.mxu0 %v6053
  %v7187 = vpop.f32.mrf.mxu0
  %v7188 = vadd.f32 %v7019, %v7187
  %v7189 = vpop.f32.mrf.mxu0
  %v7190 = vadd.f32 %v7021, %v7189
  %7191 = vmatmul.bf16.gmra.mxu0 %v6056
  %v7192 = vpop.f32.mrf.mxu0
  %v7193 = vadd.f32 %v7024, %v7192
  %v7194 = vpop.f32.mrf.mxu0
  %v7195 = vadd.f32 %v7026, %v7194
  %7196 = vmatmul.bf16.gmra.mxu0 %v6059
  %v7197 = vpop.f32.mrf.mxu0
  %v7198 = vadd.f32 %v7029, %v7197
  %v7199 = vpop.f32.mrf.mxu0
  %v7200 = vadd.f32 %v7031, %v7199
  %7201 = vmatmul.bf16.gmra.mxu0 %v6062
  %v7202 = vpop.f32.mrf.mxu0
  %v7203 = vadd.f32 %v7034, %v7202
  %v7204 = vpop.f32.mrf.mxu0
  %v7205 = vadd.f32 %v7036, %v7204
  %7206 = vmatmul.bf16.gmra.mxu0 %v6065
  %v7207 = vpop.f32.mrf.mxu0
  %v7208 = vadd.f32 %v7039, %v7207
  %v7209 = vpop.f32.mrf.mxu0
  %v7210 = vadd.f32 %v7041, %v7209
  %7211 = vmatmul.bf16.gmra.mxu0 %v6068
  %v7212 = vpop.f32.mrf.mxu0
  %v7213 = vadd.f32 %v7044, %v7212
  %v7214 = vpop.f32.mrf.mxu0
  %v7215 = vadd.f32 %v7046, %v7214
  %7216 = vmatmul.bf16.gmra.mxu0 %v6071
  %v7217 = vpop.f32.mrf.mxu0
  %v7218 = vadd.f32 %v7049, %v7217
  %v7219 = vpop.f32.mrf.mxu0
  %v7220 = vadd.f32 %v7051, %v7219
  %7221 = vmatmul.bf16.gmra.mxu0 %v6074
  %v7222 = vpop.f32.mrf.mxu0
  %v7223 = vadd.f32 %v7054, %v7222
  %v7224 = vpop.f32.mrf.mxu0
  %v7225 = vadd.f32 %v7056, %v7224
  %7226 = vdwg.mxu0
  %7227 = vmatpush.bf16.msra.mxu0 %v6607
  %7228 = vmatpush.bf16.msra.mxu0 %v6606
  %7229 = vmatpush.bf16.msra.mxu0 %v6605
  %7230 = vmatpush.bf16.msra.mxu0 %v6604
  %7231 = vmatpush.bf16.msra.mxu0 %v6603
  %7232 = vmatpush.bf16.msra.mxu0 %v6602
  %7233 = vmatpush.bf16.msra.mxu0 %v6601
  %7234 = vmatpush.bf16.msra.mxu0 %v6600
  %7235 = vmatmul.bf16.gmra.mxu0 %v5450
  %v7236 = vpop.f32.mrf.mxu0
  %v7237 = vadd.f32 %v7068, %v7236
  %v7238 = vpop.f32.mrf.mxu0
  %v7239 = vadd.f32 %v7070, %v7238
  %7240 = vmatmul.bf16.gmra.mxu0 %v5451
  %v7241 = vpop.f32.mrf.mxu0
  %v7242 = vadd.f32 %v7073, %v7241
  %v7243 = vpop.f32.mrf.mxu0
  %v7244 = vadd.f32 %v7075, %v7243
  %7245 = vmatmul.bf16.gmra.mxu0 %v5452
  %v7246 = vpop.f32.mrf.mxu0
  %v7247 = vadd.f32 %v7078, %v7246
  %v7248 = vpop.f32.mrf.mxu0
  %v7249 = vadd.f32 %v7080, %v7248
  %7250 = vmatmul.bf16.gmra.mxu0 %v5453
  %v7251 = vpop.f32.mrf.mxu0
  %v7252 = vadd.f32 %v7083, %v7251
  %v7253 = vpop.f32.mrf.mxu0
  %v7254 = vadd.f32 %v7085, %v7253
  %7255 = vmatmul.bf16.gmra.mxu0 %v5454
  %v7256 = vpop.f32.mrf.mxu0
  %v7257 = vadd.f32 %v7088, %v7256
  %v7258 = vpop.f32.mrf.mxu0
  %v7259 = vadd.f32 %v7090, %v7258
  %7260 = vmatmul.bf16.gmra.mxu0 %v5455
  %v7261 = vpop.f32.mrf.mxu0
  %v7262 = vadd.f32 %v7093, %v7261
  %v7263 = vpop.f32.mrf.mxu0
  %v7264 = vadd.f32 %v7095, %v7263
  %7265 = vmatmul.bf16.gmra.mxu0 %v5456
  %v7266 = vpop.f32.mrf.mxu0
  %v7267 = vadd.f32 %v7098, %v7266
  %v7268 = vpop.f32.mrf.mxu0
  %v7269 = vadd.f32 %v7100, %v7268
  %7270 = vmatmul.bf16.gmra.mxu0 %v5457
  %v7271 = vpop.f32.mrf.mxu0
  %v7272 = vadd.f32 %v7103, %v7271
  %v7273 = vpop.f32.mrf.mxu0
  %v7274 = vadd.f32 %v7105, %v7273
  %7275 = vmatmul.bf16.gmra.mxu0 %v5458
  %v7276 = vpop.f32.mrf.mxu0
  %v7277 = vadd.f32 %v7108, %v7276
  %v7278 = vpop.f32.mrf.mxu0
  %v7279 = vadd.f32 %v7110, %v7278
  %7280 = vmatmul.bf16.gmra.mxu0 %v5459
  %v7281 = vpop.f32.mrf.mxu0
  %v7282 = vadd.f32 %v7113, %v7281
  %v7283 = vpop.f32.mrf.mxu0
  %v7284 = vadd.f32 %v7115, %v7283
  %7285 = vmatmul.bf16.gmra.mxu0 %v5460
  %v7286 = vpop.f32.mrf.mxu0
  %v7287 = vadd.f32 %v7118, %v7286
  %v7288 = vpop.f32.mrf.mxu0
  %v7289 = vadd.f32 %v7120, %v7288
  %7290 = vmatmul.bf16.gmra.mxu0 %v5461
  %v7291 = vpop.f32.mrf.mxu0
  %v7292 = vadd.f32 %v7123, %v7291
  %v7293 = vpop.f32.mrf.mxu0
  %v7294 = vadd.f32 %v7125, %v7293
  %7295 = vmatmul.bf16.gmra.mxu0 %v5462
  %v7296 = vpop.f32.mrf.mxu0
  %v7297 = vadd.f32 %v7128, %v7296
  %v7298 = vpop.f32.mrf.mxu0
  %v7299 = vadd.f32 %v7130, %v7298
  %7300 = vmatmul.bf16.gmra.mxu0 %v5463
  %v7301 = vpop.f32.mrf.mxu0
  %v7302 = vadd.f32 %v7133, %v7301
  %v7303 = vpop.f32.mrf.mxu0
  %v7304 = vadd.f32 %v7135, %v7303
  %7305 = vmatmul.bf16.gmra.mxu0 %v5464
  %v7306 = vpop.f32.mrf.mxu0
  %v7307 = vadd.f32 %v7138, %v7306
  %v7308 = vpop.f32.mrf.mxu0
  %v7309 = vadd.f32 %v7140, %v7308
  %7310 = vmatmul.bf16.gmra.mxu0 %v5465
  %v7311 = vpop.f32.mrf.mxu0
  %v7312 = vadd.f32 %v7143, %v7311
  %v7313 = vpop.f32.mrf.mxu0
  %v7314 = vadd.f32 %v7145, %v7313
  %7315 = vmatmul.bf16.gmra.mxu0 %v5466
  %v7316 = vpop.f32.mrf.mxu0
  %v7317 = vadd.f32 %v7148, %v7316
  %v7318 = vpop.f32.mrf.mxu0
  %v7319 = vadd.f32 %v7150, %v7318
  %7320 = vmatmul.bf16.gmra.mxu0 %v5467
  %v7321 = vpop.f32.mrf.mxu0
  %v7322 = vadd.f32 %v7153, %v7321
  %v7323 = vpop.f32.mrf.mxu0
  %v7324 = vadd.f32 %v7155, %v7323
  %7325 = vmatmul.bf16.gmra.mxu0 %v5468
  %v7326 = vpop.f32.mrf.mxu0
  %v7327 = vadd.f32 %v7158, %v7326
  %v7328 = vpop.f32.mrf.mxu0
  %v7329 = vadd.f32 %v7160, %v7328
  %7330 = vmatmul.bf16.gmra.mxu0 %v5469
  %v7331 = vpop.f32.mrf.mxu0
  %v7332 = vadd.f32 %v7163, %v7331
  %v7333 = vpop.f32.mrf.mxu0
  %v7334 = vadd.f32 %v7165, %v7333
  %7335 = vmatmul.bf16.gmra.mxu0 %v5470
  %v7336 = vpop.f32.mrf.mxu0
  %v7337 = vadd.f32 %v7168, %v7336
  %v7338 = vpop.f32.mrf.mxu0
  %v7339 = vadd.f32 %v7170, %v7338
  %7340 = vmatmul.bf16.gmra.mxu0 %v5471
  %v7341 = vpop.f32.mrf.mxu0
  %v7342 = vadd.f32 %v7173, %v7341
  %v7343 = vpop.f32.mrf.mxu0
  %v7344 = vadd.f32 %v7175, %v7343
  %7345 = vmatmul.bf16.gmra.mxu0 %v5472
  %v7346 = vpop.f32.mrf.mxu0
  %v7347 = vadd.f32 %v7178, %v7346
  %v7348 = vpop.f32.mrf.mxu0
  %v7349 = vadd.f32 %v7180, %v7348
  %7350 = vmatmul.bf16.gmra.mxu0 %v5473
  %v7351 = vpop.f32.mrf.mxu0
  %v7352 = vadd.f32 %v7183, %v7351
  %v7353 = vpop.f32.mrf.mxu0
  %v7354 = vadd.f32 %v7185, %v7353
  %7355 = vmatmul.bf16.gmra.mxu0 %v5474
  %v7356 = vpop.f32.mrf.mxu0
  %v7357 = vadd.f32 %v7188, %v7356
  %v7358 = vpop.f32.mrf.mxu0
  %v7359 = vadd.f32 %v7190, %v7358
  %7360 = vmatmul.bf16.gmra.mxu0 %v5475
  %v7361 = vpop.f32.mrf.mxu0
  %v7362 = vadd.f32 %v7193, %v7361
  %v7363 = vpop.f32.mrf.mxu0
  %v7364 = vadd.f32 %v7195, %v7363
  %7365 = vmatmul.bf16.gmra.mxu0 %v5476
  %v7366 = vpop.f32.mrf.mxu0
  %v7367 = vadd.f32 %v7198, %v7366
  %v7368 = vpop.f32.mrf.mxu0
  %v7369 = vadd.f32 %v7200, %v7368
  %7370 = vmatmul.bf16.gmra.mxu0 %v5477
  %v7371 = vpop.f32.mrf.mxu0
  %v7372 = vadd.f32 %v7203, %v7371
  %v7373 = vpop.f32.mrf.mxu0
  %v7374 = vadd.f32 %v7205, %v7373
  %7375 = vmatmul.bf16.gmra.mxu0 %v5478
  %v7376 = vpop.f32.mrf.mxu0
  %v7377 = vadd.f32 %v7208, %v7376
  %v7378 = vpop.f32.mrf.mxu0
  %v7379 = vadd.f32 %v7210, %v7378
  %7380 = vmatmul.bf16.gmra.mxu0 %v5479
  %v7381 = vpop.f32.mrf.mxu0
  %v7382 = vadd.f32 %v7213, %v7381
  %v7383 = vpop.f32.mrf.mxu0
  %v7384 = vadd.f32 %v7215, %v7383
  %7385 = vmatmul.bf16.gmra.mxu0 %v5480
  %v7386 = vpop.f32.mrf.mxu0
  %v7387 = vadd.f32 %v7218, %v7386
  %v7388 = vpop.f32.mrf.mxu0
  %v7389 = vadd.f32 %v7220, %v7388
  %7390 = vmatmul.bf16.gmra.mxu0 %v5481
  %v7391 = vpop.f32.mrf.mxu0
  %v7392 = vadd.f32 %v7223, %v7391
  %v7393 = vpop.f32.mrf.mxu0
  %v7394 = vadd.f32 %v7225, %v7393
  %7395 = vdwg.mxu0
  %7396 = vmatpush.bf16.msra.mxu0 %v6615
  %7397 = vmatpush.bf16.msra.mxu0 %v6614
  %7398 = vmatpush.bf16.msra.mxu0 %v6613
  %7399 = vmatpush.bf16.msra.mxu0 %v6612
  %7400 = vmatpush.bf16.msra.mxu0 %v6611
  %7401 = vmatpush.bf16.msra.mxu0 %v6610
  %7402 = vmatpush.bf16.msra.mxu0 %v6609
  %7403 = vmatpush.bf16.msra.mxu0 %v6608
  %7404 = vmatmul.bf16.gmra.mxu0 %v5539
  %v7405 = vpop.f32.mrf.mxu0
  %v7406 = vadd.f32 %v7237, %v7405
  %v7407 = vpop.f32.mrf.mxu0
  %v7408 = vadd.f32 %v7239, %v7407
  %7409 = vmatmul.bf16.gmra.mxu0 %v5551
  %v7410 = vpop.f32.mrf.mxu0
  %v7411 = vadd.f32 %v7242, %v7410
  %v7412 = vpop.f32.mrf.mxu0
  %v7413 = vadd.f32 %v7244, %v7412
  %7414 = vmatmul.bf16.gmra.mxu0 %v5563
  %v7415 = vpop.f32.mrf.mxu0
  %v7416 = vadd.f32 %v7247, %v7415
  %v7417 = vpop.f32.mrf.mxu0
  %v7418 = vadd.f32 %v7249, %v7417
  %7419 = vmatmul.bf16.gmra.mxu0 %v5575
  %v7420 = vpop.f32.mrf.mxu0
  %v7421 = vadd.f32 %v7252, %v7420
  %v7422 = vpop.f32.mrf.mxu0
  %v7423 = vadd.f32 %v7254, %v7422
  %7424 = vmatmul.bf16.gmra.mxu0 %v5587
  %v7425 = vpop.f32.mrf.mxu0
  %v7426 = vadd.f32 %v7257, %v7425
  %v7427 = vpop.f32.mrf.mxu0
  %v7428 = vadd.f32 %v7259, %v7427
  %7429 = vmatmul.bf16.gmra.mxu0 %v5599
  %v7430 = vpop.f32.mrf.mxu0
  %v7431 = vadd.f32 %v7262, %v7430
  %v7432 = vpop.f32.mrf.mxu0
  %v7433 = vadd.f32 %v7264, %v7432
  %7434 = vmatmul.bf16.gmra.mxu0 %v5611
  %v7435 = vpop.f32.mrf.mxu0
  %v7436 = vadd.f32 %v7267, %v7435
  %v7437 = vpop.f32.mrf.mxu0
  %v7438 = vadd.f32 %v7269, %v7437
  %7439 = vmatmul.bf16.gmra.mxu0 %v5623
  %v7440 = vpop.f32.mrf.mxu0
  %v7441 = vadd.f32 %v7272, %v7440
  %v7442 = vpop.f32.mrf.mxu0
  %v7443 = vadd.f32 %v7274, %v7442
  %7444 = vmatmul.bf16.gmra.mxu0 %v5635
  %v7445 = vpop.f32.mrf.mxu0
  %v7446 = vadd.f32 %v7277, %v7445
  %v7447 = vpop.f32.mrf.mxu0
  %v7448 = vadd.f32 %v7279, %v7447
  %7449 = vmatmul.bf16.gmra.mxu0 %v5647
  %v7450 = vpop.f32.mrf.mxu0
  %v7451 = vadd.f32 %v7282, %v7450
  %v7452 = vpop.f32.mrf.mxu0
  %v7453 = vadd.f32 %v7284, %v7452
  %7454 = vmatmul.bf16.gmra.mxu0 %v5659
  %v7455 = vpop.f32.mrf.mxu0
  %v7456 = vadd.f32 %v7287, %v7455
  %v7457 = vpop.f32.mrf.mxu0
  %v7458 = vadd.f32 %v7289, %v7457
  %7459 = vmatmul.bf16.gmra.mxu0 %v5671
  %v7460 = vpop.f32.mrf.mxu0
  %v7461 = vadd.f32 %v7292, %v7460
  %v7462 = vpop.f32.mrf.mxu0
  %v7463 = vadd.f32 %v7294, %v7462
  %7464 = vmatmul.bf16.gmra.mxu0 %v5683
  %v7465 = vpop.f32.mrf.mxu0
  %v7466 = vadd.f32 %v7297, %v7465
  %v7467 = vpop.f32.mrf.mxu0
  %v7468 = vadd.f32 %v7299, %v7467
  %7469 = vmatmul.bf16.gmra.mxu0 %v5695
  %v7470 = vpop.f32.mrf.mxu0
  %v7471 = vadd.f32 %v7302, %v7470
  %v7472 = vpop.f32.mrf.mxu0
  %v7473 = vadd.f32 %v7304, %v7472
  %7474 = vmatmul.bf16.gmra.mxu0 %v5707
  %v7475 = vpop.f32.mrf.mxu0
  %v7476 = vadd.f32 %v7307, %v7475
  %v7477 = vpop.f32.mrf.mxu0
  %v7478 = vadd.f32 %v7309, %v7477
  %7479 = vmatmul.bf16.gmra.mxu0 %v6117
  %v7480 = vpop.f32.mrf.mxu0
  %v7481 = vadd.f32 %v7312, %v7480
  %v7482 = vpop.f32.mrf.mxu0
  %v7483 = vadd.f32 %v7314, %v7482
  %7484 = vmatmul.bf16.gmra.mxu0 %v5719
  %v7485 = vpop.f32.mrf.mxu0
  %v7486 = vadd.f32 %v7317, %v7485
  %v7487 = vpop.f32.mrf.mxu0
  %v7488 = vadd.f32 %v7319, %v7487
  %7489 = vmatmul.bf16.gmra.mxu0 %v5731
  %v7490 = vpop.f32.mrf.mxu0
  %v7491 = vadd.f32 %v7322, %v7490
  %v7492 = vpop.f32.mrf.mxu0
  %v7493 = vadd.f32 %v7324, %v7492
  %7494 = vmatmul.bf16.gmra.mxu0 %v5743
  %v7495 = vpop.f32.mrf.mxu0
  %v7496 = vadd.f32 %v7327, %v7495
  %v7497 = vpop.f32.mrf.mxu0
  %v7498 = vadd.f32 %v7329, %v7497
  %7499 = vmatmul.bf16.gmra.mxu0 %v5755
  %v7500 = vpop.f32.mrf.mxu0
  %v7501 = vadd.f32 %v7332, %v7500
  %v7502 = vpop.f32.mrf.mxu0
  %v7503 = vadd.f32 %v7334, %v7502
  %7504 = vmatmul.bf16.gmra.mxu0 %v5767
  %v7505 = vpop.f32.mrf.mxu0
  %v7506 = vadd.f32 %v7337, %v7505
  %v7507 = vpop.f32.mrf.mxu0
  %v7508 = vadd.f32 %v7339, %v7507
  %7509 = vmatmul.bf16.gmra.mxu0 %v5779
  %v7510 = vpop.f32.mrf.mxu0
  %v7511 = vadd.f32 %v7342, %v7510
  %v7512 = vpop.f32.mrf.mxu0
  %v7513 = vadd.f32 %v7344, %v7512
  %7514 = vmatmul.bf16.gmra.mxu0 %v5791
  %v7515 = vpop.f32.mrf.mxu0
  %v7516 = vadd.f32 %v7347, %v7515
  %v7517 = vpop.f32.mrf.mxu0
  %v7518 = vadd.f32 %v7349, %v7517
  %7519 = vmatmul.bf16.gmra.mxu0 %v5803
  %v7520 = vpop.f32.mrf.mxu0
  %v7521 = vadd.f32 %v7352, %v7520
  %v7522 = vpop.f32.mrf.mxu0
  %v7523 = vadd.f32 %v7354, %v7522
  %7524 = vmatmul.bf16.gmra.mxu0 %v5815
  %v7525 = vpop.f32.mrf.mxu0
  %v7526 = vadd.f32 %v7357, %v7525
  %v7527 = vpop.f32.mrf.mxu0
  %v7528 = vadd.f32 %v7359, %v7527
  %7529 = vmatmul.bf16.gmra.mxu0 %v5827
  %v7530 = vpop.f32.mrf.mxu0
  %v7531 = vadd.f32 %v7362, %v7530
  %v7532 = vpop.f32.mrf.mxu0
  %v7533 = vadd.f32 %v7364, %v7532
  %7534 = vmatmul.bf16.gmra.mxu0 %v5839
  %v7535 = vpop.f32.mrf.mxu0
  %v7536 = vadd.f32 %v7367, %v7535
  %v7537 = vpop.f32.mrf.mxu0
  %v7538 = vadd.f32 %v7369, %v7537
  %7539 = vmatmul.bf16.gmra.mxu0 %v5851
  %v7540 = vpop.f32.mrf.mxu0
  %v7541 = vadd.f32 %v7372, %v7540
  %v7542 = vpop.f32.mrf.mxu0
  %v7543 = vadd.f32 %v7374, %v7542
  %7544 = vmatmul.bf16.gmra.mxu0 %v5863
  %v7545 = vpop.f32.mrf.mxu0
  %v7546 = vadd.f32 %v7377, %v7545
  %v7547 = vpop.f32.mrf.mxu0
  %v7548 = vadd.f32 %v7379, %v7547
  %7549 = vmatmul.bf16.gmra.mxu0 %v5875
  %v7550 = vpop.f32.mrf.mxu0
  %v7551 = vadd.f32 %v7382, %v7550
  %v7552 = vpop.f32.mrf.mxu0
  %v7553 = vadd.f32 %v7384, %v7552
  %7554 = vmatmul.bf16.gmra.mxu0 %v5887
  %v7555 = vpop.f32.mrf.mxu0
  %v7556 = vadd.f32 %v7387, %v7555
  %v7557 = vpop.f32.mrf.mxu0
  %v7558 = vadd.f32 %v7389, %v7557
  %7559 = vmatmul.bf16.gmra.mxu0 %v6129
  %v7560 = vpop.f32.mrf.mxu0
  %v7561 = vadd.f32 %v7392, %v7560
  %v7562 = vpop.f32.mrf.mxu0
  %v7563 = vadd.f32 %v7394, %v7562
  %7564 = vdwg.mxu0
  %7565 = vmatpush.bf16.msra.mxu0 %v6623
  %7566 = vmatpush.bf16.msra.mxu0 %v6622
  %7567 = vmatpush.bf16.msra.mxu0 %v6621
  %7568 = vmatpush.bf16.msra.mxu0 %v6620
  %7569 = vmatpush.bf16.msra.mxu0 %v6619
  %7570 = vmatpush.bf16.msra.mxu0 %v6618
  %7571 = vmatpush.bf16.msra.mxu0 %v6617
  %7572 = vmatpush.bf16.msra.mxu0 %v6616
  %7573 = vmatmul.bf16.gmra.mxu0 %v5987
  %v7574 = vpop.f32.mrf.mxu0
  %v7575 = vadd.f32 %v7406, %v7574
  %v7576 = vpop.f32.mrf.mxu0
  %v7577 = vadd.f32 %v7408, %v7576
  %7578 = vmatmul.bf16.gmra.mxu0 %v5990
  %v7579 = vpop.f32.mrf.mxu0
  %v7580 = vadd.f32 %v7411, %v7579
  %v7581 = vpop.f32.mrf.mxu0
  %v7582 = vadd.f32 %v7413, %v7581
  %7583 = vmatmul.bf16.gmra.mxu0 %v5993
  %v7584 = vpop.f32.mrf.mxu0
  %v7585 = vadd.f32 %v7416, %v7584
  %v7586 = vpop.f32.mrf.mxu0
  %v7587 = vadd.f32 %v7418, %v7586
  %7588 = vmatmul.bf16.gmra.mxu0 %v5996
  %v7589 = vpop.f32.mrf.mxu0
  %v7590 = vadd.f32 %v7421, %v7589
  %v7591 = vpop.f32.mrf.mxu0
  %v7592 = vadd.f32 %v7423, %v7591
  %7593 = vmatmul.bf16.gmra.mxu0 %v5999
  %v7594 = vpop.f32.mrf.mxu0
  %v7595 = vadd.f32 %v7426, %v7594
  %v7596 = vpop.f32.mrf.mxu0
  %v7597 = vadd.f32 %v7428, %v7596
  %7598 = vmatmul.bf16.gmra.mxu0 %v6002
  %v7599 = vpop.f32.mrf.mxu0
  %v7600 = vadd.f32 %v7431, %v7599
  %v7601 = vpop.f32.mrf.mxu0
  %v7602 = vadd.f32 %v7433, %v7601
  %7603 = vmatmul.bf16.gmra.mxu0 %v6005
  %v7604 = vpop.f32.mrf.mxu0
  %v7605 = vadd.f32 %v7436, %v7604
  %v7606 = vpop.f32.mrf.mxu0
  %v7607 = vadd.f32 %v7438, %v7606
  %7608 = vmatmul.bf16.gmra.mxu0 %v6008
  %v7609 = vpop.f32.mrf.mxu0
  %v7610 = vadd.f32 %v7441, %v7609
  %v7611 = vpop.f32.mrf.mxu0
  %v7612 = vadd.f32 %v7443, %v7611
  %7613 = vmatmul.bf16.gmra.mxu0 %v6011
  %v7614 = vpop.f32.mrf.mxu0
  %v7615 = vadd.f32 %v7446, %v7614
  %v7616 = vpop.f32.mrf.mxu0
  %v7617 = vadd.f32 %v7448, %v7616
  %7618 = vmatmul.bf16.gmra.mxu0 %v6014
  %v7619 = vpop.f32.mrf.mxu0
  %v7620 = vadd.f32 %v7451, %v7619
  %v7621 = vpop.f32.mrf.mxu0
  %v7622 = vadd.f32 %v7453, %v7621
  %7623 = vmatmul.bf16.gmra.mxu0 %v6017
  %v7624 = vpop.f32.mrf.mxu0
  %v7625 = vadd.f32 %v7456, %v7624
  %v7626 = vpop.f32.mrf.mxu0
  %v7627 = vadd.f32 %v7458, %v7626
  %7628 = vmatmul.bf16.gmra.mxu0 %v6020
  %v7629 = vpop.f32.mrf.mxu0
  %v7630 = vadd.f32 %v7461, %v7629
  %v7631 = vpop.f32.mrf.mxu0
  %v7632 = vadd.f32 %v7463, %v7631
  %7633 = vmatmul.bf16.gmra.mxu0 %v6023
  %v7634 = vpop.f32.mrf.mxu0
  %v7635 = vadd.f32 %v7466, %v7634
  %v7636 = vpop.f32.mrf.mxu0
  %v7637 = vadd.f32 %v7468, %v7636
  %7638 = vmatmul.bf16.gmra.mxu0 %v6026
  %v7639 = vpop.f32.mrf.mxu0
  %v7640 = vadd.f32 %v7471, %v7639
  %v7641 = vpop.f32.mrf.mxu0
  %v7642 = vadd.f32 %v7473, %v7641
  %7643 = vmatmul.bf16.gmra.mxu0 %v6029
  %v7644 = vpop.f32.mrf.mxu0
  %v7645 = vadd.f32 %v7476, %v7644
  %v7646 = vpop.f32.mrf.mxu0
  %v7647 = vadd.f32 %v7478, %v7646
  %7648 = vmatmul.bf16.gmra.mxu0 %v6138
  %v7649 = vpop.f32.mrf.mxu0
  %v7650 = vadd.f32 %v7481, %v7649
  %v7651 = vpop.f32.mrf.mxu0
  %v7652 = vadd.f32 %v7483, %v7651
  %7653 = vmatmul.bf16.gmra.mxu0 %v6032
  %v7654 = vpop.f32.mrf.mxu0
  %v7655 = vadd.f32 %v7486, %v7654
  %v7656 = vpop.f32.mrf.mxu0
  %v7657 = vadd.f32 %v7488, %v7656
  %7658 = vmatmul.bf16.gmra.mxu0 %v6035
  %v7659 = vpop.f32.mrf.mxu0
  %v7660 = vadd.f32 %v7491, %v7659
  %v7661 = vpop.f32.mrf.mxu0
  %v7662 = vadd.f32 %v7493, %v7661
  %7663 = vmatmul.bf16.gmra.mxu0 %v6038
  %v7664 = vpop.f32.mrf.mxu0
  %v7665 = vadd.f32 %v7496, %v7664
  %v7666 = vpop.f32.mrf.mxu0
  %v7667 = vadd.f32 %v7498, %v7666
  %7668 = vmatmul.bf16.gmra.mxu0 %v6041
  %v7669 = vpop.f32.mrf.mxu0
  %v7670 = vadd.f32 %v7501, %v7669
  %v7671 = vpop.f32.mrf.mxu0
  %v7672 = vadd.f32 %v7503, %v7671
  %7673 = vmatmul.bf16.gmra.mxu0 %v6044
  %v7674 = vpop.f32.mrf.mxu0
  %v7675 = vadd.f32 %v7506, %v7674
  %v7676 = vpop.f32.mrf.mxu0
  %v7677 = vadd.f32 %v7508, %v7676
  %7678 = vmatmul.bf16.gmra.mxu0 %v6047
  %v7679 = vpop.f32.mrf.mxu0
  %v7680 = vadd.f32 %v7511, %v7679
  %v7681 = vpop.f32.mrf.mxu0
  %v7682 = vadd.f32 %v7513, %v7681
  %7683 = vmatmul.bf16.gmra.mxu0 %v6050
  %v7684 = vpop.f32.mrf.mxu0
  %v7685 = vadd.f32 %v7516, %v7684
  %v7686 = vpop.f32.mrf.mxu0
  %v7687 = vadd.f32 %v7518, %v7686
  %7688 = vmatmul.bf16.gmra.mxu0 %v6053
  %v7689 = vpop.f32.mrf.mxu0
  %v7690 = vadd.f32 %v7521, %v7689
  %v7691 = vpop.f32.mrf.mxu0
  %v7692 = vadd.f32 %v7523, %v7691
  %7693 = vmatmul.bf16.gmra.mxu0 %v6056
  %v7694 = vpop.f32.mrf.mxu0
  %v7695 = vadd.f32 %v7526, %v7694
  %v7696 = vpop.f32.mrf.mxu0
  %v7697 = vadd.f32 %v7528, %v7696
  %7698 = vmatmul.bf16.gmra.mxu0 %v6059
  %v7699 = vpop.f32.mrf.mxu0
  %v7700 = vadd.f32 %v7531, %v7699
  %v7701 = vpop.f32.mrf.mxu0
  %v7702 = vadd.f32 %v7533, %v7701
  %7703 = vmatmul.bf16.gmra.mxu0 %v6062
  %v7704 = vpop.f32.mrf.mxu0
  %v7705 = vadd.f32 %v7536, %v7704
  %v7706 = vpop.f32.mrf.mxu0
  %v7707 = vadd.f32 %v7538, %v7706
  %7708 = vmatmul.bf16.gmra.mxu0 %v6065
  %v7709 = vpop.f32.mrf.mxu0
  %v7710 = vadd.f32 %v7541, %v7709
  %v7711 = vpop.f32.mrf.mxu0
  %v7712 = vadd.f32 %v7543, %v7711
  %7713 = vmatmul.bf16.gmra.mxu0 %v6068
  %v7714 = vpop.f32.mrf.mxu0
  %v7715 = vadd.f32 %v7546, %v7714
  %v7716 = vpop.f32.mrf.mxu0
  %v7717 = vadd.f32 %v7548, %v7716
  %7718 = vmatmul.bf16.gmra.mxu0 %v6071
  %v7719 = vpop.f32.mrf.mxu0
  %v7720 = vadd.f32 %v7551, %v7719
  %v7721 = vpop.f32.mrf.mxu0
  %v7722 = vadd.f32 %v7553, %v7721
  %7723 = vmatmul.bf16.gmra.mxu0 %v6074
  %v7724 = vpop.f32.mrf.mxu0
  %v7725 = vadd.f32 %v7556, %v7724
  %v7726 = vpop.f32.mrf.mxu0
  %v7727 = vadd.f32 %v7558, %v7726
  %7728 = vmatmul.bf16.gmra.mxu0 %v6141
  %v7729 = vpop.f32.mrf.mxu0
  %v7730 = vadd.f32 %v7561, %v7729
  %v7731 = vpop.f32.mrf.mxu0
  %v7732 = vadd.f32 %v7563, %v7731
  %7733 = vdwg.mxu0
  %7734 = vmatpush.bf16.msra.mxu0 %v6631
  %7735 = vmatpush.bf16.msra.mxu0 %v6630
  %7736 = vmatpush.bf16.msra.mxu0 %v6629
  %7737 = vmatpush.bf16.msra.mxu0 %v6628
  %7738 = vmatpush.bf16.msra.mxu0 %v6627
  %7739 = vmatpush.bf16.msra.mxu0 %v6626
  %7740 = vmatpush.bf16.msra.mxu0 %v6625
  %7741 = vmatpush.bf16.msra.mxu0 %v6624
  %7742 = vmatmul.bf16.gmra.mxu0 %v5451
  %v7743 = vpop.f32.mrf.mxu0
  %v7744 = vadd.f32 %v7575, %v7743
  %v7745 = vpop.f32.mrf.mxu0
  %v7746 = vadd.f32 %v7577, %v7745
  %7747 = vmatmul.bf16.gmra.mxu0 %v5452
  %v7748 = vpop.f32.mrf.mxu0
  %v7749 = vadd.f32 %v7580, %v7748
  %v7750 = vpop.f32.mrf.mxu0
  %v7751 = vadd.f32 %v7582, %v7750
  %7752 = vmatmul.bf16.gmra.mxu0 %v5453
  %v7753 = vpop.f32.mrf.mxu0
  %v7754 = vadd.f32 %v7585, %v7753
  %v7755 = vpop.f32.mrf.mxu0
  %v7756 = vadd.f32 %v7587, %v7755
  %7757 = vmatmul.bf16.gmra.mxu0 %v5454
  %v7758 = vpop.f32.mrf.mxu0
  %v7759 = vadd.f32 %v7590, %v7758
  %v7760 = vpop.f32.mrf.mxu0
  %v7761 = vadd.f32 %v7592, %v7760
  %7762 = vmatmul.bf16.gmra.mxu0 %v5455
  %v7763 = vpop.f32.mrf.mxu0
  %v7764 = vadd.f32 %v7595, %v7763
  %v7765 = vpop.f32.mrf.mxu0
  %v7766 = vadd.f32 %v7597, %v7765
  %7767 = vmatmul.bf16.gmra.mxu0 %v5456
  %v7768 = vpop.f32.mrf.mxu0
  %v7769 = vadd.f32 %v7600, %v7768
  %v7770 = vpop.f32.mrf.mxu0
  %v7771 = vadd.f32 %v7602, %v7770
  %7772 = vmatmul.bf16.gmra.mxu0 %v5457
  %v7773 = vpop.f32.mrf.mxu0
  %v7774 = vadd.f32 %v7605, %v7773
  %v7775 = vpop.f32.mrf.mxu0
  %v7776 = vadd.f32 %v7607, %v7775
  %7777 = vmatmul.bf16.gmra.mxu0 %v5458
  %v7778 = vpop.f32.mrf.mxu0
  %v7779 = vadd.f32 %v7610, %v7778
  %v7780 = vpop.f32.mrf.mxu0
  %v7781 = vadd.f32 %v7612, %v7780
  %7782 = vmatmul.bf16.gmra.mxu0 %v5459
  %v7783 = vpop.f32.mrf.mxu0
  %v7784 = vadd.f32 %v7615, %v7783
  %v7785 = vpop.f32.mrf.mxu0
  %v7786 = vadd.f32 %v7617, %v7785
  %7787 = vmatmul.bf16.gmra.mxu0 %v5460
  %v7788 = vpop.f32.mrf.mxu0
  %v7789 = vadd.f32 %v7620, %v7788
  %v7790 = vpop.f32.mrf.mxu0
  %v7791 = vadd.f32 %v7622, %v7790
  %7792 = vmatmul.bf16.gmra.mxu0 %v5461
  %v7793 = vpop.f32.mrf.mxu0
  %v7794 = vadd.f32 %v7625, %v7793
  %v7795 = vpop.f32.mrf.mxu0
  %v7796 = vadd.f32 %v7627, %v7795
  %7797 = vmatmul.bf16.gmra.mxu0 %v5462
  %v7798 = vpop.f32.mrf.mxu0
  %v7799 = vadd.f32 %v7630, %v7798
  %v7800 = vpop.f32.mrf.mxu0
  %v7801 = vadd.f32 %v7632, %v7800
  %7802 = vmatmul.bf16.gmra.mxu0 %v5463
  %v7803 = vpop.f32.mrf.mxu0
  %v7804 = vadd.f32 %v7635, %v7803
  %v7805 = vpop.f32.mrf.mxu0
  %v7806 = vadd.f32 %v7637, %v7805
  %7807 = vmatmul.bf16.gmra.mxu0 %v5464
  %v7808 = vpop.f32.mrf.mxu0
  %v7809 = vadd.f32 %v7640, %v7808
  %v7810 = vpop.f32.mrf.mxu0
  %v7811 = vadd.f32 %v7642, %v7810
  %7812 = vmatmul.bf16.gmra.mxu0 %v5465
  %v7813 = vpop.f32.mrf.mxu0
  %v7814 = vadd.f32 %v7645, %v7813
  %v7815 = vpop.f32.mrf.mxu0
  %v7816 = vadd.f32 %v7647, %v7815
  %7817 = vmatmul.bf16.gmra.mxu0 %v974
  %v7818 = vpop.f32.mrf.mxu0
  %v7819 = vadd.f32 %v7650, %v7818
  %v7820 = vpop.f32.mrf.mxu0
  %v7821 = vadd.f32 %v7652, %v7820
  %7822 = vmatmul.bf16.gmra.mxu0 %v5467
  %v7823 = vpop.f32.mrf.mxu0
  %v7824 = vadd.f32 %v7655, %v7823
  %v7825 = vpop.f32.mrf.mxu0
  %v7826 = vadd.f32 %v7657, %v7825
  %7827 = vmatmul.bf16.gmra.mxu0 %v5468
  %v7828 = vpop.f32.mrf.mxu0
  %v7829 = vadd.f32 %v7660, %v7828
  %v7830 = vpop.f32.mrf.mxu0
  %v7831 = vadd.f32 %v7662, %v7830
  %7832 = vmatmul.bf16.gmra.mxu0 %v5469
  %v7833 = vpop.f32.mrf.mxu0
  %v7834 = vadd.f32 %v7665, %v7833
  %v7835 = vpop.f32.mrf.mxu0
  %v7836 = vadd.f32 %v7667, %v7835
  %7837 = vmatmul.bf16.gmra.mxu0 %v5470
  %v7838 = vpop.f32.mrf.mxu0
  %v7839 = vadd.f32 %v7670, %v7838
  %v7840 = vpop.f32.mrf.mxu0
  %v7841 = vadd.f32 %v7672, %v7840
  %7842 = vmatmul.bf16.gmra.mxu0 %v5471
  %v7843 = vpop.f32.mrf.mxu0
  %v7844 = vadd.f32 %v7675, %v7843
  %v7845 = vpop.f32.mrf.mxu0
  %v7846 = vadd.f32 %v7677, %v7845
  %7847 = vmatmul.bf16.gmra.mxu0 %v5472
  %v7848 = vpop.f32.mrf.mxu0
  %v7849 = vadd.f32 %v7680, %v7848
  %v7850 = vpop.f32.mrf.mxu0
  %v7851 = vadd.f32 %v7682, %v7850
  %7852 = vmatmul.bf16.gmra.mxu0 %v5473
  %v7853 = vpop.f32.mrf.mxu0
  %v7854 = vadd.f32 %v7685, %v7853
  %v7855 = vpop.f32.mrf.mxu0
  %v7856 = vadd.f32 %v7687, %v7855
  %7857 = vmatmul.bf16.gmra.mxu0 %v5474
  %v7858 = vpop.f32.mrf.mxu0
  %v7859 = vadd.f32 %v7690, %v7858
  %v7860 = vpop.f32.mrf.mxu0
  %v7861 = vadd.f32 %v7692, %v7860
  %7862 = vmatmul.bf16.gmra.mxu0 %v5475
  %v7863 = vpop.f32.mrf.mxu0
  %v7864 = vadd.f32 %v7695, %v7863
  %v7865 = vpop.f32.mrf.mxu0
  %v7866 = vadd.f32 %v7697, %v7865
  %7867 = vmatmul.bf16.gmra.mxu0 %v5476
  %v7868 = vpop.f32.mrf.mxu0
  %v7869 = vadd.f32 %v7700, %v7868
  %v7870 = vpop.f32.mrf.mxu0
  %v7871 = vadd.f32 %v7702, %v7870
  %7872 = vmatmul.bf16.gmra.mxu0 %v5477
  %v7873 = vpop.f32.mrf.mxu0
  %v7874 = vadd.f32 %v7705, %v7873
  %v7875 = vpop.f32.mrf.mxu0
  %v7876 = vadd.f32 %v7707, %v7875
  %7877 = vmatmul.bf16.gmra.mxu0 %v5478
  %v7878 = vpop.f32.mrf.mxu0
  %v7879 = vadd.f32 %v7710, %v7878
  %v7880 = vpop.f32.mrf.mxu0
  %v7881 = vadd.f32 %v7712, %v7880
  %7882 = vmatmul.bf16.gmra.mxu0 %v5479
  %v7883 = vpop.f32.mrf.mxu0
  %v7884 = vadd.f32 %v7715, %v7883
  %v7885 = vpop.f32.mrf.mxu0
  %v7886 = vadd.f32 %v7717, %v7885
  %7887 = vmatmul.bf16.gmra.mxu0 %v5480
  %v7888 = vpop.f32.mrf.mxu0
  %v7889 = vadd.f32 %v7720, %v7888
  %v7890 = vpop.f32.mrf.mxu0
  %v7891 = vadd.f32 %v7722, %v7890
  %7892 = vmatmul.bf16.gmra.mxu0 %v5481
  %v7893 = vpop.f32.mrf.mxu0
  %v7894 = vadd.f32 %v7725, %v7893
  %v7895 = vpop.f32.mrf.mxu0
  %v7896 = vadd.f32 %v7727, %v7895
  %7897 = vmatmul.bf16.gmra.mxu0 %v974
  %v7898 = vpop.f32.mrf.mxu0
  %v7899 = vadd.f32 %v7730, %v7898
  %v7900 = vpop.f32.mrf.mxu0
  %v7901 = vadd.f32 %v7732, %v7900
  %7902 = vdwg.mxu0
  %7903 = vmatpush.bf16.msra.mxu0 %v6639
  %7904 = vmatpush.bf16.msra.mxu0 %v6638
  %7905 = vmatpush.bf16.msra.mxu0 %v6637
  %7906 = vmatpush.bf16.msra.mxu0 %v6636
  %7907 = vmatpush.bf16.msra.mxu0 %v6635
  %7908 = vmatpush.bf16.msra.mxu0 %v6634
  %7909 = vmatpush.bf16.msra.mxu0 %v6633
  %7910 = vmatpush.bf16.msra.mxu0 %v6632
  %7911 = vmatmul.bf16.gmra.mxu0 %v5551
  %v7912 = vpop.f32.mrf.mxu0
  %v7913 = vadd.f32 %v7744, %v7912
  %v7914 = vpop.f32.mrf.mxu0
  %v7915 = vadd.f32 %v7746, %v7914
  %7916 = vmatmul.bf16.gmra.mxu0 %v5563
  %v7917 = vpop.f32.mrf.mxu0
  %v7918 = vadd.f32 %v7749, %v7917
  %v7919 = vpop.f32.mrf.mxu0
  %v7920 = vadd.f32 %v7751, %v7919
  %7921 = vmatmul.bf16.gmra.mxu0 %v5575
  %v7922 = vpop.f32.mrf.mxu0
  %v7923 = vadd.f32 %v7754, %v7922
  %v7924 = vpop.f32.mrf.mxu0
  %v7925 = vadd.f32 %v7756, %v7924
  %7926 = vmatmul.bf16.gmra.mxu0 %v5587
  %v7927 = vpop.f32.mrf.mxu0
  %v7928 = vadd.f32 %v7759, %v7927
  %v7929 = vpop.f32.mrf.mxu0
  %v7930 = vadd.f32 %v7761, %v7929
  %7931 = vmatmul.bf16.gmra.mxu0 %v5599
  %v7932 = vpop.f32.mrf.mxu0
  %v7933 = vadd.f32 %v7764, %v7932
  %v7934 = vpop.f32.mrf.mxu0
  %v7935 = vadd.f32 %v7766, %v7934
  %7936 = vmatmul.bf16.gmra.mxu0 %v5611
  %v7937 = vpop.f32.mrf.mxu0
  %v7938 = vadd.f32 %v7769, %v7937
  %v7939 = vpop.f32.mrf.mxu0
  %v7940 = vadd.f32 %v7771, %v7939
  %7941 = vmatmul.bf16.gmra.mxu0 %v5623
  %v7942 = vpop.f32.mrf.mxu0
  %v7943 = vadd.f32 %v7774, %v7942
  %v7944 = vpop.f32.mrf.mxu0
  %v7945 = vadd.f32 %v7776, %v7944
  %7946 = vmatmul.bf16.gmra.mxu0 %v5635
  %v7947 = vpop.f32.mrf.mxu0
  %v7948 = vadd.f32 %v7779, %v7947
  %v7949 = vpop.f32.mrf.mxu0
  %v7950 = vadd.f32 %v7781, %v7949
  %7951 = vmatmul.bf16.gmra.mxu0 %v5647
  %v7952 = vpop.f32.mrf.mxu0
  %v7953 = vadd.f32 %v7784, %v7952
  %v7954 = vpop.f32.mrf.mxu0
  %v7955 = vadd.f32 %v7786, %v7954
  %7956 = vmatmul.bf16.gmra.mxu0 %v5659
  %v7957 = vpop.f32.mrf.mxu0
  %v7958 = vadd.f32 %v7789, %v7957
  %v7959 = vpop.f32.mrf.mxu0
  %v7960 = vadd.f32 %v7791, %v7959
  %7961 = vmatmul.bf16.gmra.mxu0 %v5671
  %v7962 = vpop.f32.mrf.mxu0
  %v7963 = vadd.f32 %v7794, %v7962
  %v7964 = vpop.f32.mrf.mxu0
  %v7965 = vadd.f32 %v7796, %v7964
  %7966 = vmatmul.bf16.gmra.mxu0 %v5683
  %v7967 = vpop.f32.mrf.mxu0
  %v7968 = vadd.f32 %v7799, %v7967
  %v7969 = vpop.f32.mrf.mxu0
  %v7970 = vadd.f32 %v7801, %v7969
  %7971 = vmatmul.bf16.gmra.mxu0 %v5695
  %v7972 = vpop.f32.mrf.mxu0
  %v7973 = vadd.f32 %v7804, %v7972
  %v7974 = vpop.f32.mrf.mxu0
  %v7975 = vadd.f32 %v7806, %v7974
  %7976 = vmatmul.bf16.gmra.mxu0 %v5707
  %v7977 = vpop.f32.mrf.mxu0
  %v7978 = vadd.f32 %v7809, %v7977
  %v7979 = vpop.f32.mrf.mxu0
  %v7980 = vadd.f32 %v7811, %v7979
  %7981 = vmatmul.bf16.gmra.mxu0 %v6117
  %v7982 = vpop.f32.mrf.mxu0
  %v7983 = vadd.f32 %v7814, %v7982
  %v7984 = vpop.f32.mrf.mxu0
  %v7985 = vadd.f32 %v7816, %v7984
  %7986 = vmatmul.bf16.gmra.mxu0 %v5527
  %v7987 = vpop.f32.mrf.mxu0
  %v7988 = vadd.f32 %v7819, %v7987
  %v7989 = vpop.f32.mrf.mxu0
  %v7990 = vadd.f32 %v7821, %v7989
  %7991 = vmatmul.bf16.gmra.mxu0 %v5731
  %v7992 = vpop.f32.mrf.mxu0
  %v7993 = vadd.f32 %v7824, %v7992
  %v7994 = vpop.f32.mrf.mxu0
  %v7995 = vadd.f32 %v7826, %v7994
  %7996 = vmatmul.bf16.gmra.mxu0 %v5743
  %v7997 = vpop.f32.mrf.mxu0
  %v7998 = vadd.f32 %v7829, %v7997
  %v7999 = vpop.f32.mrf.mxu0
  %v8000 = vadd.f32 %v7831, %v7999
  %8001 = vmatmul.bf16.gmra.mxu0 %v5755
  %v8002 = vpop.f32.mrf.mxu0
  %v8003 = vadd.f32 %v7834, %v8002
  %v8004 = vpop.f32.mrf.mxu0
  %v8005 = vadd.f32 %v7836, %v8004
  %8006 = vmatmul.bf16.gmra.mxu0 %v5767
  %v8007 = vpop.f32.mrf.mxu0
  %v8008 = vadd.f32 %v7839, %v8007
  %v8009 = vpop.f32.mrf.mxu0
  %v8010 = vadd.f32 %v7841, %v8009
  %8011 = vmatmul.bf16.gmra.mxu0 %v5779
  %v8012 = vpop.f32.mrf.mxu0
  %v8013 = vadd.f32 %v7844, %v8012
  %v8014 = vpop.f32.mrf.mxu0
  %v8015 = vadd.f32 %v7846, %v8014
  %8016 = vmatmul.bf16.gmra.mxu0 %v5791
  %v8017 = vpop.f32.mrf.mxu0
  %v8018 = vadd.f32 %v7849, %v8017
  %v8019 = vpop.f32.mrf.mxu0
  %v8020 = vadd.f32 %v7851, %v8019
  %8021 = vmatmul.bf16.gmra.mxu0 %v5803
  %v8022 = vpop.f32.mrf.mxu0
  %v8023 = vadd.f32 %v7854, %v8022
  %v8024 = vpop.f32.mrf.mxu0
  %v8025 = vadd.f32 %v7856, %v8024
  %8026 = vmatmul.bf16.gmra.mxu0 %v5815
  %v8027 = vpop.f32.mrf.mxu0
  %v8028 = vadd.f32 %v7859, %v8027
  %v8029 = vpop.f32.mrf.mxu0
  %v8030 = vadd.f32 %v7861, %v8029
  %8031 = vmatmul.bf16.gmra.mxu0 %v5827
  %v8032 = vpop.f32.mrf.mxu0
  %v8033 = vadd.f32 %v7864, %v8032
  %v8034 = vpop.f32.mrf.mxu0
  %v8035 = vadd.f32 %v7866, %v8034
  %8036 = vmatmul.bf16.gmra.mxu0 %v5839
  %v8037 = vpop.f32.mrf.mxu0
  %v8038 = vadd.f32 %v7869, %v8037
  %v8039 = vpop.f32.mrf.mxu0
  %v8040 = vadd.f32 %v7871, %v8039
  %8041 = vmatmul.bf16.gmra.mxu0 %v5851
  %v8042 = vpop.f32.mrf.mxu0
  %v8043 = vadd.f32 %v7874, %v8042
  %v8044 = vpop.f32.mrf.mxu0
  %v8045 = vadd.f32 %v7876, %v8044
  %8046 = vmatmul.bf16.gmra.mxu0 %v5863
  %v8047 = vpop.f32.mrf.mxu0
  %v8048 = vadd.f32 %v7879, %v8047
  %v8049 = vpop.f32.mrf.mxu0
  %v8050 = vadd.f32 %v7881, %v8049
  %8051 = vmatmul.bf16.gmra.mxu0 %v5875
  %v8052 = vpop.f32.mrf.mxu0
  %v8053 = vadd.f32 %v7884, %v8052
  %v8054 = vpop.f32.mrf.mxu0
  %v8055 = vadd.f32 %v7886, %v8054
  %8056 = vmatmul.bf16.gmra.mxu0 %v5887
  %v8057 = vpop.f32.mrf.mxu0
  %v8058 = vadd.f32 %v7889, %v8057
  %v8059 = vpop.f32.mrf.mxu0
  %v8060 = vadd.f32 %v7891, %v8059
  %8061 = vmatmul.bf16.gmra.mxu0 %v6129
  %v8062 = vpop.f32.mrf.mxu0
  %v8063 = vadd.f32 %v7894, %v8062
  %v8064 = vpop.f32.mrf.mxu0
  %v8065 = vadd.f32 %v7896, %v8064
  %8066 = vmatmul.bf16.gmra.mxu0 %v5527
  %v8067 = vpop.f32.mrf.mxu0
  %v8068 = vadd.f32 %v7899, %v8067
  %v8069 = vpop.f32.mrf.mxu0
  %v8070 = vadd.f32 %v7901, %v8069
  %8071 = vdwg.mxu0
  %8072 = vmatpush.bf16.msra.mxu0 %v6647
  %8073 = vmatpush.bf16.msra.mxu0 %v6646
  %8074 = vmatpush.bf16.msra.mxu0 %v6645
  %8075 = vmatpush.bf16.msra.mxu0 %v6644
  %8076 = vmatpush.bf16.msra.mxu0 %v6643
  %8077 = vmatpush.bf16.msra.mxu0 %v6642
  %8078 = vmatpush.bf16.msra.mxu0 %v6641
  %8079 = vmatpush.bf16.msra.mxu0 %v6640
  %8080 = vmatmul.bf16.gmra.mxu0 %v5990
  %v8081 = vpop.f32.mrf.mxu0
  %v8082 = vadd.f32 %v7913, %v8081
  %v8083 = vpop.f32.mrf.mxu0
  %v8084 = vadd.f32 %v7915, %v8083
  %8085 = vmatmul.bf16.gmra.mxu0 %v5993
  %v8086 = vpop.f32.mrf.mxu0
  %v8087 = vadd.f32 %v7918, %v8086
  %v8088 = vpop.f32.mrf.mxu0
  %v8089 = vadd.f32 %v7920, %v8088
  %8090 = vmatmul.bf16.gmra.mxu0 %v5996
  %v8091 = vpop.f32.mrf.mxu0
  %v8092 = vadd.f32 %v7923, %v8091
  %v8093 = vpop.f32.mrf.mxu0
  %v8094 = vadd.f32 %v7925, %v8093
  %8095 = vmatmul.bf16.gmra.mxu0 %v5999
  %v8096 = vpop.f32.mrf.mxu0
  %v8097 = vadd.f32 %v7928, %v8096
  %v8098 = vpop.f32.mrf.mxu0
  %v8099 = vadd.f32 %v7930, %v8098
  %8100 = vmatmul.bf16.gmra.mxu0 %v6002
  %v8101 = vpop.f32.mrf.mxu0
  %v8102 = vadd.f32 %v7933, %v8101
  %v8103 = vpop.f32.mrf.mxu0
  %v8104 = vadd.f32 %v7935, %v8103
  %8105 = vmatmul.bf16.gmra.mxu0 %v6005
  %v8106 = vpop.f32.mrf.mxu0
  %v8107 = vadd.f32 %v7938, %v8106
  %v8108 = vpop.f32.mrf.mxu0
  %v8109 = vadd.f32 %v7940, %v8108
  %8110 = vmatmul.bf16.gmra.mxu0 %v6008
  %v8111 = vpop.f32.mrf.mxu0
  %v8112 = vadd.f32 %v7943, %v8111
  %v8113 = vpop.f32.mrf.mxu0
  %v8114 = vadd.f32 %v7945, %v8113
  %8115 = vmatmul.bf16.gmra.mxu0 %v6011
  %v8116 = vpop.f32.mrf.mxu0
  %v8117 = vadd.f32 %v7948, %v8116
  %v8118 = vpop.f32.mrf.mxu0
  %v8119 = vadd.f32 %v7950, %v8118
  %8120 = vmatmul.bf16.gmra.mxu0 %v6014
  %v8121 = vpop.f32.mrf.mxu0
  %v8122 = vadd.f32 %v7953, %v8121
  %v8123 = vpop.f32.mrf.mxu0
  %v8124 = vadd.f32 %v7955, %v8123
  %8125 = vmatmul.bf16.gmra.mxu0 %v6017
  %v8126 = vpop.f32.mrf.mxu0
  %v8127 = vadd.f32 %v7958, %v8126
  %v8128 = vpop.f32.mrf.mxu0
  %v8129 = vadd.f32 %v7960, %v8128
  %8130 = vmatmul.bf16.gmra.mxu0 %v6020
  %v8131 = vpop.f32.mrf.mxu0
  %v8132 = vadd.f32 %v7963, %v8131
  %v8133 = vpop.f32.mrf.mxu0
  %v8134 = vadd.f32 %v7965, %v8133
  %8135 = vmatmul.bf16.gmra.mxu0 %v6023
  %v8136 = vpop.f32.mrf.mxu0
  %v8137 = vadd.f32 %v7968, %v8136
  %v8138 = vpop.f32.mrf.mxu0
  %v8139 = vadd.f32 %v7970, %v8138
  %8140 = vmatmul.bf16.gmra.mxu0 %v6026
  %v8141 = vpop.f32.mrf.mxu0
  %v8142 = vadd.f32 %v7973, %v8141
  %v8143 = vpop.f32.mrf.mxu0
  %v8144 = vadd.f32 %v7975, %v8143
  %8145 = vmatmul.bf16.gmra.mxu0 %v6029
  %v8146 = vpop.f32.mrf.mxu0
  %v8147 = vadd.f32 %v7978, %v8146
  %v8148 = vpop.f32.mrf.mxu0
  %v8149 = vadd.f32 %v7980, %v8148
  %8150 = vmatmul.bf16.gmra.mxu0 %v6138
  %v8151 = vpop.f32.mrf.mxu0
  %v8152 = vadd.f32 %v7983, %v8151
  %v8153 = vpop.f32.mrf.mxu0
  %v8154 = vadd.f32 %v7985, %v8153
  %8155 = vmatmul.bf16.gmra.mxu0 %v5984
  %v8156 = vpop.f32.mrf.mxu0
  %v8157 = vadd.f32 %v7988, %v8156
  %v8158 = vpop.f32.mrf.mxu0
  %v8159 = vadd.f32 %v7990, %v8158
  %8160 = vmatmul.bf16.gmra.mxu0 %v6035
  %v8161 = vpop.f32.mrf.mxu0
  %v8162 = vadd.f32 %v7993, %v8161
  %v8163 = vpop.f32.mrf.mxu0
  %v8164 = vadd.f32 %v7995, %v8163
  %8165 = vmatmul.bf16.gmra.mxu0 %v6038
  %v8166 = vpop.f32.mrf.mxu0
  %v8167 = vadd.f32 %v7998, %v8166
  %v8168 = vpop.f32.mrf.mxu0
  %v8169 = vadd.f32 %v8000, %v8168
  %8170 = vmatmul.bf16.gmra.mxu0 %v6041
  %v8171 = vpop.f32.mrf.mxu0
  %v8172 = vadd.f32 %v8003, %v8171
  %v8173 = vpop.f32.mrf.mxu0
  %v8174 = vadd.f32 %v8005, %v8173
  %8175 = vmatmul.bf16.gmra.mxu0 %v6044
  %v8176 = vpop.f32.mrf.mxu0
  %v8177 = vadd.f32 %v8008, %v8176
  %v8178 = vpop.f32.mrf.mxu0
  %v8179 = vadd.f32 %v8010, %v8178
  %8180 = vmatmul.bf16.gmra.mxu0 %v6047
  %v8181 = vpop.f32.mrf.mxu0
  %v8182 = vadd.f32 %v8013, %v8181
  %v8183 = vpop.f32.mrf.mxu0
  %v8184 = vadd.f32 %v8015, %v8183
  %8185 = vmatmul.bf16.gmra.mxu0 %v6050
  %v8186 = vpop.f32.mrf.mxu0
  %v8187 = vadd.f32 %v8018, %v8186
  %v8188 = vpop.f32.mrf.mxu0
  %v8189 = vadd.f32 %v8020, %v8188
  %8190 = vmatmul.bf16.gmra.mxu0 %v6053
  %v8191 = vpop.f32.mrf.mxu0
  %v8192 = vadd.f32 %v8023, %v8191
  %v8193 = vpop.f32.mrf.mxu0
  %v8194 = vadd.f32 %v8025, %v8193
  %8195 = vmatmul.bf16.gmra.mxu0 %v6056
  %v8196 = vpop.f32.mrf.mxu0
  %v8197 = vadd.f32 %v8028, %v8196
  %v8198 = vpop.f32.mrf.mxu0
  %v8199 = vadd.f32 %v8030, %v8198
  %8200 = vmatmul.bf16.gmra.mxu0 %v6059
  %v8201 = vpop.f32.mrf.mxu0
  %v8202 = vadd.f32 %v8033, %v8201
  %v8203 = vpop.f32.mrf.mxu0
  %v8204 = vadd.f32 %v8035, %v8203
  %8205 = vmatmul.bf16.gmra.mxu0 %v6062
  %v8206 = vpop.f32.mrf.mxu0
  %v8207 = vadd.f32 %v8038, %v8206
  %v8208 = vpop.f32.mrf.mxu0
  %v8209 = vadd.f32 %v8040, %v8208
  %8210 = vmatmul.bf16.gmra.mxu0 %v6065
  %v8211 = vpop.f32.mrf.mxu0
  %v8212 = vadd.f32 %v8043, %v8211
  %v8213 = vpop.f32.mrf.mxu0
  %v8214 = vadd.f32 %v8045, %v8213
  %8215 = vmatmul.bf16.gmra.mxu0 %v6068
  %v8216 = vpop.f32.mrf.mxu0
  %v8217 = vadd.f32 %v8048, %v8216
  %v8218 = vpop.f32.mrf.mxu0
  %v8219 = vadd.f32 %v8050, %v8218
  %8220 = vmatmul.bf16.gmra.mxu0 %v6071
  %v8221 = vpop.f32.mrf.mxu0
  %v8222 = vadd.f32 %v8053, %v8221
  %v8223 = vpop.f32.mrf.mxu0
  %v8224 = vadd.f32 %v8055, %v8223
  %8225 = vmatmul.bf16.gmra.mxu0 %v6074
  %v8226 = vpop.f32.mrf.mxu0
  %v8227 = vadd.f32 %v8058, %v8226
  %v8228 = vpop.f32.mrf.mxu0
  %v8229 = vadd.f32 %v8060, %v8228
  %8230 = vmatmul.bf16.gmra.mxu0 %v6141
  %v8231 = vpop.f32.mrf.mxu0
  %v8232 = vadd.f32 %v8063, %v8231
  %v8233 = vpop.f32.mrf.mxu0
  %v8234 = vadd.f32 %v8065, %v8233
  %8235 = vmatmul.bf16.gmra.mxu0 %v5984
  %v8236 = vpop.f32.mrf.mxu0
  %v8237 = vadd.f32 %v8068, %v8236
  %v8238 = vpop.f32.mrf.mxu0
  %v8239 = vadd.f32 %v8070, %v8238
  %8240 = vdwg.mxu0
  %v8241 = vld [vmem:[%s15] sm:$0x1]
  %v8243 = vperm.slane %v8241, 0
  %v8245 = vmul.f32 %v8082, %v8243
  %v8246 = vmul.f32 %v8084, %v8243
  %v8247 = vmul.f32 %v8087, %v8243
  %v8248 = vmul.f32 %v8089, %v8243
  %v8249 = vmul.f32 %v8092, %v8243
  %v8250 = vmul.f32 %v8094, %v8243
  %v8251 = vmul.f32 %v8097, %v8243
  %v8252 = vmul.f32 %v8099, %v8243
  %v8253 = vmul.f32 %v8102, %v8243
  %v8254 = vmul.f32 %v8104, %v8243
  %v8255 = vmul.f32 %v8107, %v8243
  %v8256 = vmul.f32 %v8109, %v8243
  %v8257 = vmul.f32 %v8112, %v8243
  %v8258 = vmul.f32 %v8114, %v8243
  %v8259 = vmul.f32 %v8117, %v8243
  %v8260 = vmul.f32 %v8119, %v8243
  %v8261 = vmul.f32 %v8122, %v8243
  %v8262 = vmul.f32 %v8124, %v8243
  %v8263 = vmul.f32 %v8127, %v8243
  %v8264 = vmul.f32 %v8129, %v8243
  %v8265 = vmul.f32 %v8132, %v8243
  %v8266 = vmul.f32 %v8134, %v8243
  %v8267 = vmul.f32 %v8137, %v8243
  %v8268 = vmul.f32 %v8139, %v8243
  %v8269 = vmul.f32 %v8142, %v8243
  %v8270 = vmul.f32 %v8144, %v8243
  %v8271 = vmul.f32 %v8147, %v8243
  %v8272 = vmul.f32 %v8149, %v8243
  %v8273 = vmul.f32 %v8152, %v8243
  %v8274 = vmul.f32 %v8154, %v8243
  %v8275 = vmul.f32 %v8157, %v8243
  %v8276 = vmul.f32 %v8159, %v8243
  %v8277 = vmul.f32 %v8162, %v8243
  %v8278 = vmul.f32 %v8164, %v8243
  %v8279 = vmul.f32 %v8167, %v8243
  %v8280 = vmul.f32 %v8169, %v8243
  %v8281 = vmul.f32 %v8172, %v8243
  %v8282 = vmul.f32 %v8174, %v8243
  %v8283 = vmul.f32 %v8177, %v8243
  %v8284 = vmul.f32 %v8179, %v8243
  %v8285 = vmul.f32 %v8182, %v8243
  %v8286 = vmul.f32 %v8184, %v8243
  %v8287 = vmul.f32 %v8187, %v8243
  %v8288 = vmul.f32 %v8189, %v8243
  %v8289 = vmul.f32 %v8192, %v8243
  %v8290 = vmul.f32 %v8194, %v8243
  %v8291 = vmul.f32 %v8197, %v8243
  %v8292 = vmul.f32 %v8199, %v8243
  %v8293 = vmul.f32 %v8202, %v8243
  %v8294 = vmul.f32 %v8204, %v8243
  %v8295 = vmul.f32 %v8207, %v8243
  %v8296 = vmul.f32 %v8209, %v8243
  %v8297 = vmul.f32 %v8212, %v8243
  %v8298 = vmul.f32 %v8214, %v8243
  %v8299 = vmul.f32 %v8217, %v8243
  %v8300 = vmul.f32 %v8219, %v8243
  %v8301 = vmul.f32 %v8222, %v8243
  %v8302 = vmul.f32 %v8224, %v8243
  %v8303 = vmul.f32 %v8227, %v8243
  %v8304 = vmul.f32 %v8229, %v8243
  %v8305 = vmul.f32 %v8232, %v8243
  %v8306 = vmul.f32 %v8234, %v8243
  %v8307 = vmul.f32 %v8237, %v8243
  %v8308 = vmul.f32 %v8239, %v8243
  %v8309 = vld [vmem:[%s16] sm:$0x1]
  %v8311 = vperm.slane %v8309, 0
  %v8313 = vadd.f32 %v8245, %v8311
  %v8314 = vadd.f32 %v8246, %v8311
  %v8315 = vadd.f32 %v8247, %v8311
  %v8316 = vadd.f32 %v8248, %v8311
  %v8317 = vadd.f32 %v8249, %v8311
  %v8318 = vadd.f32 %v8250, %v8311
  %v8319 = vadd.f32 %v8251, %v8311
  %v8320 = vadd.f32 %v8252, %v8311
  %v8321 = vadd.f32 %v8253, %v8311
  %v8322 = vadd.f32 %v8254, %v8311
  %v8323 = vadd.f32 %v8255, %v8311
  %v8324 = vadd.f32 %v8256, %v8311
  %v8325 = vadd.f32 %v8257, %v8311
  %v8326 = vadd.f32 %v8258, %v8311
  %v8327 = vadd.f32 %v8259, %v8311
  %v8328 = vadd.f32 %v8260, %v8311
  %v8329 = vadd.f32 %v8261, %v8311
  %v8330 = vadd.f32 %v8262, %v8311
  %v8331 = vadd.f32 %v8263, %v8311
  %v8332 = vadd.f32 %v8264, %v8311
  %v8333 = vadd.f32 %v8265, %v8311
  %v8334 = vadd.f32 %v8266, %v8311
  %v8335 = vadd.f32 %v8267, %v8311
  %v8336 = vadd.f32 %v8268, %v8311
  %v8337 = vadd.f32 %v8269, %v8311
  %v8338 = vadd.f32 %v8270, %v8311
  %v8339 = vadd.f32 %v8271, %v8311
  %v8340 = vadd.f32 %v8272, %v8311
  %v8341 = vadd.f32 %v8273, %v8311
  %v8342 = vadd.f32 %v8274, %v8311
  %v8343 = vadd.f32 %v8275, %v8311
  %v8344 = vadd.f32 %v8276, %v8311
  %v8345 = vadd.f32 %v8277, %v8311
  %v8346 = vadd.f32 %v8278, %v8311
  %v8347 = vadd.f32 %v8279, %v8311
  %v8348 = vadd.f32 %v8280, %v8311
  %v8349 = vadd.f32 %v8281, %v8311
  %v8350 = vadd.f32 %v8282, %v8311
  %v8351 = vadd.f32 %v8283, %v8311
  %v8352 = vadd.f32 %v8284, %v8311
  %v8353 = vadd.f32 %v8285, %v8311
  %v8354 = vadd.f32 %v8286, %v8311
  %v8355 = vadd.f32 %v8287, %v8311
  %v8356 = vadd.f32 %v8288, %v8311
  %v8357 = vadd.f32 %v8289, %v8311
  %v8358 = vadd.f32 %v8290, %v8311
  %v8359 = vadd.f32 %v8291, %v8311
  %v8360 = vadd.f32 %v8292, %v8311
  %v8361 = vadd.f32 %v8293, %v8311
  %v8362 = vadd.f32 %v8294, %v8311
  %v8363 = vadd.f32 %v8295, %v8311
  %v8364 = vadd.f32 %v8296, %v8311
  %v8365 = vadd.f32 %v8297, %v8311
  %v8366 = vadd.f32 %v8298, %v8311
  %v8367 = vadd.f32 %v8299, %v8311
  %v8368 = vadd.f32 %v8300, %v8311
  %v8369 = vadd.f32 %v8301, %v8311
  %v8370 = vadd.f32 %v8302, %v8311
  %v8371 = vadd.f32 %v8303, %v8311
  %v8372 = vadd.f32 %v8304, %v8311
  %v8373 = vadd.f32 %v8305, %v8311
  %v8374 = vadd.f32 %v8306, %v8311
  %v8375 = vadd.f32 %v8307, %v8311
  %v8376 = vadd.f32 %v8308, %v8311
  %v8377 = vmax.f32 %v8313, 0.0
  %v8378 = vmax.f32 %v8314, 0.0
  %v8379 = vmax.f32 %v8315, 0.0
  %v8380 = vmax.f32 %v8316, 0.0
  %v8381 = vmax.f32 %v8317, 0.0
  %v8382 = vmax.f32 %v8318, 0.0
  %v8383 = vmax.f32 %v8319, 0.0
  %v8384 = vmax.f32 %v8320, 0.0
  %v8385 = vmax.f32 %v8321, 0.0
  %v8386 = vmax.f32 %v8322, 0.0
  %v8387 = vmax.f32 %v8323, 0.0
  %v8388 = vmax.f32 %v8324, 0.0
  %v8389 = vmax.f32 %v8325, 0.0
  %v8390 = vmax.f32 %v8326, 0.0
  %v8391 = vmax.f32 %v8327, 0.0
  %v8392 = vmax.f32 %v8328, 0.0
  %v8393 = vmax.f32 %v8329, 0.0
  %v8394 = vmax.f32 %v8330, 0.0
  %v8395 = vmax.f32 %v8331, 0.0
  %v8396 = vmax.f32 %v8332, 0.0
  %v8397 = vmax.f32 %v8333, 0.0
  %v8398 = vmax.f32 %v8334, 0.0
  %v8399 = vmax.f32 %v8335, 0.0
  %v8400 = vmax.f32 %v8336, 0.0
  %v8401 = vmax.f32 %v8337, 0.0
  %v8402 = vmax.f32 %v8338, 0.0
  %v8403 = vmax.f32 %v8339, 0.0
  %v8404 = vmax.f32 %v8340, 0.0
  %v8405 = vmax.f32 %v8341, 0.0
  %v8406 = vmax.f32 %v8342, 0.0
  %v8407 = vmax.f32 %v8343, 0.0
  %v8408 = vmax.f32 %v8344, 0.0
  %v8409 = vmax.f32 %v8345, 0.0
  %v8410 = vmax.f32 %v8346, 0.0
  %v8411 = vmax.f32 %v8347, 0.0
  %v8412 = vmax.f32 %v8348, 0.0
  %v8413 = vmax.f32 %v8349, 0.0
  %v8414 = vmax.f32 %v8350, 0.0
  %v8415 = vmax.f32 %v8351, 0.0
  %v8416 = vmax.f32 %v8352, 0.0
  %v8417 = vmax.f32 %v8353, 0.0
  %v8418 = vmax.f32 %v8354, 0.0
  %v8419 = vmax.f32 %v8355, 0.0
  %v8420 = vmax.f32 %v8356, 0.0
  %v8421 = vmax.f32 %v8357, 0.0
  %v8422 = vmax.f32 %v8358, 0.0
  %v8423 = vmax.f32 %v8359, 0.0
  %v8424 = vmax.f32 %v8360, 0.0
  %v8425 = vmax.f32 %v8361, 0.0
  %v8426 = vmax.f32 %v8362, 0.0
  %v8427 = vmax.f32 %v8363, 0.0
  %v8428 = vmax.f32 %v8364, 0.0
  %v8429 = vmax.f32 %v8365, 0.0
  %v8430 = vmax.f32 %v8366, 0.0
  %v8431 = vmax.f32 %v8367, 0.0
  %v8432 = vmax.f32 %v8368, 0.0
  %v8433 = vmax.f32 %v8369, 0.0
  %v8434 = vmax.f32 %v8370, 0.0
  %v8435 = vmax.f32 %v8371, 0.0
  %v8436 = vmax.f32 %v8372, 0.0
  %v8437 = vmax.f32 %v8373, 0.0
  %v8438 = vmax.f32 %v8374, 0.0
  %v8439 = vmax.f32 %v8375, 0.0
  %v8440 = vmax.f32 %v8376, 0.0
  %v8441 = vpack.c.bf16 %v8377, %v8377
  %v8442 = vpack.c.bf16 %v8378, %v8378
  %v8443 = vpack.c.bf16 %v8379, %v8379
  %v8444 = vpack.c.bf16 %v8380, %v8380
  %v8445 = vpack.c.bf16 %v8381, %v8381
  %v8446 = vpack.c.bf16 %v8382, %v8382
  %v8447 = vpack.c.bf16 %v8383, %v8383
  %v8448 = vpack.c.bf16 %v8384, %v8384
  %v8449 = vpack.c.bf16 %v8385, %v8385
  %v8450 = vpack.c.bf16 %v8386, %v8386
  %v8451 = vpack.c.bf16 %v8387, %v8387
  %v8452 = vpack.c.bf16 %v8388, %v8388
  %v8453 = vpack.c.bf16 %v8389, %v8389
  %v8454 = vpack.c.bf16 %v8390, %v8390
  %v8455 = vpack.c.bf16 %v8391, %v8391
  %v8456 = vpack.c.bf16 %v8392, %v8392
  %v8457 = vpack.c.bf16 %v8393, %v8393
  %v8458 = vpack.c.bf16 %v8394, %v8394
  %v8459 = vpack.c.bf16 %v8395, %v8395
  %v8460 = vpack.c.bf16 %v8396, %v8396
  %v8461 = vpack.c.bf16 %v8397, %v8397
  %v8462 = vpack.c.bf16 %v8398, %v8398
  %v8463 = vpack.c.bf16 %v8399, %v8399
  %v8464 = vpack.c.bf16 %v8400, %v8400
  %v8465 = vpack.c.bf16 %v8401, %v8401
  %v8466 = vpack.c.bf16 %v8402, %v8402
  %v8467 = vpack.c.bf16 %v8403, %v8403
  %v8468 = vpack.c.bf16 %v8404, %v8404
  %v8469 = vpack.c.bf16 %v8405, %v8405
  %v8470 = vpack.c.bf16 %v8406, %v8406
  %v8471 = vpack.c.bf16 %v8407, %v8407
  %v8472 = vpack.c.bf16 %v8408, %v8408
  %v8473 = vpack.c.bf16 %v8409, %v8409
  %v8474 = vpack.c.bf16 %v8410, %v8410
  %v8475 = vpack.c.bf16 %v8411, %v8411
  %v8476 = vpack.c.bf16 %v8412, %v8412
  %v8477 = vpack.c.bf16 %v8413, %v8413
  %v8478 = vpack.c.bf16 %v8414, %v8414
  %v8479 = vpack.c.bf16 %v8415, %v8415
  %v8480 = vpack.c.bf16 %v8416, %v8416
  %v8481 = vpack.c.bf16 %v8417, %v8417
  %v8482 = vpack.c.bf16 %v8418, %v8418
  %v8483 = vpack.c.bf16 %v8419, %v8419
  %v8484 = vpack.c.bf16 %v8420, %v8420
  %v8485 = vpack.c.bf16 %v8421, %v8421
  %v8486 = vpack.c.bf16 %v8422, %v8422
  %v8487 = vpack.c.bf16 %v8423, %v8423
  %v8488 = vpack.c.bf16 %v8424, %v8424
  %v8489 = vpack.c.bf16 %v8425, %v8425
  %v8490 = vpack.c.bf16 %v8426, %v8426
  %v8491 = vpack.c.bf16 %v8427, %v8427
  %v8492 = vpack.c.bf16 %v8428, %v8428
  %v8493 = vpack.c.bf16 %v8429, %v8429
  %v8494 = vpack.c.bf16 %v8430, %v8430
  %v8495 = vpack.c.bf16 %v8431, %v8431
  %v8496 = vpack.c.bf16 %v8432, %v8432
  %v8497 = vpack.c.bf16 %v8433, %v8433
  %v8498 = vpack.c.bf16 %v8434, %v8434
  %v8499 = vpack.c.bf16 %v8435, %v8435
  %v8500 = vpack.c.bf16 %v8436, %v8436
  %v8501 = vpack.c.bf16 %v8437, %v8437
  %v8502 = vpack.c.bf16 %v8438, %v8438
  %v8503 = vpack.c.bf16 %v8439, %v8439
  %v8504 = vpack.c.bf16 %v8440, %v8440
  %v8569 = vunpack.c.l.b16 %v8441
  %v8570 = vunpack.c.l.b16 %v8442
  %v8571 = vunpack.c.l.b16 %v8443
  %v8572 = vunpack.c.l.b16 %v8444
  %v8573 = vunpack.c.l.b16 %v8445
  %v8574 = vunpack.c.l.b16 %v8446
  %v8575 = vunpack.c.l.b16 %v8447
  %v8576 = vunpack.c.l.b16 %v8448
  %v8577 = vunpack.c.l.b16 %v8449
  %v8578 = vunpack.c.l.b16 %v8450
  %v8579 = vunpack.c.l.b16 %v8451
  %v8580 = vunpack.c.l.b16 %v8452
  %v8581 = vunpack.c.l.b16 %v8453
  %v8582 = vunpack.c.l.b16 %v8454
  %v8583 = vunpack.c.l.b16 %v8455
  %v8584 = vunpack.c.l.b16 %v8456
  %v8585 = vunpack.c.l.b16 %v8457
  %v8586 = vunpack.c.l.b16 %v8458
  %v8587 = vunpack.c.l.b16 %v8459
  %v8588 = vunpack.c.l.b16 %v8460
  %v8589 = vunpack.c.l.b16 %v8461
  %v8590 = vunpack.c.l.b16 %v8462
  %v8591 = vunpack.c.l.b16 %v8463
  %v8592 = vunpack.c.l.b16 %v8464
  %v8593 = vunpack.c.l.b16 %v8465
  %v8594 = vunpack.c.l.b16 %v8466
  %v8595 = vunpack.c.l.b16 %v8467
  %v8596 = vunpack.c.l.b16 %v8468
  %v8597 = vunpack.c.l.b16 %v8469
  %v8598 = vunpack.c.l.b16 %v8470
  %v8599 = vunpack.c.l.b16 %v8471
  %v8600 = vunpack.c.l.b16 %v8472
  %v8601 = vunpack.c.l.b16 %v8473
  %v8602 = vunpack.c.l.b16 %v8474
  %v8603 = vunpack.c.l.b16 %v8475
  %v8604 = vunpack.c.l.b16 %v8476
  %v8605 = vunpack.c.l.b16 %v8477
  %v8606 = vunpack.c.l.b16 %v8478
  %v8607 = vunpack.c.l.b16 %v8479
  %v8608 = vunpack.c.l.b16 %v8480
  %v8609 = vunpack.c.l.b16 %v8481
  %v8610 = vunpack.c.l.b16 %v8482
  %v8611 = vunpack.c.l.b16 %v8483
  %v8612 = vunpack.c.l.b16 %v8484
  %v8613 = vunpack.c.l.b16 %v8485
  %v8614 = vunpack.c.l.b16 %v8486
  %v8615 = vunpack.c.l.b16 %v8487
  %v8616 = vunpack.c.l.b16 %v8488
  %v8617 = vunpack.c.l.b16 %v8489
  %v8618 = vunpack.c.l.b16 %v8490
  %v8619 = vunpack.c.l.b16 %v8491
  %v8620 = vunpack.c.l.b16 %v8492
  %v8621 = vunpack.c.l.b16 %v8493
  %v8622 = vunpack.c.l.b16 %v8494
  %v8623 = vunpack.c.l.b16 %v8495
  %v8624 = vunpack.c.l.b16 %v8496
  %v8625 = vunpack.c.l.b16 %v8497
  %v8626 = vunpack.c.l.b16 %v8498
  %v8627 = vunpack.c.l.b16 %v8499
  %v8628 = vunpack.c.l.b16 %v8500
  %v8629 = vunpack.c.l.b16 %v8501
  %v8630 = vunpack.c.l.b16 %v8502
  %v8631 = vunpack.c.l.b16 %v8503
  %v8632 = vunpack.c.l.b16 %v8504
  %v8633 = vpack.c.b16 %v8570, %v8569
  %v8634 = vpack.c.b16 %v8572, %v8571
  %v8635 = vpack.c.b16 %v8574, %v8573
  %v8636 = vpack.c.b16 %v8576, %v8575
  %v8637 = vpack.c.b16 %v8578, %v8577
  %v8638 = vpack.c.b16 %v8580, %v8579
  %v8639 = vpack.c.b16 %v8582, %v8581
  %v8640 = vpack.c.b16 %v8584, %v8583
  %v8641 = vpack.c.b16 %v8586, %v8585
  %v8642 = vpack.c.b16 %v8588, %v8587
  %v8643 = vpack.c.b16 %v8590, %v8589
  %v8644 = vpack.c.b16 %v8592, %v8591
  %v8645 = vpack.c.b16 %v8594, %v8593
  %v8646 = vpack.c.b16 %v8596, %v8595
  %v8647 = vpack.c.b16 %v8598, %v8597
  %v8648 = vpack.c.b16 %v8600, %v8599
  %v8649 = vpack.c.b16 %v8602, %v8601
  %v8650 = vpack.c.b16 %v8604, %v8603
  %v8651 = vpack.c.b16 %v8606, %v8605
  %v8652 = vpack.c.b16 %v8608, %v8607
  %v8653 = vpack.c.b16 %v8610, %v8609
  %v8654 = vpack.c.b16 %v8612, %v8611
  %v8655 = vpack.c.b16 %v8614, %v8613
  %v8656 = vpack.c.b16 %v8616, %v8615
  %v8657 = vpack.c.b16 %v8618, %v8617
  %v8658 = vpack.c.b16 %v8620, %v8619
  %v8659 = vpack.c.b16 %v8622, %v8621
  %v8660 = vpack.c.b16 %v8624, %v8623
  %v8661 = vpack.c.b16 %v8626, %v8625
  %v8662 = vpack.c.b16 %v8628, %v8627
  %v8663 = vpack.c.b16 %v8630, %v8629
  %v8664 = vpack.c.b16 %v8632, %v8631
  %v8666 = vshrl.u32 %v8633, 16
  %v8668 = vrot.slane %v8666, 7
  %v8669 = vshll.u32 %v8633, 16
  %v8671 = vor.u32 %v8668, %v8669
  %v8673 = vshrl.u32 %v8634, 16
  %v8675 = vrot.slane %v8673, 7
  %v8676 = vshll.u32 %v8634, 16
  %v8678 = vor.u32 %v8675, %v8676
  %v8680 = vshrl.u32 %v8635, 16
  %v8682 = vrot.slane %v8680, 7
  %v8683 = vshll.u32 %v8635, 16
  %v8685 = vor.u32 %v8682, %v8683
  %v8687 = vshrl.u32 %v8636, 16
  %v8689 = vrot.slane %v8687, 7
  %v8690 = vshll.u32 %v8636, 16
  %v8692 = vor.u32 %v8689, %v8690
  %v8694 = vshrl.u32 %v8637, 16
  %v8696 = vrot.slane %v8694, 7
  %v8697 = vshll.u32 %v8637, 16
  %v8699 = vor.u32 %v8696, %v8697
  %v8701 = vshrl.u32 %v8638, 16
  %v8703 = vrot.slane %v8701, 7
  %v8704 = vshll.u32 %v8638, 16
  %v8706 = vor.u32 %v8703, %v8704
  %v8708 = vshrl.u32 %v8639, 16
  %v8710 = vrot.slane %v8708, 7
  %v8711 = vshll.u32 %v8639, 16
  %v8713 = vor.u32 %v8710, %v8711
  %v8715 = vshrl.u32 %v8640, 16
  %v8717 = vrot.slane %v8715, 7
  %v8718 = vshll.u32 %v8640, 16
  %v8720 = vor.u32 %v8717, %v8718
  %v8722 = vshrl.u32 %v8641, 16
  %v8724 = vrot.slane %v8722, 7
  %v8725 = vshll.u32 %v8641, 16
  %v8727 = vor.u32 %v8724, %v8725
  %v8729 = vshrl.u32 %v8642, 16
  %v8731 = vrot.slane %v8729, 7
  %v8732 = vshll.u32 %v8642, 16
  %v8734 = vor.u32 %v8731, %v8732
  %v8736 = vshrl.u32 %v8643, 16
  %v8738 = vrot.slane %v8736, 7
  %v8739 = vshll.u32 %v8643, 16
  %v8741 = vor.u32 %v8738, %v8739
  %v8743 = vshrl.u32 %v8644, 16
  %v8745 = vrot.slane %v8743, 7
  %v8746 = vshll.u32 %v8644, 16
  %v8748 = vor.u32 %v8745, %v8746
  %v8750 = vshrl.u32 %v8645, 16
  %v8752 = vrot.slane %v8750, 7
  %v8753 = vshll.u32 %v8645, 16
  %v8755 = vor.u32 %v8752, %v8753
  %v8757 = vshrl.u32 %v8646, 16
  %v8759 = vrot.slane %v8757, 7
  %v8760 = vshll.u32 %v8646, 16
  %v8762 = vor.u32 %v8759, %v8760
  %v8764 = vshrl.u32 %v8647, 16
  %v8766 = vrot.slane %v8764, 7
  %v8767 = vshll.u32 %v8647, 16
  %v8769 = vor.u32 %v8766, %v8767
  %v8771 = vshrl.u32 %v8648, 16
  %v8773 = vrot.slane %v8771, 7
  %v8774 = vshll.u32 %v8648, 16
  %v8776 = vor.u32 %v8773, %v8774
  %v8778 = vshrl.u32 %v8649, 16
  %v8780 = vrot.slane %v8778, 7
  %v8781 = vshll.u32 %v8649, 16
  %v8783 = vor.u32 %v8780, %v8781
  %v8785 = vshrl.u32 %v8650, 16
  %v8787 = vrot.slane %v8785, 7
  %v8788 = vshll.u32 %v8650, 16
  %v8790 = vor.u32 %v8787, %v8788
  %v8792 = vshrl.u32 %v8651, 16
  %v8794 = vrot.slane %v8792, 7
  %v8795 = vshll.u32 %v8651, 16
  %v8797 = vor.u32 %v8794, %v8795
  %v8799 = vshrl.u32 %v8652, 16
  %v8801 = vrot.slane %v8799, 7
  %v8802 = vshll.u32 %v8652, 16
  %v8804 = vor.u32 %v8801, %v8802
  %v8806 = vshrl.u32 %v8653, 16
  %v8808 = vrot.slane %v8806, 7
  %v8809 = vshll.u32 %v8653, 16
  %v8811 = vor.u32 %v8808, %v8809
  %v8813 = vshrl.u32 %v8654, 16
  %v8815 = vrot.slane %v8813, 7
  %v8816 = vshll.u32 %v8654, 16
  %v8818 = vor.u32 %v8815, %v8816
  %v8820 = vshrl.u32 %v8655, 16
  %v8822 = vrot.slane %v8820, 7
  %v8823 = vshll.u32 %v8655, 16
  %v8825 = vor.u32 %v8822, %v8823
  %v8827 = vshrl.u32 %v8656, 16
  %v8829 = vrot.slane %v8827, 7
  %v8830 = vshll.u32 %v8656, 16
  %v8832 = vor.u32 %v8829, %v8830
  %v8834 = vshrl.u32 %v8657, 16
  %v8836 = vrot.slane %v8834, 7
  %v8837 = vshll.u32 %v8657, 16
  %v8839 = vor.u32 %v8836, %v8837
  %v8841 = vshrl.u32 %v8658, 16
  %v8843 = vrot.slane %v8841, 7
  %v8844 = vshll.u32 %v8658, 16
  %v8846 = vor.u32 %v8843, %v8844
  %v8848 = vshrl.u32 %v8659, 16
  %v8850 = vrot.slane %v8848, 7
  %v8851 = vshll.u32 %v8659, 16
  %v8853 = vor.u32 %v8850, %v8851
  %v8855 = vshrl.u32 %v8660, 16
  %v8857 = vrot.slane %v8855, 7
  %v8858 = vshll.u32 %v8660, 16
  %v8860 = vor.u32 %v8857, %v8858
  %v8862 = vshrl.u32 %v8661, 16
  %v8864 = vrot.slane %v8862, 7
  %v8865 = vshll.u32 %v8661, 16
  %v8867 = vor.u32 %v8864, %v8865
  %v8869 = vshrl.u32 %v8662, 16
  %v8871 = vrot.slane %v8869, 7
  %v8872 = vshll.u32 %v8662, 16
  %v8874 = vor.u32 %v8871, %v8872
  %v8876 = vshrl.u32 %v8663, 16
  %v8878 = vrot.slane %v8876, 7
  %v8879 = vshll.u32 %v8663, 16
  %v8881 = vor.u32 %v8878, %v8879
  %v8883 = vshrl.u32 %v8664, 16
  %v8885 = vrot.slane %v8883, 7
  %v8886 = vshll.u32 %v8664, 16
  %v8888 = vor.u32 %v8885, %v8886
  %v8953 = vsel %vm973, 0, %v8671
  %v8954 = vsel %vm973, 0, %v8678
  %v8955 = vsel %vm973, 0, %v8685
  %v8956 = vsel %vm973, 0, %v8692
  %v8957 = vsel %vm973, 0, %v8699
  %v8958 = vsel %vm973, 0, %v8706
  %v8959 = vsel %vm973, 0, %v8713
  %v8960 = vsel %vm973, 0, %v8720
  %v8961 = vsel %vm973, 0, %v8727
  %v8962 = vsel %vm973, 0, %v8734
  %v8963 = vsel %vm973, 0, %v8741
  %v8964 = vsel %vm973, 0, %v8748
  %v8965 = vsel %vm973, 0, %v8755
  %v8966 = vsel %vm973, 0, %v8762
  %v8967 = vsel %vm973, 0, %v8769
  %v8968 = vsel %vm973, 0, %v8776
  %v8969 = vsel %vm973, 0, %v8783
  %v8970 = vsel %vm973, 0, %v8790
  %v8971 = vsel %vm973, 0, %v8797
  %v8972 = vsel %vm973, 0, %v8804
  %v8973 = vsel %vm973, 0, %v8811
  %v8974 = vsel %vm973, 0, %v8818
  %v8975 = vsel %vm973, 0, %v8825
  %v8976 = vsel %vm973, 0, %v8832
  %v8977 = vsel %vm973, 0, %v8839
  %v8978 = vsel %vm973, 0, %v8846
  %v8979 = vsel %vm973, 0, %v8853
  %v8980 = vsel %vm973, 0, %v8860
  %v8981 = vsel %vm973, 0, %v8867
  %v8982 = vsel %vm973, 0, %v8874
  %v8983 = vsel %vm973, 0, %v8881
  %v8984 = vsel %vm973, 0, %v8888
  %v8985 = vsel %vm973, %v8668, 0
  %v8986 = vsel %vm973, %v8675, 0
  %v8987 = vsel %vm973, %v8682, 0
  %v8988 = vsel %vm973, %v8689, 0
  %v8989 = vsel %vm973, %v8696, 0
  %v8990 = vsel %vm973, %v8703, 0
  %v8991 = vsel %vm973, %v8710, 0
  %v8992 = vsel %vm973, %v8717, 0
  %v8993 = vsel %vm973, %v8724, 0
  %v8994 = vsel %vm973, %v8731, 0
  %v8995 = vsel %vm973, %v8738, 0
  %v8996 = vsel %vm973, %v8745, 0
  %v8997 = vsel %vm973, %v8752, 0
  %v8998 = vsel %vm973, %v8759, 0
  %v8999 = vsel %vm973, %v8766, 0
  %v9000 = vsel %vm973, %v8773, 0
  %v9001 = vsel %vm973, %v8780, 0
  %v9002 = vsel %vm973, %v8787, 0
  %v9003 = vsel %vm973, %v8794, 0
  %v9004 = vsel %vm973, %v8801, 0
  %v9005 = vsel %vm973, %v8808, 0
  %v9006 = vsel %vm973, %v8815, 0
  %v9007 = vsel %vm973, %v8822, 0
  %v9008 = vsel %vm973, %v8829, 0
  %v9009 = vsel %vm973, %v8836, 0
  %v9010 = vsel %vm973, %v8843, 0
  %v9011 = vsel %vm973, %v8850, 0
  %v9012 = vsel %vm973, %v8857, 0
  %v9013 = vsel %vm973, %v8864, 0
  %v9014 = vsel %vm973, %v8871, 0
  %v9015 = vsel %vm973, %v8878, 0
  %v9016 = vsel %vm973, %v8885, 0
  %v9018 = vshrl.u32 %v8953, 16
  %v9020 = vshll.u32 %v8953, 16
  %v9022 = vrot.slane %v9020, 1
  %v9023 = vor.u32 %v9018, %v9022
  %v9025 = vshll.u32 %v8985, 16
  %v9027 = vrot.slane %v9025, 1
  %v9028 = vsel %vm5515, %v9023, %v9027
  %v9030 = vshrl.u32 %v8954, 16
  %v9032 = vshll.u32 %v8954, 16
  %v9034 = vrot.slane %v9032, 1
  %v9035 = vor.u32 %v9030, %v9034
  %v9037 = vshll.u32 %v8986, 16
  %v9039 = vrot.slane %v9037, 1
  %v9040 = vsel %vm5515, %v9035, %v9039
  %v9042 = vshrl.u32 %v8955, 16
  %v9044 = vshll.u32 %v8955, 16
  %v9046 = vrot.slane %v9044, 1
  %v9047 = vor.u32 %v9042, %v9046
  %v9049 = vshll.u32 %v8987, 16
  %v9051 = vrot.slane %v9049, 1
  %v9052 = vsel %vm5515, %v9047, %v9051
  %v9054 = vshrl.u32 %v8956, 16
  %v9056 = vshll.u32 %v8956, 16
  %v9058 = vrot.slane %v9056, 1
  %v9059 = vor.u32 %v9054, %v9058
  %v9061 = vshll.u32 %v8988, 16
  %v9063 = vrot.slane %v9061, 1
  %v9064 = vsel %vm5515, %v9059, %v9063
  %v9066 = vshrl.u32 %v8957, 16
  %v9068 = vshll.u32 %v8957, 16
  %v9070 = vrot.slane %v9068, 1
  %v9071 = vor.u32 %v9066, %v9070
  %v9073 = vshll.u32 %v8989, 16
  %v9075 = vrot.slane %v9073, 1
  %v9076 = vsel %vm5515, %v9071, %v9075
  %v9078 = vshrl.u32 %v8958, 16
  %v9080 = vshll.u32 %v8958, 16
  %v9082 = vrot.slane %v9080, 1
  %v9083 = vor.u32 %v9078, %v9082
  %v9085 = vshll.u32 %v8990, 16
  %v9087 = vrot.slane %v9085, 1
  %v9088 = vsel %vm5515, %v9083, %v9087
  %v9090 = vshrl.u32 %v8959, 16
  %v9092 = vshll.u32 %v8959, 16
  %v9094 = vrot.slane %v9092, 1
  %v9095 = vor.u32 %v9090, %v9094
  %v9097 = vshll.u32 %v8991, 16
  %v9099 = vrot.slane %v9097, 1
  %v9100 = vsel %vm5515, %v9095, %v9099
  %v9102 = vshrl.u32 %v8960, 16
  %v9104 = vshll.u32 %v8960, 16
  %v9106 = vrot.slane %v9104, 1
  %v9107 = vor.u32 %v9102, %v9106
  %v9109 = vshll.u32 %v8992, 16
  %v9111 = vrot.slane %v9109, 1
  %v9112 = vsel %vm5515, %v9107, %v9111
  %v9114 = vshrl.u32 %v8961, 16
  %v9116 = vshll.u32 %v8961, 16
  %v9118 = vrot.slane %v9116, 1
  %v9119 = vor.u32 %v9114, %v9118
  %v9121 = vshll.u32 %v8993, 16
  %v9123 = vrot.slane %v9121, 1
  %v9124 = vsel %vm5515, %v9119, %v9123
  %v9126 = vshrl.u32 %v8962, 16
  %v9128 = vshll.u32 %v8962, 16
  %v9130 = vrot.slane %v9128, 1
  %v9131 = vor.u32 %v9126, %v9130
  %v9133 = vshll.u32 %v8994, 16
  %v9135 = vrot.slane %v9133, 1
  %v9136 = vsel %vm5515, %v9131, %v9135
  %v9138 = vshrl.u32 %v8963, 16
  %v9140 = vshll.u32 %v8963, 16
  %v9142 = vrot.slane %v9140, 1
  %v9143 = vor.u32 %v9138, %v9142
  %v9145 = vshll.u32 %v8995, 16
  %v9147 = vrot.slane %v9145, 1
  %v9148 = vsel %vm5515, %v9143, %v9147
  %v9150 = vshrl.u32 %v8964, 16
  %v9152 = vshll.u32 %v8964, 16
  %v9154 = vrot.slane %v9152, 1
  %v9155 = vor.u32 %v9150, %v9154
  %v9157 = vshll.u32 %v8996, 16
  %v9159 = vrot.slane %v9157, 1
  %v9160 = vsel %vm5515, %v9155, %v9159
  %v9162 = vshrl.u32 %v8965, 16
  %v9164 = vshll.u32 %v8965, 16
  %v9166 = vrot.slane %v9164, 1
  %v9167 = vor.u32 %v9162, %v9166
  %v9169 = vshll.u32 %v8997, 16
  %v9171 = vrot.slane %v9169, 1
  %v9172 = vsel %vm5515, %v9167, %v9171
  %v9174 = vshrl.u32 %v8966, 16
  %v9176 = vshll.u32 %v8966, 16
  %v9178 = vrot.slane %v9176, 1
  %v9179 = vor.u32 %v9174, %v9178
  %v9181 = vshll.u32 %v8998, 16
  %v9183 = vrot.slane %v9181, 1
  %v9184 = vsel %vm5515, %v9179, %v9183
  %v9186 = vshrl.u32 %v8967, 16
  %v9188 = vshll.u32 %v8967, 16
  %v9190 = vrot.slane %v9188, 1
  %v9191 = vor.u32 %v9186, %v9190
  %v9193 = vshll.u32 %v8999, 16
  %v9195 = vrot.slane %v9193, 1
  %v9196 = vsel %vm5515, %v9191, %v9195
  %v9198 = vshrl.u32 %v8969, 16
  %v9200 = vshll.u32 %v8969, 16
  %v9202 = vrot.slane %v9200, 1
  %v9203 = vor.u32 %v9198, %v9202
  %v9205 = vshll.u32 %v9001, 16
  %v9207 = vrot.slane %v9205, 1
  %v9208 = vsel %vm5515, %v9203, %v9207
  %v9210 = vshrl.u32 %v8970, 16
  %v9212 = vshll.u32 %v8970, 16
  %v9214 = vrot.slane %v9212, 1
  %v9215 = vor.u32 %v9210, %v9214
  %v9217 = vshll.u32 %v9002, 16
  %v9219 = vrot.slane %v9217, 1
  %v9220 = vsel %vm5515, %v9215, %v9219
  %v9222 = vshrl.u32 %v8971, 16
  %v9224 = vshll.u32 %v8971, 16
  %v9226 = vrot.slane %v9224, 1
  %v9227 = vor.u32 %v9222, %v9226
  %v9229 = vshll.u32 %v9003, 16
  %v9231 = vrot.slane %v9229, 1
  %v9232 = vsel %vm5515, %v9227, %v9231
  %v9234 = vshrl.u32 %v8972, 16
  %v9236 = vshll.u32 %v8972, 16
  %v9238 = vrot.slane %v9236, 1
  %v9239 = vor.u32 %v9234, %v9238
  %v9241 = vshll.u32 %v9004, 16
  %v9243 = vrot.slane %v9241, 1
  %v9244 = vsel %vm5515, %v9239, %v9243
  %v9246 = vshrl.u32 %v8973, 16
  %v9248 = vshll.u32 %v8973, 16
  %v9250 = vrot.slane %v9248, 1
  %v9251 = vor.u32 %v9246, %v9250
  %v9253 = vshll.u32 %v9005, 16
  %v9255 = vrot.slane %v9253, 1
  %v9256 = vsel %vm5515, %v9251, %v9255
  %v9258 = vshrl.u32 %v8974, 16
  %v9260 = vshll.u32 %v8974, 16
  %v9262 = vrot.slane %v9260, 1
  %v9263 = vor.u32 %v9258, %v9262
  %v9265 = vshll.u32 %v9006, 16
  %v9267 = vrot.slane %v9265, 1
  %v9268 = vsel %vm5515, %v9263, %v9267
  %v9270 = vshrl.u32 %v8975, 16
  %v9272 = vshll.u32 %v8975, 16
  %v9274 = vrot.slane %v9272, 1
  %v9275 = vor.u32 %v9270, %v9274
  %v9277 = vshll.u32 %v9007, 16
  %v9279 = vrot.slane %v9277, 1
  %v9280 = vsel %vm5515, %v9275, %v9279
  %v9282 = vshrl.u32 %v8976, 16
  %v9284 = vshll.u32 %v8976, 16
  %v9286 = vrot.slane %v9284, 1
  %v9287 = vor.u32 %v9282, %v9286
  %v9289 = vshll.u32 %v9008, 16
  %v9291 = vrot.slane %v9289, 1
  %v9292 = vsel %vm5515, %v9287, %v9291
  %v9294 = vshrl.u32 %v8977, 16
  %v9296 = vshll.u32 %v8977, 16
  %v9298 = vrot.slane %v9296, 1
  %v9299 = vor.u32 %v9294, %v9298
  %v9301 = vshll.u32 %v9009, 16
  %v9303 = vrot.slane %v9301, 1
  %v9304 = vsel %vm5515, %v9299, %v9303
  %v9306 = vshrl.u32 %v8978, 16
  %v9308 = vshll.u32 %v8978, 16
  %v9310 = vrot.slane %v9308, 1
  %v9311 = vor.u32 %v9306, %v9310
  %v9313 = vshll.u32 %v9010, 16
  %v9315 = vrot.slane %v9313, 1
  %v9316 = vsel %vm5515, %v9311, %v9315
  %v9318 = vshrl.u32 %v8979, 16
  %v9320 = vshll.u32 %v8979, 16
  %v9322 = vrot.slane %v9320, 1
  %v9323 = vor.u32 %v9318, %v9322
  %v9325 = vshll.u32 %v9011, 16
  %v9327 = vrot.slane %v9325, 1
  %v9328 = vsel %vm5515, %v9323, %v9327
  %v9330 = vshrl.u32 %v8980, 16
  %v9332 = vshll.u32 %v8980, 16
  %v9334 = vrot.slane %v9332, 1
  %v9335 = vor.u32 %v9330, %v9334
  %v9337 = vshll.u32 %v9012, 16
  %v9339 = vrot.slane %v9337, 1
  %v9340 = vsel %vm5515, %v9335, %v9339
  %v9342 = vshrl.u32 %v8981, 16
  %v9344 = vshll.u32 %v8981, 16
  %v9346 = vrot.slane %v9344, 1
  %v9347 = vor.u32 %v9342, %v9346
  %v9349 = vshll.u32 %v9013, 16
  %v9351 = vrot.slane %v9349, 1
  %v9352 = vsel %vm5515, %v9347, %v9351
  %v9354 = vshrl.u32 %v8982, 16
  %v9356 = vshll.u32 %v8982, 16
  %v9358 = vrot.slane %v9356, 1
  %v9359 = vor.u32 %v9354, %v9358
  %v9361 = vshll.u32 %v9014, 16
  %v9363 = vrot.slane %v9361, 1
  %v9364 = vsel %vm5515, %v9359, %v9363
  %v9366 = vshrl.u32 %v8983, 16
  %v9368 = vshll.u32 %v8983, 16
  %v9370 = vrot.slane %v9368, 1
  %v9371 = vor.u32 %v9366, %v9370
  %v9373 = vshll.u32 %v9015, 16
  %v9375 = vrot.slane %v9373, 1
  %v9376 = vsel %vm5515, %v9371, %v9375
  %v9467 = vrot.slane %v8953, 1
  %v9468 = vrot.slane %v8985, 1
  %v9469 = vsel %vm5981, %v9467, %v9468
  %v9470 = vrot.slane %v8954, 1
  %v9471 = vrot.slane %v8986, 1
  %v9472 = vsel %vm5981, %v9470, %v9471
  %v9473 = vrot.slane %v8955, 1
  %v9474 = vrot.slane %v8987, 1
  %v9475 = vsel %vm5981, %v9473, %v9474
  %v9476 = vrot.slane %v8956, 1
  %v9477 = vrot.slane %v8988, 1
  %v9478 = vsel %vm5981, %v9476, %v9477
  %v9479 = vrot.slane %v8957, 1
  %v9480 = vrot.slane %v8989, 1
  %v9481 = vsel %vm5981, %v9479, %v9480
  %v9482 = vrot.slane %v8958, 1
  %v9483 = vrot.slane %v8990, 1
  %v9484 = vsel %vm5981, %v9482, %v9483
  %v9485 = vrot.slane %v8959, 1
  %v9486 = vrot.slane %v8991, 1
  %v9487 = vsel %vm5981, %v9485, %v9486
  %v9488 = vrot.slane %v8960, 1
  %v9489 = vrot.slane %v8992, 1
  %v9490 = vsel %vm5981, %v9488, %v9489
  %v9491 = vrot.slane %v8961, 1
  %v9492 = vrot.slane %v8993, 1
  %v9493 = vsel %vm5981, %v9491, %v9492
  %v9494 = vrot.slane %v8962, 1
  %v9495 = vrot.slane %v8994, 1
  %v9496 = vsel %vm5981, %v9494, %v9495
  %v9497 = vrot.slane %v8963, 1
  %v9498 = vrot.slane %v8995, 1
  %v9499 = vsel %vm5981, %v9497, %v9498
  %v9500 = vrot.slane %v8964, 1
  %v9501 = vrot.slane %v8996, 1
  %v9502 = vsel %vm5981, %v9500, %v9501
  %v9503 = vrot.slane %v8965, 1
  %v9504 = vrot.slane %v8997, 1
  %v9505 = vsel %vm5981, %v9503, %v9504
  %v9506 = vrot.slane %v8966, 1
  %v9507 = vrot.slane %v8998, 1
  %v9508 = vsel %vm5981, %v9506, %v9507
  %v9509 = vrot.slane %v8967, 1
  %v9510 = vrot.slane %v8999, 1
  %v9511 = vsel %vm5981, %v9509, %v9510
  %v9512 = vrot.slane %v8969, 1
  %v9513 = vrot.slane %v9001, 1
  %v9514 = vsel %vm5981, %v9512, %v9513
  %v9515 = vrot.slane %v8970, 1
  %v9516 = vrot.slane %v9002, 1
  %v9517 = vsel %vm5981, %v9515, %v9516
  %v9518 = vrot.slane %v8971, 1
  %v9519 = vrot.slane %v9003, 1
  %v9520 = vsel %vm5981, %v9518, %v9519
  %v9521 = vrot.slane %v8972, 1
  %v9522 = vrot.slane %v9004, 1
  %v9523 = vsel %vm5981, %v9521, %v9522
  %v9524 = vrot.slane %v8973, 1
  %v9525 = vrot.slane %v9005, 1
  %v9526 = vsel %vm5981, %v9524, %v9525
  %v9527 = vrot.slane %v8974, 1
  %v9528 = vrot.slane %v9006, 1
  %v9529 = vsel %vm5981, %v9527, %v9528
  %v9530 = vrot.slane %v8975, 1
  %v9531 = vrot.slane %v9007, 1
  %v9532 = vsel %vm5981, %v9530, %v9531
  %v9533 = vrot.slane %v8976, 1
  %v9534 = vrot.slane %v9008, 1
  %v9535 = vsel %vm5981, %v9533, %v9534
  %v9536 = vrot.slane %v8977, 1
  %v9537 = vrot.slane %v9009, 1
  %v9538 = vsel %vm5981, %v9536, %v9537
  %v9539 = vrot.slane %v8978, 1
  %v9540 = vrot.slane %v9010, 1
  %v9541 = vsel %vm5981, %v9539, %v9540
  %v9542 = vrot.slane %v8979, 1
  %v9543 = vrot.slane %v9011, 1
  %v9544 = vsel %vm5981, %v9542, %v9543
  %v9545 = vrot.slane %v8980, 1
  %v9546 = vrot.slane %v9012, 1
  %v9547 = vsel %vm5981, %v9545, %v9546
  %v9548 = vrot.slane %v8981, 1
  %v9549 = vrot.slane %v9013, 1
  %v9550 = vsel %vm5981, %v9548, %v9549
  %v9551 = vrot.slane %v8982, 1
  %v9552 = vrot.slane %v9014, 1
  %v9553 = vsel %vm5981, %v9551, %v9552
  %v9554 = vrot.slane %v8983, 1
  %v9555 = vrot.slane %v9015, 1
  %v9556 = vsel %vm5981, %v9554, %v9555
  %v9588 = vshrl.u32 %v8968, 16
  %v9590 = vshll.u32 %v8968, 16
  %v9592 = vrot.slane %v9590, 1
  %v9593 = vor.u32 %v9588, %v9592
  %v9595 = vshll.u32 %v9000, 16
  %v9597 = vrot.slane %v9595, 1
  %v9598 = vsel %vm5515, %v9593, %v9597
  %v9600 = vshrl.u32 %v8984, 16
  %v9602 = vshll.u32 %v8984, 16
  %v9604 = vrot.slane %v9602, 1
  %v9605 = vor.u32 %v9600, %v9604
  %v9607 = vshll.u32 %v9016, 16
  %v9609 = vrot.slane %v9607, 1
  %v9610 = vsel %vm5515, %v9605, %v9609
  %v9617 = vrot.slane %v8968, 1
  %v9618 = vrot.slane %v9000, 1
  %v9619 = vsel %vm5981, %v9617, %v9618
  %v9620 = vrot.slane %v8984, 1
  %v9621 = vrot.slane %v9016, 1
  %v9622 = vsel %vm5981, %v9620, %v9621
  %v9625 = vld [vmem:[%s17] sm:$0xf]
  %v9626 = vld [vmem:[%s17 + $0x4] sm:$0xf]
  %v9627 = vld [vmem:[%s17 + $0x8] sm:$0xf]
  %v9628 = vld [vmem:[%s17 + $0xc] sm:$0xf]
  %v9629 = vld [vmem:[%s17 + $0x10] sm:$0xf]
  %v9630 = vld [vmem:[%s17 + $0x14] sm:$0xf]
  %v9631 = vld [vmem:[%s17 + $0x18] sm:$0xf]
  %v9632 = vld [vmem:[%s17 + $0x1c] sm:$0xf]
  %v9633 = vld [vmem:[%s17 + $0x20] sm:$0xf]
  %v9634 = vld [vmem:[%s17 + $0x24] sm:$0xf]
  %v9635 = vld [vmem:[%s17 + $0x28] sm:$0xf]
  %v9636 = vld [vmem:[%s17 + $0x2c] sm:$0xf]
  %v9637 = vld [vmem:[%s17 + $0x30] sm:$0xf]
  %v9638 = vld [vmem:[%s17 + $0x34] sm:$0xf]
  %v9639 = vld [vmem:[%s17 + $0x38] sm:$0xf]
  %v9640 = vld [vmem:[%s17 + $0x3c] sm:$0xf]
  %v9641 = vld [vmem:[%s17 + $0x40] sm:$0xf]
  %v9642 = vld [vmem:[%s17 + $0x44] sm:$0xf]
  %v9643 = vld [vmem:[%s17 + $0x48] sm:$0xf]
  %v9644 = vld [vmem:[%s17 + $0x4c] sm:$0xf]
  %v9645 = vld [vmem:[%s17 + $0x50] sm:$0xf]
  %v9646 = vld [vmem:[%s17 + $0x54] sm:$0xf]
  %v9647 = vld [vmem:[%s17 + $0x58] sm:$0xf]
  %v9648 = vld [vmem:[%s17 + $0x5c] sm:$0xf]
  %v9649 = vld [vmem:[%s17 + $0x60] sm:$0xf]
  %v9650 = vld [vmem:[%s17 + $0x64] sm:$0xf]
  %v9651 = vld [vmem:[%s17 + $0x68] sm:$0xf]
  %v9652 = vld [vmem:[%s17 + $0x6c] sm:$0xf]
  %v9653 = vld [vmem:[%s17 + $0x70] sm:$0xf]
  %v9654 = vld [vmem:[%s17 + $0x74] sm:$0xf]
  %v9655 = vld [vmem:[%s17 + $0x78] sm:$0xf]
  %v9656 = vld [vmem:[%s17 + $0x7c] sm:$0xf]
  %v9657 = vld [vmem:[%s17 + $0x80] sm:$0xf]
  %v9658 = vld [vmem:[%s17 + $0x84] sm:$0xf]
  %v9659 = vld [vmem:[%s17 + $0x88] sm:$0xf]
  %v9660 = vld [vmem:[%s17 + $0x8c] sm:$0xf]
  %v9661 = vld [vmem:[%s17 + $0x90] sm:$0xf]
  %v9662 = vld [vmem:[%s17 + $0x94] sm:$0xf]
  %v9663 = vld [vmem:[%s17 + $0x98] sm:$0xf]
  %v9664 = vld [vmem:[%s17 + $0x9c] sm:$0xf]
  %v9665 = vld [vmem:[%s17 + $0xa0] sm:$0xf]
  %v9666 = vld [vmem:[%s17 + $0xa4] sm:$0xf]
  %v9667 = vld [vmem:[%s17 + $0xa8] sm:$0xf]
  %v9668 = vld [vmem:[%s17 + $0xac] sm:$0xf]
  %v9669 = vld [vmem:[%s17 + $0xb0] sm:$0xf]
  %v9670 = vld [vmem:[%s17 + $0xb4] sm:$0xf]
  %v9671 = vld [vmem:[%s17 + $0xb8] sm:$0xf]
  %v9672 = vld [vmem:[%s17 + $0xbc] sm:$0xf]
  %v9673 = vld [vmem:[%s17 + $0xc0] sm:$0xf]
  %v9674 = vld [vmem:[%s17 + $0xc4] sm:$0xf]
  %v9675 = vld [vmem:[%s17 + $0xc8] sm:$0xf]
  %v9676 = vld [vmem:[%s17 + $0xcc] sm:$0xf]
  %v9677 = vld [vmem:[%s17 + $0xd0] sm:$0xf]
  %v9678 = vld [vmem:[%s17 + $0xd4] sm:$0xf]
  %v9679 = vld [vmem:[%s17 + $0xd8] sm:$0xf]
  %v9680 = vld [vmem:[%s17 + $0xdc] sm:$0xf]
  %v9681 = vld [vmem:[%s17 + $0xe0] sm:$0xf]
  %v9682 = vld [vmem:[%s17 + $0xe4] sm:$0xf]
  %v9683 = vld [vmem:[%s17 + $0xe8] sm:$0xf]
  %v9684 = vld [vmem:[%s17 + $0xec] sm:$0xf]
  %v9685 = vld [vmem:[%s17 + $0xf0] sm:$0xf]
  %v9686 = vld [vmem:[%s17 + $0xf4] sm:$0xf]
  %v9687 = vld [vmem:[%s17 + $0xf8] sm:$0xf]
  %v9688 = vld [vmem:[%s17 + $0xfc] sm:$0xf]
  %v9689 = vld [vmem:[%s17 + $0x100] sm:$0xf]
  %v9690 = vld [vmem:[%s17 + $0x104] sm:$0xf]
  %v9691 = vld [vmem:[%s17 + $0x108] sm:$0xf]
  %v9692 = vld [vmem:[%s17 + $0x10c] sm:$0xf]
  %v9693 = vld [vmem:[%s17 + $0x110] sm:$0xf]
  %v9694 = vld [vmem:[%s17 + $0x114] sm:$0xf]
  %v9695 = vld [vmem:[%s17 + $0x118] sm:$0xf]
  %v9696 = vld [vmem:[%s17 + $0x11c] sm:$0xf]
  %v9697 = vld [vmem:[%s17 + $0x120] sm:$0xf]
  %v9698 = vld [vmem:[%s17 + $0x124] sm:$0xf]
  %v9699 = vld [vmem:[%s17 + $0x128] sm:$0xf]
  %v9700 = vld [vmem:[%s17 + $0x12c] sm:$0xf]
  %v9701 = vld [vmem:[%s17 + $0x130] sm:$0xf]
  %v9702 = vld [vmem:[%s17 + $0x134] sm:$0xf]
  %v9703 = vld [vmem:[%s17 + $0x138] sm:$0xf]
  %v9704 = vld [vmem:[%s17 + $0x13c] sm:$0xf]
  %v9705 = vld [vmem:[%s17 + $0x140] sm:$0xf]
  %v9706 = vld [vmem:[%s17 + $0x144] sm:$0xf]
  %v9707 = vld [vmem:[%s17 + $0x148] sm:$0xf]
  %v9708 = vld [vmem:[%s17 + $0x14c] sm:$0xf]
  %v9709 = vld [vmem:[%s17 + $0x150] sm:$0xf]
  %v9710 = vld [vmem:[%s17 + $0x154] sm:$0xf]
  %v9711 = vld [vmem:[%s17 + $0x158] sm:$0xf]
  %v9712 = vld [vmem:[%s17 + $0x15c] sm:$0xf]
  %v9713 = vld [vmem:[%s17 + $0x160] sm:$0xf]
  %v9714 = vld [vmem:[%s17 + $0x164] sm:$0xf]
  %v9715 = vld [vmem:[%s17 + $0x168] sm:$0xf]
  %v9716 = vld [vmem:[%s17 + $0x16c] sm:$0xf]
  %v9717 = vld [vmem:[%s17 + $0x170] sm:$0xf]
  %v9718 = vld [vmem:[%s17 + $0x174] sm:$0xf]
  %v9719 = vld [vmem:[%s17 + $0x178] sm:$0xf]
  %v9720 = vld [vmem:[%s17 + $0x17c] sm:$0xf]
  %v9721 = vld [vmem:[%s17 + $0x180] sm:$0xf]
  %v9722 = vld [vmem:[%s17 + $0x184] sm:$0xf]
  %v9723 = vld [vmem:[%s17 + $0x188] sm:$0xf]
  %v9724 = vld [vmem:[%s17 + $0x18c] sm:$0xf]
  %v9725 = vld [vmem:[%s17 + $0x190] sm:$0xf]
  %v9726 = vld [vmem:[%s17 + $0x194] sm:$0xf]
  %v9727 = vld [vmem:[%s17 + $0x198] sm:$0xf]
  %v9728 = vld [vmem:[%s17 + $0x19c] sm:$0xf]
  %v9729 = vld [vmem:[%s17 + $0x1a0] sm:$0xf]
  %v9730 = vld [vmem:[%s17 + $0x1a4] sm:$0xf]
  %v9731 = vld [vmem:[%s17 + $0x1a8] sm:$0xf]
  %v9732 = vld [vmem:[%s17 + $0x1ac] sm:$0xf]
  %v9733 = vld [vmem:[%s17 + $0x1b0] sm:$0xf]
  %v9734 = vld [vmem:[%s17 + $0x1b4] sm:$0xf]
  %v9735 = vld [vmem:[%s17 + $0x1b8] sm:$0xf]
  %v9736 = vld [vmem:[%s17 + $0x1bc] sm:$0xf]
  %v9737 = vld [vmem:[%s17 + $0x1c0] sm:$0xf]
  %v9738 = vld [vmem:[%s17 + $0x1c4] sm:$0xf]
  %v9739 = vld [vmem:[%s17 + $0x1c8] sm:$0xf]
  %v9740 = vld [vmem:[%s17 + $0x1cc] sm:$0xf]
  %v9741 = vld [vmem:[%s17 + $0x1d0] sm:$0xf]
  %v9742 = vld [vmem:[%s17 + $0x1d4] sm:$0xf]
  %v9743 = vld [vmem:[%s17 + $0x1d8] sm:$0xf]
  %v9744 = vld [vmem:[%s17 + $0x1dc] sm:$0xf]
  %v9745 = vld [vmem:[%s17 + $0x1e0] sm:$0xf]
  %v9746 = vld [vmem:[%s17 + $0x1e4] sm:$0xf]
  %v9747 = vld [vmem:[%s17 + $0x1e8] sm:$0xf]
  %v9748 = vld [vmem:[%s17 + $0x1ec] sm:$0xf]
  %v9749 = vld [vmem:[%s17 + $0x1f0] sm:$0xf]
  %v9750 = vld [vmem:[%s17 + $0x1f4] sm:$0xf]
  %v9751 = vld [vmem:[%s17 + $0x1f8] sm:$0xf]
  %v9752 = vld [vmem:[%s17 + $0x1fc] sm:$0xf]
  %v9753 = vld [vmem:[%s17 + $0x200] sm:$0xf]
  %v9754 = vld [vmem:[%s17 + $0x204] sm:$0xf]
  %v9755 = vld [vmem:[%s17 + $0x208] sm:$0xf]
  %v9756 = vld [vmem:[%s17 + $0x20c] sm:$0xf]
  %v9757 = vld [vmem:[%s17 + $0x210] sm:$0xf]
  %v9758 = vld [vmem:[%s17 + $0x214] sm:$0xf]
  %v9759 = vld [vmem:[%s17 + $0x218] sm:$0xf]
  %v9760 = vld [vmem:[%s17 + $0x21c] sm:$0xf]
  %v9761 = vld [vmem:[%s17 + $0x220] sm:$0xf]
  %v9762 = vld [vmem:[%s17 + $0x224] sm:$0xf]
  %v9763 = vld [vmem:[%s17 + $0x228] sm:$0xf]
  %v9764 = vld [vmem:[%s17 + $0x22c] sm:$0xf]
  %v9765 = vld [vmem:[%s17 + $0x230] sm:$0xf]
  %v9766 = vld [vmem:[%s17 + $0x234] sm:$0xf]
  %v9767 = vld [vmem:[%s17 + $0x238] sm:$0xf]
  %v9768 = vld [vmem:[%s17 + $0x23c] sm:$0xf]
  %v9913 = vunpack.c.l.b16 %v9625
  %v9914 = vunpack.c.l.b16 %v9626
  %v9915 = vunpack.c.l.b16 %v9627
  %v9916 = vunpack.c.l.b16 %v9628
  %v9917 = vunpack.c.l.b16 %v9629
  %v9918 = vunpack.c.l.b16 %v9630
  %v9919 = vunpack.c.l.b16 %v9631
  %v9920 = vunpack.c.l.b16 %v9632
  %v9921 = vunpack.c.l.b16 %v9633
  %v9922 = vunpack.c.l.b16 %v9634
  %v9923 = vunpack.c.l.b16 %v9635
  %v9924 = vunpack.c.l.b16 %v9636
  %v9925 = vunpack.c.l.b16 %v9637
  %v9926 = vunpack.c.l.b16 %v9638
  %v9927 = vunpack.c.l.b16 %v9639
  %v9928 = vunpack.c.l.b16 %v9640
  %v9929 = vunpack.c.l.b16 %v9641
  %v9930 = vunpack.c.l.b16 %v9642
  %v9931 = vunpack.c.l.b16 %v9643
  %v9932 = vunpack.c.l.b16 %v9644
  %v9933 = vunpack.c.l.b16 %v9645
  %v9934 = vunpack.c.l.b16 %v9646
  %v9935 = vunpack.c.l.b16 %v9647
  %v9936 = vunpack.c.l.b16 %v9648
  %v9937 = vunpack.c.l.b16 %v9649
  %v9938 = vunpack.c.l.b16 %v9650
  %v9939 = vunpack.c.l.b16 %v9651
  %v9940 = vunpack.c.l.b16 %v9652
  %v9941 = vunpack.c.l.b16 %v9653
  %v9942 = vunpack.c.l.b16 %v9654
  %v9943 = vunpack.c.l.b16 %v9655
  %v9944 = vunpack.c.l.b16 %v9656
  %v9945 = vunpack.c.l.b16 %v9657
  %v9946 = vunpack.c.l.b16 %v9658
  %v9947 = vunpack.c.l.b16 %v9659
  %v9948 = vunpack.c.l.b16 %v9660
  %v9949 = vunpack.c.l.b16 %v9661
  %v9950 = vunpack.c.l.b16 %v9662
  %v9951 = vunpack.c.l.b16 %v9663
  %v9952 = vunpack.c.l.b16 %v9664
  %v9953 = vunpack.c.l.b16 %v9665
  %v9954 = vunpack.c.l.b16 %v9666
  %v9955 = vunpack.c.l.b16 %v9667
  %v9956 = vunpack.c.l.b16 %v9668
  %v9957 = vunpack.c.l.b16 %v9669
  %v9958 = vunpack.c.l.b16 %v9670
  %v9959 = vunpack.c.l.b16 %v9671
  %v9960 = vunpack.c.l.b16 %v9672
  %v9961 = vunpack.c.l.b16 %v9673
  %v9962 = vunpack.c.l.b16 %v9674
  %v9963 = vunpack.c.l.b16 %v9675
  %v9964 = vunpack.c.l.b16 %v9676
  %v9965 = vunpack.c.l.b16 %v9677
  %v9966 = vunpack.c.l.b16 %v9678
  %v9967 = vunpack.c.l.b16 %v9679
  %v9968 = vunpack.c.l.b16 %v9680
  %v9969 = vunpack.c.l.b16 %v9681
  %v9970 = vunpack.c.l.b16 %v9682
  %v9971 = vunpack.c.l.b16 %v9683
  %v9972 = vunpack.c.l.b16 %v9684
  %v9973 = vunpack.c.l.b16 %v9685
  %v9974 = vunpack.c.l.b16 %v9686
  %v9975 = vunpack.c.l.b16 %v9687
  %v9976 = vunpack.c.l.b16 %v9688
  %v9977 = vunpack.c.l.b16 %v9689
  %v9978 = vunpack.c.l.b16 %v9690
  %v9979 = vunpack.c.l.b16 %v9691
  %v9980 = vunpack.c.l.b16 %v9692
  %v9981 = vunpack.c.l.b16 %v9693
  %v9982 = vunpack.c.l.b16 %v9694
  %v9983 = vunpack.c.l.b16 %v9695
  %v9984 = vunpack.c.l.b16 %v9696
  %v9985 = vunpack.c.l.b16 %v9697
  %v9986 = vunpack.c.l.b16 %v9698
  %v9987 = vunpack.c.l.b16 %v9699
  %v9988 = vunpack.c.l.b16 %v9700
  %v9989 = vunpack.c.l.b16 %v9701
  %v9990 = vunpack.c.l.b16 %v9702
  %v9991 = vunpack.c.l.b16 %v9703
  %v9992 = vunpack.c.l.b16 %v9704
  %v9993 = vunpack.c.l.b16 %v9705
  %v9994 = vunpack.c.l.b16 %v9706
  %v9995 = vunpack.c.l.b16 %v9707
  %v9996 = vunpack.c.l.b16 %v9708
  %v9997 = vunpack.c.l.b16 %v9709
  %v9998 = vunpack.c.l.b16 %v9710
  %v9999 = vunpack.c.l.b16 %v9711
  %v10000 = vunpack.c.l.b16 %v9712
  %v10001 = vunpack.c.l.b16 %v9713
  %v10002 = vunpack.c.l.b16 %v9714
  %v10003 = vunpack.c.l.b16 %v9715
  %v10004 = vunpack.c.l.b16 %v9716
  %v10005 = vunpack.c.l.b16 %v9717
  %v10006 = vunpack.c.l.b16 %v9718
  %v10007 = vunpack.c.l.b16 %v9719
  %v10008 = vunpack.c.l.b16 %v9720
  %v10009 = vunpack.c.l.b16 %v9721
  %v10010 = vunpack.c.l.b16 %v9722
  %v10011 = vunpack.c.l.b16 %v9723
  %v10012 = vunpack.c.l.b16 %v9724
  %v10013 = vunpack.c.l.b16 %v9725
  %v10014 = vunpack.c.l.b16 %v9726
  %v10015 = vunpack.c.l.b16 %v9727
  %v10016 = vunpack.c.l.b16 %v9728
  %v10017 = vunpack.c.l.b16 %v9729
  %v10018 = vunpack.c.l.b16 %v9730
  %v10019 = vunpack.c.l.b16 %v9731
  %v10020 = vunpack.c.l.b16 %v9732
  %v10021 = vunpack.c.l.b16 %v9733
  %v10022 = vunpack.c.l.b16 %v9734
  %v10023 = vunpack.c.l.b16 %v9735
  %v10024 = vunpack.c.l.b16 %v9736
  %v10025 = vunpack.c.l.b16 %v9737
  %v10026 = vunpack.c.l.b16 %v9738
  %v10027 = vunpack.c.l.b16 %v9739
  %v10028 = vunpack.c.l.b16 %v9740
  %v10029 = vunpack.c.l.b16 %v9741
  %v10030 = vunpack.c.l.b16 %v9742
  %v10031 = vunpack.c.l.b16 %v9743
  %v10032 = vunpack.c.l.b16 %v9744
  %v10033 = vunpack.c.l.b16 %v9745
  %v10034 = vunpack.c.l.b16 %v9746
  %v10035 = vunpack.c.l.b16 %v9747
  %v10036 = vunpack.c.l.b16 %v9748
  %v10037 = vunpack.c.l.b16 %v9749
  %v10038 = vunpack.c.l.b16 %v9750
  %v10039 = vunpack.c.l.b16 %v9751
  %v10040 = vunpack.c.l.b16 %v9752
  %v10041 = vunpack.c.l.b16 %v9753
  %v10042 = vunpack.c.l.b16 %v9754
  %v10043 = vunpack.c.l.b16 %v9755
  %v10044 = vunpack.c.l.b16 %v9756
  %v10045 = vunpack.c.l.b16 %v9757
  %v10046 = vunpack.c.l.b16 %v9758
  %v10047 = vunpack.c.l.b16 %v9759
  %v10048 = vunpack.c.l.b16 %v9760
  %v10049 = vunpack.c.l.b16 %v9761
  %v10050 = vunpack.c.l.b16 %v9762
  %v10051 = vunpack.c.l.b16 %v9763
  %v10052 = vunpack.c.l.b16 %v9764
  %v10053 = vunpack.c.l.b16 %v9765
  %v10054 = vunpack.c.l.b16 %v9766
  %v10055 = vunpack.c.l.b16 %v9767
  %v10056 = vunpack.c.l.b16 %v9768
  %v10057 = vpack.c.b16 %v9914, %v9913
  %v10058 = vpack.c.b16 %v9916, %v9915
  %v10059 = vpack.c.b16 %v9918, %v9917
  %v10060 = vpack.c.b16 %v9920, %v9919
  %v10061 = vpack.c.b16 %v9922, %v9921
  %v10062 = vpack.c.b16 %v9924, %v9923
  %v10063 = vpack.c.b16 %v9926, %v9925
  %v10064 = vpack.c.b16 %v9928, %v9927
  %v10065 = vpack.c.b16 %v9930, %v9929
  %v10066 = vpack.c.b16 %v9932, %v9931
  %v10067 = vpack.c.b16 %v9934, %v9933
  %v10068 = vpack.c.b16 %v9936, %v9935
  %v10069 = vpack.c.b16 %v9938, %v9937
  %v10070 = vpack.c.b16 %v9940, %v9939
  %v10071 = vpack.c.b16 %v9942, %v9941
  %v10072 = vpack.c.b16 %v9944, %v9943
  %v10073 = vpack.c.b16 %v9946, %v9945
  %v10074 = vpack.c.b16 %v9948, %v9947
  %v10075 = vpack.c.b16 %v9950, %v9949
  %v10076 = vpack.c.b16 %v9952, %v9951
  %v10077 = vpack.c.b16 %v9954, %v9953
  %v10078 = vpack.c.b16 %v9956, %v9955
  %v10079 = vpack.c.b16 %v9958, %v9957
  %v10080 = vpack.c.b16 %v9960, %v9959
  %v10081 = vpack.c.b16 %v9962, %v9961
  %v10082 = vpack.c.b16 %v9964, %v9963
  %v10083 = vpack.c.b16 %v9966, %v9965
  %v10084 = vpack.c.b16 %v9968, %v9967
  %v10085 = vpack.c.b16 %v9970, %v9969
  %v10086 = vpack.c.b16 %v9972, %v9971
  %v10087 = vpack.c.b16 %v9974, %v9973
  %v10088 = vpack.c.b16 %v9976, %v9975
  %v10089 = vpack.c.b16 %v9978, %v9977
  %v10090 = vpack.c.b16 %v9980, %v9979
  %v10091 = vpack.c.b16 %v9982, %v9981
  %v10092 = vpack.c.b16 %v9984, %v9983
  %v10093 = vpack.c.b16 %v9986, %v9985
  %v10094 = vpack.c.b16 %v9988, %v9987
  %v10095 = vpack.c.b16 %v9990, %v9989
  %v10096 = vpack.c.b16 %v9992, %v9991
  %v10097 = vpack.c.b16 %v9994, %v9993
  %v10098 = vpack.c.b16 %v9996, %v9995
  %v10099 = vpack.c.b16 %v9998, %v9997
  %v10100 = vpack.c.b16 %v10000, %v9999
  %v10101 = vpack.c.b16 %v10002, %v10001
  %v10102 = vpack.c.b16 %v10004, %v10003
  %v10103 = vpack.c.b16 %v10006, %v10005
  %v10104 = vpack.c.b16 %v10008, %v10007
  %v10105 = vpack.c.b16 %v10010, %v10009
  %v10106 = vpack.c.b16 %v10012, %v10011
  %v10107 = vpack.c.b16 %v10014, %v10013
  %v10108 = vpack.c.b16 %v10016, %v10015
  %v10109 = vpack.c.b16 %v10018, %v10017
  %v10110 = vpack.c.b16 %v10020, %v10019
  %v10111 = vpack.c.b16 %v10022, %v10021
  %v10112 = vpack.c.b16 %v10024, %v10023
  %v10113 = vpack.c.b16 %v10026, %v10025
  %v10114 = vpack.c.b16 %v10028, %v10027
  %v10115 = vpack.c.b16 %v10030, %v10029
  %v10116 = vpack.c.b16 %v10032, %v10031
  %v10117 = vpack.c.b16 %v10034, %v10033
  %v10118 = vpack.c.b16 %v10036, %v10035
  %v10119 = vpack.c.b16 %v10038, %v10037
  %v10120 = vpack.c.b16 %v10040, %v10039
  %v10121 = vpack.c.b16 %v10042, %v10041
  %v10122 = vpack.c.b16 %v10044, %v10043
  %v10123 = vpack.c.b16 %v10046, %v10045
  %v10124 = vpack.c.b16 %v10048, %v10047
  %v10125 = vpack.c.b16 %v10050, %v10049
  %v10126 = vpack.c.b16 %v10052, %v10051
  %v10127 = vpack.c.b16 %v10054, %v10053
  %v10128 = vpack.c.b16 %v10056, %v10055
  %10201 = vmatpush.bf16.msra.mxu0 %v10064
  %10202 = vmatpush.bf16.msra.mxu0 %v10063
  %10203 = vmatpush.bf16.msra.mxu0 %v10062
  %10204 = vmatpush.bf16.msra.mxu0 %v10061
  %10205 = vmatpush.bf16.msra.mxu0 %v10060
  %10206 = vmatpush.bf16.msra.mxu0 %v10059
  %10207 = vmatpush.bf16.msra.mxu0 %v10058
  %10208 = vmatpush.bf16.msra.mxu0 %v10057
  %10209 = vmatmul.bf16.gmra.mxu0 %v974
  %v10210 = vpop.f32.mrf.mxu0
  %v10211 = vadd.f32 0.0, %v10210
  %v10212 = vpop.f32.mrf.mxu0
  %v10213 = vadd.f32 0.0, %v10212
  %10214 = vmatmul.bf16.gmra.mxu0 %v8953
  %v10215 = vpop.f32.mrf.mxu0
  %v10216 = vadd.f32 0.0, %v10215
  %v10217 = vpop.f32.mrf.mxu0
  %v10218 = vadd.f32 0.0, %v10217
  %10219 = vmatmul.bf16.gmra.mxu0 %v8954
  %v10220 = vpop.f32.mrf.mxu0
  %v10221 = vadd.f32 0.0, %v10220
  %v10222 = vpop.f32.mrf.mxu0
  %v10223 = vadd.f32 0.0, %v10222
  %10224 = vmatmul.bf16.gmra.mxu0 %v8955
  %v10225 = vpop.f32.mrf.mxu0
  %v10226 = vadd.f32 0.0, %v10225
  %v10227 = vpop.f32.mrf.mxu0
  %v10228 = vadd.f32 0.0, %v10227
  %10229 = vmatmul.bf16.gmra.mxu0 %v8956
  %v10230 = vpop.f32.mrf.mxu0
  %v10231 = vadd.f32 0.0, %v10230
  %v10232 = vpop.f32.mrf.mxu0
  %v10233 = vadd.f32 0.0, %v10232
  %10234 = vmatmul.bf16.gmra.mxu0 %v8957
  %v10235 = vpop.f32.mrf.mxu0
  %v10236 = vadd.f32 0.0, %v10235
  %v10237 = vpop.f32.mrf.mxu0
  %v10238 = vadd.f32 0.0, %v10237
  %10239 = vmatmul.bf16.gmra.mxu0 %v8958
  %v10240 = vpop.f32.mrf.mxu0
  %v10241 = vadd.f32 0.0, %v10240
  %v10242 = vpop.f32.mrf.mxu0
  %v10243 = vadd.f32 0.0, %v10242
  %10244 = vmatmul.bf16.gmra.mxu0 %v8959
  %v10245 = vpop.f32.mrf.mxu0
  %v10246 = vadd.f32 0.0, %v10245
  %v10247 = vpop.f32.mrf.mxu0
  %v10248 = vadd.f32 0.0, %v10247
  %10249 = vmatmul.bf16.gmra.mxu0 %v8960
  %v10250 = vpop.f32.mrf.mxu0
  %v10251 = vadd.f32 0.0, %v10250
  %v10252 = vpop.f32.mrf.mxu0
  %v10253 = vadd.f32 0.0, %v10252
  %10254 = vmatmul.bf16.gmra.mxu0 %v8961
  %v10255 = vpop.f32.mrf.mxu0
  %v10256 = vadd.f32 0.0, %v10255
  %v10257 = vpop.f32.mrf.mxu0
  %v10258 = vadd.f32 0.0, %v10257
  %10259 = vmatmul.bf16.gmra.mxu0 %v8962
  %v10260 = vpop.f32.mrf.mxu0
  %v10261 = vadd.f32 0.0, %v10260
  %v10262 = vpop.f32.mrf.mxu0
  %v10263 = vadd.f32 0.0, %v10262
  %10264 = vmatmul.bf16.gmra.mxu0 %v8963
  %v10265 = vpop.f32.mrf.mxu0
  %v10266 = vadd.f32 0.0, %v10265
  %v10267 = vpop.f32.mrf.mxu0
  %v10268 = vadd.f32 0.0, %v10267
  %10269 = vmatmul.bf16.gmra.mxu0 %v8964
  %v10270 = vpop.f32.mrf.mxu0
  %v10271 = vadd.f32 0.0, %v10270
  %v10272 = vpop.f32.mrf.mxu0
  %v10273 = vadd.f32 0.0, %v10272
  %10274 = vmatmul.bf16.gmra.mxu0 %v8965
  %v10275 = vpop.f32.mrf.mxu0
  %v10276 = vadd.f32 0.0, %v10275
  %v10277 = vpop.f32.mrf.mxu0
  %v10278 = vadd.f32 0.0, %v10277
  %10279 = vmatmul.bf16.gmra.mxu0 %v8966
  %v10280 = vpop.f32.mrf.mxu0
  %v10281 = vadd.f32 0.0, %v10280
  %v10282 = vpop.f32.mrf.mxu0
  %v10283 = vadd.f32 0.0, %v10282
  %10284 = vmatmul.bf16.gmra.mxu0 %v8967
  %v10285 = vpop.f32.mrf.mxu0
  %v10286 = vadd.f32 0.0, %v10285
  %v10287 = vpop.f32.mrf.mxu0
  %v10288 = vadd.f32 0.0, %v10287
  %10289 = vmatmul.bf16.gmra.mxu0 %v974
  %v10290 = vpop.f32.mrf.mxu0
  %v10291 = vadd.f32 0.0, %v10290
  %v10292 = vpop.f32.mrf.mxu0
  %v10293 = vadd.f32 0.0, %v10292
  %10294 = vmatmul.bf16.gmra.mxu0 %v8969
  %v10295 = vpop.f32.mrf.mxu0
  %v10296 = vadd.f32 0.0, %v10295
  %v10297 = vpop.f32.mrf.mxu0
  %v10298 = vadd.f32 0.0, %v10297
  %10299 = vmatmul.bf16.gmra.mxu0 %v8970
  %v10300 = vpop.f32.mrf.mxu0
  %v10301 = vadd.f32 0.0, %v10300
  %v10302 = vpop.f32.mrf.mxu0
  %v10303 = vadd.f32 0.0, %v10302
  %10304 = vmatmul.bf16.gmra.mxu0 %v8971
  %v10305 = vpop.f32.mrf.mxu0
  %v10306 = vadd.f32 0.0, %v10305
  %v10307 = vpop.f32.mrf.mxu0
  %v10308 = vadd.f32 0.0, %v10307
  %10309 = vmatmul.bf16.gmra.mxu0 %v8972
  %v10310 = vpop.f32.mrf.mxu0
  %v10311 = vadd.f32 0.0, %v10310
  %v10312 = vpop.f32.mrf.mxu0
  %v10313 = vadd.f32 0.0, %v10312
  %10314 = vmatmul.bf16.gmra.mxu0 %v8973
  %v10315 = vpop.f32.mrf.mxu0
  %v10316 = vadd.f32 0.0, %v10315
  %v10317 = vpop.f32.mrf.mxu0
  %v10318 = vadd.f32 0.0, %v10317
  %10319 = vmatmul.bf16.gmra.mxu0 %v8974
  %v10320 = vpop.f32.mrf.mxu0
  %v10321 = vadd.f32 0.0, %v10320
  %v10322 = vpop.f32.mrf.mxu0
  %v10323 = vadd.f32 0.0, %v10322
  %10324 = vmatmul.bf16.gmra.mxu0 %v8975
  %v10325 = vpop.f32.mrf.mxu0
  %v10326 = vadd.f32 0.0, %v10325
  %v10327 = vpop.f32.mrf.mxu0
  %v10328 = vadd.f32 0.0, %v10327
  %10329 = vmatmul.bf16.gmra.mxu0 %v8976
  %v10330 = vpop.f32.mrf.mxu0
  %v10331 = vadd.f32 0.0, %v10330
  %v10332 = vpop.f32.mrf.mxu0
  %v10333 = vadd.f32 0.0, %v10332
  %10334 = vmatmul.bf16.gmra.mxu0 %v8977
  %v10335 = vpop.f32.mrf.mxu0
  %v10336 = vadd.f32 0.0, %v10335
  %v10337 = vpop.f32.mrf.mxu0
  %v10338 = vadd.f32 0.0, %v10337
  %10339 = vmatmul.bf16.gmra.mxu0 %v8978
  %v10340 = vpop.f32.mrf.mxu0
  %v10341 = vadd.f32 0.0, %v10340
  %v10342 = vpop.f32.mrf.mxu0
  %v10343 = vadd.f32 0.0, %v10342
  %10344 = vmatmul.bf16.gmra.mxu0 %v8979
  %v10345 = vpop.f32.mrf.mxu0
  %v10346 = vadd.f32 0.0, %v10345
  %v10347 = vpop.f32.mrf.mxu0
  %v10348 = vadd.f32 0.0, %v10347
  %10349 = vmatmul.bf16.gmra.mxu0 %v8980
  %v10350 = vpop.f32.mrf.mxu0
  %v10351 = vadd.f32 0.0, %v10350
  %v10352 = vpop.f32.mrf.mxu0
  %v10353 = vadd.f32 0.0, %v10352
  %10354 = vmatmul.bf16.gmra.mxu0 %v8981
  %v10355 = vpop.f32.mrf.mxu0
  %v10356 = vadd.f32 0.0, %v10355
  %v10357 = vpop.f32.mrf.mxu0
  %v10358 = vadd.f32 0.0, %v10357
  %10359 = vmatmul.bf16.gmra.mxu0 %v8982
  %v10360 = vpop.f32.mrf.mxu0
  %v10361 = vadd.f32 0.0, %v10360
  %v10362 = vpop.f32.mrf.mxu0
  %v10363 = vadd.f32 0.0, %v10362
  %10364 = vmatmul.bf16.gmra.mxu0 %v8983
  %v10365 = vpop.f32.mrf.mxu0
  %v10366 = vadd.f32 0.0, %v10365
  %v10367 = vpop.f32.mrf.mxu0
  %v10368 = vadd.f32 0.0, %v10367
  %10369 = vdwg.mxu0
  %10370 = vmatpush.bf16.msra.mxu0 %v10072
  %10371 = vmatpush.bf16.msra.mxu0 %v10071
  %10372 = vmatpush.bf16.msra.mxu0 %v10070
  %10373 = vmatpush.bf16.msra.mxu0 %v10069
  %10374 = vmatpush.bf16.msra.mxu0 %v10068
  %10375 = vmatpush.bf16.msra.mxu0 %v10067
  %10376 = vmatpush.bf16.msra.mxu0 %v10066
  %10377 = vmatpush.bf16.msra.mxu0 %v10065
  %10378 = vmatmul.bf16.gmra.mxu0 %v5527
  %v10379 = vpop.f32.mrf.mxu0
  %v10380 = vadd.f32 %v10211, %v10379
  %v10381 = vpop.f32.mrf.mxu0
  %v10382 = vadd.f32 %v10213, %v10381
  %10383 = vmatmul.bf16.gmra.mxu0 %v9028
  %v10384 = vpop.f32.mrf.mxu0
  %v10385 = vadd.f32 %v10216, %v10384
  %v10386 = vpop.f32.mrf.mxu0
  %v10387 = vadd.f32 %v10218, %v10386
  %10388 = vmatmul.bf16.gmra.mxu0 %v9040
  %v10389 = vpop.f32.mrf.mxu0
  %v10390 = vadd.f32 %v10221, %v10389
  %v10391 = vpop.f32.mrf.mxu0
  %v10392 = vadd.f32 %v10223, %v10391
  %10393 = vmatmul.bf16.gmra.mxu0 %v9052
  %v10394 = vpop.f32.mrf.mxu0
  %v10395 = vadd.f32 %v10226, %v10394
  %v10396 = vpop.f32.mrf.mxu0
  %v10397 = vadd.f32 %v10228, %v10396
  %10398 = vmatmul.bf16.gmra.mxu0 %v9064
  %v10399 = vpop.f32.mrf.mxu0
  %v10400 = vadd.f32 %v10231, %v10399
  %v10401 = vpop.f32.mrf.mxu0
  %v10402 = vadd.f32 %v10233, %v10401
  %10403 = vmatmul.bf16.gmra.mxu0 %v9076
  %v10404 = vpop.f32.mrf.mxu0
  %v10405 = vadd.f32 %v10236, %v10404
  %v10406 = vpop.f32.mrf.mxu0
  %v10407 = vadd.f32 %v10238, %v10406
  %10408 = vmatmul.bf16.gmra.mxu0 %v9088
  %v10409 = vpop.f32.mrf.mxu0
  %v10410 = vadd.f32 %v10241, %v10409
  %v10411 = vpop.f32.mrf.mxu0
  %v10412 = vadd.f32 %v10243, %v10411
  %10413 = vmatmul.bf16.gmra.mxu0 %v9100
  %v10414 = vpop.f32.mrf.mxu0
  %v10415 = vadd.f32 %v10246, %v10414
  %v10416 = vpop.f32.mrf.mxu0
  %v10417 = vadd.f32 %v10248, %v10416
  %10418 = vmatmul.bf16.gmra.mxu0 %v9112
  %v10419 = vpop.f32.mrf.mxu0
  %v10420 = vadd.f32 %v10251, %v10419
  %v10421 = vpop.f32.mrf.mxu0
  %v10422 = vadd.f32 %v10253, %v10421
  %10423 = vmatmul.bf16.gmra.mxu0 %v9124
  %v10424 = vpop.f32.mrf.mxu0
  %v10425 = vadd.f32 %v10256, %v10424
  %v10426 = vpop.f32.mrf.mxu0
  %v10427 = vadd.f32 %v10258, %v10426
  %10428 = vmatmul.bf16.gmra.mxu0 %v9136
  %v10429 = vpop.f32.mrf.mxu0
  %v10430 = vadd.f32 %v10261, %v10429
  %v10431 = vpop.f32.mrf.mxu0
  %v10432 = vadd.f32 %v10263, %v10431
  %10433 = vmatmul.bf16.gmra.mxu0 %v9148
  %v10434 = vpop.f32.mrf.mxu0
  %v10435 = vadd.f32 %v10266, %v10434
  %v10436 = vpop.f32.mrf.mxu0
  %v10437 = vadd.f32 %v10268, %v10436
  %10438 = vmatmul.bf16.gmra.mxu0 %v9160
  %v10439 = vpop.f32.mrf.mxu0
  %v10440 = vadd.f32 %v10271, %v10439
  %v10441 = vpop.f32.mrf.mxu0
  %v10442 = vadd.f32 %v10273, %v10441
  %10443 = vmatmul.bf16.gmra.mxu0 %v9172
  %v10444 = vpop.f32.mrf.mxu0
  %v10445 = vadd.f32 %v10276, %v10444
  %v10446 = vpop.f32.mrf.mxu0
  %v10447 = vadd.f32 %v10278, %v10446
  %10448 = vmatmul.bf16.gmra.mxu0 %v9184
  %v10449 = vpop.f32.mrf.mxu0
  %v10450 = vadd.f32 %v10281, %v10449
  %v10451 = vpop.f32.mrf.mxu0
  %v10452 = vadd.f32 %v10283, %v10451
  %10453 = vmatmul.bf16.gmra.mxu0 %v9196
  %v10454 = vpop.f32.mrf.mxu0
  %v10455 = vadd.f32 %v10286, %v10454
  %v10456 = vpop.f32.mrf.mxu0
  %v10457 = vadd.f32 %v10288, %v10456
  %10458 = vmatmul.bf16.gmra.mxu0 %v5527
  %v10459 = vpop.f32.mrf.mxu0
  %v10460 = vadd.f32 %v10291, %v10459
  %v10461 = vpop.f32.mrf.mxu0
  %v10462 = vadd.f32 %v10293, %v10461
  %10463 = vmatmul.bf16.gmra.mxu0 %v9208
  %v10464 = vpop.f32.mrf.mxu0
  %v10465 = vadd.f32 %v10296, %v10464
  %v10466 = vpop.f32.mrf.mxu0
  %v10467 = vadd.f32 %v10298, %v10466
  %10468 = vmatmul.bf16.gmra.mxu0 %v9220
  %v10469 = vpop.f32.mrf.mxu0
  %v10470 = vadd.f32 %v10301, %v10469
  %v10471 = vpop.f32.mrf.mxu0
  %v10472 = vadd.f32 %v10303, %v10471
  %10473 = vmatmul.bf16.gmra.mxu0 %v9232
  %v10474 = vpop.f32.mrf.mxu0
  %v10475 = vadd.f32 %v10306, %v10474
  %v10476 = vpop.f32.mrf.mxu0
  %v10477 = vadd.f32 %v10308, %v10476
  %10478 = vmatmul.bf16.gmra.mxu0 %v9244
  %v10479 = vpop.f32.mrf.mxu0
  %v10480 = vadd.f32 %v10311, %v10479
  %v10481 = vpop.f32.mrf.mxu0
  %v10482 = vadd.f32 %v10313, %v10481
  %10483 = vmatmul.bf16.gmra.mxu0 %v9256
  %v10484 = vpop.f32.mrf.mxu0
  %v10485 = vadd.f32 %v10316, %v10484
  %v10486 = vpop.f32.mrf.mxu0
  %v10487 = vadd.f32 %v10318, %v10486
  %10488 = vmatmul.bf16.gmra.mxu0 %v9268
  %v10489 = vpop.f32.mrf.mxu0
  %v10490 = vadd.f32 %v10321, %v10489
  %v10491 = vpop.f32.mrf.mxu0
  %v10492 = vadd.f32 %v10323, %v10491
  %10493 = vmatmul.bf16.gmra.mxu0 %v9280
  %v10494 = vpop.f32.mrf.mxu0
  %v10495 = vadd.f32 %v10326, %v10494
  %v10496 = vpop.f32.mrf.mxu0
  %v10497 = vadd.f32 %v10328, %v10496
  %10498 = vmatmul.bf16.gmra.mxu0 %v9292
  %v10499 = vpop.f32.mrf.mxu0
  %v10500 = vadd.f32 %v10331, %v10499
  %v10501 = vpop.f32.mrf.mxu0
  %v10502 = vadd.f32 %v10333, %v10501
  %10503 = vmatmul.bf16.gmra.mxu0 %v9304
  %v10504 = vpop.f32.mrf.mxu0
  %v10505 = vadd.f32 %v10336, %v10504
  %v10506 = vpop.f32.mrf.mxu0
  %v10507 = vadd.f32 %v10338, %v10506
  %10508 = vmatmul.bf16.gmra.mxu0 %v9316
  %v10509 = vpop.f32.mrf.mxu0
  %v10510 = vadd.f32 %v10341, %v10509
  %v10511 = vpop.f32.mrf.mxu0
  %v10512 = vadd.f32 %v10343, %v10511
  %10513 = vmatmul.bf16.gmra.mxu0 %v9328
  %v10514 = vpop.f32.mrf.mxu0
  %v10515 = vadd.f32 %v10346, %v10514
  %v10516 = vpop.f32.mrf.mxu0
  %v10517 = vadd.f32 %v10348, %v10516
  %10518 = vmatmul.bf16.gmra.mxu0 %v9340
  %v10519 = vpop.f32.mrf.mxu0
  %v10520 = vadd.f32 %v10351, %v10519
  %v10521 = vpop.f32.mrf.mxu0
  %v10522 = vadd.f32 %v10353, %v10521
  %10523 = vmatmul.bf16.gmra.mxu0 %v9352
  %v10524 = vpop.f32.mrf.mxu0
  %v10525 = vadd.f32 %v10356, %v10524
  %v10526 = vpop.f32.mrf.mxu0
  %v10527 = vadd.f32 %v10358, %v10526
  %10528 = vmatmul.bf16.gmra.mxu0 %v9364
  %v10529 = vpop.f32.mrf.mxu0
  %v10530 = vadd.f32 %v10361, %v10529
  %v10531 = vpop.f32.mrf.mxu0
  %v10532 = vadd.f32 %v10363, %v10531
  %10533 = vmatmul.bf16.gmra.mxu0 %v9376
  %v10534 = vpop.f32.mrf.mxu0
  %v10535 = vadd.f32 %v10366, %v10534
  %v10536 = vpop.f32.mrf.mxu0
  %v10537 = vadd.f32 %v10368, %v10536
  %10538 = vdwg.mxu0
  %10539 = vmatpush.bf16.msra.mxu0 %v10080
  %10540 = vmatpush.bf16.msra.mxu0 %v10079
  %10541 = vmatpush.bf16.msra.mxu0 %v10078
  %10542 = vmatpush.bf16.msra.mxu0 %v10077
  %10543 = vmatpush.bf16.msra.mxu0 %v10076
  %10544 = vmatpush.bf16.msra.mxu0 %v10075
  %10545 = vmatpush.bf16.msra.mxu0 %v10074
  %10546 = vmatpush.bf16.msra.mxu0 %v10073
  %10547 = vmatmul.bf16.gmra.mxu0 %v5984
  %v10548 = vpop.f32.mrf.mxu0
  %v10549 = vadd.f32 %v10380, %v10548
  %v10550 = vpop.f32.mrf.mxu0
  %v10551 = vadd.f32 %v10382, %v10550
  %10552 = vmatmul.bf16.gmra.mxu0 %v9469
  %v10553 = vpop.f32.mrf.mxu0
  %v10554 = vadd.f32 %v10385, %v10553
  %v10555 = vpop.f32.mrf.mxu0
  %v10556 = vadd.f32 %v10387, %v10555
  %10557 = vmatmul.bf16.gmra.mxu0 %v9472
  %v10558 = vpop.f32.mrf.mxu0
  %v10559 = vadd.f32 %v10390, %v10558
  %v10560 = vpop.f32.mrf.mxu0
  %v10561 = vadd.f32 %v10392, %v10560
  %10562 = vmatmul.bf16.gmra.mxu0 %v9475
  %v10563 = vpop.f32.mrf.mxu0
  %v10564 = vadd.f32 %v10395, %v10563
  %v10565 = vpop.f32.mrf.mxu0
  %v10566 = vadd.f32 %v10397, %v10565
  %10567 = vmatmul.bf16.gmra.mxu0 %v9478
  %v10568 = vpop.f32.mrf.mxu0
  %v10569 = vadd.f32 %v10400, %v10568
  %v10570 = vpop.f32.mrf.mxu0
  %v10571 = vadd.f32 %v10402, %v10570
  %10572 = vmatmul.bf16.gmra.mxu0 %v9481
  %v10573 = vpop.f32.mrf.mxu0
  %v10574 = vadd.f32 %v10405, %v10573
  %v10575 = vpop.f32.mrf.mxu0
  %v10576 = vadd.f32 %v10407, %v10575
  %10577 = vmatmul.bf16.gmra.mxu0 %v9484
  %v10578 = vpop.f32.mrf.mxu0
  %v10579 = vadd.f32 %v10410, %v10578
  %v10580 = vpop.f32.mrf.mxu0
  %v10581 = vadd.f32 %v10412, %v10580
  %10582 = vmatmul.bf16.gmra.mxu0 %v9487
  %v10583 = vpop.f32.mrf.mxu0
  %v10584 = vadd.f32 %v10415, %v10583
  %v10585 = vpop.f32.mrf.mxu0
  %v10586 = vadd.f32 %v10417, %v10585
  %10587 = vmatmul.bf16.gmra.mxu0 %v9490
  %v10588 = vpop.f32.mrf.mxu0
  %v10589 = vadd.f32 %v10420, %v10588
  %v10590 = vpop.f32.mrf.mxu0
  %v10591 = vadd.f32 %v10422, %v10590
  %10592 = vmatmul.bf16.gmra.mxu0 %v9493
  %v10593 = vpop.f32.mrf.mxu0
  %v10594 = vadd.f32 %v10425, %v10593
  %v10595 = vpop.f32.mrf.mxu0
  %v10596 = vadd.f32 %v10427, %v10595
  %10597 = vmatmul.bf16.gmra.mxu0 %v9496
  %v10598 = vpop.f32.mrf.mxu0
  %v10599 = vadd.f32 %v10430, %v10598
  %v10600 = vpop.f32.mrf.mxu0
  %v10601 = vadd.f32 %v10432, %v10600
  %10602 = vmatmul.bf16.gmra.mxu0 %v9499
  %v10603 = vpop.f32.mrf.mxu0
  %v10604 = vadd.f32 %v10435, %v10603
  %v10605 = vpop.f32.mrf.mxu0
  %v10606 = vadd.f32 %v10437, %v10605
  %10607 = vmatmul.bf16.gmra.mxu0 %v9502
  %v10608 = vpop.f32.mrf.mxu0
  %v10609 = vadd.f32 %v10440, %v10608
  %v10610 = vpop.f32.mrf.mxu0
  %v10611 = vadd.f32 %v10442, %v10610
  %10612 = vmatmul.bf16.gmra.mxu0 %v9505
  %v10613 = vpop.f32.mrf.mxu0
  %v10614 = vadd.f32 %v10445, %v10613
  %v10615 = vpop.f32.mrf.mxu0
  %v10616 = vadd.f32 %v10447, %v10615
  %10617 = vmatmul.bf16.gmra.mxu0 %v9508
  %v10618 = vpop.f32.mrf.mxu0
  %v10619 = vadd.f32 %v10450, %v10618
  %v10620 = vpop.f32.mrf.mxu0
  %v10621 = vadd.f32 %v10452, %v10620
  %10622 = vmatmul.bf16.gmra.mxu0 %v9511
  %v10623 = vpop.f32.mrf.mxu0
  %v10624 = vadd.f32 %v10455, %v10623
  %v10625 = vpop.f32.mrf.mxu0
  %v10626 = vadd.f32 %v10457, %v10625
  %10627 = vmatmul.bf16.gmra.mxu0 %v5984
  %v10628 = vpop.f32.mrf.mxu0
  %v10629 = vadd.f32 %v10460, %v10628
  %v10630 = vpop.f32.mrf.mxu0
  %v10631 = vadd.f32 %v10462, %v10630
  %10632 = vmatmul.bf16.gmra.mxu0 %v9514
  %v10633 = vpop.f32.mrf.mxu0
  %v10634 = vadd.f32 %v10465, %v10633
  %v10635 = vpop.f32.mrf.mxu0
  %v10636 = vadd.f32 %v10467, %v10635
  %10637 = vmatmul.bf16.gmra.mxu0 %v9517
  %v10638 = vpop.f32.mrf.mxu0
  %v10639 = vadd.f32 %v10470, %v10638
  %v10640 = vpop.f32.mrf.mxu0
  %v10641 = vadd.f32 %v10472, %v10640
  %10642 = vmatmul.bf16.gmra.mxu0 %v9520
  %v10643 = vpop.f32.mrf.mxu0
  %v10644 = vadd.f32 %v10475, %v10643
  %v10645 = vpop.f32.mrf.mxu0
  %v10646 = vadd.f32 %v10477, %v10645
  %10647 = vmatmul.bf16.gmra.mxu0 %v9523
  %v10648 = vpop.f32.mrf.mxu0
  %v10649 = vadd.f32 %v10480, %v10648
  %v10650 = vpop.f32.mrf.mxu0
  %v10651 = vadd.f32 %v10482, %v10650
  %10652 = vmatmul.bf16.gmra.mxu0 %v9526
  %v10653 = vpop.f32.mrf.mxu0
  %v10654 = vadd.f32 %v10485, %v10653
  %v10655 = vpop.f32.mrf.mxu0
  %v10656 = vadd.f32 %v10487, %v10655
  %10657 = vmatmul.bf16.gmra.mxu0 %v9529
  %v10658 = vpop.f32.mrf.mxu0
  %v10659 = vadd.f32 %v10490, %v10658
  %v10660 = vpop.f32.mrf.mxu0
  %v10661 = vadd.f32 %v10492, %v10660
  %10662 = vmatmul.bf16.gmra.mxu0 %v9532
  %v10663 = vpop.f32.mrf.mxu0
  %v10664 = vadd.f32 %v10495, %v10663
  %v10665 = vpop.f32.mrf.mxu0
  %v10666 = vadd.f32 %v10497, %v10665
  %10667 = vmatmul.bf16.gmra.mxu0 %v9535
  %v10668 = vpop.f32.mrf.mxu0
  %v10669 = vadd.f32 %v10500, %v10668
  %v10670 = vpop.f32.mrf.mxu0
  %v10671 = vadd.f32 %v10502, %v10670
  %10672 = vmatmul.bf16.gmra.mxu0 %v9538
  %v10673 = vpop.f32.mrf.mxu0
  %v10674 = vadd.f32 %v10505, %v10673
  %v10675 = vpop.f32.mrf.mxu0
  %v10676 = vadd.f32 %v10507, %v10675
  %10677 = vmatmul.bf16.gmra.mxu0 %v9541
  %v10678 = vpop.f32.mrf.mxu0
  %v10679 = vadd.f32 %v10510, %v10678
  %v10680 = vpop.f32.mrf.mxu0
  %v10681 = vadd.f32 %v10512, %v10680
  %10682 = vmatmul.bf16.gmra.mxu0 %v9544
  %v10683 = vpop.f32.mrf.mxu0
  %v10684 = vadd.f32 %v10515, %v10683
  %v10685 = vpop.f32.mrf.mxu0
  %v10686 = vadd.f32 %v10517, %v10685
  %10687 = vmatmul.bf16.gmra.mxu0 %v9547
  %v10688 = vpop.f32.mrf.mxu0
  %v10689 = vadd.f32 %v10520, %v10688
  %v10690 = vpop.f32.mrf.mxu0
  %v10691 = vadd.f32 %v10522, %v10690
  %10692 = vmatmul.bf16.gmra.mxu0 %v9550
  %v10693 = vpop.f32.mrf.mxu0
  %v10694 = vadd.f32 %v10525, %v10693
  %v10695 = vpop.f32.mrf.mxu0
  %v10696 = vadd.f32 %v10527, %v10695
  %10697 = vmatmul.bf16.gmra.mxu0 %v9553
  %v10698 = vpop.f32.mrf.mxu0
  %v10699 = vadd.f32 %v10530, %v10698
  %v10700 = vpop.f32.mrf.mxu0
  %v10701 = vadd.f32 %v10532, %v10700
  %10702 = vmatmul.bf16.gmra.mxu0 %v9556
  %v10703 = vpop.f32.mrf.mxu0
  %v10704 = vadd.f32 %v10535, %v10703
  %v10705 = vpop.f32.mrf.mxu0
  %v10706 = vadd.f32 %v10537, %v10705
  %10707 = vdwg.mxu0
  %10708 = vmatpush.bf16.msra.mxu0 %v10088
  %10709 = vmatpush.bf16.msra.mxu0 %v10087
  %10710 = vmatpush.bf16.msra.mxu0 %v10086
  %10711 = vmatpush.bf16.msra.mxu0 %v10085
  %10712 = vmatpush.bf16.msra.mxu0 %v10084
  %10713 = vmatpush.bf16.msra.mxu0 %v10083
  %10714 = vmatpush.bf16.msra.mxu0 %v10082
  %10715 = vmatpush.bf16.msra.mxu0 %v10081
  %10716 = vmatmul.bf16.gmra.mxu0 %v8953
  %v10717 = vpop.f32.mrf.mxu0
  %v10718 = vadd.f32 %v10549, %v10717
  %v10719 = vpop.f32.mrf.mxu0
  %v10720 = vadd.f32 %v10551, %v10719
  %10721 = vmatmul.bf16.gmra.mxu0 %v8954
  %v10722 = vpop.f32.mrf.mxu0
  %v10723 = vadd.f32 %v10554, %v10722
  %v10724 = vpop.f32.mrf.mxu0
  %v10725 = vadd.f32 %v10556, %v10724
  %10726 = vmatmul.bf16.gmra.mxu0 %v8955
  %v10727 = vpop.f32.mrf.mxu0
  %v10728 = vadd.f32 %v10559, %v10727
  %v10729 = vpop.f32.mrf.mxu0
  %v10730 = vadd.f32 %v10561, %v10729
  %10731 = vmatmul.bf16.gmra.mxu0 %v8956
  %v10732 = vpop.f32.mrf.mxu0
  %v10733 = vadd.f32 %v10564, %v10732
  %v10734 = vpop.f32.mrf.mxu0
  %v10735 = vadd.f32 %v10566, %v10734
  %10736 = vmatmul.bf16.gmra.mxu0 %v8957
  %v10737 = vpop.f32.mrf.mxu0
  %v10738 = vadd.f32 %v10569, %v10737
  %v10739 = vpop.f32.mrf.mxu0
  %v10740 = vadd.f32 %v10571, %v10739
  %10741 = vmatmul.bf16.gmra.mxu0 %v8958
  %v10742 = vpop.f32.mrf.mxu0
  %v10743 = vadd.f32 %v10574, %v10742
  %v10744 = vpop.f32.mrf.mxu0
  %v10745 = vadd.f32 %v10576, %v10744
  %10746 = vmatmul.bf16.gmra.mxu0 %v8959
  %v10747 = vpop.f32.mrf.mxu0
  %v10748 = vadd.f32 %v10579, %v10747
  %v10749 = vpop.f32.mrf.mxu0
  %v10750 = vadd.f32 %v10581, %v10749
  %10751 = vmatmul.bf16.gmra.mxu0 %v8960
  %v10752 = vpop.f32.mrf.mxu0
  %v10753 = vadd.f32 %v10584, %v10752
  %v10754 = vpop.f32.mrf.mxu0
  %v10755 = vadd.f32 %v10586, %v10754
  %10756 = vmatmul.bf16.gmra.mxu0 %v8961
  %v10757 = vpop.f32.mrf.mxu0
  %v10758 = vadd.f32 %v10589, %v10757
  %v10759 = vpop.f32.mrf.mxu0
  %v10760 = vadd.f32 %v10591, %v10759
  %10761 = vmatmul.bf16.gmra.mxu0 %v8962
  %v10762 = vpop.f32.mrf.mxu0
  %v10763 = vadd.f32 %v10594, %v10762
  %v10764 = vpop.f32.mrf.mxu0
  %v10765 = vadd.f32 %v10596, %v10764
  %10766 = vmatmul.bf16.gmra.mxu0 %v8963
  %v10767 = vpop.f32.mrf.mxu0
  %v10768 = vadd.f32 %v10599, %v10767
  %v10769 = vpop.f32.mrf.mxu0
  %v10770 = vadd.f32 %v10601, %v10769
  %10771 = vmatmul.bf16.gmra.mxu0 %v8964
  %v10772 = vpop.f32.mrf.mxu0
  %v10773 = vadd.f32 %v10604, %v10772
  %v10774 = vpop.f32.mrf.mxu0
  %v10775 = vadd.f32 %v10606, %v10774
  %10776 = vmatmul.bf16.gmra.mxu0 %v8965
  %v10777 = vpop.f32.mrf.mxu0
  %v10778 = vadd.f32 %v10609, %v10777
  %v10779 = vpop.f32.mrf.mxu0
  %v10780 = vadd.f32 %v10611, %v10779
  %10781 = vmatmul.bf16.gmra.mxu0 %v8966
  %v10782 = vpop.f32.mrf.mxu0
  %v10783 = vadd.f32 %v10614, %v10782
  %v10784 = vpop.f32.mrf.mxu0
  %v10785 = vadd.f32 %v10616, %v10784
  %10786 = vmatmul.bf16.gmra.mxu0 %v8967
  %v10787 = vpop.f32.mrf.mxu0
  %v10788 = vadd.f32 %v10619, %v10787
  %v10789 = vpop.f32.mrf.mxu0
  %v10790 = vadd.f32 %v10621, %v10789
  %10791 = vmatmul.bf16.gmra.mxu0 %v8968
  %v10792 = vpop.f32.mrf.mxu0
  %v10793 = vadd.f32 %v10624, %v10792
  %v10794 = vpop.f32.mrf.mxu0
  %v10795 = vadd.f32 %v10626, %v10794
  %10796 = vmatmul.bf16.gmra.mxu0 %v8969
  %v10797 = vpop.f32.mrf.mxu0
  %v10798 = vadd.f32 %v10629, %v10797
  %v10799 = vpop.f32.mrf.mxu0
  %v10800 = vadd.f32 %v10631, %v10799
  %10801 = vmatmul.bf16.gmra.mxu0 %v8970
  %v10802 = vpop.f32.mrf.mxu0
  %v10803 = vadd.f32 %v10634, %v10802
  %v10804 = vpop.f32.mrf.mxu0
  %v10805 = vadd.f32 %v10636, %v10804
  %10806 = vmatmul.bf16.gmra.mxu0 %v8971
  %v10807 = vpop.f32.mrf.mxu0
  %v10808 = vadd.f32 %v10639, %v10807
  %v10809 = vpop.f32.mrf.mxu0
  %v10810 = vadd.f32 %v10641, %v10809
  %10811 = vmatmul.bf16.gmra.mxu0 %v8972
  %v10812 = vpop.f32.mrf.mxu0
  %v10813 = vadd.f32 %v10644, %v10812
  %v10814 = vpop.f32.mrf.mxu0
  %v10815 = vadd.f32 %v10646, %v10814
  %10816 = vmatmul.bf16.gmra.mxu0 %v8973
  %v10817 = vpop.f32.mrf.mxu0
  %v10818 = vadd.f32 %v10649, %v10817
  %v10819 = vpop.f32.mrf.mxu0
  %v10820 = vadd.f32 %v10651, %v10819
  %10821 = vmatmul.bf16.gmra.mxu0 %v8974
  %v10822 = vpop.f32.mrf.mxu0
  %v10823 = vadd.f32 %v10654, %v10822
  %v10824 = vpop.f32.mrf.mxu0
  %v10825 = vadd.f32 %v10656, %v10824
  %10826 = vmatmul.bf16.gmra.mxu0 %v8975
  %v10827 = vpop.f32.mrf.mxu0
  %v10828 = vadd.f32 %v10659, %v10827
  %v10829 = vpop.f32.mrf.mxu0
  %v10830 = vadd.f32 %v10661, %v10829
  %10831 = vmatmul.bf16.gmra.mxu0 %v8976
  %v10832 = vpop.f32.mrf.mxu0
  %v10833 = vadd.f32 %v10664, %v10832
  %v10834 = vpop.f32.mrf.mxu0
  %v10835 = vadd.f32 %v10666, %v10834
  %10836 = vmatmul.bf16.gmra.mxu0 %v8977
  %v10837 = vpop.f32.mrf.mxu0
  %v10838 = vadd.f32 %v10669, %v10837
  %v10839 = vpop.f32.mrf.mxu0
  %v10840 = vadd.f32 %v10671, %v10839
  %10841 = vmatmul.bf16.gmra.mxu0 %v8978
  %v10842 = vpop.f32.mrf.mxu0
  %v10843 = vadd.f32 %v10674, %v10842
  %v10844 = vpop.f32.mrf.mxu0
  %v10845 = vadd.f32 %v10676, %v10844
  %10846 = vmatmul.bf16.gmra.mxu0 %v8979
  %v10847 = vpop.f32.mrf.mxu0
  %v10848 = vadd.f32 %v10679, %v10847
  %v10849 = vpop.f32.mrf.mxu0
  %v10850 = vadd.f32 %v10681, %v10849
  %10851 = vmatmul.bf16.gmra.mxu0 %v8980
  %v10852 = vpop.f32.mrf.mxu0
  %v10853 = vadd.f32 %v10684, %v10852
  %v10854 = vpop.f32.mrf.mxu0
  %v10855 = vadd.f32 %v10686, %v10854
  %10856 = vmatmul.bf16.gmra.mxu0 %v8981
  %v10857 = vpop.f32.mrf.mxu0
  %v10858 = vadd.f32 %v10689, %v10857
  %v10859 = vpop.f32.mrf.mxu0
  %v10860 = vadd.f32 %v10691, %v10859
  %10861 = vmatmul.bf16.gmra.mxu0 %v8982
  %v10862 = vpop.f32.mrf.mxu0
  %v10863 = vadd.f32 %v10694, %v10862
  %v10864 = vpop.f32.mrf.mxu0
  %v10865 = vadd.f32 %v10696, %v10864
  %10866 = vmatmul.bf16.gmra.mxu0 %v8983
  %v10867 = vpop.f32.mrf.mxu0
  %v10868 = vadd.f32 %v10699, %v10867
  %v10869 = vpop.f32.mrf.mxu0
  %v10870 = vadd.f32 %v10701, %v10869
  %10871 = vmatmul.bf16.gmra.mxu0 %v8984
  %v10872 = vpop.f32.mrf.mxu0
  %v10873 = vadd.f32 %v10704, %v10872
  %v10874 = vpop.f32.mrf.mxu0
  %v10875 = vadd.f32 %v10706, %v10874
  %10876 = vdwg.mxu0
  %10877 = vmatpush.bf16.msra.mxu0 %v10096
  %10878 = vmatpush.bf16.msra.mxu0 %v10095
  %10879 = vmatpush.bf16.msra.mxu0 %v10094
  %10880 = vmatpush.bf16.msra.mxu0 %v10093
  %10881 = vmatpush.bf16.msra.mxu0 %v10092
  %10882 = vmatpush.bf16.msra.mxu0 %v10091
  %10883 = vmatpush.bf16.msra.mxu0 %v10090
  %10884 = vmatpush.bf16.msra.mxu0 %v10089
  %10885 = vmatmul.bf16.gmra.mxu0 %v9028
  %v10886 = vpop.f32.mrf.mxu0
  %v10887 = vadd.f32 %v10718, %v10886
  %v10888 = vpop.f32.mrf.mxu0
  %v10889 = vadd.f32 %v10720, %v10888
  %10890 = vmatmul.bf16.gmra.mxu0 %v9040
  %v10891 = vpop.f32.mrf.mxu0
  %v10892 = vadd.f32 %v10723, %v10891
  %v10893 = vpop.f32.mrf.mxu0
  %v10894 = vadd.f32 %v10725, %v10893
  %10895 = vmatmul.bf16.gmra.mxu0 %v9052
  %v10896 = vpop.f32.mrf.mxu0
  %v10897 = vadd.f32 %v10728, %v10896
  %v10898 = vpop.f32.mrf.mxu0
  %v10899 = vadd.f32 %v10730, %v10898
  %10900 = vmatmul.bf16.gmra.mxu0 %v9064
  %v10901 = vpop.f32.mrf.mxu0
  %v10902 = vadd.f32 %v10733, %v10901
  %v10903 = vpop.f32.mrf.mxu0
  %v10904 = vadd.f32 %v10735, %v10903
  %10905 = vmatmul.bf16.gmra.mxu0 %v9076
  %v10906 = vpop.f32.mrf.mxu0
  %v10907 = vadd.f32 %v10738, %v10906
  %v10908 = vpop.f32.mrf.mxu0
  %v10909 = vadd.f32 %v10740, %v10908
  %10910 = vmatmul.bf16.gmra.mxu0 %v9088
  %v10911 = vpop.f32.mrf.mxu0
  %v10912 = vadd.f32 %v10743, %v10911
  %v10913 = vpop.f32.mrf.mxu0
  %v10914 = vadd.f32 %v10745, %v10913
  %10915 = vmatmul.bf16.gmra.mxu0 %v9100
  %v10916 = vpop.f32.mrf.mxu0
  %v10917 = vadd.f32 %v10748, %v10916
  %v10918 = vpop.f32.mrf.mxu0
  %v10919 = vadd.f32 %v10750, %v10918
  %10920 = vmatmul.bf16.gmra.mxu0 %v9112
  %v10921 = vpop.f32.mrf.mxu0
  %v10922 = vadd.f32 %v10753, %v10921
  %v10923 = vpop.f32.mrf.mxu0
  %v10924 = vadd.f32 %v10755, %v10923
  %10925 = vmatmul.bf16.gmra.mxu0 %v9124
  %v10926 = vpop.f32.mrf.mxu0
  %v10927 = vadd.f32 %v10758, %v10926
  %v10928 = vpop.f32.mrf.mxu0
  %v10929 = vadd.f32 %v10760, %v10928
  %10930 = vmatmul.bf16.gmra.mxu0 %v9136
  %v10931 = vpop.f32.mrf.mxu0
  %v10932 = vadd.f32 %v10763, %v10931
  %v10933 = vpop.f32.mrf.mxu0
  %v10934 = vadd.f32 %v10765, %v10933
  %10935 = vmatmul.bf16.gmra.mxu0 %v9148
  %v10936 = vpop.f32.mrf.mxu0
  %v10937 = vadd.f32 %v10768, %v10936
  %v10938 = vpop.f32.mrf.mxu0
  %v10939 = vadd.f32 %v10770, %v10938
  %10940 = vmatmul.bf16.gmra.mxu0 %v9160
  %v10941 = vpop.f32.mrf.mxu0
  %v10942 = vadd.f32 %v10773, %v10941
  %v10943 = vpop.f32.mrf.mxu0
  %v10944 = vadd.f32 %v10775, %v10943
  %10945 = vmatmul.bf16.gmra.mxu0 %v9172
  %v10946 = vpop.f32.mrf.mxu0
  %v10947 = vadd.f32 %v10778, %v10946
  %v10948 = vpop.f32.mrf.mxu0
  %v10949 = vadd.f32 %v10780, %v10948
  %10950 = vmatmul.bf16.gmra.mxu0 %v9184
  %v10951 = vpop.f32.mrf.mxu0
  %v10952 = vadd.f32 %v10783, %v10951
  %v10953 = vpop.f32.mrf.mxu0
  %v10954 = vadd.f32 %v10785, %v10953
  %10955 = vmatmul.bf16.gmra.mxu0 %v9196
  %v10956 = vpop.f32.mrf.mxu0
  %v10957 = vadd.f32 %v10788, %v10956
  %v10958 = vpop.f32.mrf.mxu0
  %v10959 = vadd.f32 %v10790, %v10958
  %10960 = vmatmul.bf16.gmra.mxu0 %v9598
  %v10961 = vpop.f32.mrf.mxu0
  %v10962 = vadd.f32 %v10793, %v10961
  %v10963 = vpop.f32.mrf.mxu0
  %v10964 = vadd.f32 %v10795, %v10963
  %10965 = vmatmul.bf16.gmra.mxu0 %v9208
  %v10966 = vpop.f32.mrf.mxu0
  %v10967 = vadd.f32 %v10798, %v10966
  %v10968 = vpop.f32.mrf.mxu0
  %v10969 = vadd.f32 %v10800, %v10968
  %10970 = vmatmul.bf16.gmra.mxu0 %v9220
  %v10971 = vpop.f32.mrf.mxu0
  %v10972 = vadd.f32 %v10803, %v10971
  %v10973 = vpop.f32.mrf.mxu0
  %v10974 = vadd.f32 %v10805, %v10973
  %10975 = vmatmul.bf16.gmra.mxu0 %v9232
  %v10976 = vpop.f32.mrf.mxu0
  %v10977 = vadd.f32 %v10808, %v10976
  %v10978 = vpop.f32.mrf.mxu0
  %v10979 = vadd.f32 %v10810, %v10978
  %10980 = vmatmul.bf16.gmra.mxu0 %v9244
  %v10981 = vpop.f32.mrf.mxu0
  %v10982 = vadd.f32 %v10813, %v10981
  %v10983 = vpop.f32.mrf.mxu0
  %v10984 = vadd.f32 %v10815, %v10983
  %10985 = vmatmul.bf16.gmra.mxu0 %v9256
  %v10986 = vpop.f32.mrf.mxu0
  %v10987 = vadd.f32 %v10818, %v10986
  %v10988 = vpop.f32.mrf.mxu0
  %v10989 = vadd.f32 %v10820, %v10988
  %10990 = vmatmul.bf16.gmra.mxu0 %v9268
  %v10991 = vpop.f32.mrf.mxu0
  %v10992 = vadd.f32 %v10823, %v10991
  %v10993 = vpop.f32.mrf.mxu0
  %v10994 = vadd.f32 %v10825, %v10993
  %10995 = vmatmul.bf16.gmra.mxu0 %v9280
  %v10996 = vpop.f32.mrf.mxu0
  %v10997 = vadd.f32 %v10828, %v10996
  %v10998 = vpop.f32.mrf.mxu0
  %v10999 = vadd.f32 %v10830, %v10998
  %11000 = vmatmul.bf16.gmra.mxu0 %v9292
  %v11001 = vpop.f32.mrf.mxu0
  %v11002 = vadd.f32 %v10833, %v11001
  %v11003 = vpop.f32.mrf.mxu0
  %v11004 = vadd.f32 %v10835, %v11003
  %11005 = vmatmul.bf16.gmra.mxu0 %v9304
  %v11006 = vpop.f32.mrf.mxu0
  %v11007 = vadd.f32 %v10838, %v11006
  %v11008 = vpop.f32.mrf.mxu0
  %v11009 = vadd.f32 %v10840, %v11008
  %11010 = vmatmul.bf16.gmra.mxu0 %v9316
  %v11011 = vpop.f32.mrf.mxu0
  %v11012 = vadd.f32 %v10843, %v11011
  %v11013 = vpop.f32.mrf.mxu0
  %v11014 = vadd.f32 %v10845, %v11013
  %11015 = vmatmul.bf16.gmra.mxu0 %v9328
  %v11016 = vpop.f32.mrf.mxu0
  %v11017 = vadd.f32 %v10848, %v11016
  %v11018 = vpop.f32.mrf.mxu0
  %v11019 = vadd.f32 %v10850, %v11018
  %11020 = vmatmul.bf16.gmra.mxu0 %v9340
  %v11021 = vpop.f32.mrf.mxu0
  %v11022 = vadd.f32 %v10853, %v11021
  %v11023 = vpop.f32.mrf.mxu0
  %v11024 = vadd.f32 %v10855, %v11023
  %11025 = vmatmul.bf16.gmra.mxu0 %v9352
  %v11026 = vpop.f32.mrf.mxu0
  %v11027 = vadd.f32 %v10858, %v11026
  %v11028 = vpop.f32.mrf.mxu0
  %v11029 = vadd.f32 %v10860, %v11028
  %11030 = vmatmul.bf16.gmra.mxu0 %v9364
  %v11031 = vpop.f32.mrf.mxu0
  %v11032 = vadd.f32 %v10863, %v11031
  %v11033 = vpop.f32.mrf.mxu0
  %v11034 = vadd.f32 %v10865, %v11033
  %11035 = vmatmul.bf16.gmra.mxu0 %v9376
  %v11036 = vpop.f32.mrf.mxu0
  %v11037 = vadd.f32 %v10868, %v11036
  %v11038 = vpop.f32.mrf.mxu0
  %v11039 = vadd.f32 %v10870, %v11038
  %11040 = vmatmul.bf16.gmra.mxu0 %v9610
  %v11041 = vpop.f32.mrf.mxu0
  %v11042 = vadd.f32 %v10873, %v11041
  %v11043 = vpop.f32.mrf.mxu0
  %v11044 = vadd.f32 %v10875, %v11043
  %11045 = vdwg.mxu0
  %11046 = vmatpush.bf16.msra.mxu0 %v10104
  %11047 = vmatpush.bf16.msra.mxu0 %v10103
  %11048 = vmatpush.bf16.msra.mxu0 %v10102
  %11049 = vmatpush.bf16.msra.mxu0 %v10101
  %11050 = vmatpush.bf16.msra.mxu0 %v10100
  %11051 = vmatpush.bf16.msra.mxu0 %v10099
  %11052 = vmatpush.bf16.msra.mxu0 %v10098
  %11053 = vmatpush.bf16.msra.mxu0 %v10097
  %11054 = vmatmul.bf16.gmra.mxu0 %v9469
  %v11055 = vpop.f32.mrf.mxu0
  %v11056 = vadd.f32 %v10887, %v11055
  %v11057 = vpop.f32.mrf.mxu0
  %v11058 = vadd.f32 %v10889, %v11057
  %11059 = vmatmul.bf16.gmra.mxu0 %v9472
  %v11060 = vpop.f32.mrf.mxu0
  %v11061 = vadd.f32 %v10892, %v11060
  %v11062 = vpop.f32.mrf.mxu0
  %v11063 = vadd.f32 %v10894, %v11062
  %11064 = vmatmul.bf16.gmra.mxu0 %v9475
  %v11065 = vpop.f32.mrf.mxu0
  %v11066 = vadd.f32 %v10897, %v11065
  %v11067 = vpop.f32.mrf.mxu0
  %v11068 = vadd.f32 %v10899, %v11067
  %11069 = vmatmul.bf16.gmra.mxu0 %v9478
  %v11070 = vpop.f32.mrf.mxu0
  %v11071 = vadd.f32 %v10902, %v11070
  %v11072 = vpop.f32.mrf.mxu0
  %v11073 = vadd.f32 %v10904, %v11072
  %11074 = vmatmul.bf16.gmra.mxu0 %v9481
  %v11075 = vpop.f32.mrf.mxu0
  %v11076 = vadd.f32 %v10907, %v11075
  %v11077 = vpop.f32.mrf.mxu0
  %v11078 = vadd.f32 %v10909, %v11077
  %11079 = vmatmul.bf16.gmra.mxu0 %v9484
  %v11080 = vpop.f32.mrf.mxu0
  %v11081 = vadd.f32 %v10912, %v11080
  %v11082 = vpop.f32.mrf.mxu0
  %v11083 = vadd.f32 %v10914, %v11082
  %11084 = vmatmul.bf16.gmra.mxu0 %v9487
  %v11085 = vpop.f32.mrf.mxu0
  %v11086 = vadd.f32 %v10917, %v11085
  %v11087 = vpop.f32.mrf.mxu0
  %v11088 = vadd.f32 %v10919, %v11087
  %11089 = vmatmul.bf16.gmra.mxu0 %v9490
  %v11090 = vpop.f32.mrf.mxu0
  %v11091 = vadd.f32 %v10922, %v11090
  %v11092 = vpop.f32.mrf.mxu0
  %v11093 = vadd.f32 %v10924, %v11092
  %11094 = vmatmul.bf16.gmra.mxu0 %v9493
  %v11095 = vpop.f32.mrf.mxu0
  %v11096 = vadd.f32 %v10927, %v11095
  %v11097 = vpop.f32.mrf.mxu0
  %v11098 = vadd.f32 %v10929, %v11097
  %11099 = vmatmul.bf16.gmra.mxu0 %v9496
  %v11100 = vpop.f32.mrf.mxu0
  %v11101 = vadd.f32 %v10932, %v11100
  %v11102 = vpop.f32.mrf.mxu0
  %v11103 = vadd.f32 %v10934, %v11102
  %11104 = vmatmul.bf16.gmra.mxu0 %v9499
  %v11105 = vpop.f32.mrf.mxu0
  %v11106 = vadd.f32 %v10937, %v11105
  %v11107 = vpop.f32.mrf.mxu0
  %v11108 = vadd.f32 %v10939, %v11107
  %11109 = vmatmul.bf16.gmra.mxu0 %v9502
  %v11110 = vpop.f32.mrf.mxu0
  %v11111 = vadd.f32 %v10942, %v11110
  %v11112 = vpop.f32.mrf.mxu0
  %v11113 = vadd.f32 %v10944, %v11112
  %11114 = vmatmul.bf16.gmra.mxu0 %v9505
  %v11115 = vpop.f32.mrf.mxu0
  %v11116 = vadd.f32 %v10947, %v11115
  %v11117 = vpop.f32.mrf.mxu0
  %v11118 = vadd.f32 %v10949, %v11117
  %11119 = vmatmul.bf16.gmra.mxu0 %v9508
  %v11120 = vpop.f32.mrf.mxu0
  %v11121 = vadd.f32 %v10952, %v11120
  %v11122 = vpop.f32.mrf.mxu0
  %v11123 = vadd.f32 %v10954, %v11122
  %11124 = vmatmul.bf16.gmra.mxu0 %v9511
  %v11125 = vpop.f32.mrf.mxu0
  %v11126 = vadd.f32 %v10957, %v11125
  %v11127 = vpop.f32.mrf.mxu0
  %v11128 = vadd.f32 %v10959, %v11127
  %11129 = vmatmul.bf16.gmra.mxu0 %v9619
  %v11130 = vpop.f32.mrf.mxu0
  %v11131 = vadd.f32 %v10962, %v11130
  %v11132 = vpop.f32.mrf.mxu0
  %v11133 = vadd.f32 %v10964, %v11132
  %11134 = vmatmul.bf16.gmra.mxu0 %v9514
  %v11135 = vpop.f32.mrf.mxu0
  %v11136 = vadd.f32 %v10967, %v11135
  %v11137 = vpop.f32.mrf.mxu0
  %v11138 = vadd.f32 %v10969, %v11137
  %11139 = vmatmul.bf16.gmra.mxu0 %v9517
  %v11140 = vpop.f32.mrf.mxu0
  %v11141 = vadd.f32 %v10972, %v11140
  %v11142 = vpop.f32.mrf.mxu0
  %v11143 = vadd.f32 %v10974, %v11142
  %11144 = vmatmul.bf16.gmra.mxu0 %v9520
  %v11145 = vpop.f32.mrf.mxu0
  %v11146 = vadd.f32 %v10977, %v11145
  %v11147 = vpop.f32.mrf.mxu0
  %v11148 = vadd.f32 %v10979, %v11147
  %11149 = vmatmul.bf16.gmra.mxu0 %v9523
  %v11150 = vpop.f32.mrf.mxu0
  %v11151 = vadd.f32 %v10982, %v11150
  %v11152 = vpop.f32.mrf.mxu0
  %v11153 = vadd.f32 %v10984, %v11152
  %11154 = vmatmul.bf16.gmra.mxu0 %v9526
  %v11155 = vpop.f32.mrf.mxu0
  %v11156 = vadd.f32 %v10987, %v11155
  %v11157 = vpop.f32.mrf.mxu0
  %v11158 = vadd.f32 %v10989, %v11157
  %11159 = vmatmul.bf16.gmra.mxu0 %v9529
  %v11160 = vpop.f32.mrf.mxu0
  %v11161 = vadd.f32 %v10992, %v11160
  %v11162 = vpop.f32.mrf.mxu0
  %v11163 = vadd.f32 %v10994, %v11162
  %11164 = vmatmul.bf16.gmra.mxu0 %v9532
  %v11165 = vpop.f32.mrf.mxu0
  %v11166 = vadd.f32 %v10997, %v11165
  %v11167 = vpop.f32.mrf.mxu0
  %v11168 = vadd.f32 %v10999, %v11167
  %11169 = vmatmul.bf16.gmra.mxu0 %v9535
  %v11170 = vpop.f32.mrf.mxu0
  %v11171 = vadd.f32 %v11002, %v11170
  %v11172 = vpop.f32.mrf.mxu0
  %v11173 = vadd.f32 %v11004, %v11172
  %11174 = vmatmul.bf16.gmra.mxu0 %v9538
  %v11175 = vpop.f32.mrf.mxu0
  %v11176 = vadd.f32 %v11007, %v11175
  %v11177 = vpop.f32.mrf.mxu0
  %v11178 = vadd.f32 %v11009, %v11177
  %11179 = vmatmul.bf16.gmra.mxu0 %v9541
  %v11180 = vpop.f32.mrf.mxu0
  %v11181 = vadd.f32 %v11012, %v11180
  %v11182 = vpop.f32.mrf.mxu0
  %v11183 = vadd.f32 %v11014, %v11182
  %11184 = vmatmul.bf16.gmra.mxu0 %v9544
  %v11185 = vpop.f32.mrf.mxu0
  %v11186 = vadd.f32 %v11017, %v11185
  %v11187 = vpop.f32.mrf.mxu0
  %v11188 = vadd.f32 %v11019, %v11187
  %11189 = vmatmul.bf16.gmra.mxu0 %v9547
  %v11190 = vpop.f32.mrf.mxu0
  %v11191 = vadd.f32 %v11022, %v11190
  %v11192 = vpop.f32.mrf.mxu0
  %v11193 = vadd.f32 %v11024, %v11192
  %11194 = vmatmul.bf16.gmra.mxu0 %v9550
  %v11195 = vpop.f32.mrf.mxu0
  %v11196 = vadd.f32 %v11027, %v11195
  %v11197 = vpop.f32.mrf.mxu0
  %v11198 = vadd.f32 %v11029, %v11197
  %11199 = vmatmul.bf16.gmra.mxu0 %v9553
  %v11200 = vpop.f32.mrf.mxu0
  %v11201 = vadd.f32 %v11032, %v11200
  %v11202 = vpop.f32.mrf.mxu0
  %v11203 = vadd.f32 %v11034, %v11202
  %11204 = vmatmul.bf16.gmra.mxu0 %v9556
  %v11205 = vpop.f32.mrf.mxu0
  %v11206 = vadd.f32 %v11037, %v11205
  %v11207 = vpop.f32.mrf.mxu0
  %v11208 = vadd.f32 %v11039, %v11207
  %11209 = vmatmul.bf16.gmra.mxu0 %v9622
  %v11210 = vpop.f32.mrf.mxu0
  %v11211 = vadd.f32 %v11042, %v11210
  %v11212 = vpop.f32.mrf.mxu0
  %v11213 = vadd.f32 %v11044, %v11212
  %11214 = vdwg.mxu0
  %11215 = vmatpush.bf16.msra.mxu0 %v10112
  %11216 = vmatpush.bf16.msra.mxu0 %v10111
  %11217 = vmatpush.bf16.msra.mxu0 %v10110
  %11218 = vmatpush.bf16.msra.mxu0 %v10109
  %11219 = vmatpush.bf16.msra.mxu0 %v10108
  %11220 = vmatpush.bf16.msra.mxu0 %v10107
  %11221 = vmatpush.bf16.msra.mxu0 %v10106
  %11222 = vmatpush.bf16.msra.mxu0 %v10105
  %11223 = vmatmul.bf16.gmra.mxu0 %v8954
  %v11224 = vpop.f32.mrf.mxu0
  %v11225 = vadd.f32 %v11056, %v11224
  %v11226 = vpop.f32.mrf.mxu0
  %v11227 = vadd.f32 %v11058, %v11226
  %11228 = vmatmul.bf16.gmra.mxu0 %v8955
  %v11229 = vpop.f32.mrf.mxu0
  %v11230 = vadd.f32 %v11061, %v11229
  %v11231 = vpop.f32.mrf.mxu0
  %v11232 = vadd.f32 %v11063, %v11231
  %11233 = vmatmul.bf16.gmra.mxu0 %v8956
  %v11234 = vpop.f32.mrf.mxu0
  %v11235 = vadd.f32 %v11066, %v11234
  %v11236 = vpop.f32.mrf.mxu0
  %v11237 = vadd.f32 %v11068, %v11236
  %11238 = vmatmul.bf16.gmra.mxu0 %v8957
  %v11239 = vpop.f32.mrf.mxu0
  %v11240 = vadd.f32 %v11071, %v11239
  %v11241 = vpop.f32.mrf.mxu0
  %v11242 = vadd.f32 %v11073, %v11241
  %11243 = vmatmul.bf16.gmra.mxu0 %v8958
  %v11244 = vpop.f32.mrf.mxu0
  %v11245 = vadd.f32 %v11076, %v11244
  %v11246 = vpop.f32.mrf.mxu0
  %v11247 = vadd.f32 %v11078, %v11246
  %11248 = vmatmul.bf16.gmra.mxu0 %v8959
  %v11249 = vpop.f32.mrf.mxu0
  %v11250 = vadd.f32 %v11081, %v11249
  %v11251 = vpop.f32.mrf.mxu0
  %v11252 = vadd.f32 %v11083, %v11251
  %11253 = vmatmul.bf16.gmra.mxu0 %v8960
  %v11254 = vpop.f32.mrf.mxu0
  %v11255 = vadd.f32 %v11086, %v11254
  %v11256 = vpop.f32.mrf.mxu0
  %v11257 = vadd.f32 %v11088, %v11256
  %11258 = vmatmul.bf16.gmra.mxu0 %v8961
  %v11259 = vpop.f32.mrf.mxu0
  %v11260 = vadd.f32 %v11091, %v11259
  %v11261 = vpop.f32.mrf.mxu0
  %v11262 = vadd.f32 %v11093, %v11261
  %11263 = vmatmul.bf16.gmra.mxu0 %v8962
  %v11264 = vpop.f32.mrf.mxu0
  %v11265 = vadd.f32 %v11096, %v11264
  %v11266 = vpop.f32.mrf.mxu0
  %v11267 = vadd.f32 %v11098, %v11266
  %11268 = vmatmul.bf16.gmra.mxu0 %v8963
  %v11269 = vpop.f32.mrf.mxu0
  %v11270 = vadd.f32 %v11101, %v11269
  %v11271 = vpop.f32.mrf.mxu0
  %v11272 = vadd.f32 %v11103, %v11271
  %11273 = vmatmul.bf16.gmra.mxu0 %v8964
  %v11274 = vpop.f32.mrf.mxu0
  %v11275 = vadd.f32 %v11106, %v11274
  %v11276 = vpop.f32.mrf.mxu0
  %v11277 = vadd.f32 %v11108, %v11276
  %11278 = vmatmul.bf16.gmra.mxu0 %v8965
  %v11279 = vpop.f32.mrf.mxu0
  %v11280 = vadd.f32 %v11111, %v11279
  %v11281 = vpop.f32.mrf.mxu0
  %v11282 = vadd.f32 %v11113, %v11281
  %11283 = vmatmul.bf16.gmra.mxu0 %v8966
  %v11284 = vpop.f32.mrf.mxu0
  %v11285 = vadd.f32 %v11116, %v11284
  %v11286 = vpop.f32.mrf.mxu0
  %v11287 = vadd.f32 %v11118, %v11286
  %11288 = vmatmul.bf16.gmra.mxu0 %v8967
  %v11289 = vpop.f32.mrf.mxu0
  %v11290 = vadd.f32 %v11121, %v11289
  %v11291 = vpop.f32.mrf.mxu0
  %v11292 = vadd.f32 %v11123, %v11291
  %11293 = vmatmul.bf16.gmra.mxu0 %v8968
  %v11294 = vpop.f32.mrf.mxu0
  %v11295 = vadd.f32 %v11126, %v11294
  %v11296 = vpop.f32.mrf.mxu0
  %v11297 = vadd.f32 %v11128, %v11296
  %11298 = vmatmul.bf16.gmra.mxu0 %v974
  %v11299 = vpop.f32.mrf.mxu0
  %v11300 = vadd.f32 %v11131, %v11299
  %v11301 = vpop.f32.mrf.mxu0
  %v11302 = vadd.f32 %v11133, %v11301
  %11303 = vmatmul.bf16.gmra.mxu0 %v8970
  %v11304 = vpop.f32.mrf.mxu0
  %v11305 = vadd.f32 %v11136, %v11304
  %v11306 = vpop.f32.mrf.mxu0
  %v11307 = vadd.f32 %v11138, %v11306
  %11308 = vmatmul.bf16.gmra.mxu0 %v8971
  %v11309 = vpop.f32.mrf.mxu0
  %v11310 = vadd.f32 %v11141, %v11309
  %v11311 = vpop.f32.mrf.mxu0
  %v11312 = vadd.f32 %v11143, %v11311
  %11313 = vmatmul.bf16.gmra.mxu0 %v8972
  %v11314 = vpop.f32.mrf.mxu0
  %v11315 = vadd.f32 %v11146, %v11314
  %v11316 = vpop.f32.mrf.mxu0
  %v11317 = vadd.f32 %v11148, %v11316
  %11318 = vmatmul.bf16.gmra.mxu0 %v8973
  %v11319 = vpop.f32.mrf.mxu0
  %v11320 = vadd.f32 %v11151, %v11319
  %v11321 = vpop.f32.mrf.mxu0
  %v11322 = vadd.f32 %v11153, %v11321
  %11323 = vmatmul.bf16.gmra.mxu0 %v8974
  %v11324 = vpop.f32.mrf.mxu0
  %v11325 = vadd.f32 %v11156, %v11324
  %v11326 = vpop.f32.mrf.mxu0
  %v11327 = vadd.f32 %v11158, %v11326
  %11328 = vmatmul.bf16.gmra.mxu0 %v8975
  %v11329 = vpop.f32.mrf.mxu0
  %v11330 = vadd.f32 %v11161, %v11329
  %v11331 = vpop.f32.mrf.mxu0
  %v11332 = vadd.f32 %v11163, %v11331
  %11333 = vmatmul.bf16.gmra.mxu0 %v8976
  %v11334 = vpop.f32.mrf.mxu0
  %v11335 = vadd.f32 %v11166, %v11334
  %v11336 = vpop.f32.mrf.mxu0
  %v11337 = vadd.f32 %v11168, %v11336
  %11338 = vmatmul.bf16.gmra.mxu0 %v8977
  %v11339 = vpop.f32.mrf.mxu0
  %v11340 = vadd.f32 %v11171, %v11339
  %v11341 = vpop.f32.mrf.mxu0
  %v11342 = vadd.f32 %v11173, %v11341
  %11343 = vmatmul.bf16.gmra.mxu0 %v8978
  %v11344 = vpop.f32.mrf.mxu0
  %v11345 = vadd.f32 %v11176, %v11344
  %v11346 = vpop.f32.mrf.mxu0
  %v11347 = vadd.f32 %v11178, %v11346
  %11348 = vmatmul.bf16.gmra.mxu0 %v8979
  %v11349 = vpop.f32.mrf.mxu0
  %v11350 = vadd.f32 %v11181, %v11349
  %v11351 = vpop.f32.mrf.mxu0
  %v11352 = vadd.f32 %v11183, %v11351
  %11353 = vmatmul.bf16.gmra.mxu0 %v8980
  %v11354 = vpop.f32.mrf.mxu0
  %v11355 = vadd.f32 %v11186, %v11354
  %v11356 = vpop.f32.mrf.mxu0
  %v11357 = vadd.f32 %v11188, %v11356
  %11358 = vmatmul.bf16.gmra.mxu0 %v8981
  %v11359 = vpop.f32.mrf.mxu0
  %v11360 = vadd.f32 %v11191, %v11359
  %v11361 = vpop.f32.mrf.mxu0
  %v11362 = vadd.f32 %v11193, %v11361
  %11363 = vmatmul.bf16.gmra.mxu0 %v8982
  %v11364 = vpop.f32.mrf.mxu0
  %v11365 = vadd.f32 %v11196, %v11364
  %v11366 = vpop.f32.mrf.mxu0
  %v11367 = vadd.f32 %v11198, %v11366
  %11368 = vmatmul.bf16.gmra.mxu0 %v8983
  %v11369 = vpop.f32.mrf.mxu0
  %v11370 = vadd.f32 %v11201, %v11369
  %v11371 = vpop.f32.mrf.mxu0
  %v11372 = vadd.f32 %v11203, %v11371
  %11373 = vmatmul.bf16.gmra.mxu0 %v8984
  %v11374 = vpop.f32.mrf.mxu0
  %v11375 = vadd.f32 %v11206, %v11374
  %v11376 = vpop.f32.mrf.mxu0
  %v11377 = vadd.f32 %v11208, %v11376
  %11378 = vmatmul.bf16.gmra.mxu0 %v974
  %v11379 = vpop.f32.mrf.mxu0
  %v11380 = vadd.f32 %v11211, %v11379
  %v11381 = vpop.f32.mrf.mxu0
  %v11382 = vadd.f32 %v11213, %v11381
  %11383 = vdwg.mxu0
  %11384 = vmatpush.bf16.msra.mxu0 %v10120
  %11385 = vmatpush.bf16.msra.mxu0 %v10119
  %11386 = vmatpush.bf16.msra.mxu0 %v10118
  %11387 = vmatpush.bf16.msra.mxu0 %v10117
  %11388 = vmatpush.bf16.msra.mxu0 %v10116
  %11389 = vmatpush.bf16.msra.mxu0 %v10115
  %11390 = vmatpush.bf16.msra.mxu0 %v10114
  %11391 = vmatpush.bf16.msra.mxu0 %v10113
  %11392 = vmatmul.bf16.gmra.mxu0 %v9040
  %v11393 = vpop.f32.mrf.mxu0
  %v11394 = vadd.f32 %v11225, %v11393
  %v11395 = vpop.f32.mrf.mxu0
  %v11396 = vadd.f32 %v11227, %v11395
  %11397 = vmatmul.bf16.gmra.mxu0 %v9052
  %v11398 = vpop.f32.mrf.mxu0
  %v11399 = vadd.f32 %v11230, %v11398
  %v11400 = vpop.f32.mrf.mxu0
  %v11401 = vadd.f32 %v11232, %v11400
  %11402 = vmatmul.bf16.gmra.mxu0 %v9064
  %v11403 = vpop.f32.mrf.mxu0
  %v11404 = vadd.f32 %v11235, %v11403
  %v11405 = vpop.f32.mrf.mxu0
  %v11406 = vadd.f32 %v11237, %v11405
  %11407 = vmatmul.bf16.gmra.mxu0 %v9076
  %v11408 = vpop.f32.mrf.mxu0
  %v11409 = vadd.f32 %v11240, %v11408
  %v11410 = vpop.f32.mrf.mxu0
  %v11411 = vadd.f32 %v11242, %v11410
  %11412 = vmatmul.bf16.gmra.mxu0 %v9088
  %v11413 = vpop.f32.mrf.mxu0
  %v11414 = vadd.f32 %v11245, %v11413
  %v11415 = vpop.f32.mrf.mxu0
  %v11416 = vadd.f32 %v11247, %v11415
  %11417 = vmatmul.bf16.gmra.mxu0 %v9100
  %v11418 = vpop.f32.mrf.mxu0
  %v11419 = vadd.f32 %v11250, %v11418
  %v11420 = vpop.f32.mrf.mxu0
  %v11421 = vadd.f32 %v11252, %v11420
  %11422 = vmatmul.bf16.gmra.mxu0 %v9112
  %v11423 = vpop.f32.mrf.mxu0
  %v11424 = vadd.f32 %v11255, %v11423
  %v11425 = vpop.f32.mrf.mxu0
  %v11426 = vadd.f32 %v11257, %v11425
  %11427 = vmatmul.bf16.gmra.mxu0 %v9124
  %v11428 = vpop.f32.mrf.mxu0
  %v11429 = vadd.f32 %v11260, %v11428
  %v11430 = vpop.f32.mrf.mxu0
  %v11431 = vadd.f32 %v11262, %v11430
  %11432 = vmatmul.bf16.gmra.mxu0 %v9136
  %v11433 = vpop.f32.mrf.mxu0
  %v11434 = vadd.f32 %v11265, %v11433
  %v11435 = vpop.f32.mrf.mxu0
  %v11436 = vadd.f32 %v11267, %v11435
  %11437 = vmatmul.bf16.gmra.mxu0 %v9148
  %v11438 = vpop.f32.mrf.mxu0
  %v11439 = vadd.f32 %v11270, %v11438
  %v11440 = vpop.f32.mrf.mxu0
  %v11441 = vadd.f32 %v11272, %v11440
  %11442 = vmatmul.bf16.gmra.mxu0 %v9160
  %v11443 = vpop.f32.mrf.mxu0
  %v11444 = vadd.f32 %v11275, %v11443
  %v11445 = vpop.f32.mrf.mxu0
  %v11446 = vadd.f32 %v11277, %v11445
  %11447 = vmatmul.bf16.gmra.mxu0 %v9172
  %v11448 = vpop.f32.mrf.mxu0
  %v11449 = vadd.f32 %v11280, %v11448
  %v11450 = vpop.f32.mrf.mxu0
  %v11451 = vadd.f32 %v11282, %v11450
  %11452 = vmatmul.bf16.gmra.mxu0 %v9184
  %v11453 = vpop.f32.mrf.mxu0
  %v11454 = vadd.f32 %v11285, %v11453
  %v11455 = vpop.f32.mrf.mxu0
  %v11456 = vadd.f32 %v11287, %v11455
  %11457 = vmatmul.bf16.gmra.mxu0 %v9196
  %v11458 = vpop.f32.mrf.mxu0
  %v11459 = vadd.f32 %v11290, %v11458
  %v11460 = vpop.f32.mrf.mxu0
  %v11461 = vadd.f32 %v11292, %v11460
  %11462 = vmatmul.bf16.gmra.mxu0 %v9598
  %v11463 = vpop.f32.mrf.mxu0
  %v11464 = vadd.f32 %v11295, %v11463
  %v11465 = vpop.f32.mrf.mxu0
  %v11466 = vadd.f32 %v11297, %v11465
  %11467 = vmatmul.bf16.gmra.mxu0 %v5527
  %v11468 = vpop.f32.mrf.mxu0
  %v11469 = vadd.f32 %v11300, %v11468
  %v11470 = vpop.f32.mrf.mxu0
  %v11471 = vadd.f32 %v11302, %v11470
  %11472 = vmatmul.bf16.gmra.mxu0 %v9220
  %v11473 = vpop.f32.mrf.mxu0
  %v11474 = vadd.f32 %v11305, %v11473
  %v11475 = vpop.f32.mrf.mxu0
  %v11476 = vadd.f32 %v11307, %v11475
  %11477 = vmatmul.bf16.gmra.mxu0 %v9232
  %v11478 = vpop.f32.mrf.mxu0
  %v11479 = vadd.f32 %v11310, %v11478
  %v11480 = vpop.f32.mrf.mxu0
  %v11481 = vadd.f32 %v11312, %v11480
  %11482 = vmatmul.bf16.gmra.mxu0 %v9244
  %v11483 = vpop.f32.mrf.mxu0
  %v11484 = vadd.f32 %v11315, %v11483
  %v11485 = vpop.f32.mrf.mxu0
  %v11486 = vadd.f32 %v11317, %v11485
  %11487 = vmatmul.bf16.gmra.mxu0 %v9256
  %v11488 = vpop.f32.mrf.mxu0
  %v11489 = vadd.f32 %v11320, %v11488
  %v11490 = vpop.f32.mrf.mxu0
  %v11491 = vadd.f32 %v11322, %v11490
  %11492 = vmatmul.bf16.gmra.mxu0 %v9268
  %v11493 = vpop.f32.mrf.mxu0
  %v11494 = vadd.f32 %v11325, %v11493
  %v11495 = vpop.f32.mrf.mxu0
  %v11496 = vadd.f32 %v11327, %v11495
  %11497 = vmatmul.bf16.gmra.mxu0 %v9280
  %v11498 = vpop.f32.mrf.mxu0
  %v11499 = vadd.f32 %v11330, %v11498
  %v11500 = vpop.f32.mrf.mxu0
  %v11501 = vadd.f32 %v11332, %v11500
  %11502 = vmatmul.bf16.gmra.mxu0 %v9292
  %v11503 = vpop.f32.mrf.mxu0
  %v11504 = vadd.f32 %v11335, %v11503
  %v11505 = vpop.f32.mrf.mxu0
  %v11506 = vadd.f32 %v11337, %v11505
  %11507 = vmatmul.bf16.gmra.mxu0 %v9304
  %v11508 = vpop.f32.mrf.mxu0
  %v11509 = vadd.f32 %v11340, %v11508
  %v11510 = vpop.f32.mrf.mxu0
  %v11511 = vadd.f32 %v11342, %v11510
  %11512 = vmatmul.bf16.gmra.mxu0 %v9316
  %v11513 = vpop.f32.mrf.mxu0
  %v11514 = vadd.f32 %v11345, %v11513
  %v11515 = vpop.f32.mrf.mxu0
  %v11516 = vadd.f32 %v11347, %v11515
  %11517 = vmatmul.bf16.gmra.mxu0 %v9328
  %v11518 = vpop.f32.mrf.mxu0
  %v11519 = vadd.f32 %v11350, %v11518
  %v11520 = vpop.f32.mrf.mxu0
  %v11521 = vadd.f32 %v11352, %v11520
  %11522 = vmatmul.bf16.gmra.mxu0 %v9340
  %v11523 = vpop.f32.mrf.mxu0
  %v11524 = vadd.f32 %v11355, %v11523
  %v11525 = vpop.f32.mrf.mxu0
  %v11526 = vadd.f32 %v11357, %v11525
  %11527 = vmatmul.bf16.gmra.mxu0 %v9352
  %v11528 = vpop.f32.mrf.mxu0
  %v11529 = vadd.f32 %v11360, %v11528
  %v11530 = vpop.f32.mrf.mxu0
  %v11531 = vadd.f32 %v11362, %v11530
  %11532 = vmatmul.bf16.gmra.mxu0 %v9364
  %v11533 = vpop.f32.mrf.mxu0
  %v11534 = vadd.f32 %v11365, %v11533
  %v11535 = vpop.f32.mrf.mxu0
  %v11536 = vadd.f32 %v11367, %v11535
  %11537 = vmatmul.bf16.gmra.mxu0 %v9376
  %v11538 = vpop.f32.mrf.mxu0
  %v11539 = vadd.f32 %v11370, %v11538
  %v11540 = vpop.f32.mrf.mxu0
  %v11541 = vadd.f32 %v11372, %v11540
  %11542 = vmatmul.bf16.gmra.mxu0 %v9610
  %v11543 = vpop.f32.mrf.mxu0
  %v11544 = vadd.f32 %v11375, %v11543
  %v11545 = vpop.f32.mrf.mxu0
  %v11546 = vadd.f32 %v11377, %v11545
  %11547 = vmatmul.bf16.gmra.mxu0 %v5527
  %v11548 = vpop.f32.mrf.mxu0
  %v11549 = vadd.f32 %v11380, %v11548
  %v11550 = vpop.f32.mrf.mxu0
  %v11551 = vadd.f32 %v11382, %v11550
  %11552 = vdwg.mxu0
  %11553 = vmatpush.bf16.msra.mxu0 %v10128
  %11554 = vmatpush.bf16.msra.mxu0 %v10127
  %11555 = vmatpush.bf16.msra.mxu0 %v10126
  %11556 = vmatpush.bf16.msra.mxu0 %v10125
  %11557 = vmatpush.bf16.msra.mxu0 %v10124
  %11558 = vmatpush.bf16.msra.mxu0 %v10123
  %11559 = vmatpush.bf16.msra.mxu0 %v10122
  %11560 = vmatpush.bf16.msra.mxu0 %v10121
  %11561 = vmatmul.bf16.gmra.mxu0 %v9472
  %v11562 = vpop.f32.mrf.mxu0
  %v11563 = vadd.f32 %v11394, %v11562
  %v11564 = vpop.f32.mrf.mxu0
  %v11565 = vadd.f32 %v11396, %v11564
  %11566 = vmatmul.bf16.gmra.mxu0 %v9475
  %v11567 = vpop.f32.mrf.mxu0
  %v11568 = vadd.f32 %v11399, %v11567
  %v11569 = vpop.f32.mrf.mxu0
  %v11570 = vadd.f32 %v11401, %v11569
  %11571 = vmatmul.bf16.gmra.mxu0 %v9478
  %v11572 = vpop.f32.mrf.mxu0
  %v11573 = vadd.f32 %v11404, %v11572
  %v11574 = vpop.f32.mrf.mxu0
  %v11575 = vadd.f32 %v11406, %v11574
  %11576 = vmatmul.bf16.gmra.mxu0 %v9481
  %v11577 = vpop.f32.mrf.mxu0
  %v11578 = vadd.f32 %v11409, %v11577
  %v11579 = vpop.f32.mrf.mxu0
  %v11580 = vadd.f32 %v11411, %v11579
  %11581 = vmatmul.bf16.gmra.mxu0 %v9484
  %v11582 = vpop.f32.mrf.mxu0
  %v11583 = vadd.f32 %v11414, %v11582
  %v11584 = vpop.f32.mrf.mxu0
  %v11585 = vadd.f32 %v11416, %v11584
  %11586 = vmatmul.bf16.gmra.mxu0 %v9487
  %v11587 = vpop.f32.mrf.mxu0
  %v11588 = vadd.f32 %v11419, %v11587
  %v11589 = vpop.f32.mrf.mxu0
  %v11590 = vadd.f32 %v11421, %v11589
  %11591 = vmatmul.bf16.gmra.mxu0 %v9490
  %v11592 = vpop.f32.mrf.mxu0
  %v11593 = vadd.f32 %v11424, %v11592
  %v11594 = vpop.f32.mrf.mxu0
  %v11595 = vadd.f32 %v11426, %v11594
  %11596 = vmatmul.bf16.gmra.mxu0 %v9493
  %v11597 = vpop.f32.mrf.mxu0
  %v11598 = vadd.f32 %v11429, %v11597
  %v11599 = vpop.f32.mrf.mxu0
  %v11600 = vadd.f32 %v11431, %v11599
  %11601 = vmatmul.bf16.gmra.mxu0 %v9496
  %v11602 = vpop.f32.mrf.mxu0
  %v11603 = vadd.f32 %v11434, %v11602
  %v11604 = vpop.f32.mrf.mxu0
  %v11605 = vadd.f32 %v11436, %v11604
  %11606 = vmatmul.bf16.gmra.mxu0 %v9499
  %v11607 = vpop.f32.mrf.mxu0
  %v11608 = vadd.f32 %v11439, %v11607
  %v11609 = vpop.f32.mrf.mxu0
  %v11610 = vadd.f32 %v11441, %v11609
  %11611 = vmatmul.bf16.gmra.mxu0 %v9502
  %v11612 = vpop.f32.mrf.mxu0
  %v11613 = vadd.f32 %v11444, %v11612
  %v11614 = vpop.f32.mrf.mxu0
  %v11615 = vadd.f32 %v11446, %v11614
  %11616 = vmatmul.bf16.gmra.mxu0 %v9505
  %v11617 = vpop.f32.mrf.mxu0
  %v11618 = vadd.f32 %v11449, %v11617
  %v11619 = vpop.f32.mrf.mxu0
  %v11620 = vadd.f32 %v11451, %v11619
  %11621 = vmatmul.bf16.gmra.mxu0 %v9508
  %v11622 = vpop.f32.mrf.mxu0
  %v11623 = vadd.f32 %v11454, %v11622
  %v11624 = vpop.f32.mrf.mxu0
  %v11625 = vadd.f32 %v11456, %v11624
  %11626 = vmatmul.bf16.gmra.mxu0 %v9511
  %v11627 = vpop.f32.mrf.mxu0
  %v11628 = vadd.f32 %v11459, %v11627
  %v11629 = vpop.f32.mrf.mxu0
  %v11630 = vadd.f32 %v11461, %v11629
  %11631 = vmatmul.bf16.gmra.mxu0 %v9619
  %v11632 = vpop.f32.mrf.mxu0
  %v11633 = vadd.f32 %v11464, %v11632
  %v11634 = vpop.f32.mrf.mxu0
  %v11635 = vadd.f32 %v11466, %v11634
  %11636 = vmatmul.bf16.gmra.mxu0 %v5984
  %v11637 = vpop.f32.mrf.mxu0
  %v11638 = vadd.f32 %v11469, %v11637
  %v11639 = vpop.f32.mrf.mxu0
  %v11640 = vadd.f32 %v11471, %v11639
  %11641 = vmatmul.bf16.gmra.mxu0 %v9517
  %v11642 = vpop.f32.mrf.mxu0
  %v11643 = vadd.f32 %v11474, %v11642
  %v11644 = vpop.f32.mrf.mxu0
  %v11645 = vadd.f32 %v11476, %v11644
  %11646 = vmatmul.bf16.gmra.mxu0 %v9520
  %v11647 = vpop.f32.mrf.mxu0
  %v11648 = vadd.f32 %v11479, %v11647
  %v11649 = vpop.f32.mrf.mxu0
  %v11650 = vadd.f32 %v11481, %v11649
  %11651 = vmatmul.bf16.gmra.mxu0 %v9523
  %v11652 = vpop.f32.mrf.mxu0
  %v11653 = vadd.f32 %v11484, %v11652
  %v11654 = vpop.f32.mrf.mxu0
  %v11655 = vadd.f32 %v11486, %v11654
  %11656 = vmatmul.bf16.gmra.mxu0 %v9526
  %v11657 = vpop.f32.mrf.mxu0
  %v11658 = vadd.f32 %v11489, %v11657
  %v11659 = vpop.f32.mrf.mxu0
  %v11660 = vadd.f32 %v11491, %v11659
  %11661 = vmatmul.bf16.gmra.mxu0 %v9529
  %v11662 = vpop.f32.mrf.mxu0
  %v11663 = vadd.f32 %v11494, %v11662
  %v11664 = vpop.f32.mrf.mxu0
  %v11665 = vadd.f32 %v11496, %v11664
  %11666 = vmatmul.bf16.gmra.mxu0 %v9532
  %v11667 = vpop.f32.mrf.mxu0
  %v11668 = vadd.f32 %v11499, %v11667
  %v11669 = vpop.f32.mrf.mxu0
  %v11670 = vadd.f32 %v11501, %v11669
  %11671 = vmatmul.bf16.gmra.mxu0 %v9535
  %v11672 = vpop.f32.mrf.mxu0
  %v11673 = vadd.f32 %v11504, %v11672
  %v11674 = vpop.f32.mrf.mxu0
  %v11675 = vadd.f32 %v11506, %v11674
  %11676 = vmatmul.bf16.gmra.mxu0 %v9538
  %v11677 = vpop.f32.mrf.mxu0
  %v11678 = vadd.f32 %v11509, %v11677
  %v11679 = vpop.f32.mrf.mxu0
  %v11680 = vadd.f32 %v11511, %v11679
  %11681 = vmatmul.bf16.gmra.mxu0 %v9541
  %v11682 = vpop.f32.mrf.mxu0
  %v11683 = vadd.f32 %v11514, %v11682
  %v11684 = vpop.f32.mrf.mxu0
  %v11685 = vadd.f32 %v11516, %v11684
  %11686 = vmatmul.bf16.gmra.mxu0 %v9544
  %v11687 = vpop.f32.mrf.mxu0
  %v11688 = vadd.f32 %v11519, %v11687
  %v11689 = vpop.f32.mrf.mxu0
  %v11690 = vadd.f32 %v11521, %v11689
  %11691 = vmatmul.bf16.gmra.mxu0 %v9547
  %v11692 = vpop.f32.mrf.mxu0
  %v11693 = vadd.f32 %v11524, %v11692
  %v11694 = vpop.f32.mrf.mxu0
  %v11695 = vadd.f32 %v11526, %v11694
  %11696 = vmatmul.bf16.gmra.mxu0 %v9550
  %v11697 = vpop.f32.mrf.mxu0
  %v11698 = vadd.f32 %v11529, %v11697
  %v11699 = vpop.f32.mrf.mxu0
  %v11700 = vadd.f32 %v11531, %v11699
  %11701 = vmatmul.bf16.gmra.mxu0 %v9553
  %v11702 = vpop.f32.mrf.mxu0
  %v11703 = vadd.f32 %v11534, %v11702
  %v11704 = vpop.f32.mrf.mxu0
  %v11705 = vadd.f32 %v11536, %v11704
  %11706 = vmatmul.bf16.gmra.mxu0 %v9556
  %v11707 = vpop.f32.mrf.mxu0
  %v11708 = vadd.f32 %v11539, %v11707
  %v11709 = vpop.f32.mrf.mxu0
  %v11710 = vadd.f32 %v11541, %v11709
  %11711 = vmatmul.bf16.gmra.mxu0 %v9622
  %v11712 = vpop.f32.mrf.mxu0
  %v11713 = vadd.f32 %v11544, %v11712
  %v11714 = vpop.f32.mrf.mxu0
  %v11715 = vadd.f32 %v11546, %v11714
  %11716 = vmatmul.bf16.gmra.mxu0 %v5984
  %v11717 = vpop.f32.mrf.mxu0
  %v11718 = vadd.f32 %v11549, %v11717
  %v11719 = vpop.f32.mrf.mxu0
  %v11720 = vadd.f32 %v11551, %v11719
  %11721 = vdwg.mxu0
  %v11722 = vld [vmem:[%s18] sm:$0x1]
  %v11724 = vperm.slane %v11722, 0
  %v11726 = vmul.f32 %v11563, %v11724
  %v11727 = vmul.f32 %v11565, %v11724
  %v11728 = vmul.f32 %v11568, %v11724
  %v11729 = vmul.f32 %v11570, %v11724
  %v11730 = vmul.f32 %v11573, %v11724
  %v11731 = vmul.f32 %v11575, %v11724
  %v11732 = vmul.f32 %v11578, %v11724
  %v11733 = vmul.f32 %v11580, %v11724
  %v11734 = vmul.f32 %v11583, %v11724
  %v11735 = vmul.f32 %v11585, %v11724
  %v11736 = vmul.f32 %v11588, %v11724
  %v11737 = vmul.f32 %v11590, %v11724
  %v11738 = vmul.f32 %v11593, %v11724
  %v11739 = vmul.f32 %v11595, %v11724
  %v11740 = vmul.f32 %v11598, %v11724
  %v11741 = vmul.f32 %v11600, %v11724
  %v11742 = vmul.f32 %v11603, %v11724
  %v11743 = vmul.f32 %v11605, %v11724
  %v11744 = vmul.f32 %v11608, %v11724
  %v11745 = vmul.f32 %v11610, %v11724
  %v11746 = vmul.f32 %v11613, %v11724
  %v11747 = vmul.f32 %v11615, %v11724
  %v11748 = vmul.f32 %v11618, %v11724
  %v11749 = vmul.f32 %v11620, %v11724
  %v11750 = vmul.f32 %v11623, %v11724
  %v11751 = vmul.f32 %v11625, %v11724
  %v11752 = vmul.f32 %v11628, %v11724
  %v11753 = vmul.f32 %v11630, %v11724
  %v11754 = vmul.f32 %v11633, %v11724
  %v11755 = vmul.f32 %v11635, %v11724
  %v11756 = vmul.f32 %v11638, %v11724
  %v11757 = vmul.f32 %v11640, %v11724
  %v11758 = vmul.f32 %v11643, %v11724
  %v11759 = vmul.f32 %v11645, %v11724
  %v11760 = vmul.f32 %v11648, %v11724
  %v11761 = vmul.f32 %v11650, %v11724
  %v11762 = vmul.f32 %v11653, %v11724
  %v11763 = vmul.f32 %v11655, %v11724
  %v11764 = vmul.f32 %v11658, %v11724
  %v11765 = vmul.f32 %v11660, %v11724
  %v11766 = vmul.f32 %v11663, %v11724
  %v11767 = vmul.f32 %v11665, %v11724
  %v11768 = vmul.f32 %v11668, %v11724
  %v11769 = vmul.f32 %v11670, %v11724
  %v11770 = vmul.f32 %v11673, %v11724
  %v11771 = vmul.f32 %v11675, %v11724
  %v11772 = vmul.f32 %v11678, %v11724
  %v11773 = vmul.f32 %v11680, %v11724
  %v11774 = vmul.f32 %v11683, %v11724
  %v11775 = vmul.f32 %v11685, %v11724
  %v11776 = vmul.f32 %v11688, %v11724
  %v11777 = vmul.f32 %v11690, %v11724
  %v11778 = vmul.f32 %v11693, %v11724
  %v11779 = vmul.f32 %v11695, %v11724
  %v11780 = vmul.f32 %v11698, %v11724
  %v11781 = vmul.f32 %v11700, %v11724
  %v11782 = vmul.f32 %v11703, %v11724
  %v11783 = vmul.f32 %v11705, %v11724
  %v11784 = vmul.f32 %v11708, %v11724
  %v11785 = vmul.f32 %v11710, %v11724
  %v11786 = vmul.f32 %v11713, %v11724
  %v11787 = vmul.f32 %v11715, %v11724
  %v11788 = vmul.f32 %v11718, %v11724
  %v11789 = vmul.f32 %v11720, %v11724
  %v11790 = vld [vmem:[%s19] sm:$0x1]
  %v11792 = vperm.slane %v11790, 0
  %v11794 = vadd.f32 %v11726, %v11792
  %v11795 = vadd.f32 %v11727, %v11792
  %v11796 = vadd.f32 %v11728, %v11792
  %v11797 = vadd.f32 %v11729, %v11792
  %v11798 = vadd.f32 %v11730, %v11792
  %v11799 = vadd.f32 %v11731, %v11792
  %v11800 = vadd.f32 %v11732, %v11792
  %v11801 = vadd.f32 %v11733, %v11792
  %v11802 = vadd.f32 %v11734, %v11792
  %v11803 = vadd.f32 %v11735, %v11792
  %v11804 = vadd.f32 %v11736, %v11792
  %v11805 = vadd.f32 %v11737, %v11792
  %v11806 = vadd.f32 %v11738, %v11792
  %v11807 = vadd.f32 %v11739, %v11792
  %v11808 = vadd.f32 %v11740, %v11792
  %v11809 = vadd.f32 %v11741, %v11792
  %v11810 = vadd.f32 %v11742, %v11792
  %v11811 = vadd.f32 %v11743, %v11792
  %v11812 = vadd.f32 %v11744, %v11792
  %v11813 = vadd.f32 %v11745, %v11792
  %v11814 = vadd.f32 %v11746, %v11792
  %v11815 = vadd.f32 %v11747, %v11792
  %v11816 = vadd.f32 %v11748, %v11792
  %v11817 = vadd.f32 %v11749, %v11792
  %v11818 = vadd.f32 %v11750, %v11792
  %v11819 = vadd.f32 %v11751, %v11792
  %v11820 = vadd.f32 %v11752, %v11792
  %v11821 = vadd.f32 %v11753, %v11792
  %v11822 = vadd.f32 %v11754, %v11792
  %v11823 = vadd.f32 %v11755, %v11792
  %v11824 = vadd.f32 %v11756, %v11792
  %v11825 = vadd.f32 %v11757, %v11792
  %v11826 = vadd.f32 %v11758, %v11792
  %v11827 = vadd.f32 %v11759, %v11792
  %v11828 = vadd.f32 %v11760, %v11792
  %v11829 = vadd.f32 %v11761, %v11792
  %v11830 = vadd.f32 %v11762, %v11792
  %v11831 = vadd.f32 %v11763, %v11792
  %v11832 = vadd.f32 %v11764, %v11792
  %v11833 = vadd.f32 %v11765, %v11792
  %v11834 = vadd.f32 %v11766, %v11792
  %v11835 = vadd.f32 %v11767, %v11792
  %v11836 = vadd.f32 %v11768, %v11792
  %v11837 = vadd.f32 %v11769, %v11792
  %v11838 = vadd.f32 %v11770, %v11792
  %v11839 = vadd.f32 %v11771, %v11792
  %v11840 = vadd.f32 %v11772, %v11792
  %v11841 = vadd.f32 %v11773, %v11792
  %v11842 = vadd.f32 %v11774, %v11792
  %v11843 = vadd.f32 %v11775, %v11792
  %v11844 = vadd.f32 %v11776, %v11792
  %v11845 = vadd.f32 %v11777, %v11792
  %v11846 = vadd.f32 %v11778, %v11792
  %v11847 = vadd.f32 %v11779, %v11792
  %v11848 = vadd.f32 %v11780, %v11792
  %v11849 = vadd.f32 %v11781, %v11792
  %v11850 = vadd.f32 %v11782, %v11792
  %v11851 = vadd.f32 %v11783, %v11792
  %v11852 = vadd.f32 %v11784, %v11792
  %v11853 = vadd.f32 %v11785, %v11792
  %v11854 = vadd.f32 %v11786, %v11792
  %v11855 = vadd.f32 %v11787, %v11792
  %v11856 = vadd.f32 %v11788, %v11792
  %v11857 = vadd.f32 %v11789, %v11792
  %v11858 = vmax.f32 %v11794, 0.0
  %v11859 = vmax.f32 %v11795, 0.0
  %v11860 = vmax.f32 %v11796, 0.0
  %v11861 = vmax.f32 %v11797, 0.0
  %v11862 = vmax.f32 %v11798, 0.0
  %v11863 = vmax.f32 %v11799, 0.0
  %v11864 = vmax.f32 %v11800, 0.0
  %v11865 = vmax.f32 %v11801, 0.0
  %v11866 = vmax.f32 %v11802, 0.0
  %v11867 = vmax.f32 %v11803, 0.0
  %v11868 = vmax.f32 %v11804, 0.0
  %v11869 = vmax.f32 %v11805, 0.0
  %v11870 = vmax.f32 %v11806, 0.0
  %v11871 = vmax.f32 %v11807, 0.0
  %v11872 = vmax.f32 %v11808, 0.0
  %v11873 = vmax.f32 %v11809, 0.0
  %v11874 = vmax.f32 %v11810, 0.0
  %v11875 = vmax.f32 %v11811, 0.0
  %v11876 = vmax.f32 %v11812, 0.0
  %v11877 = vmax.f32 %v11813, 0.0
  %v11878 = vmax.f32 %v11814, 0.0
  %v11879 = vmax.f32 %v11815, 0.0
  %v11880 = vmax.f32 %v11816, 0.0
  %v11881 = vmax.f32 %v11817, 0.0
  %v11882 = vmax.f32 %v11818, 0.0
  %v11883 = vmax.f32 %v11819, 0.0
  %v11884 = vmax.f32 %v11820, 0.0
  %v11885 = vmax.f32 %v11821, 0.0
  %v11886 = vmax.f32 %v11822, 0.0
  %v11887 = vmax.f32 %v11823, 0.0
  %v11888 = vmax.f32 %v11824, 0.0
  %v11889 = vmax.f32 %v11825, 0.0
  %v11890 = vmax.f32 %v11826, 0.0
  %v11891 = vmax.f32 %v11827, 0.0
  %v11892 = vmax.f32 %v11828, 0.0
  %v11893 = vmax.f32 %v11829, 0.0
  %v11894 = vmax.f32 %v11830, 0.0
  %v11895 = vmax.f32 %v11831, 0.0
  %v11896 = vmax.f32 %v11832, 0.0
  %v11897 = vmax.f32 %v11833, 0.0
  %v11898 = vmax.f32 %v11834, 0.0
  %v11899 = vmax.f32 %v11835, 0.0
  %v11900 = vmax.f32 %v11836, 0.0
  %v11901 = vmax.f32 %v11837, 0.0
  %v11902 = vmax.f32 %v11838, 0.0
  %v11903 = vmax.f32 %v11839, 0.0
  %v11904 = vmax.f32 %v11840, 0.0
  %v11905 = vmax.f32 %v11841, 0.0
  %v11906 = vmax.f32 %v11842, 0.0
  %v11907 = vmax.f32 %v11843, 0.0
  %v11908 = vmax.f32 %v11844, 0.0
  %v11909 = vmax.f32 %v11845, 0.0
  %v11910 = vmax.f32 %v11846, 0.0
  %v11911 = vmax.f32 %v11847, 0.0
  %v11912 = vmax.f32 %v11848, 0.0
  %v11913 = vmax.f32 %v11849, 0.0
  %v11914 = vmax.f32 %v11850, 0.0
  %v11915 = vmax.f32 %v11851, 0.0
  %v11916 = vmax.f32 %v11852, 0.0
  %v11917 = vmax.f32 %v11853, 0.0
  %v11918 = vmax.f32 %v11854, 0.0
  %v11919 = vmax.f32 %v11855, 0.0
  %v11920 = vmax.f32 %v11856, 0.0
  %v11921 = vmax.f32 %v11857, 0.0
  %11922 = vxpose.xlu0.b32.start [1/16] %v11858, 128
  %11923 = vxpose.xlu0.b32.cont [2/16] %v11859, 128
  %11924 = vxpose.xlu0.b32.cont [3/16] %v11860, 128
  %11925 = vxpose.xlu0.b32.cont [4/16] %v11861, 128
  %11926 = vxpose.xlu0.b32.cont [5/16] %v11862, 128
  %11927 = vxpose.xlu0.b32.cont [6/16] %v11863, 128
  %11928 = vxpose.xlu0.b32.cont [7/16] %v11864, 128
  %11929 = vxpose.xlu0.b32.cont [8/16] %v11865, 128
  %11930 = vxpose.xlu0.b32.cont [9/16] %v11866, 128
  %11931 = vxpose.xlu0.b32.cont [10/16] %v11867, 128
  %11932 = vxpose.xlu0.b32.cont [11/16] %v11868, 128
  %11933 = vxpose.xlu0.b32.cont [12/16] %v11869, 128
  %11934 = vxpose.xlu0.b32.cont [13/16] %v11870, 128
  %11935 = vxpose.xlu0.b32.cont [14/16] %v11871, 128
  %11936 = vxpose.xlu0.b32.cont [15/16] %v11872, 128
  %11937 = vxpose.xlu0.b32.end [16/16] %v11873, 128
  %v11938 = vpop.trf.xlu0
  %v11939 = vpop.trf.xlu0
  %v11940 = vpop.trf.xlu0
  %v11941 = vpop.trf.xlu0
  %v11942 = vpop.trf.xlu0
  %v11943 = vpop.trf.xlu0
  %v11944 = vpop.trf.xlu0
  %v11945 = vpop.trf.xlu0
  %v11946 = vpop.trf.xlu0
  %v11947 = vpop.trf.xlu0
  %v11948 = vpop.trf.xlu0
  %v11949 = vpop.trf.xlu0
  %v11950 = vpop.trf.xlu0
  %v11951 = vpop.trf.xlu0
  %v11952 = vpop.trf.xlu0
  %v11953 = vpop.trf.xlu0
  %11954 = vxpose.xlu0.b32.start [1/16] %v11874, 128
  %11955 = vxpose.xlu0.b32.cont [2/16] %v11875, 128
  %11956 = vxpose.xlu0.b32.cont [3/16] %v11876, 128
  %11957 = vxpose.xlu0.b32.cont [4/16] %v11877, 128
  %11958 = vxpose.xlu0.b32.cont [5/16] %v11878, 128
  %11959 = vxpose.xlu0.b32.cont [6/16] %v11879, 128
  %11960 = vxpose.xlu0.b32.cont [7/16] %v11880, 128
  %11961 = vxpose.xlu0.b32.cont [8/16] %v11881, 128
  %11962 = vxpose.xlu0.b32.cont [9/16] %v11882, 128
  %11963 = vxpose.xlu0.b32.cont [10/16] %v11883, 128
  %11964 = vxpose.xlu0.b32.cont [11/16] %v11884, 128
  %11965 = vxpose.xlu0.b32.cont [12/16] %v11885, 128
  %11966 = vxpose.xlu0.b32.cont [13/16] %v11886, 128
  %11967 = vxpose.xlu0.b32.cont [14/16] %v11887, 128
  %11968 = vxpose.xlu0.b32.cont [15/16] %v11888, 128
  %11969 = vxpose.xlu0.b32.end [16/16] %v11889, 128
  %v11970 = vpop.trf.xlu0
  %v11971 = vpop.trf.xlu0
  %v11972 = vpop.trf.xlu0
  %v11973 = vpop.trf.xlu0
  %v11974 = vpop.trf.xlu0
  %v11975 = vpop.trf.xlu0
  %v11976 = vpop.trf.xlu0
  %v11977 = vpop.trf.xlu0
  %v11978 = vpop.trf.xlu0
  %v11979 = vpop.trf.xlu0
  %v11980 = vpop.trf.xlu0
  %v11981 = vpop.trf.xlu0
  %v11982 = vpop.trf.xlu0
  %v11983 = vpop.trf.xlu0
  %v11984 = vpop.trf.xlu0
  %v11985 = vpop.trf.xlu0
  %11986 = vxpose.xlu0.b32.start [1/16] %v11890, 128
  %11987 = vxpose.xlu0.b32.cont [2/16] %v11891, 128
  %11988 = vxpose.xlu0.b32.cont [3/16] %v11892, 128
  %11989 = vxpose.xlu0.b32.cont [4/16] %v11893, 128
  %11990 = vxpose.xlu0.b32.cont [5/16] %v11894, 128
  %11991 = vxpose.xlu0.b32.cont [6/16] %v11895, 128
  %11992 = vxpose.xlu0.b32.cont [7/16] %v11896, 128
  %11993 = vxpose.xlu0.b32.cont [8/16] %v11897, 128
  %11994 = vxpose.xlu0.b32.cont [9/16] %v11898, 128
  %11995 = vxpose.xlu0.b32.cont [10/16] %v11899, 128
  %11996 = vxpose.xlu0.b32.cont [11/16] %v11900, 128
  %11997 = vxpose.xlu0.b32.cont [12/16] %v11901, 128
  %11998 = vxpose.xlu0.b32.cont [13/16] %v11902, 128
  %11999 = vxpose.xlu0.b32.cont [14/16] %v11903, 128
  %12000 = vxpose.xlu0.b32.cont [15/16] %v11904, 128
  %12001 = vxpose.xlu0.b32.end [16/16] %v11905, 128
  %v12002 = vpop.trf.xlu0
  %v12003 = vpop.trf.xlu0
  %v12004 = vpop.trf.xlu0
  %v12005 = vpop.trf.xlu0
  %v12006 = vpop.trf.xlu0
  %v12007 = vpop.trf.xlu0
  %v12008 = vpop.trf.xlu0
  %v12009 = vpop.trf.xlu0
  %v12010 = vpop.trf.xlu0
  %v12011 = vpop.trf.xlu0
  %v12012 = vpop.trf.xlu0
  %v12013 = vpop.trf.xlu0
  %v12014 = vpop.trf.xlu0
  %v12015 = vpop.trf.xlu0
  %v12016 = vpop.trf.xlu0
  %v12017 = vpop.trf.xlu0
  %12018 = vxpose.xlu0.b32.start [1/16] %v11906, 128
  %12019 = vxpose.xlu0.b32.cont [2/16] %v11907, 128
  %12020 = vxpose.xlu0.b32.cont [3/16] %v11908, 128
  %12021 = vxpose.xlu0.b32.cont [4/16] %v11909, 128
  %12022 = vxpose.xlu0.b32.cont [5/16] %v11910, 128
  %12023 = vxpose.xlu0.b32.cont [6/16] %v11911, 128
  %12024 = vxpose.xlu0.b32.cont [7/16] %v11912, 128
  %12025 = vxpose.xlu0.b32.cont [8/16] %v11913, 128
  %12026 = vxpose.xlu0.b32.cont [9/16] %v11914, 128
  %12027 = vxpose.xlu0.b32.cont [10/16] %v11915, 128
  %12028 = vxpose.xlu0.b32.cont [11/16] %v11916, 128
  %12029 = vxpose.xlu0.b32.cont [12/16] %v11917, 128
  %12030 = vxpose.xlu0.b32.cont [13/16] %v11918, 128
  %12031 = vxpose.xlu0.b32.cont [14/16] %v11919, 128
  %12032 = vxpose.xlu0.b32.cont [15/16] %v11920, 128
  %12033 = vxpose.xlu0.b32.end [16/16] %v11921, 128
  %v12034 = vpop.trf.xlu0
  %v12035 = vpop.trf.xlu0
  %v12036 = vpop.trf.xlu0
  %v12037 = vpop.trf.xlu0
  %v12038 = vpop.trf.xlu0
  %v12039 = vpop.trf.xlu0
  %v12040 = vpop.trf.xlu0
  %v12041 = vpop.trf.xlu0
  %v12042 = vpop.trf.xlu0
  %v12043 = vpop.trf.xlu0
  %v12044 = vpop.trf.xlu0
  %v12045 = vpop.trf.xlu0
  %v12046 = vpop.trf.xlu0
  %v12047 = vpop.trf.xlu0
  %v12048 = vpop.trf.xlu0
  %v12049 = vpop.trf.xlu0
  %12050 = vst [vmem:[%s20] sm:$0xff] %v11938
  %12051 = vst [vmem:[%s20 + $0x8] sm:$0xff] %v11970
  %12052 = vst [vmem:[%s20 + $0x10] sm:$0xff] %v11939
  %12053 = vst [vmem:[%s20 + $0x18] sm:$0xff] %v11971
  %12054 = vst [vmem:[%s20 + $0x20] sm:$0xff] %v11940
  %12055 = vst [vmem:[%s20 + $0x28] sm:$0xff] %v11972
  %12056 = vst [vmem:[%s20 + $0x30] sm:$0xff] %v11941
  %12057 = vst [vmem:[%s20 + $0x38] sm:$0xff] %v11973
  %12058 = vst [vmem:[%s20 + $0x40] sm:$0xff] %v11942
  %12059 = vst [vmem:[%s20 + $0x48] sm:$0xff] %v11974
  %12060 = vst [vmem:[%s20 + $0x50] sm:$0xff] %v11943
  %12061 = vst [vmem:[%s20 + $0x58] sm:$0xff] %v11975
  %12062 = vst [vmem:[%s20 + $0x60] sm:$0xff] %v11944
  %12063 = vst [vmem:[%s20 + $0x68] sm:$0xff] %v11976
  %12064 = vst [vmem:[%s20 + $0x70] sm:$0xff] %v11945
  %12065 = vst [vmem:[%s20 + $0x78] sm:$0xff] %v11977
  %12066 = vst [vmem:[%s20 + $0x80] sm:$0xff] %v12002
  %12067 = vst [vmem:[%s20 + $0x88] sm:$0xff] %v12034
  %12068 = vst [vmem:[%s20 + $0x90] sm:$0xff] %v12003
  %12069 = vst [vmem:[%s20 + $0x98] sm:$0xff] %v12035
  %12070 = vst [vmem:[%s20 + $0xa0] sm:$0xff] %v12004
  %12071 = vst [vmem:[%s20 + $0xa8] sm:$0xff] %v12036
  %12072 = vst [vmem:[%s20 + $0xb0] sm:$0xff] %v12005
  %12073 = vst [vmem:[%s20 + $0xb8] sm:$0xff] %v12037
  %12074 = vst [vmem:[%s20 + $0xc0] sm:$0xff] %v12006
  %12075 = vst [vmem:[%s20 + $0xc8] sm:$0xff] %v12038
  %12076 = vst [vmem:[%s20 + $0xd0] sm:$0xff] %v12007
  %12077 = vst [vmem:[%s20 + $0xd8] sm:$0xff] %v12039
  %12078 = vst [vmem:[%s20 + $0xe0] sm:$0xff] %v12008
  %12079 = vst [vmem:[%s20 + $0xe8] sm:$0xff] %v12040
  %12080 = vst [vmem:[%s20 + $0xf0] sm:$0xff] %v12009
  %12081 = vst [vmem:[%s20 + $0xf8] sm:$0xff] %v12041
  // Predicated region
  $region82: #{bev_backbone_v1_forward.1} parent=0 // pred_check
    _
  $region83: #{bev_backbone_v1_forward.1} parent=0 // pred_check_branch
    %12083 = sbr.rel (0) target = $region85
  $region84: #{bev_backbone_v1_forward.1} parent=0 // pred_region
    _
  $region85: #{bev_backbone_v1_forward.1} parent=0 // pred_fallthru
    _
  // Predicated region
  $region86: #{bev_backbone_v1_forward.1} parent=0 // pred_check
    _
  $region87: #{bev_backbone_v1_forward.1} parent=0 // pred_check_branch
    %12085 = sbr.rel (0) target = $region89
  $region88: #{bev_backbone_v1_forward.1} parent=0 // pred_region
    _
  $region89: #{bev_backbone_v1_forward.1} parent=0 // pred_fallthru
    _

</llo_original>
